<compile_context>
chip_gen: v6e
topology: v6e:2x2x1
jax: 0.10.0
libtpu: 0.0.40
codegen_flags: <defaults>
</compile_context>

<pallas_src>
import jax
import jax.numpy as jnp
from jax.experimental import pallas as pl
from jax.experimental.pallas import tpu as pltpu

N_EMBD = 128
N_HEAD = 4
HEAD_SIZE = N_EMBD // N_HEAD
LN_EPS = 1e-5
NEG_INF = -1e30  # large finite negative (robust if rows ever end up fully masked)


def _layernorm(z, g, b):
    mu = jnp.mean(z, axis=-1, keepdims=True)
    var = jnp.mean((z - mu) ** 2, axis=-1, keepdims=True)
    return (z - mu) * jax.lax.rsqrt(var + LN_EPS) * g + b


def block_kernel(x_ref, wqkv_ref, wp_ref, bp_ref,
                 g1_ref, be1_ref, g2_ref, be2_ref,
                 w1_ref, b1_ref, w2_ref, b2_ref, o_ref):
    Bblk, T, C = x_ref.shape
    M = Bblk * T

    # Residual stream in fp32, flattened to (M, C) so every big matmul gets
    # M = Bblk*T rows on the MXU.
    x = x_ref[...].reshape(M, C)

    # ---- ln1 (fp32 stats) -> fused QKV projection ----
    xn = _layernorm(x, g1_ref[...], be1_ref[...])
    xn_b = xn.astype(jnp.bfloat16)

    # One MXU op with N = 3C = 384 instead of three N = 128 matmuls.
    qkv = jnp.dot(xn_b, wqkv_ref[...], preferred_element_type=jnp.float32)  # (M, 3C)

    # NOTE: reference intentionally scales by n_embd**-0.5 (C), not head_size**-0.5.
    # Fold the scale into q once; the lane slices at 0 / C / 2C are tile-aligned.
    scale = 1.0 / jnp.sqrt(jnp.float32(C))
    q3 = (qkv[:, :C] * scale).astype(jnp.bfloat16).reshape(Bblk, T, C)
    k3 = qkv[:, C:2 * C].astype(jnp.bfloat16).reshape(Bblk, T, C)
    v3 = qkv[:, 2 * C:].astype(jnp.bfloat16).reshape(Bblk, T, C)

    row = jax.lax.broadcasted_iota(jnp.int32, (T, T), 0)
    col = jax.lax.broadcasted_iota(jnp.int32, (T, T), 1)
    causal = (row >= col)[None]            # (1, T, T), broadcast over batch

    # ---- causal attention per head (batched over the batch axis) ----
    head_outs = []
    for h in range(N_HEAD):                # static unroll over heads
        lo = h * HEAD_SIZE
        hi = lo + HEAD_SIZE
        qh = q3[:, :, lo:hi]               # (Bblk, T, hs) bf16
        kh = k3[:, :, lo:hi]
        vh = v3[:, :, lo:hi]

        s = jnp.einsum("bqd,bkd->bqk", qh, kh,
                       preferred_element_type=jnp.float32)       # (Bblk, T, T)
        s = jnp.where(causal, s, NEG_INF)
        s = s - jnp.max(s, axis=-1, keepdims=True)
        p = jnp.exp(s)
        p = p * pl.reciprocal(jnp.sum(p, axis=-1, keepdims=True), approx=True)

        oh = jnp.einsum("bqk,bkd->bqd", p.astype(jnp.bfloat16), vh,
                        preferred_element_type=jnp.float32)      # (Bblk, T, hs)
        head_outs.append(oh)

    # Concatenate the head outputs along lanes (XLU, has slack) and do ONE
    # full-depth K = C output projection instead of four K = hs matmuls.
    o_all = jnp.concatenate(head_outs, axis=-1)                  # (Bblk, T, C) fp32
    o_all = o_all.reshape(M, C).astype(jnp.bfloat16)
    sa = jnp.dot(o_all, wp_ref[...], preferred_element_type=jnp.float32)  # (M, C)

    x1 = x + sa + bp_ref[...]              # first residual (fp32)

    # ---- ln2 -> feed-forward (Linear -> ReLU -> Linear) ----
    xn2 = _layernorm(x1, g2_ref[...], be2_ref[...]).astype(jnp.bfloat16)
    h1 = jnp.dot(xn2, w1_ref[...], preferred_element_type=jnp.float32) + b1_ref[...]
    h1 = jnp.maximum(h1, 0.0).astype(jnp.bfloat16)
    ff = jnp.dot(h1, w2_ref[...], preferred_element_type=jnp.float32) + b2_ref[...]

    o_ref[...] = (x1 + ff).reshape(Bblk, T, C).astype(o_ref.dtype)


def _tensorcores_per_chip():
    """TensorCores addressable by one pallas_call grid.  v5e/v6e have a single
    TC; v7x has 2 (v4 megacore also exposes 2 via 'parallel' grid axes)."""
    try:
        kind = jax.devices()[0].device_kind.lower()
    except Exception:
        return 1
    if "v7" in kind or "v4" in kind:
        return 2
    return 1


def _pick_block_b(B, T, num_cores=1, target_rows=256, max_rows=2048):
    """Pick the batch block.  Single-TC chips: one grid step with the biggest
    block that fits (the grid is a serial loop, splitting only adds per-step
    overhead).  Multi-TC chips: prefer a core-multiple number of grid steps
    with M = Bblk*T >= target_rows per step; otherwise accept smaller M."""
    divs = [d for d in range(1, B + 1) if B % d == 0]
    fits = [d for d in divs if d * T <= max_rows] or [1]
    if num_cores <= 1:
        return max(fits)
    good = [d for d in fits if (B // d) % num_cores == 0 and d * T >= target_rows]
    if good:
        return max(good)
    split = [d for d in fits if (B // d) % num_cores == 0]
    if split:
        return max(split)
    return max(fits)


def _vmem_estimate_bytes(block_b, T, C):
    """Rough per-step live VMEM: double-buffered x/out blocks, double-buffered
    bf16 weights, fp32 intermediates (activations, h1, per-head scores)."""
    M = block_b * T
    f32, bf16 = 4, 2
    io = 2 * 2 * M * C * f32                              # x + out, 2 buffers each
    weights = 2 * (12 * C * C) * bf16                     # wqkv + wp + w1 + w2
    interm = 8 * M * C * f32 + M * 4 * C * f32 + N_HEAD * block_b * T * T * f32
    return io + weights + interm


def gpt_block(x, params, block_b=None):
    B, T, C = x.shape
    assert C == N_EMBD
    if block_b is None:
        block_b = _pick_block_b(B, T, num_cores=_tensorcores_per_chip())
    assert B % block_b == 0
    grid = (B // block_b,)

    # Cast weight matrices to bf16 once in the wrapper (native MXU path, half
    # the weight DMA bytes) and fuse Wq|Wk|Wv into a single (C, 3C) matrix.
    bf = lambda w: w.astype(jnp.bfloat16)
    wqkv = jnp.concatenate([params["wq"], params["wk"], params["wv"]], axis=1)
    wqkv, wp = bf(wqkv), bf(params["wp"])
    w1, w2 = bf(params["w1"]), bf(params["w2"])

    # Weight blocks have a constant block index across the grid, so Pallas only
    # DMAs them once.  (pl.Buffered(1) could drop their second VMEM buffer, but
    # at C=128 the saving is negligible, so it is skipped for robustness.)
    full = lambda shape: pl.BlockSpec(shape, lambda b: tuple(0 for _ in shape))

    in_specs = [
        pl.BlockSpec((block_b, T, C), lambda b: (b, 0, 0)),   # x
        full((C, 3 * C)),                                     # fused Wqkv (bf16)
        full((C, C)), full((1, C)),                           # Wproj (bf16), bproj
        full((1, C)), full((1, C)),                           # ln1 gamma/beta
        full((1, C)), full((1, C)),                           # ln2 gamma/beta
        full((C, 4 * C)), full((1, 4 * C)),                   # ffn W1 (bf16), b1
        full((4 * C, C)), full((1, C)),                       # ffn W2 (bf16), b2
    ]

    # VMEM guardrail: only raise the scoped limit when the estimate needs it
    # (cap at 64 MiB so the request stays within v7x physical VMEM).
    cp_kwargs = dict(dimension_semantics=("parallel",))
    est = _vmem_estimate_bytes(block_b, T, C)
    if est > (32 << 20):
        cp_kwargs["vmem_limit_bytes"] = min(int(est * 1.25), 64 << 20)

    return pl.pallas_call(
        block_kernel,
        out_shape=jax.ShapeDtypeStruct((B, T, C), x.dtype),
        grid_spec=pltpu.PrefetchScalarGridSpec(
            num_scalar_prefetch=0,
            grid=grid,
            in_specs=in_specs,
            out_specs=pl.BlockSpec((block_b, T, C), lambda b: (b, 0, 0)),
        ),
        compiler_params=pltpu.CompilerParams(**cp_kwargs),
    )(x, wqkv, wp, params["bp"],
      params["g1"], params["be1"], params["g2"], params["be2"],
      w1, params["b1"], w2, params["b2"])


def init_params(key):
    C = N_EMBD
    ks = jax.random.split(key, 8)
    std = 0.02
    return {
        # per-head K/Q/V weights concatenated along the output dim so that
        # column block h corresponds to head h (matches torch.cat over heads).
        "wq": std * jax.random.normal(ks[0], (C, C), jnp.float32),
        "wk": std * jax.random.normal(ks[1], (C, C), jnp.float32),
        "wv": std * jax.random.normal(ks[2], (C, C), jnp.float32),
        "wp": std * jax.random.normal(ks[3], (C, C), jnp.float32),
        "bp": std * jax.random.normal(ks[4], (1, C), jnp.float32),
        "g1": jnp.ones((1, C), jnp.float32),
        "be1": jnp.zeros((1, C), jnp.float32),
        "g2": jnp.ones((1, C), jnp.float32),
        "be2": jnp.zeros((1, C), jnp.float32),
        "w1": std * jax.random.normal(ks[5], (C, 4 * C), jnp.float32),
        "b1": std * jax.random.normal(ks[6], (1, 4 * C), jnp.float32),
        "w2": std * jax.random.normal(ks[7], (4 * C, C), jnp.float32),
        "b2": jnp.zeros((1, C), jnp.float32),
    }


def _reference(x, p):
    # plain-JAX fp32 reference of the same forward pass (eval mode, dropout = id)
    def ln(z, g, b):
        mu = jnp.mean(z, -1, keepdims=True)
        var = jnp.mean((z - mu) ** 2, -1, keepdims=True)
        return (z - mu) / jnp.sqrt(var + LN_EPS) * g + b

    B, T, C = x.shape
    xn = ln(x, p["g1"], p["be1"])
    q = xn @ p["wq"]; k = xn @ p["wk"]; v = xn @ p["wv"]
    qh = q.reshape(B, T, N_HEAD, HEAD_SIZE).transpose(0, 2, 1, 3)
    kh = k.reshape(B, T, N_HEAD, HEAD_SIZE).transpose(0, 2, 1, 3)
    vh = v.reshape(B, T, N_HEAD, HEAD_SIZE).transpose(0, 2, 1, 3)
    s = jnp.einsum("bhqd,bhkd->bhqk", qh, kh) * (C ** -0.5)
    mask = jnp.tril(jnp.ones((T, T), bool))
    s = jnp.where(mask, s, -jnp.inf)
    w = jax.nn.softmax(s, axis=-1)
    o = jnp.einsum("bhqk,bhkd->bhqd", w, vh).transpose(0, 2, 1, 3).reshape(B, T, C)
    x1 = x + o @ p["wp"] + p["bp"]
    xn2 = ln(x1, p["g2"], p["be2"])
    ff = jnp.maximum(xn2 @ p["w1"] + p["b1"], 0.0) @ p["w2"] + p["b2"]
    return x1 + ff


if __name__ == "__main__":
    key = jax.random.PRNGKey(0)
    k_x, k_p = jax.random.split(key)

    # B=16, T=16 -> on v5e/v6e one step with M = 256 MXU rows; on v7x two
    # parallel steps of M = 128 (one per TensorCore).
    B, T = 16, 16
    x = jax.random.normal(k_x, (B, T, N_EMBD), jnp.float32)
    params = init_params(k_p)

    out = jax.block_until_ready(gpt_block(x, params))
    ref = _reference(x, params)

    assert out.shape == (B, T, N_EMBD)
    # bf16 matmul inputs + approx reciprocal => compare at bf16-level tolerance.
    max_err = float(jnp.max(jnp.abs(out - ref)))
    assert jnp.allclose(out, ref, atol=2e-2, rtol=2e-2), (
        f"mismatch vs reference (max abs err {max_err})")

    print("KERNEL_OK")
</pallas_src>

<mosaic_0001>
module attributes {stable_mosaic.version = 11 : i64} {
  func.func @block_kernel(%arg0: i32, %arg1: memref<16x16x128xf32, #tpu.memory_space<vmem>>, %arg2: memref<128x384xbf16, #tpu.memory_space<vmem>>, %arg3: memref<128x128xbf16, #tpu.memory_space<vmem>>, %arg4: memref<1x128xf32, #tpu.memory_space<vmem>>, %arg5: memref<1x128xf32, #tpu.memory_space<vmem>>, %arg6: memref<1x128xf32, #tpu.memory_space<vmem>>, %arg7: memref<1x128xf32, #tpu.memory_space<vmem>>, %arg8: memref<1x128xf32, #tpu.memory_space<vmem>>, %arg9: memref<128x512xbf16, #tpu.memory_space<vmem>>, %arg10: memref<1x512xf32, #tpu.memory_space<vmem>>, %arg11: memref<512x128xbf16, #tpu.memory_space<vmem>>, %arg12: memref<1x128xf32, #tpu.memory_space<vmem>>, %arg13: memref<16x16x128xf32, #tpu.memory_space<vmem>>) attributes {dimension_semantics = [#tpu.dimension_semantics<parallel>], iteration_bounds = array<i64: 1>, scalar_prefetch = 0 : i64, scratch_operands = 0 : i64, tpu.core_type = #tpu.core_type<tc>, window_params = [{transform_indices = @transform_0, window_bounds = array<i64: 16, 16, 128>}, {pipeline_mode = #tpu.pipeline_mode<synchronous>, transform_indices = @transform_1, window_bounds = array<i64: 128, 384>}, {pipeline_mode = #tpu.pipeline_mode<synchronous>, transform_indices = @transform_2, window_bounds = array<i64: 128, 128>}, {pipeline_mode = #tpu.pipeline_mode<synchronous>, transform_indices = @transform_3, window_bounds = array<i64: 1, 128>}, {pipeline_mode = #tpu.pipeline_mode<synchronous>, transform_indices = @transform_4, window_bounds = array<i64: 1, 128>}, {pipeline_mode = #tpu.pipeline_mode<synchronous>, transform_indices = @transform_5, window_bounds = array<i64: 1, 128>}, {pipeline_mode = #tpu.pipeline_mode<synchronous>, transform_indices = @transform_6, window_bounds = array<i64: 1, 128>}, {pipeline_mode = #tpu.pipeline_mode<synchronous>, transform_indices = @transform_7, window_bounds = array<i64: 1, 128>}, {pipeline_mode = #tpu.pipeline_mode<synchronous>, transform_indices = @transform_8, window_bounds = array<i64: 128, 512>}, {pipeline_mode = #tpu.pipeline_mode<synchronous>, transform_indices = @transform_9, window_bounds = array<i64: 1, 512>}, {pipeline_mode = #tpu.pipeline_mode<synchronous>, transform_indices = @transform_10, window_bounds = array<i64: 512, 128>}, {pipeline_mode = #tpu.pipeline_mode<synchronous>, transform_indices = @transform_11, window_bounds = array<i64: 1, 128>}, {transform_indices = @transform_12, window_bounds = array<i64: 16, 16, 128>}]} {
    %c0 = arith.constant 0 : index
    %c0_0 = arith.constant 0 : index
    %c0_1 = arith.constant 0 : index
    %0 = vector.load %arg1[%c0, %c0_0, %c0_1] : memref<16x16x128xf32, #tpu.memory_space<vmem>>, vector<16x16x128xf32>
    %1 = vector.shape_cast %0 : vector<16x16x128xf32> to vector<256x128xf32>
    %c0_2 = arith.constant 0 : index
    %c0_3 = arith.constant 0 : index
    %2 = vector.load %arg5[%c0_2, %c0_3] : memref<1x128xf32, #tpu.memory_space<vmem>>, vector<1x128xf32>
    %c0_4 = arith.constant 0 : index
    %c0_5 = arith.constant 0 : index
    %3 = vector.load %arg6[%c0_4, %c0_5] : memref<1x128xf32, #tpu.memory_space<vmem>>, vector<1x128xf32>
    %cst = arith.constant dense<0.000000e+00> : vector<256xf32>
    %4 = vector.multi_reduction <add>, %1, %cst [1] : vector<256x128xf32> to vector<256xf32>
    %5 = vector.shape_cast %4 : vector<256xf32> to vector<256x1xf32>
    %cst_6 = arith.constant 1.280000e+02 : f32
    %6 = vector.broadcast %cst_6 : f32 to vector<256x1xf32>
    %7 = arith.divf %5, %6 : vector<256x1xf32>
    %8 = vector.broadcast %7 : vector<256x1xf32> to vector<256x128xf32>
    %9 = arith.subf %1, %8 : vector<256x128xf32>
    %10 = arith.mulf %9, %9 : vector<256x128xf32>
    %cst_7 = arith.constant dense<0.000000e+00> : vector<256xf32>
    %11 = vector.multi_reduction <add>, %10, %cst_7 [1] : vector<256x128xf32> to vector<256xf32>
    %12 = vector.shape_cast %11 : vector<256xf32> to vector<256x1xf32>
    %cst_8 = arith.constant 1.280000e+02 : f32
    %13 = vector.broadcast %cst_8 : f32 to vector<256x1xf32>
    %14 = arith.divf %12, %13 : vector<256x1xf32>
    %15 = vector.broadcast %7 : vector<256x1xf32> to vector<256x128xf32>
    %16 = arith.subf %1, %15 : vector<256x128xf32>
    %cst_9 = arith.constant 9.99999974E-6 : f32
    %17 = vector.broadcast %cst_9 : f32 to vector<256x1xf32>
    %18 = arith.addf %14, %17 : vector<256x1xf32>
    %19 = math.rsqrt %18 : vector<256x1xf32>
    %20 = vector.broadcast %19 : vector<256x1xf32> to vector<256x128xf32>
    %21 = arith.mulf %16, %20 : vector<256x128xf32>
    %22 = vector.broadcast %2 : vector<1x128xf32> to vector<256x128xf32>
    %23 = arith.mulf %21, %22 : vector<256x128xf32>
    %24 = vector.broadcast %3 : vector<1x128xf32> to vector<256x128xf32>
    %25 = arith.addf %23, %24 : vector<256x128xf32>
    %26 = arith.truncf %25 : vector<256x128xf32> to vector<256x128xbf16>
    %c0_10 = arith.constant 0 : index
    %c0_11 = arith.constant 0 : index
    %27 = vector.load %arg2[%c0_10, %c0_11] : memref<128x384xbf16, #tpu.memory_space<vmem>>, vector<128x384xbf16>
    %cst_12 = arith.constant dense<0.000000e+00> : vector<256x384xf32>
    %28 = tpu.matmul %26, %27, %cst_12 {dimension_numbers = #tpu.dot_dimension_numbers<[1], [0], [0], [1], [0, 0, 1, 1], [], []>} : vector<256x128xbf16>, vector<128x384xbf16>, vector<256x384xf32> -> vector<256x384xf32>
    %cst_13 = arith.constant 1.280000e+02 : f32
    %29 = math.sqrt %cst_13 : f32
    %cst_14 = arith.constant 1.000000e+00 : f32
    %30 = arith.divf %cst_14, %29 : f32
    %31 = vector.extract_strided_slice %28 {offsets = [0, 0], sizes = [256, 128], strides = [1, 1]} : vector<256x384xf32> to vector<256x128xf32>
    %32 = vector.broadcast %30 : f32 to vector<256x128xf32>
    %33 = arith.mulf %31, %32 : vector<256x128xf32>
    %34 = arith.truncf %33 : vector<256x128xf32> to vector<256x128xbf16>
    %35 = vector.shape_cast %34 : vector<256x128xbf16> to vector<16x16x128xbf16>
    %36 = vector.extract_strided_slice %28 {offsets = [0, 128], sizes = [256, 128], strides = [1, 1]} : vector<256x384xf32> to vector<256x128xf32>
    %37 = arith.truncf %36 : vector<256x128xf32> to vector<256x128xbf16>
    %38 = vector.shape_cast %37 : vector<256x128xbf16> to vector<16x16x128xbf16>
    %39 = vector.extract_strided_slice %28 {offsets = [0, 256], sizes = [256, 128], strides = [1, 1]} : vector<256x384xf32> to vector<256x128xf32>
    %40 = arith.truncf %39 : vector<256x128xf32> to vector<256x128xbf16>
    %41 = vector.shape_cast %40 : vector<256x128xbf16> to vector<16x16x128xbf16>
    %42 = tpu.iota {dimensions = array<i32: 0>} : vector<16x16xi32>
    %43 = tpu.iota {dimensions = array<i32: 1>} : vector<16x16xi32>
    %44 = arith.cmpi sge, %42, %43 : vector<16x16xi32>
    %45 = vector.shape_cast %44 : vector<16x16xi1> to vector<1x16x16xi1>
    %46 = vector.extract_strided_slice %35 {offsets = [0, 0, 0], sizes = [16, 16, 32], strides = [1, 1, 1]} : vector<16x16x128xbf16> to vector<16x16x32xbf16>
    %47 = vector.extract_strided_slice %38 {offsets = [0, 0, 0], sizes = [16, 16, 32], strides = [1, 1, 1]} : vector<16x16x128xbf16> to vector<16x16x32xbf16>
    %48 = vector.extract_strided_slice %41 {offsets = [0, 0, 0], sizes = [16, 16, 32], strides = [1, 1, 1]} : vector<16x16x128xbf16> to vector<16x16x32xbf16>
    "tpu.trace_start"() <{level = 10 : i32, message = "bqd,bkd->bqk"}> : () -> ()
    %cst_15 = arith.constant dense<0.000000e+00> : vector<16x16x16xf32>
    %49 = tpu.matmul %46, %47, %cst_15 {dimension_numbers = #tpu.dot_dimension_numbers<[2], [2], [1], [1], [0, 0, 0, 1, 1, 1], [0], [0]>} : vector<16x16x32xbf16>, vector<16x16x32xbf16>, vector<16x16x16xf32> -> vector<16x16x16xf32>
    %cst_16 = arith.constant -1.000000e+30 : f32
    "tpu.trace_stop"() : () -> ()
    %50 = vector.shape_cast %45 : vector<1x16x16xi1> to vector<1x16x16xi1>
    %51 = vector.broadcast %50 : vector<1x16x16xi1> to vector<16x16x16xi1>
    %52 = vector.broadcast %cst_16 : f32 to vector<16x16x16xf32>
    %53 = arith.select %51, %49, %52 : vector<16x16x16xi1>, vector<16x16x16xf32>
    %cst_17 = arith.constant dense<0xFF800000> : vector<16x16xf32>
    %54 = vector.multi_reduction <maximumf>, %53, %cst_17 [2] : vector<16x16x16xf32> to vector<16x16xf32>
    %55 = vector.shape_cast %54 : vector<16x16xf32> to vector<16x16x1xf32>
    %56 = vector.broadcast %55 : vector<16x16x1xf32> to vector<16x16x16xf32>
    %57 = arith.subf %53, %56 : vector<16x16x16xf32>
    %58 = math.exp %57 : vector<16x16x16xf32>
    %cst_18 = arith.constant dense<0.000000e+00> : vector<16x16xf32>
    %59 = vector.multi_reduction <add>, %58, %cst_18 [2] : vector<16x16x16xf32> to vector<16x16xf32>
    %60 = vector.shape_cast %59 : vector<16x16xf32> to vector<16x16x1xf32>
    %61 = tpu.reciprocal %60 {approx = true} : vector<16x16x1xf32> -> vector<16x16x1xf32>
    %62 = vector.broadcast %61 : vector<16x16x1xf32> to vector<16x16x16xf32>
    %63 = arith.mulf %58, %62 : vector<16x16x16xf32>
    %64 = arith.truncf %63 : vector<16x16x16xf32> to vector<16x16x16xbf16>
    "tpu.trace_start"() <{level = 10 : i32, message = "bqk,bkd->bqd"}> : () -> ()
    %cst_19 = arith.constant dense<0.000000e+00> : vector<16x16x32xf32>
    %65 = tpu.matmul %64, %48, %cst_19 {dimension_numbers = #tpu.dot_dimension_numbers<[2], [1], [1], [2], [0, 0, 0, 1, 1, 2], [0], [0]>} : vector<16x16x16xbf16>, vector<16x16x32xbf16>, vector<16x16x32xf32> -> vector<16x16x32xf32>
    "tpu.trace_stop"() : () -> ()
    %66 = vector.extract_strided_slice %35 {offsets = [0, 0, 32], sizes = [16, 16, 32], strides = [1, 1, 1]} : vector<16x16x128xbf16> to vector<16x16x32xbf16>
    %67 = vector.extract_strided_slice %38 {offsets = [0, 0, 32], sizes = [16, 16, 32], strides = [1, 1, 1]} : vector<16x16x128xbf16> to vector<16x16x32xbf16>
    %68 = vector.extract_strided_slice %41 {offsets = [0, 0, 32], sizes = [16, 16, 32], strides = [1, 1, 1]} : vector<16x16x128xbf16> to vector<16x16x32xbf16>
    "tpu.trace_start"() <{level = 10 : i32, message = "bqd,bkd->bqk"}> : () -> ()
    %cst_20 = arith.constant dense<0.000000e+00> : vector<16x16x16xf32>
    %69 = tpu.matmul %66, %67, %cst_20 {dimension_numbers = #tpu.dot_dimension_numbers<[2], [2], [1], [1], [0, 0, 0, 1, 1, 1], [0], [0]>} : vector<16x16x32xbf16>, vector<16x16x32xbf16>, vector<16x16x16xf32> -> vector<16x16x16xf32>
    %cst_21 = arith.constant -1.000000e+30 : f32
    "tpu.trace_stop"() : () -> ()
    %70 = vector.shape_cast %45 : vector<1x16x16xi1> to vector<1x16x16xi1>
    %71 = vector.broadcast %70 : vector<1x16x16xi1> to vector<16x16x16xi1>
    %72 = vector.broadcast %cst_21 : f32 to vector<16x16x16xf32>
    %73 = arith.select %71, %69, %72 : vector<16x16x16xi1>, vector<16x16x16xf32>
    %cst_22 = arith.constant dense<0xFF800000> : vector<16x16xf32>
    %74 = vector.multi_reduction <maximumf>, %73, %cst_22 [2] : vector<16x16x16xf32> to vector<16x16xf32>
    %75 = vector.shape_cast %74 : vector<16x16xf32> to vector<16x16x1xf32>
    %76 = vector.broadcast %75 : vector<16x16x1xf32> to vector<16x16x16xf32>
    %77 = arith.subf %73, %76 : vector<16x16x16xf32>
    %78 = math.exp %77 : vector<16x16x16xf32>
    %cst_23 = arith.constant dense<0.000000e+00> : vector<16x16xf32>
    %79 = vector.multi_reduction <add>, %78, %cst_23 [2] : vector<16x16x16xf32> to vector<16x16xf32>
    %80 = vector.shape_cast %79 : vector<16x16xf32> to vector<16x16x1xf32>
    %81 = tpu.reciprocal %80 {approx = true} : vector<16x16x1xf32> -> vector<16x16x1xf32>
    %82 = vector.broadcast %81 : vector<16x16x1xf32> to vector<16x16x16xf32>
    %83 = arith.mulf %78, %82 : vector<16x16x16xf32>
    %84 = arith.truncf %83 : vector<16x16x16xf32> to vector<16x16x16xbf16>
    "tpu.trace_start"() <{level = 10 : i32, message = "bqk,bkd->bqd"}> : () -> ()
    %cst_24 = arith.constant dense<0.000000e+00> : vector<16x16x32xf32>
    %85 = tpu.matmul %84, %68, %cst_24 {dimension_numbers = #tpu.dot_dimension_numbers<[2], [1], [1], [2], [0, 0, 0, 1, 1, 2], [0], [0]>} : vector<16x16x16xbf16>, vector<16x16x32xbf16>, vector<16x16x32xf32> -> vector<16x16x32xf32>
    "tpu.trace_stop"() : () -> ()
    %86 = vector.extract_strided_slice %35 {offsets = [0, 0, 64], sizes = [16, 16, 32], strides = [1, 1, 1]} : vector<16x16x128xbf16> to vector<16x16x32xbf16>
    %87 = vector.extract_strided_slice %38 {offsets = [0, 0, 64], sizes = [16, 16, 32], strides = [1, 1, 1]} : vector<16x16x128xbf16> to vector<16x16x32xbf16>
    %88 = vector.extract_strided_slice %41 {offsets = [0, 0, 64], sizes = [16, 16, 32], strides = [1, 1, 1]} : vector<16x16x128xbf16> to vector<16x16x32xbf16>
    "tpu.trace_start"() <{level = 10 : i32, message = "bqd,bkd->bqk"}> : () -> ()
    %cst_25 = arith.constant dense<0.000000e+00> : vector<16x16x16xf32>
    %89 = tpu.matmul %86, %87, %cst_25 {dimension_numbers = #tpu.dot_dimension_numbers<[2], [2], [1], [1], [0, 0, 0, 1, 1, 1], [0], [0]>} : vector<16x16x32xbf16>, vector<16x16x32xbf16>, vector<16x16x16xf32> -> vector<16x16x16xf32>
    %cst_26 = arith.constant -1.000000e+30 : f32
    "tpu.trace_stop"() : () -> ()
    %90 = vector.shape_cast %45 : vector<1x16x16xi1> to vector<1x16x16xi1>
    %91 = vector.broadcast %90 : vector<1x16x16xi1> to vector<16x16x16xi1>
    %92 = vector.broadcast %cst_26 : f32 to vector<16x16x16xf32>
    %93 = arith.select %91, %89, %92 : vector<16x16x16xi1>, vector<16x16x16xf32>
    %cst_27 = arith.constant dense<0xFF800000> : vector<16x16xf32>
    %94 = vector.multi_reduction <maximumf>, %93, %cst_27 [2] : vector<16x16x16xf32> to vector<16x16xf32>
    %95 = vector.shape_cast %94 : vector<16x16xf32> to vector<16x16x1xf32>
    %96 = vector.broadcast %95 : vector<16x16x1xf32> to vector<16x16x16xf32>
    %97 = arith.subf %93, %96 : vector<16x16x16xf32>
    %98 = math.exp %97 : vector<16x16x16xf32>
    %cst_28 = arith.constant dense<0.000000e+00> : vector<16x16xf32>
    %99 = vector.multi_reduction <add>, %98, %cst_28 [2] : vector<16x16x16xf32> to vector<16x16xf32>
    %100 = vector.shape_cast %99 : vector<16x16xf32> to vector<16x16x1xf32>
    %101 = tpu.reciprocal %100 {approx = true} : vector<16x16x1xf32> -> vector<16x16x1xf32>
    %102 = vector.broadcast %101 : vector<16x16x1xf32> to vector<16x16x16xf32>
    %103 = arith.mulf %98, %102 : vector<16x16x16xf32>
    %104 = arith.truncf %103 : vector<16x16x16xf32> to vector<16x16x16xbf16>
    "tpu.trace_start"() <{level = 10 : i32, message = "bqk,bkd->bqd"}> : () -> ()
    %cst_29 = arith.constant dense<0.000000e+00> : vector<16x16x32xf32>
    %105 = tpu.matmul %104, %88, %cst_29 {dimension_numbers = #tpu.dot_dimension_numbers<[2], [1], [1], [2], [0, 0, 0, 1, 1, 2], [0], [0]>} : vector<16x16x16xbf16>, vector<16x16x32xbf16>, vector<16x16x32xf32> -> vector<16x16x32xf32>
    "tpu.trace_stop"() : () -> ()
    %106 = vector.extract_strided_slice %35 {offsets = [0, 0, 96], sizes = [16, 16, 32], strides = [1, 1, 1]} : vector<16x16x128xbf16> to vector<16x16x32xbf16>
    %107 = vector.extract_strided_slice %38 {offsets = [0, 0, 96], sizes = [16, 16, 32], strides = [1, 1, 1]} : vector<16x16x128xbf16> to vector<16x16x32xbf16>
    %108 = vector.extract_strided_slice %41 {offsets = [0, 0, 96], sizes = [16, 16, 32], strides = [1, 1, 1]} : vector<16x16x128xbf16> to vector<16x16x32xbf16>
    "tpu.trace_start"() <{level = 10 : i32, message = "bqd,bkd->bqk"}> : () -> ()
    %cst_30 = arith.constant dense<0.000000e+00> : vector<16x16x16xf32>
    %109 = tpu.matmul %106, %107, %cst_30 {dimension_numbers = #tpu.dot_dimension_numbers<[2], [2], [1], [1], [0, 0, 0, 1, 1, 1], [0], [0]>} : vector<16x16x32xbf16>, vector<16x16x32xbf16>, vector<16x16x16xf32> -> vector<16x16x16xf32>
    %cst_31 = arith.constant -1.000000e+30 : f32
    "tpu.trace_stop"() : () -> ()
    %110 = vector.shape_cast %45 : vector<1x16x16xi1> to vector<1x16x16xi1>
    %111 = vector.broadcast %110 : vector<1x16x16xi1> to vector<16x16x16xi1>
    %112 = vector.broadcast %cst_31 : f32 to vector<16x16x16xf32>
    %113 = arith.select %111, %109, %112 : vector<16x16x16xi1>, vector<16x16x16xf32>
    %cst_32 = arith.constant dense<0xFF800000> : vector<16x16xf32>
    %114 = vector.multi_reduction <maximumf>, %113, %cst_32 [2] : vector<16x16x16xf32> to vector<16x16xf32>
    %115 = vector.shape_cast %114 : vector<16x16xf32> to vector<16x16x1xf32>
    %116 = vector.broadcast %115 : vector<16x16x1xf32> to vector<16x16x16xf32>
    %117 = arith.subf %113, %116 : vector<16x16x16xf32>
    %118 = math.exp %117 : vector<16x16x16xf32>
    %cst_33 = arith.constant dense<0.000000e+00> : vector<16x16xf32>
    %119 = vector.multi_reduction <add>, %118, %cst_33 [2] : vector<16x16x16xf32> to vector<16x16xf32>
    %120 = vector.shape_cast %119 : vector<16x16xf32> to vector<16x16x1xf32>
    %121 = tpu.reciprocal %120 {approx = true} : vector<16x16x1xf32> -> vector<16x16x1xf32>
    %122 = vector.broadcast %121 : vector<16x16x1xf32> to vector<16x16x16xf32>
    %123 = arith.mulf %118, %122 : vector<16x16x16xf32>
    %124 = arith.truncf %123 : vector<16x16x16xf32> to vector<16x16x16xbf16>
    "tpu.trace_start"() <{level = 10 : i32, message = "bqk,bkd->bqd"}> : () -> ()
    %cst_34 = arith.constant dense<0.000000e+00> : vector<16x16x32xf32>
    %125 = tpu.matmul %124, %108, %cst_34 {dimension_numbers = #tpu.dot_dimension_numbers<[2], [1], [1], [2], [0, 0, 0, 1, 1, 2], [0], [0]>} : vector<16x16x16xbf16>, vector<16x16x32xbf16>, vector<16x16x32xf32> -> vector<16x16x32xf32>
    "tpu.trace_stop"() : () -> ()
    %126 = tpu.concatenate %65, %85, %105, %125 in 2 : vector<16x16x32xf32>, vector<16x16x32xf32>, vector<16x16x32xf32>, vector<16x16x32xf32> -> vector<16x16x128xf32>
    %127 = vector.shape_cast %126 : vector<16x16x128xf32> to vector<256x128xf32>
    %128 = arith.truncf %127 : vector<256x128xf32> to vector<256x128xbf16>
    %c0_35 = arith.constant 0 : index
    %c0_36 = arith.constant 0 : index
    %129 = vector.load %arg3[%c0_35, %c0_36] : memref<128x128xbf16, #tpu.memory_space<vmem>>, vector<128x128xbf16>
    %cst_37 = arith.constant dense<0.000000e+00> : vector<256x128xf32>
    %130 = tpu.matmul %128, %129, %cst_37 {dimension_numbers = #tpu.dot_dimension_numbers<[1], [0], [0], [1], [0, 0, 1, 1], [], []>} : vector<256x128xbf16>, vector<128x128xbf16>, vector<256x128xf32> -> vector<256x128xf32>
    %131 = arith.addf %1, %130 : vector<256x128xf32>
    %c0_38 = arith.constant 0 : index
    %c0_39 = arith.constant 0 : index
    %132 = vector.load %arg4[%c0_38, %c0_39] : memref<1x128xf32, #tpu.memory_space<vmem>>, vector<1x128xf32>
    %133 = vector.broadcast %132 : vector<1x128xf32> to vector<256x128xf32>
    %134 = arith.addf %131, %133 : vector<256x128xf32>
    %c0_40 = arith.constant 0 : index
    %c0_41 = arith.constant 0 : index
    %135 = vector.load %arg7[%c0_40, %c0_41] : memref<1x128xf32, #tpu.memory_space<vmem>>, vector<1x128xf32>
    %c0_42 = arith.constant 0 : index
    %c0_43 = arith.constant 0 : index
    %136 = vector.load %arg8[%c0_42, %c0_43] : memref<1x128xf32, #tpu.memory_space<vmem>>, vector<1x128xf32>
    %cst_44 = arith.constant dense<0.000000e+00> : vector<256xf32>
    %137 = vector.multi_reduction <add>, %134, %cst_44 [1] : vector<256x128xf32> to vector<256xf32>
    %138 = vector.shape_cast %137 : vector<256xf32> to vector<256x1xf32>
    %cst_45 = arith.constant 1.280000e+02 : f32
    %139 = vector.broadcast %cst_45 : f32 to vector<256x1xf32>
    %140 = arith.divf %138, %139 : vector<256x1xf32>
    %141 = vector.broadcast %140 : vector<256x1xf32> to vector<256x128xf32>
    %142 = arith.subf %134, %141 : vector<256x128xf32>
    %143 = arith.mulf %142, %142 : vector<256x128xf32>
    %cst_46 = arith.constant dense<0.000000e+00> : vector<256xf32>
    %144 = vector.multi_reduction <add>, %143, %cst_46 [1] : vector<256x128xf32> to vector<256xf32>
    %145 = vector.shape_cast %144 : vector<256xf32> to vector<256x1xf32>
    %cst_47 = arith.constant 1.280000e+02 : f32
    %146 = vector.broadcast %cst_47 : f32 to vector<256x1xf32>
    %147 = arith.divf %145, %146 : vector<256x1xf32>
    %148 = vector.broadcast %140 : vector<256x1xf32> to vector<256x128xf32>
    %149 = arith.subf %134, %148 : vector<256x128xf32>
    %cst_48 = arith.constant 9.99999974E-6 : f32
    %150 = vector.broadcast %cst_48 : f32 to vector<256x1xf32>
    %151 = arith.addf %147, %150 : vector<256x1xf32>
    %152 = math.rsqrt %151 : vector<256x1xf32>
    %153 = vector.broadcast %152 : vector<256x1xf32> to vector<256x128xf32>
    %154 = arith.mulf %149, %153 : vector<256x128xf32>
    %155 = vector.broadcast %135 : vector<1x128xf32> to vector<256x128xf32>
    %156 = arith.mulf %154, %155 : vector<256x128xf32>
    %157 = vector.broadcast %136 : vector<1x128xf32> to vector<256x128xf32>
    %158 = arith.addf %156, %157 : vector<256x128xf32>
    %159 = arith.truncf %158 : vector<256x128xf32> to vector<256x128xbf16>
    %c0_49 = arith.constant 0 : index
    %c0_50 = arith.constant 0 : index
    %160 = vector.load %arg9[%c0_49, %c0_50] : memref<128x512xbf16, #tpu.memory_space<vmem>>, vector<128x512xbf16>
    %cst_51 = arith.constant dense<0.000000e+00> : vector<256x512xf32>
    %161 = tpu.matmul %159, %160, %cst_51 {dimension_numbers = #tpu.dot_dimension_numbers<[1], [0], [0], [1], [0, 0, 1, 1], [], []>} : vector<256x128xbf16>, vector<128x512xbf16>, vector<256x512xf32> -> vector<256x512xf32>
    %c0_52 = arith.constant 0 : index
    %c0_53 = arith.constant 0 : index
    %162 = vector.load %arg10[%c0_52, %c0_53] : memref<1x512xf32, #tpu.memory_space<vmem>>, vector<1x512xf32>
    %163 = vector.broadcast %162 : vector<1x512xf32> to vector<256x512xf32>
    %164 = arith.addf %161, %163 : vector<256x512xf32>
    %cst_54 = arith.constant 0.000000e+00 : f32
    %165 = vector.broadcast %cst_54 : f32 to vector<256x512xf32>
    %166 = arith.maximumf %164, %165 : vector<256x512xf32>
    %167 = arith.truncf %166 : vector<256x512xf32> to vector<256x512xbf16>
    %c0_55 = arith.constant 0 : index
    %c0_56 = arith.constant 0 : index
    %168 = vector.load %arg11[%c0_55, %c0_56] : memref<512x128xbf16, #tpu.memory_space<vmem>>, vector<512x128xbf16>
    %cst_57 = arith.constant dense<0.000000e+00> : vector<256x128xf32>
    %169 = tpu.matmul %167, %168, %cst_57 {dimension_numbers = #tpu.dot_dimension_numbers<[1], [0], [0], [1], [0, 0, 1, 1], [], []>} : vector<256x512xbf16>, vector<512x128xbf16>, vector<256x128xf32> -> vector<256x128xf32>
    %c0_58 = arith.constant 0 : index
    %c0_59 = arith.constant 0 : index
    %170 = vector.load %arg12[%c0_58, %c0_59] : memref<1x128xf32, #tpu.memory_space<vmem>>, vector<1x128xf32>
    %171 = vector.broadcast %170 : vector<1x128xf32> to vector<256x128xf32>
    %172 = arith.addf %169, %171 : vector<256x128xf32>
    %173 = arith.addf %134, %172 : vector<256x128xf32>
    %174 = vector.shape_cast %173 : vector<256x128xf32> to vector<16x16x128xf32>
    %c0_60 = arith.constant 0 : index
    %c0_61 = arith.constant 0 : index
    %c0_62 = arith.constant 0 : index
    %175 = vector.load %arg13[%c0_60, %c0_61, %c0_62] : memref<16x16x128xf32, #tpu.memory_space<vmem>>, vector<16x16x128xf32>
    tpu.vector_store %arg13[%c0_60, %c0_61, %c0_62], %174 {strides = array<i32>} : memref<16x16x128xf32, #tpu.memory_space<vmem>>, vector<16x16x128xf32>,
    return
  }
  func.func @transform_0(%arg0: i32) -> (i32, i32, i32) {
    %c0_i32 = arith.constant 0 : i32
    %c0_i32_0 = arith.constant 0 : i32
    %c0_i32_1 = arith.constant 0 : i32
    return %arg0, %c0_i32, %c0_i32_0 : i32, i32, i32
  }
  func.func @transform_1(%arg0: i32) -> (i32, i32) {
    %c0_i32 = arith.constant 0 : i32
    %c0_i32_0 = arith.constant 0 : i32
    %c0_i32_1 = arith.constant 0 : i32
    return %c0_i32, %c0_i32_0 : i32, i32
  }
  func.func @transform_2(%arg0: i32) -> (i32, i32) {
    %c0_i32 = arith.constant 0 : i32
    %c0_i32_0 = arith.constant 0 : i32
    %c0_i32_1 = arith.constant 0 : i32
    return %c0_i32, %c0_i32_0 : i32, i32
  }
  func.func @transform_3(%arg0: i32) -> (i32, i32) {
    %c0_i32 = arith.constant 0 : i32
    %c0_i32_0 = arith.constant 0 : i32
    %c0_i32_1 = arith.constant 0 : i32
    return %c0_i32, %c0_i32_0 : i32, i32
  }
  func.func @transform_4(%arg0: i32) -> (i32, i32) {
    %c0_i32 = arith.constant 0 : i32
    %c0_i32_0 = arith.constant 0 : i32
    %c0_i32_1 = arith.constant 0 : i32
    return %c0_i32, %c0_i32_0 : i32, i32
  }
  func.func @transform_5(%arg0: i32) -> (i32, i32) {
    %c0_i32 = arith.constant 0 : i32
    %c0_i32_0 = arith.constant 0 : i32
    %c0_i32_1 = arith.constant 0 : i32
    return %c0_i32, %c0_i32_0 : i32, i32
  }
  func.func @transform_6(%arg0: i32) -> (i32, i32) {
    %c0_i32 = arith.constant 0 : i32
    %c0_i32_0 = arith.constant 0 : i32
    %c0_i32_1 = arith.constant 0 : i32
    return %c0_i32, %c0_i32_0 : i32, i32
  }
  func.func @transform_7(%arg0: i32) -> (i32, i32) {
    %c0_i32 = arith.constant 0 : i32
    %c0_i32_0 = arith.constant 0 : i32
    %c0_i32_1 = arith.constant 0 : i32
    return %c0_i32, %c0_i32_0 : i32, i32
  }
  func.func @transform_8(%arg0: i32) -> (i32, i32) {
    %c0_i32 = arith.constant 0 : i32
    %c0_i32_0 = arith.constant 0 : i32
    %c0_i32_1 = arith.constant 0 : i32
    return %c0_i32, %c0_i32_0 : i32, i32
  }
  func.func @transform_9(%arg0: i32) -> (i32, i32) {
    %c0_i32 = arith.constant 0 : i32
    %c0_i32_0 = arith.constant 0 : i32
    %c0_i32_1 = arith.constant 0 : i32
    return %c0_i32, %c0_i32_0 : i32, i32
  }
  func.func @transform_10(%arg0: i32) -> (i32, i32) {
    %c0_i32 = arith.constant 0 : i32
    %c0_i32_0 = arith.constant 0 : i32
    %c0_i32_1 = arith.constant 0 : i32
    return %c0_i32, %c0_i32_0 : i32, i32
  }
  func.func @transform_11(%arg0: i32) -> (i32, i32) {
    %c0_i32 = arith.constant 0 : i32
    %c0_i32_0 = arith.constant 0 : i32
    %c0_i32_1 = arith.constant 0 : i32
    return %c0_i32, %c0_i32_0 : i32, i32
  }
  func.func @transform_12(%arg0: i32) -> (i32, i32, i32) {
    %c0_i32 = arith.constant 0 : i32
    %c0_i32_0 = arith.constant 0 : i32
    %c0_i32_1 = arith.constant 0 : i32
    return %arg0, %c0_i32, %c0_i32_0 : i32, i32, i32
  }
}

</mosaic_0001>

<llo_original>
// kernel: tpu_custom_call.1
$region0: #{tpu_custom_call.1}
  #allocation0 [shape = 'u32[]', space=smem, size = 0x4, offset = 0x4, fixed_abs, tag = 'smem constant byte address 0x4 - core index']
  #allocation1 [shape = 'u32[144,128]{1,0:T(1,128)}', space=vmem, size = 0x12000, scoped, tag = 'internal scratch']
  %s0 = inlined_call_operand.hbm [shape: f32[16,16,128], index: 0, kind: input, shape index: {}]
  %s1 = inlined_call_operand.hbm [shape: bf16[128,384], index: 1, kind: input, shape index: {}]
  %s2 = inlined_call_operand.hbm [shape: bf16[128,128], index: 2, kind: input, shape index: {}]
  %s3 = inlined_call_operand.vmem [shape: f32[1,128], index: 3, kind: input, shape index: {}]
  %s4 = inlined_call_operand.vmem [shape: f32[1,128], index: 4, kind: input, shape index: {}]
  %s5 = inlined_call_operand.vmem [shape: f32[1,128], index: 5, kind: input, shape index: {}]
  %s6 = inlined_call_operand.vmem [shape: f32[1,128], index: 6, kind: input, shape index: {}]
  %s7 = inlined_call_operand.vmem [shape: f32[1,128], index: 7, kind: input, shape index: {}]
  %s8 = inlined_call_operand.hbm [shape: bf16[128,512], index: 8, kind: input, shape index: {}]
  %s9 = inlined_call_operand.vmem [shape: f32[1,512], index: 9, kind: input, shape index: {}]
  %s10 = inlined_call_operand.hbm [shape: bf16[512,128], index: 10, kind: input, shape index: {}]
  %s11 = inlined_call_operand.vmem [shape: f32[1,128], index: 11, kind: input, shape index: {}]
  %s12 = inlined_call_operand.hbm [shape: f32[16,16,128], index: 12, kind: output, shape index: {}]
  %s13 = sld [smem:[#allocation0]]
  $region78: #{tpu_custom_call.1} parent=0
    _
  %s15 = ssub.s32 1, %s13
  %s16 = scalar_select 0, %s15, %s13
  $region1: #{tpu_custom_call.1} parent=0
    #allocation2 [shape = 'u8[131072]{0}', space=vmem, size = 0x20000, scoped, tag = 'input window, operand 0, single buffered']
    #allocation3 [shape = 's32[1]{0}', space=sflag, size = 0x4, scoped, tag = 'scoped memory for tpu_custom_call.1']
    #allocation4 [shape = 's32[1]{0}', space=sflag, size = 0x4, scoped, tag = 'scoped memory for tpu_custom_call.1']
    #allocation5 [shape = 'u8[98304]{0}', space=vmem, size = 0x18000, scoped, tag = 'input window, operand 1, single buffered']
    #allocation6 [shape = 's32[1]{0}', space=sflag, size = 0x4, scoped, tag = 'scoped memory for tpu_custom_call.1']
    #allocation7 [shape = 'u8[32768]{0}', space=vmem, size = 0x8000, scoped, tag = 'input window, operand 2, single buffered']
    #allocation8 [shape = 'u8[131072]{0}', space=vmem, size = 0x20000, scoped, tag = 'input window, operand 8, single buffered']
    #allocation9 [shape = 's32[1]{0}', space=sflag, size = 0x4, scoped, tag = 'scoped memory for tpu_custom_call.1']
    #allocation10 [shape = 'u8[131072]{0}', space=vmem, size = 0x20000, scoped, tag = 'input window, operand 10, single buffered']
    #allocation11 [shape = 'u8[131072]{0}', space=vmem, size = 0x20000, scoped, tag = 'output window, operand 0, single buffered']
    %17 = vsyncpa [#allocation3], 0
    %18 = vsyncpa [#allocation6], 0
    %19 = vsyncpa [#allocation9], 0
    %20 = vsyncpa [#allocation4], 0
    // Predicated region
    $region2: #{tpu_custom_call.1} parent=1 // pred_check
      _
    $region3: #{tpu_custom_call.1} parent=1 // pred_check_branch
      %22 = sbr.rel (0) target = $region5
    $region4: #{tpu_custom_call.1} parent=1 // pred_region
      %s24 = ssub.s32 4096, 4096
      %25 = vsyncadd [#allocation3], %s24
      %s26 = sshll.u32 [#allocation2], 4
      %s27 = int_to_ptr.vmem [resolvable:$true] %s26
      %32 = dma.hbm_to_vmem [thread:$0]  %s0, 4096, %s27, [#allocation3], 128, 128, 8
    $region5: #{tpu_custom_call.1} parent=1 // pred_fallthru
      _
    // Predicated region
    $region6: #{tpu_custom_call.1} parent=1 // pred_check
      _
    $region7: #{tpu_custom_call.1} parent=1 // pred_check_branch
      %34 = sbr.rel (0) target = $region9
    $region8: #{tpu_custom_call.1} parent=1 // pred_region
      %s36 = ssub.s32 3072, 3072
      %37 = vsyncadd [#allocation6], %s36
      %s38 = sshll.u32 [#allocation5], 4
      %s39 = int_to_ptr.vmem [resolvable:$true] %s38
      %44 = dma.hbm_to_vmem [thread:$0]  %s1, 3072, %s39, [#allocation6], 192, 192, 12
    $region9: #{tpu_custom_call.1} parent=1 // pred_fallthru
      _
    // Predicated region
    $region10: #{tpu_custom_call.1} parent=1 // pred_check
      _
    $region11: #{tpu_custom_call.1} parent=1 // pred_check_branch
      %46 = sbr.rel (0) target = $region13
    $region12: #{tpu_custom_call.1} parent=1 // pred_region
      %s48 = ssub.s32 1024, 1024
      %49 = vsyncadd [#allocation6], %s48
      %s50 = sshll.u32 [#allocation7], 4
      %s51 = int_to_ptr.vmem [resolvable:$true] %s50
      %56 = dma.hbm_to_vmem [thread:$0]  %s2, 1024, %s51, [#allocation6], 64, 64, 4
    $region13: #{tpu_custom_call.1} parent=1 // pred_fallthru
      _
    // Predicated region
    $region14: #{tpu_custom_call.1} parent=1 // pred_check
      _
    $region15: #{tpu_custom_call.1} parent=1 // pred_check_branch
      %58 = sbr.rel (0) target = $region17
    $region16: #{tpu_custom_call.1} parent=1 // pred_region
      _
    $region17: #{tpu_custom_call.1} parent=1 // pred_fallthru
      _
    // Predicated region
    $region18: #{tpu_custom_call.1} parent=1 // pred_check
      _
    $region19: #{tpu_custom_call.1} parent=1 // pred_check_branch
      %60 = sbr.rel (0) target = $region21
    $region20: #{tpu_custom_call.1} parent=1 // pred_region
      _
    $region21: #{tpu_custom_call.1} parent=1 // pred_fallthru
      _
    // Predicated region
    $region22: #{tpu_custom_call.1} parent=1 // pred_check
      _
    $region23: #{tpu_custom_call.1} parent=1 // pred_check_branch
      %62 = sbr.rel (0) target = $region25
    $region24: #{tpu_custom_call.1} parent=1 // pred_region
      _
    $region25: #{tpu_custom_call.1} parent=1 // pred_fallthru
      _
    // Predicated region
    $region26: #{tpu_custom_call.1} parent=1 // pred_check
      _
    $region27: #{tpu_custom_call.1} parent=1 // pred_check_branch
      %64 = sbr.rel (0) target = $region29
    $region28: #{tpu_custom_call.1} parent=1 // pred_region
      _
    $region29: #{tpu_custom_call.1} parent=1 // pred_fallthru
      _
    // Predicated region
    $region30: #{tpu_custom_call.1} parent=1 // pred_check
      _
    $region31: #{tpu_custom_call.1} parent=1 // pred_check_branch
      %66 = sbr.rel (0) target = $region33
    $region32: #{tpu_custom_call.1} parent=1 // pred_region
      _
    $region33: #{tpu_custom_call.1} parent=1 // pred_fallthru
      _
    // Predicated region
    $region34: #{tpu_custom_call.1} parent=1 // pred_check
      _
    $region35: #{tpu_custom_call.1} parent=1 // pred_check_branch
      %68 = sbr.rel (0) target = $region37
    $region36: #{tpu_custom_call.1} parent=1 // pred_region
      %s70 = ssub.s32 4096, 4096
      %71 = vsyncadd [#allocation9], %s70
      %s72 = sshll.u32 [#allocation8], 4
      %s73 = int_to_ptr.vmem [resolvable:$true] %s72
      %78 = dma.hbm_to_vmem [thread:$0]  %s8, 4096, %s73, [#allocation9], 256, 256, 16
    $region37: #{tpu_custom_call.1} parent=1 // pred_fallthru
      _
    // Predicated region
    $region38: #{tpu_custom_call.1} parent=1 // pred_check
      _
    $region39: #{tpu_custom_call.1} parent=1 // pred_check_branch
      %80 = sbr.rel (0) target = $region41
    $region40: #{tpu_custom_call.1} parent=1 // pred_region
      _
    $region41: #{tpu_custom_call.1} parent=1 // pred_fallthru
      _
    // Predicated region
    $region42: #{tpu_custom_call.1} parent=1 // pred_check
      _
    $region43: #{tpu_custom_call.1} parent=1 // pred_check_branch
      %82 = sbr.rel (0) target = $region45
    $region44: #{tpu_custom_call.1} parent=1 // pred_region
      %s84 = ssub.s32 4096, 4096
      %85 = vsyncadd [#allocation9], %s84
      %s86 = sshll.u32 [#allocation10], 4
      %s87 = int_to_ptr.vmem [resolvable:$true] %s86
      %92 = dma.hbm_to_vmem [thread:$0]  %s10, 4096, %s87, [#allocation9], 64, 64, 4
    $region45: #{tpu_custom_call.1} parent=1 // pred_fallthru
      _
    // Predicated region
    $region46: #{tpu_custom_call.1} parent=1 // pred_check
      _
    $region47: #{tpu_custom_call.1} parent=1 // pred_check_branch
      %94 = sbr.rel (0) target = $region49
    $region48: #{tpu_custom_call.1} parent=1 // pred_region
      _
    $region49: #{tpu_custom_call.1} parent=1 // pred_fallthru
      _
    // Predicated region
    $region50: #{tpu_custom_call.1} parent=1 // pred_check
      _
    $region51: #{tpu_custom_call.1} parent=1 // pred_check_branch
      %96 = sbr.rel (0) target = $region53
    $region52: #{tpu_custom_call.1} parent=1 // pred_region
      %97 = dma.done [#allocation3], 4096
    $region53: #{tpu_custom_call.1} parent=1 // pred_fallthru
      _
    // Predicated region
    $region54: #{tpu_custom_call.1} parent=1 // pred_check
      _
    $region55: #{tpu_custom_call.1} parent=1 // pred_check_branch
      %99 = sbr.rel (0) target = $region57
    $region56: #{tpu_custom_call.1} parent=1 // pred_region
      %100 = dma.done [#allocation6], 3072
    $region57: #{tpu_custom_call.1} parent=1 // pred_fallthru
      _
    // Predicated region
    $region58: #{tpu_custom_call.1} parent=1 // pred_check
      _
    $region59: #{tpu_custom_call.1} parent=1 // pred_check_branch
      %102 = sbr.rel (0) target = $region61
    $region60: #{tpu_custom_call.1} parent=1 // pred_region
      %103 = dma.done [#allocation6], 1024
    $region61: #{tpu_custom_call.1} parent=1 // pred_fallthru
      _
    // Predicated region
    $region62: #{tpu_custom_call.1} parent=1 // pred_check
      _
    $region63: #{tpu_custom_call.1} parent=1 // pred_check_branch
      %105 = sbr.rel (0) target = $region65
    $region64: #{tpu_custom_call.1} parent=1 // pred_region
      %106 = dma.done [#allocation9], 4096
    $region65: #{tpu_custom_call.1} parent=1 // pred_fallthru
      _
    // Predicated region
    $region66: #{tpu_custom_call.1} parent=1 // pred_check
      _
    $region67: #{tpu_custom_call.1} parent=1 // pred_check_branch
      %108 = sbr.rel (0) target = $region69
    $region68: #{tpu_custom_call.1} parent=1 // pred_region
      %109 = dma.done [#allocation9], 4096
    $region69: #{tpu_custom_call.1} parent=1 // pred_fallthru
      _
    %v111 = vld [vmem:[#allocation2] sm:$0xff]
    %v112 = vld [vmem:[#allocation2 + $0x8] sm:$0xff]
    %v113 = vld [vmem:[#allocation2 + $0x10] sm:$0xff]
    %v114 = vld [vmem:[#allocation2 + $0x18] sm:$0xff]
    %v115 = vld [vmem:[#allocation2 + $0x20] sm:$0xff]
    %v116 = vld [vmem:[#allocation2 + $0x28] sm:$0xff]
    %v117 = vld [vmem:[#allocation2 + $0x30] sm:$0xff]
    %v118 = vld [vmem:[#allocation2 + $0x38] sm:$0xff]
    %v119 = vld [vmem:[#allocation2 + $0x40] sm:$0xff]
    %v120 = vld [vmem:[#allocation2 + $0x48] sm:$0xff]
    %v121 = vld [vmem:[#allocation2 + $0x50] sm:$0xff]
    %v122 = vld [vmem:[#allocation2 + $0x58] sm:$0xff]
    %v123 = vld [vmem:[#allocation2 + $0x60] sm:$0xff]
    %v124 = vld [vmem:[#allocation2 + $0x68] sm:$0xff]
    %v125 = vld [vmem:[#allocation2 + $0x70] sm:$0xff]
    %v126 = vld [vmem:[#allocation2 + $0x78] sm:$0xff]
    %v127 = vld [vmem:[#allocation2 + $0x80] sm:$0xff]
    %v128 = vld [vmem:[#allocation2 + $0x88] sm:$0xff]
    %v129 = vld [vmem:[#allocation2 + $0x90] sm:$0xff]
    %v130 = vld [vmem:[#allocation2 + $0x98] sm:$0xff]
    %v131 = vld [vmem:[#allocation2 + $0xa0] sm:$0xff]
    %v132 = vld [vmem:[#allocation2 + $0xa8] sm:$0xff]
    %v133 = vld [vmem:[#allocation2 + $0xb0] sm:$0xff]
    %v134 = vld [vmem:[#allocation2 + $0xb8] sm:$0xff]
    %v135 = vld [vmem:[#allocation2 + $0xc0] sm:$0xff]
    %v136 = vld [vmem:[#allocation2 + $0xc8] sm:$0xff]
    %v137 = vld [vmem:[#allocation2 + $0xd0] sm:$0xff]
    %v138 = vld [vmem:[#allocation2 + $0xd8] sm:$0xff]
    %v139 = vld [vmem:[#allocation2 + $0xe0] sm:$0xff]
    %v140 = vld [vmem:[#allocation2 + $0xe8] sm:$0xff]
    %v141 = vld [vmem:[#allocation2 + $0xf0] sm:$0xff]
    %v142 = vld [vmem:[#allocation2 + $0xf8] sm:$0xff]
    %v143 = vld [vmem:[%s4] sm:$0x1]
    %v144 = vld [vmem:[%s5] sm:$0x1]
    %145 = vadd.xlane.f32.xlu0 %v111
    %v146 = vpop.xlane.xlu0 %145
    %147 = vadd.xlane.f32.xlu0 %v112
    %v148 = vpop.xlane.xlu0 %147
    %149 = vadd.xlane.f32.xlu0 %v113
    %v150 = vpop.xlane.xlu0 %149
    %151 = vadd.xlane.f32.xlu0 %v114
    %v152 = vpop.xlane.xlu0 %151
    %153 = vadd.xlane.f32.xlu0 %v115
    %v154 = vpop.xlane.xlu0 %153
    %155 = vadd.xlane.f32.xlu0 %v116
    %v156 = vpop.xlane.xlu0 %155
    %157 = vadd.xlane.f32.xlu0 %v117
    %v158 = vpop.xlane.xlu0 %157
    %159 = vadd.xlane.f32.xlu0 %v118
    %v160 = vpop.xlane.xlu0 %159
    %161 = vadd.xlane.f32.xlu0 %v119
    %v162 = vpop.xlane.xlu0 %161
    %163 = vadd.xlane.f32.xlu0 %v120
    %v164 = vpop.xlane.xlu0 %163
    %165 = vadd.xlane.f32.xlu0 %v121
    %v166 = vpop.xlane.xlu0 %165
    %167 = vadd.xlane.f32.xlu0 %v122
    %v168 = vpop.xlane.xlu0 %167
    %169 = vadd.xlane.f32.xlu0 %v123
    %v170 = vpop.xlane.xlu0 %169
    %171 = vadd.xlane.f32.xlu0 %v124
    %v172 = vpop.xlane.xlu0 %171
    %173 = vadd.xlane.f32.xlu0 %v125
    %v174 = vpop.xlane.xlu0 %173
    %175 = vadd.xlane.f32.xlu0 %v126
    %v176 = vpop.xlane.xlu0 %175
    %177 = vadd.xlane.f32.xlu0 %v127
    %v178 = vpop.xlane.xlu0 %177
    %179 = vadd.xlane.f32.xlu0 %v128
    %v180 = vpop.xlane.xlu0 %179
    %181 = vadd.xlane.f32.xlu0 %v129
    %v182 = vpop.xlane.xlu0 %181
    %183 = vadd.xlane.f32.xlu0 %v130
    %v184 = vpop.xlane.xlu0 %183
    %185 = vadd.xlane.f32.xlu0 %v131
    %v186 = vpop.xlane.xlu0 %185
    %187 = vadd.xlane.f32.xlu0 %v132
    %v188 = vpop.xlane.xlu0 %187
    %189 = vadd.xlane.f32.xlu0 %v133
    %v190 = vpop.xlane.xlu0 %189
    %191 = vadd.xlane.f32.xlu0 %v134
    %v192 = vpop.xlane.xlu0 %191
    %193 = vadd.xlane.f32.xlu0 %v135
    %v194 = vpop.xlane.xlu0 %193
    %195 = vadd.xlane.f32.xlu0 %v136
    %v196 = vpop.xlane.xlu0 %195
    %197 = vadd.xlane.f32.xlu0 %v137
    %v198 = vpop.xlane.xlu0 %197
    %199 = vadd.xlane.f32.xlu0 %v138
    %v200 = vpop.xlane.xlu0 %199
    %201 = vadd.xlane.f32.xlu0 %v139
    %v202 = vpop.xlane.xlu0 %201
    %203 = vadd.xlane.f32.xlu0 %v140
    %v204 = vpop.xlane.xlu0 %203
    %205 = vadd.xlane.f32.xlu0 %v141
    %v206 = vpop.xlane.xlu0 %205
    %207 = vadd.xlane.f32.xlu0 %v142
    %v208 = vpop.xlane.xlu0 %207
    %v209 = vrcp.pop 128.0
    %v210 = vmul.f32 %v146, %v209
    %v211 = vmul.f32 %v148, %v209
    %v212 = vmul.f32 %v150, %v209
    %v213 = vmul.f32 %v152, %v209
    %v214 = vmul.f32 %v154, %v209
    %v215 = vmul.f32 %v156, %v209
    %v216 = vmul.f32 %v158, %v209
    %v217 = vmul.f32 %v160, %v209
    %v218 = vmul.f32 %v162, %v209
    %v219 = vmul.f32 %v164, %v209
    %v220 = vmul.f32 %v166, %v209
    %v221 = vmul.f32 %v168, %v209
    %v222 = vmul.f32 %v170, %v209
    %v223 = vmul.f32 %v172, %v209
    %v224 = vmul.f32 %v174, %v209
    %v225 = vmul.f32 %v176, %v209
    %v226 = vmul.f32 %v178, %v209
    %v227 = vmul.f32 %v180, %v209
    %v228 = vmul.f32 %v182, %v209
    %v229 = vmul.f32 %v184, %v209
    %v230 = vmul.f32 %v186, %v209
    %v231 = vmul.f32 %v188, %v209
    %v232 = vmul.f32 %v190, %v209
    %v233 = vmul.f32 %v192, %v209
    %v234 = vmul.f32 %v194, %v209
    %v235 = vmul.f32 %v196, %v209
    %v236 = vmul.f32 %v198, %v209
    %v237 = vmul.f32 %v200, %v209
    %v238 = vmul.f32 %v202, %v209
    %v239 = vmul.f32 %v204, %v209
    %v240 = vmul.f32 %v206, %v209
    %v241 = vmul.f32 %v208, %v209
    %v242 = vsub.f32 %v111, %v210
    %v243 = vsub.f32 %v112, %v211
    %v244 = vsub.f32 %v113, %v212
    %v245 = vsub.f32 %v114, %v213
    %v246 = vsub.f32 %v115, %v214
    %v247 = vsub.f32 %v116, %v215
    %v248 = vsub.f32 %v117, %v216
    %v249 = vsub.f32 %v118, %v217
    %v250 = vsub.f32 %v119, %v218
    %v251 = vsub.f32 %v120, %v219
    %v252 = vsub.f32 %v121, %v220
    %v253 = vsub.f32 %v122, %v221
    %v254 = vsub.f32 %v123, %v222
    %v255 = vsub.f32 %v124, %v223
    %v256 = vsub.f32 %v125, %v224
    %v257 = vsub.f32 %v126, %v225
    %v258 = vsub.f32 %v127, %v226
    %v259 = vsub.f32 %v128, %v227
    %v260 = vsub.f32 %v129, %v228
    %v261 = vsub.f32 %v130, %v229
    %v262 = vsub.f32 %v131, %v230
    %v263 = vsub.f32 %v132, %v231
    %v264 = vsub.f32 %v133, %v232
    %v265 = vsub.f32 %v134, %v233
    %v266 = vsub.f32 %v135, %v234
    %v267 = vsub.f32 %v136, %v235
    %v268 = vsub.f32 %v137, %v236
    %v269 = vsub.f32 %v138, %v237
    %v270 = vsub.f32 %v139, %v238
    %v271 = vsub.f32 %v140, %v239
    %v272 = vsub.f32 %v141, %v240
    %v273 = vsub.f32 %v142, %v241
    %v274 = vmul.f32 %v242, %v242
    %v275 = vmul.f32 %v243, %v243
    %v276 = vmul.f32 %v244, %v244
    %v277 = vmul.f32 %v245, %v245
    %v278 = vmul.f32 %v246, %v246
    %v279 = vmul.f32 %v247, %v247
    %v280 = vmul.f32 %v248, %v248
    %v281 = vmul.f32 %v249, %v249
    %v282 = vmul.f32 %v250, %v250
    %v283 = vmul.f32 %v251, %v251
    %v284 = vmul.f32 %v252, %v252
    %v285 = vmul.f32 %v253, %v253
    %v286 = vmul.f32 %v254, %v254
    %v287 = vmul.f32 %v255, %v255
    %v288 = vmul.f32 %v256, %v256
    %v289 = vmul.f32 %v257, %v257
    %v290 = vmul.f32 %v258, %v258
    %v291 = vmul.f32 %v259, %v259
    %v292 = vmul.f32 %v260, %v260
    %v293 = vmul.f32 %v261, %v261
    %v294 = vmul.f32 %v262, %v262
    %v295 = vmul.f32 %v263, %v263
    %v296 = vmul.f32 %v264, %v264
    %v297 = vmul.f32 %v265, %v265
    %v298 = vmul.f32 %v266, %v266
    %v299 = vmul.f32 %v267, %v267
    %v300 = vmul.f32 %v268, %v268
    %v301 = vmul.f32 %v269, %v269
    %v302 = vmul.f32 %v270, %v270
    %v303 = vmul.f32 %v271, %v271
    %v304 = vmul.f32 %v272, %v272
    %v305 = vmul.f32 %v273, %v273
    %306 = vadd.xlane.f32.xlu0 %v274
    %v307 = vpop.xlane.xlu0 %306
    %308 = vadd.xlane.f32.xlu0 %v275
    %v309 = vpop.xlane.xlu0 %308
    %310 = vadd.xlane.f32.xlu0 %v276
    %v311 = vpop.xlane.xlu0 %310
    %312 = vadd.xlane.f32.xlu0 %v277
    %v313 = vpop.xlane.xlu0 %312
    %314 = vadd.xlane.f32.xlu0 %v278
    %v315 = vpop.xlane.xlu0 %314
    %316 = vadd.xlane.f32.xlu0 %v279
    %v317 = vpop.xlane.xlu0 %316
    %318 = vadd.xlane.f32.xlu0 %v280
    %v319 = vpop.xlane.xlu0 %318
    %320 = vadd.xlane.f32.xlu0 %v281
    %v321 = vpop.xlane.xlu0 %320
    %322 = vadd.xlane.f32.xlu0 %v282
    %v323 = vpop.xlane.xlu0 %322
    %324 = vadd.xlane.f32.xlu0 %v283
    %v325 = vpop.xlane.xlu0 %324
    %326 = vadd.xlane.f32.xlu0 %v284
    %v327 = vpop.xlane.xlu0 %326
    %328 = vadd.xlane.f32.xlu0 %v285
    %v329 = vpop.xlane.xlu0 %328
    %330 = vadd.xlane.f32.xlu0 %v286
    %v331 = vpop.xlane.xlu0 %330
    %332 = vadd.xlane.f32.xlu0 %v287
    %v333 = vpop.xlane.xlu0 %332
    %334 = vadd.xlane.f32.xlu0 %v288
    %v335 = vpop.xlane.xlu0 %334
    %336 = vadd.xlane.f32.xlu0 %v289
    %v337 = vpop.xlane.xlu0 %336
    %338 = vadd.xlane.f32.xlu0 %v290
    %v339 = vpop.xlane.xlu0 %338
    %340 = vadd.xlane.f32.xlu0 %v291
    %v341 = vpop.xlane.xlu0 %340
    %342 = vadd.xlane.f32.xlu0 %v292
    %v343 = vpop.xlane.xlu0 %342
    %344 = vadd.xlane.f32.xlu0 %v293
    %v345 = vpop.xlane.xlu0 %344
    %346 = vadd.xlane.f32.xlu0 %v294
    %v347 = vpop.xlane.xlu0 %346
    %348 = vadd.xlane.f32.xlu0 %v295
    %v349 = vpop.xlane.xlu0 %348
    %350 = vadd.xlane.f32.xlu0 %v296
    %v351 = vpop.xlane.xlu0 %350
    %352 = vadd.xlane.f32.xlu0 %v297
    %v353 = vpop.xlane.xlu0 %352
    %354 = vadd.xlane.f32.xlu0 %v298
    %v355 = vpop.xlane.xlu0 %354
    %356 = vadd.xlane.f32.xlu0 %v299
    %v357 = vpop.xlane.xlu0 %356
    %358 = vadd.xlane.f32.xlu0 %v300
    %v359 = vpop.xlane.xlu0 %358
    %360 = vadd.xlane.f32.xlu0 %v301
    %v361 = vpop.xlane.xlu0 %360
    %362 = vadd.xlane.f32.xlu0 %v302
    %v363 = vpop.xlane.xlu0 %362
    %364 = vadd.xlane.f32.xlu0 %v303
    %v365 = vpop.xlane.xlu0 %364
    %366 = vadd.xlane.f32.xlu0 %v304
    %v367 = vpop.xlane.xlu0 %366
    %368 = vadd.xlane.f32.xlu0 %v305
    %v369 = vpop.xlane.xlu0 %368
    %v370 = vmul.f32 %v307, %v209
    %v371 = vmul.f32 %v309, %v209
    %v372 = vmul.f32 %v311, %v209
    %v373 = vmul.f32 %v313, %v209
    %v374 = vmul.f32 %v315, %v209
    %v375 = vmul.f32 %v317, %v209
    %v376 = vmul.f32 %v319, %v209
    %v377 = vmul.f32 %v321, %v209
    %v378 = vmul.f32 %v323, %v209
    %v379 = vmul.f32 %v325, %v209
    %v380 = vmul.f32 %v327, %v209
    %v381 = vmul.f32 %v329, %v209
    %v382 = vmul.f32 %v331, %v209
    %v383 = vmul.f32 %v333, %v209
    %v384 = vmul.f32 %v335, %v209
    %v385 = vmul.f32 %v337, %v209
    %v386 = vmul.f32 %v339, %v209
    %v387 = vmul.f32 %v341, %v209
    %v388 = vmul.f32 %v343, %v209
    %v389 = vmul.f32 %v345, %v209
    %v390 = vmul.f32 %v347, %v209
    %v391 = vmul.f32 %v349, %v209
    %v392 = vmul.f32 %v351, %v209
    %v393 = vmul.f32 %v353, %v209
    %v394 = vmul.f32 %v355, %v209
    %v395 = vmul.f32 %v357, %v209
    %v396 = vmul.f32 %v359, %v209
    %v397 = vmul.f32 %v361, %v209
    %v398 = vmul.f32 %v363, %v209
    %v399 = vmul.f32 %v365, %v209
    %v400 = vmul.f32 %v367, %v209
    %v401 = vmul.f32 %v369, %v209
    %v402 = vadd.f32 %v370, 1e-05
    %v403 = vadd.f32 %v371, 1e-05
    %v404 = vadd.f32 %v372, 1e-05
    %v405 = vadd.f32 %v373, 1e-05
    %v406 = vadd.f32 %v374, 1e-05
    %v407 = vadd.f32 %v375, 1e-05
    %v408 = vadd.f32 %v376, 1e-05
    %v409 = vadd.f32 %v377, 1e-05
    %v410 = vadd.f32 %v378, 1e-05
    %v411 = vadd.f32 %v379, 1e-05
    %v412 = vadd.f32 %v380, 1e-05
    %v413 = vadd.f32 %v381, 1e-05
    %v414 = vadd.f32 %v382, 1e-05
    %v415 = vadd.f32 %v383, 1e-05
    %v416 = vadd.f32 %v384, 1e-05
    %v417 = vadd.f32 %v385, 1e-05
    %v418 = vadd.f32 %v386, 1e-05
    %v419 = vadd.f32 %v387, 1e-05
    %v420 = vadd.f32 %v388, 1e-05
    %v421 = vadd.f32 %v389, 1e-05
    %v422 = vadd.f32 %v390, 1e-05
    %v423 = vadd.f32 %v391, 1e-05
    %v424 = vadd.f32 %v392, 1e-05
    %v425 = vadd.f32 %v393, 1e-05
    %v426 = vadd.f32 %v394, 1e-05
    %v427 = vadd.f32 %v395, 1e-05
    %v428 = vadd.f32 %v396, 1e-05
    %v429 = vadd.f32 %v397, 1e-05
    %v430 = vadd.f32 %v398, 1e-05
    %v431 = vadd.f32 %v399, 1e-05
    %v432 = vadd.f32 %v400, 1e-05
    %v433 = vadd.f32 %v401, 1e-05
    %v434 = vrsqrt.pop %v402
    %v435 = vrsqrt.pop %v403
    %v436 = vrsqrt.pop %v404
    %v437 = vrsqrt.pop %v405
    %v438 = vrsqrt.pop %v406
    %v439 = vrsqrt.pop %v407
    %v440 = vrsqrt.pop %v408
    %v441 = vrsqrt.pop %v409
    %v442 = vrsqrt.pop %v410
    %v443 = vrsqrt.pop %v411
    %v444 = vrsqrt.pop %v412
    %v445 = vrsqrt.pop %v413
    %v446 = vrsqrt.pop %v414
    %v447 = vrsqrt.pop %v415
    %v448 = vrsqrt.pop %v416
    %v449 = vrsqrt.pop %v417
    %v450 = vrsqrt.pop %v418
    %v451 = vrsqrt.pop %v419
    %v452 = vrsqrt.pop %v420
    %v453 = vrsqrt.pop %v421
    %v454 = vrsqrt.pop %v422
    %v455 = vrsqrt.pop %v423
    %v456 = vrsqrt.pop %v424
    %v457 = vrsqrt.pop %v425
    %v458 = vrsqrt.pop %v426
    %v459 = vrsqrt.pop %v427
    %v460 = vrsqrt.pop %v428
    %v461 = vrsqrt.pop %v429
    %v462 = vrsqrt.pop %v430
    %v463 = vrsqrt.pop %v431
    %v464 = vrsqrt.pop %v432
    %v465 = vrsqrt.pop %v433
    %v466 = vmul.f32 %v242, %v434
    %v467 = vmul.f32 %v243, %v435
    %v468 = vmul.f32 %v244, %v436
    %v469 = vmul.f32 %v245, %v437
    %v470 = vmul.f32 %v246, %v438
    %v471 = vmul.f32 %v247, %v439
    %v472 = vmul.f32 %v248, %v440
    %v473 = vmul.f32 %v249, %v441
    %v474 = vmul.f32 %v250, %v442
    %v475 = vmul.f32 %v251, %v443
    %v476 = vmul.f32 %v252, %v444
    %v477 = vmul.f32 %v253, %v445
    %v478 = vmul.f32 %v254, %v446
    %v479 = vmul.f32 %v255, %v447
    %v480 = vmul.f32 %v256, %v448
    %v481 = vmul.f32 %v257, %v449
    %v482 = vmul.f32 %v258, %v450
    %v483 = vmul.f32 %v259, %v451
    %v484 = vmul.f32 %v260, %v452
    %v485 = vmul.f32 %v261, %v453
    %v486 = vmul.f32 %v262, %v454
    %v487 = vmul.f32 %v263, %v455
    %v488 = vmul.f32 %v264, %v456
    %v489 = vmul.f32 %v265, %v457
    %v490 = vmul.f32 %v266, %v458
    %v491 = vmul.f32 %v267, %v459
    %v492 = vmul.f32 %v268, %v460
    %v493 = vmul.f32 %v269, %v461
    %v494 = vmul.f32 %v270, %v462
    %v495 = vmul.f32 %v271, %v463
    %v496 = vmul.f32 %v272, %v464
    %v497 = vmul.f32 %v273, %v465
    %v499 = vlaneseq
    %v500 = vshrl.u32 %v499, 7
    %v501 = vsub.s32 0, %v500
    %v502 = vrot.slane %v143, %v501
    %v504 = vmul.f32 %v466, %v502
    %v505 = vmul.f32 %v467, %v502
    %v506 = vmul.f32 %v468, %v502
    %v507 = vmul.f32 %v469, %v502
    %v508 = vmul.f32 %v470, %v502
    %v509 = vmul.f32 %v471, %v502
    %v510 = vmul.f32 %v472, %v502
    %v511 = vmul.f32 %v473, %v502
    %v512 = vmul.f32 %v474, %v502
    %v513 = vmul.f32 %v475, %v502
    %v514 = vmul.f32 %v476, %v502
    %v515 = vmul.f32 %v477, %v502
    %v516 = vmul.f32 %v478, %v502
    %v517 = vmul.f32 %v479, %v502
    %v518 = vmul.f32 %v480, %v502
    %v519 = vmul.f32 %v481, %v502
    %v520 = vmul.f32 %v482, %v502
    %v521 = vmul.f32 %v483, %v502
    %v522 = vmul.f32 %v484, %v502
    %v523 = vmul.f32 %v485, %v502
    %v524 = vmul.f32 %v486, %v502
    %v525 = vmul.f32 %v487, %v502
    %v526 = vmul.f32 %v488, %v502
    %v527 = vmul.f32 %v489, %v502
    %v528 = vmul.f32 %v490, %v502
    %v529 = vmul.f32 %v491, %v502
    %v530 = vmul.f32 %v492, %v502
    %v531 = vmul.f32 %v493, %v502
    %v532 = vmul.f32 %v494, %v502
    %v533 = vmul.f32 %v495, %v502
    %v534 = vmul.f32 %v496, %v502
    %v535 = vmul.f32 %v497, %v502
    %v537 = vlaneseq
    %v538 = vshrl.u32 %v537, 7
    %v539 = vsub.s32 0, %v538
    %v540 = vrot.slane %v144, %v539
    %v542 = vadd.f32 %v504, %v540
    %v543 = vadd.f32 %v505, %v540
    %v544 = vadd.f32 %v506, %v540
    %v545 = vadd.f32 %v507, %v540
    %v546 = vadd.f32 %v508, %v540
    %v547 = vadd.f32 %v509, %v540
    %v548 = vadd.f32 %v510, %v540
    %v549 = vadd.f32 %v511, %v540
    %v550 = vadd.f32 %v512, %v540
    %v551 = vadd.f32 %v513, %v540
    %v552 = vadd.f32 %v514, %v540
    %v553 = vadd.f32 %v515, %v540
    %v554 = vadd.f32 %v516, %v540
    %v555 = vadd.f32 %v517, %v540
    %v556 = vadd.f32 %v518, %v540
    %v557 = vadd.f32 %v519, %v540
    %v558 = vadd.f32 %v520, %v540
    %v559 = vadd.f32 %v521, %v540
    %v560 = vadd.f32 %v522, %v540
    %v561 = vadd.f32 %v523, %v540
    %v562 = vadd.f32 %v524, %v540
    %v563 = vadd.f32 %v525, %v540
    %v564 = vadd.f32 %v526, %v540
    %v565 = vadd.f32 %v527, %v540
    %v566 = vadd.f32 %v528, %v540
    %v567 = vadd.f32 %v529, %v540
    %v568 = vadd.f32 %v530, %v540
    %v569 = vadd.f32 %v531, %v540
    %v570 = vadd.f32 %v532, %v540
    %v571 = vadd.f32 %v533, %v540
    %v572 = vadd.f32 %v534, %v540
    %v573 = vadd.f32 %v535, %v540
    %v574 = vpack.c.bf16 %v543, %v542
    %v575 = vpack.c.bf16 %v545, %v544
    %v576 = vpack.c.bf16 %v547, %v546
    %v577 = vpack.c.bf16 %v549, %v548
    %v578 = vpack.c.bf16 %v551, %v550
    %v579 = vpack.c.bf16 %v553, %v552
    %v580 = vpack.c.bf16 %v555, %v554
    %v581 = vpack.c.bf16 %v557, %v556
    %v582 = vpack.c.bf16 %v559, %v558
    %v583 = vpack.c.bf16 %v561, %v560
    %v584 = vpack.c.bf16 %v563, %v562
    %v585 = vpack.c.bf16 %v565, %v564
    %v586 = vpack.c.bf16 %v567, %v566
    %v587 = vpack.c.bf16 %v569, %v568
    %v588 = vpack.c.bf16 %v571, %v570
    %v589 = vpack.c.bf16 %v573, %v572
    %v590 = vld [vmem:[#allocation5] sm:$0xff]
    %v591 = vld [vmem:[#allocation5 + $0x8] sm:$0xf]
    %v592 = vld [vmem:[#allocation5 + $0xc] sm:$0xff]
    %v593 = vld [vmem:[#allocation5 + $0x14] sm:$0xf]
    %v594 = vld [vmem:[#allocation5 + $0x18] sm:$0xff]
    %v595 = vld [vmem:[#allocation5 + $0x20] sm:$0xf]
    %v596 = vld [vmem:[#allocation5 + $0x24] sm:$0xff]
    %v597 = vld [vmem:[#allocation5 + $0x2c] sm:$0xf]
    %v598 = vld [vmem:[#allocation5 + $0x30] sm:$0xff]
    %v599 = vld [vmem:[#allocation5 + $0x38] sm:$0xf]
    %v600 = vld [vmem:[#allocation5 + $0x3c] sm:$0xff]
    %v601 = vld [vmem:[#allocation5 + $0x44] sm:$0xf]
    %v602 = vld [vmem:[#allocation5 + $0x48] sm:$0xff]
    %v603 = vld [vmem:[#allocation5 + $0x50] sm:$0xf]
    %v604 = vld [vmem:[#allocation5 + $0x54] sm:$0xff]
    %v605 = vld [vmem:[#allocation5 + $0x5c] sm:$0xf]
    %v606 = vld [vmem:[#allocation5 + $0x60] sm:$0xff]
    %v607 = vld [vmem:[#allocation5 + $0x68] sm:$0xf]
    %v608 = vld [vmem:[#allocation5 + $0x6c] sm:$0xff]
    %v609 = vld [vmem:[#allocation5 + $0x74] sm:$0xf]
    %v610 = vld [vmem:[#allocation5 + $0x78] sm:$0xff]
    %v611 = vld [vmem:[#allocation5 + $0x80] sm:$0xf]
    %v612 = vld [vmem:[#allocation5 + $0x84] sm:$0xff]
    %v613 = vld [vmem:[#allocation5 + $0x8c] sm:$0xf]
    %v614 = vld [vmem:[#allocation5 + $0x90] sm:$0xff]
    %v615 = vld [vmem:[#allocation5 + $0x98] sm:$0xf]
    %v616 = vld [vmem:[#allocation5 + $0x9c] sm:$0xff]
    %v617 = vld [vmem:[#allocation5 + $0xa4] sm:$0xf]
    %v618 = vld [vmem:[#allocation5 + $0xa8] sm:$0xff]
    %v619 = vld [vmem:[#allocation5 + $0xb0] sm:$0xf]
    %v620 = vld [vmem:[#allocation5 + $0xb4] sm:$0xff]
    %v621 = vld [vmem:[#allocation5 + $0xbc] sm:$0xf]
    %v654 = vunpack.c.l.b16 %v590
    %v655 = vunpack.c.h.b16 %v590
    %v656 = vunpack.c.l.b16 %v591
    %v657 = vunpack.c.l.b16 %v592
    %v658 = vunpack.c.h.b16 %v592
    %v659 = vunpack.c.l.b16 %v593
    %v660 = vunpack.c.l.b16 %v594
    %v661 = vunpack.c.h.b16 %v594
    %v662 = vunpack.c.l.b16 %v595
    %v663 = vunpack.c.l.b16 %v596
    %v664 = vunpack.c.h.b16 %v596
    %v665 = vunpack.c.l.b16 %v597
    %v666 = vunpack.c.l.b16 %v598
    %v667 = vunpack.c.h.b16 %v598
    %v668 = vunpack.c.l.b16 %v599
    %v669 = vunpack.c.l.b16 %v600
    %v670 = vunpack.c.h.b16 %v600
    %v671 = vunpack.c.l.b16 %v601
    %v672 = vunpack.c.l.b16 %v602
    %v673 = vunpack.c.h.b16 %v602
    %v674 = vunpack.c.l.b16 %v603
    %v675 = vunpack.c.l.b16 %v604
    %v676 = vunpack.c.h.b16 %v604
    %v677 = vunpack.c.l.b16 %v605
    %v678 = vunpack.c.l.b16 %v606
    %v679 = vunpack.c.h.b16 %v606
    %v680 = vunpack.c.l.b16 %v607
    %v681 = vunpack.c.l.b16 %v608
    %v682 = vunpack.c.h.b16 %v608
    %v683 = vunpack.c.l.b16 %v609
    %v684 = vunpack.c.l.b16 %v610
    %v685 = vunpack.c.h.b16 %v610
    %v686 = vunpack.c.l.b16 %v611
    %v687 = vunpack.c.l.b16 %v612
    %v688 = vunpack.c.h.b16 %v612
    %v689 = vunpack.c.l.b16 %v613
    %v690 = vunpack.c.l.b16 %v614
    %v691 = vunpack.c.h.b16 %v614
    %v692 = vunpack.c.l.b16 %v615
    %v693 = vunpack.c.l.b16 %v616
    %v694 = vunpack.c.h.b16 %v616
    %v695 = vunpack.c.l.b16 %v617
    %v696 = vunpack.c.l.b16 %v618
    %v697 = vunpack.c.h.b16 %v618
    %v698 = vunpack.c.l.b16 %v619
    %v699 = vunpack.c.l.b16 %v620
    %v700 = vunpack.c.h.b16 %v620
    %v701 = vunpack.c.l.b16 %v621
    %v702 = vpack.c.b16 %v657, %v654
    %v703 = vpack.c.b16 %v658, %v655
    %v704 = vpack.c.b16 %v659, %v656
    %v705 = vpack.c.b16 %v663, %v660
    %v706 = vpack.c.b16 %v664, %v661
    %v707 = vpack.c.b16 %v665, %v662
    %v708 = vpack.c.b16 %v669, %v666
    %v709 = vpack.c.b16 %v670, %v667
    %v710 = vpack.c.b16 %v671, %v668
    %v711 = vpack.c.b16 %v675, %v672
    %v712 = vpack.c.b16 %v676, %v673
    %v713 = vpack.c.b16 %v677, %v674
    %v714 = vpack.c.b16 %v681, %v678
    %v715 = vpack.c.b16 %v682, %v679
    %v716 = vpack.c.b16 %v683, %v680
    %v717 = vpack.c.b16 %v687, %v684
    %v718 = vpack.c.b16 %v688, %v685
    %v719 = vpack.c.b16 %v689, %v686
    %v720 = vpack.c.b16 %v693, %v690
    %v721 = vpack.c.b16 %v694, %v691
    %v722 = vpack.c.b16 %v695, %v692
    %v723 = vpack.c.b16 %v699, %v696
    %v724 = vpack.c.b16 %v700, %v697
    %v725 = vpack.c.b16 %v701, %v698
    %750 = vmatprep.subr.bf16.mxu0 %v724
    %751 = vmatpush1.bf16.msra.mxu0 %v723
    %752 = vmatprep.subr.bf16.mxu0 %v721
    %753 = vmatpush1.bf16.msra.mxu0 %v720
    %754 = vmatprep.subr.bf16.mxu0 %v718
    %755 = vmatpush1.bf16.msra.mxu0 %v717
    %756 = vmatprep.subr.bf16.mxu0 %v715
    %757 = vmatpush1.bf16.msra.mxu0 %v714
    %758 = vmatprep.subr.bf16.mxu0 %v712
    %759 = vmatpush1.bf16.msra.mxu0 %v711
    %760 = vmatprep.subr.bf16.mxu0 %v709
    %761 = vmatpush1.bf16.msra.mxu0 %v708
    %762 = vmatprep.subr.bf16.mxu0 %v706
    %763 = vmatpush1.bf16.msra.mxu0 %v705
    %764 = vmatprep.subr.bf16.mxu0 %v703
    %765 = vmatpush1.bf16.msra.mxu0 %v702
    %766 = vmatprep.subr.bf16.mxu0 0
    %767 = vmatpush2.bf16.msra.mxu0 0
    %768 = vmatprep.subr.bf16.mxu0 0
    %769 = vmatpush2.bf16.msra.mxu0 0
    %770 = vmatprep.subr.bf16.mxu0 0
    %771 = vmatpush2.bf16.msra.mxu0 0
    %772 = vmatprep.subr.bf16.mxu0 0
    %773 = vmatpush2.bf16.msra.mxu0 0
    %774 = vmatprep.subr.bf16.mxu0 0
    %775 = vmatpush2.bf16.msra.mxu0 0
    %776 = vmatprep.subr.bf16.mxu0 0
    %777 = vmatpush2.bf16.msra.mxu0 0
    %778 = vmatprep.subr.bf16.mxu0 0
    %779 = vmatpush2.bf16.msra.mxu0 0
    %780 = vmatprep.subr.bf16.mxu0 0
    %781 = vmatpush2.bf16.msra.mxu0 0
    %782 = vmatprep.mubr.bf16.mxu0 0
    %783 = vmatmul.mubr.bf16.gmra.mxu0 %v574
    %v784 = vpop.f32.mrf.mxu0
    %v785 = vadd.f32 0.0, %v784
    %v786 = vpop.f32.mrf.mxu0
    %v787 = vadd.f32 0.0, %v786
    %v788 = vpop.f32.mrf.mxu0
    %v789 = vadd.f32 0.0, %v788
    %v790 = vpop.f32.mrf.mxu0
    %v791 = vadd.f32 0.0, %v790
    %792 = vmatprep.mubr.bf16.mxu0 0
    %793 = vmatmul.mubr.bf16.gmra.mxu0 %v575
    %v794 = vpop.f32.mrf.mxu0
    %v795 = vadd.f32 0.0, %v794
    %v796 = vpop.f32.mrf.mxu0
    %v797 = vadd.f32 0.0, %v796
    %v798 = vpop.f32.mrf.mxu0
    %v799 = vadd.f32 0.0, %v798
    %v800 = vpop.f32.mrf.mxu0
    %v801 = vadd.f32 0.0, %v800
    %802 = vmatprep.mubr.bf16.mxu0 0
    %803 = vmatmul.mubr.bf16.gmra.mxu0 %v576
    %v804 = vpop.f32.mrf.mxu0
    %v805 = vadd.f32 0.0, %v804
    %v806 = vpop.f32.mrf.mxu0
    %v807 = vadd.f32 0.0, %v806
    %v808 = vpop.f32.mrf.mxu0
    %v809 = vadd.f32 0.0, %v808
    %v810 = vpop.f32.mrf.mxu0
    %v811 = vadd.f32 0.0, %v810
    %812 = vmatprep.mubr.bf16.mxu0 0
    %813 = vmatmul.mubr.bf16.gmra.mxu0 %v577
    %v814 = vpop.f32.mrf.mxu0
    %v815 = vadd.f32 0.0, %v814
    %v816 = vpop.f32.mrf.mxu0
    %v817 = vadd.f32 0.0, %v816
    %v818 = vpop.f32.mrf.mxu0
    %v819 = vadd.f32 0.0, %v818
    %v820 = vpop.f32.mrf.mxu0
    %v821 = vadd.f32 0.0, %v820
    %822 = vmatprep.mubr.bf16.mxu0 0
    %823 = vmatmul.mubr.bf16.gmra.mxu0 %v578
    %v824 = vpop.f32.mrf.mxu0
    %v825 = vadd.f32 0.0, %v824
    %v826 = vpop.f32.mrf.mxu0
    %v827 = vadd.f32 0.0, %v826
    %v828 = vpop.f32.mrf.mxu0
    %v829 = vadd.f32 0.0, %v828
    %v830 = vpop.f32.mrf.mxu0
    %v831 = vadd.f32 0.0, %v830
    %832 = vmatprep.mubr.bf16.mxu0 0
    %833 = vmatmul.mubr.bf16.gmra.mxu0 %v579
    %v834 = vpop.f32.mrf.mxu0
    %v835 = vadd.f32 0.0, %v834
    %v836 = vpop.f32.mrf.mxu0
    %v837 = vadd.f32 0.0, %v836
    %v838 = vpop.f32.mrf.mxu0
    %v839 = vadd.f32 0.0, %v838
    %v840 = vpop.f32.mrf.mxu0
    %v841 = vadd.f32 0.0, %v840
    %842 = vmatprep.mubr.bf16.mxu0 0
    %843 = vmatmul.mubr.bf16.gmra.mxu0 %v580
    %v844 = vpop.f32.mrf.mxu0
    %v845 = vadd.f32 0.0, %v844
    %v846 = vpop.f32.mrf.mxu0
    %v847 = vadd.f32 0.0, %v846
    %v848 = vpop.f32.mrf.mxu0
    %v849 = vadd.f32 0.0, %v848
    %v850 = vpop.f32.mrf.mxu0
    %v851 = vadd.f32 0.0, %v850
    %852 = vmatprep.mubr.bf16.mxu0 0
    %853 = vmatmul.mubr.bf16.gmra.mxu0 %v581
    %v854 = vpop.f32.mrf.mxu0
    %v855 = vadd.f32 0.0, %v854
    %v856 = vpop.f32.mrf.mxu0
    %v857 = vadd.f32 0.0, %v856
    %v858 = vpop.f32.mrf.mxu0
    %v859 = vadd.f32 0.0, %v858
    %v860 = vpop.f32.mrf.mxu0
    %v861 = vadd.f32 0.0, %v860
    %862 = vmatprep.mubr.bf16.mxu0 0
    %863 = vmatmul.mubr.bf16.gmra.mxu0 %v582
    %v864 = vpop.f32.mrf.mxu0
    %v865 = vadd.f32 0.0, %v864
    %v866 = vpop.f32.mrf.mxu0
    %v867 = vadd.f32 0.0, %v866
    %v868 = vpop.f32.mrf.mxu0
    %v869 = vadd.f32 0.0, %v868
    %v870 = vpop.f32.mrf.mxu0
    %v871 = vadd.f32 0.0, %v870
    %872 = vmatprep.mubr.bf16.mxu0 0
    %873 = vmatmul.mubr.bf16.gmra.mxu0 %v583
    %v874 = vpop.f32.mrf.mxu0
    %v875 = vadd.f32 0.0, %v874
    %v876 = vpop.f32.mrf.mxu0
    %v877 = vadd.f32 0.0, %v876
    %v878 = vpop.f32.mrf.mxu0
    %v879 = vadd.f32 0.0, %v878
    %v880 = vpop.f32.mrf.mxu0
    %v881 = vadd.f32 0.0, %v880
    %882 = vmatprep.mubr.bf16.mxu0 0
    %883 = vmatmul.mubr.bf16.gmra.mxu0 %v584
    %v884 = vpop.f32.mrf.mxu0
    %v885 = vadd.f32 0.0, %v884
    %v886 = vpop.f32.mrf.mxu0
    %v887 = vadd.f32 0.0, %v886
    %v888 = vpop.f32.mrf.mxu0
    %v889 = vadd.f32 0.0, %v888
    %v890 = vpop.f32.mrf.mxu0
    %v891 = vadd.f32 0.0, %v890
    %892 = vmatprep.mubr.bf16.mxu0 0
    %893 = vmatmul.mubr.bf16.gmra.mxu0 %v585
    %v894 = vpop.f32.mrf.mxu0
    %v895 = vadd.f32 0.0, %v894
    %v896 = vpop.f32.mrf.mxu0
    %v897 = vadd.f32 0.0, %v896
    %v898 = vpop.f32.mrf.mxu0
    %v899 = vadd.f32 0.0, %v898
    %v900 = vpop.f32.mrf.mxu0
    %v901 = vadd.f32 0.0, %v900
    %902 = vmatprep.mubr.bf16.mxu0 0
    %903 = vmatmul.mubr.bf16.gmra.mxu0 %v586
    %v904 = vpop.f32.mrf.mxu0
    %v905 = vadd.f32 0.0, %v904
    %v906 = vpop.f32.mrf.mxu0
    %v907 = vadd.f32 0.0, %v906
    %v908 = vpop.f32.mrf.mxu0
    %v909 = vadd.f32 0.0, %v908
    %v910 = vpop.f32.mrf.mxu0
    %v911 = vadd.f32 0.0, %v910
    %912 = vmatprep.mubr.bf16.mxu0 0
    %913 = vmatmul.mubr.bf16.gmra.mxu0 %v587
    %v914 = vpop.f32.mrf.mxu0
    %v915 = vadd.f32 0.0, %v914
    %v916 = vpop.f32.mrf.mxu0
    %v917 = vadd.f32 0.0, %v916
    %v918 = vpop.f32.mrf.mxu0
    %v919 = vadd.f32 0.0, %v918
    %v920 = vpop.f32.mrf.mxu0
    %v921 = vadd.f32 0.0, %v920
    %922 = vmatprep.mubr.bf16.mxu0 0
    %923 = vmatmul.mubr.bf16.gmra.mxu0 %v588
    %v924 = vpop.f32.mrf.mxu0
    %v925 = vadd.f32 0.0, %v924
    %v926 = vpop.f32.mrf.mxu0
    %v927 = vadd.f32 0.0, %v926
    %v928 = vpop.f32.mrf.mxu0
    %v929 = vadd.f32 0.0, %v928
    %v930 = vpop.f32.mrf.mxu0
    %v931 = vadd.f32 0.0, %v930
    %932 = vmatprep.mubr.bf16.mxu0 0
    %933 = vmatmul.mubr.bf16.gmra.mxu0 %v589
    %v934 = vpop.f32.mrf.mxu0
    %v935 = vadd.f32 0.0, %v934
    %v936 = vpop.f32.mrf.mxu0
    %v937 = vadd.f32 0.0, %v936
    %v938 = vpop.f32.mrf.mxu0
    %v939 = vadd.f32 0.0, %v938
    %v940 = vpop.f32.mrf.mxu0
    %v941 = vadd.f32 0.0, %v940
    %942 = vdwg.mxu0
    %943 = vmatprep.subr.bf16.mxu0 0
    %944 = vmatpush1.bf16.msra.mxu0 %v725
    %945 = vmatprep.subr.bf16.mxu0 0
    %946 = vmatpush1.bf16.msra.mxu0 %v722
    %947 = vmatprep.subr.bf16.mxu0 0
    %948 = vmatpush1.bf16.msra.mxu0 %v719
    %949 = vmatprep.subr.bf16.mxu0 0
    %950 = vmatpush1.bf16.msra.mxu0 %v716
    %951 = vmatprep.subr.bf16.mxu0 0
    %952 = vmatpush1.bf16.msra.mxu0 %v713
    %953 = vmatprep.subr.bf16.mxu0 0
    %954 = vmatpush1.bf16.msra.mxu0 %v710
    %955 = vmatprep.subr.bf16.mxu0 0
    %956 = vmatpush1.bf16.msra.mxu0 %v707
    %957 = vmatprep.subr.bf16.mxu0 0
    %958 = vmatpush1.bf16.msra.mxu0 %v704
    %959 = vmatprep.subr.bf16.mxu0 0
    %960 = vmatpush2.bf16.msra.mxu0 0
    %961 = vmatprep.subr.bf16.mxu0 0
    %962 = vmatpush2.bf16.msra.mxu0 0
    %963 = vmatprep.subr.bf16.mxu0 0
    %964 = vmatpush2.bf16.msra.mxu0 0
    %965 = vmatprep.subr.bf16.mxu0 0
    %966 = vmatpush2.bf16.msra.mxu0 0
    %967 = vmatprep.subr.bf16.mxu0 0
    %968 = vmatpush2.bf16.msra.mxu0 0
    %969 = vmatprep.subr.bf16.mxu0 0
    %970 = vmatpush2.bf16.msra.mxu0 0
    %971 = vmatprep.subr.bf16.mxu0 0
    %972 = vmatpush2.bf16.msra.mxu0 0
    %973 = vmatprep.subr.bf16.mxu0 0
    %974 = vmatpush2.bf16.msra.mxu0 0
    %975 = vmatprep.mubr.bf16.mxu0 0
    %976 = vmatmul.mubr.bf16.gmra.mxu0 %v574
    %v977 = vpop.f32.mrf.mxu0
    %v978 = vadd.f32 0.0, %v977
    %v979 = vpop.f32.mrf.mxu0
    %v980 = vpop.f32.mrf.mxu0
    %v981 = vadd.f32 0.0, %v980
    %v982 = vpop.f32.mrf.mxu0
    %983 = vmatprep.mubr.bf16.mxu0 0
    %984 = vmatmul.mubr.bf16.gmra.mxu0 %v575
    %v985 = vpop.f32.mrf.mxu0
    %v986 = vadd.f32 0.0, %v985
    %v987 = vpop.f32.mrf.mxu0
    %v988 = vpop.f32.mrf.mxu0
    %v989 = vadd.f32 0.0, %v988
    %v990 = vpop.f32.mrf.mxu0
    %991 = vmatprep.mubr.bf16.mxu0 0
    %992 = vmatmul.mubr.bf16.gmra.mxu0 %v576
    %v993 = vpop.f32.mrf.mxu0
    %v994 = vadd.f32 0.0, %v993
    %v995 = vpop.f32.mrf.mxu0
    %v996 = vpop.f32.mrf.mxu0
    %v997 = vadd.f32 0.0, %v996
    %v998 = vpop.f32.mrf.mxu0
    %999 = vmatprep.mubr.bf16.mxu0 0
    %1000 = vmatmul.mubr.bf16.gmra.mxu0 %v577
    %v1001 = vpop.f32.mrf.mxu0
    %v1002 = vadd.f32 0.0, %v1001
    %v1003 = vpop.f32.mrf.mxu0
    %v1004 = vpop.f32.mrf.mxu0
    %v1005 = vadd.f32 0.0, %v1004
    %v1006 = vpop.f32.mrf.mxu0
    %1007 = vmatprep.mubr.bf16.mxu0 0
    %1008 = vmatmul.mubr.bf16.gmra.mxu0 %v578
    %v1009 = vpop.f32.mrf.mxu0
    %v1010 = vadd.f32 0.0, %v1009
    %v1011 = vpop.f32.mrf.mxu0
    %v1012 = vpop.f32.mrf.mxu0
    %v1013 = vadd.f32 0.0, %v1012
    %v1014 = vpop.f32.mrf.mxu0
    %1015 = vmatprep.mubr.bf16.mxu0 0
    %1016 = vmatmul.mubr.bf16.gmra.mxu0 %v579
    %v1017 = vpop.f32.mrf.mxu0
    %v1018 = vadd.f32 0.0, %v1017
    %v1019 = vpop.f32.mrf.mxu0
    %v1020 = vpop.f32.mrf.mxu0
    %v1021 = vadd.f32 0.0, %v1020
    %v1022 = vpop.f32.mrf.mxu0
    %1023 = vmatprep.mubr.bf16.mxu0 0
    %1024 = vmatmul.mubr.bf16.gmra.mxu0 %v580
    %v1025 = vpop.f32.mrf.mxu0
    %v1026 = vadd.f32 0.0, %v1025
    %v1027 = vpop.f32.mrf.mxu0
    %v1028 = vpop.f32.mrf.mxu0
    %v1029 = vadd.f32 0.0, %v1028
    %v1030 = vpop.f32.mrf.mxu0
    %1031 = vmatprep.mubr.bf16.mxu0 0
    %1032 = vmatmul.mubr.bf16.gmra.mxu0 %v581
    %v1033 = vpop.f32.mrf.mxu0
    %v1034 = vadd.f32 0.0, %v1033
    %v1035 = vpop.f32.mrf.mxu0
    %v1036 = vpop.f32.mrf.mxu0
    %v1037 = vadd.f32 0.0, %v1036
    %v1038 = vpop.f32.mrf.mxu0
    %1039 = vmatprep.mubr.bf16.mxu0 0
    %1040 = vmatmul.mubr.bf16.gmra.mxu0 %v582
    %v1041 = vpop.f32.mrf.mxu0
    %v1042 = vadd.f32 0.0, %v1041
    %v1043 = vpop.f32.mrf.mxu0
    %v1044 = vpop.f32.mrf.mxu0
    %v1045 = vadd.f32 0.0, %v1044
    %v1046 = vpop.f32.mrf.mxu0
    %1047 = vmatprep.mubr.bf16.mxu0 0
    %1048 = vmatmul.mubr.bf16.gmra.mxu0 %v583
    %v1049 = vpop.f32.mrf.mxu0
    %v1050 = vadd.f32 0.0, %v1049
    %v1051 = vpop.f32.mrf.mxu0
    %v1052 = vpop.f32.mrf.mxu0
    %v1053 = vadd.f32 0.0, %v1052
    %v1054 = vpop.f32.mrf.mxu0
    %1055 = vmatprep.mubr.bf16.mxu0 0
    %1056 = vmatmul.mubr.bf16.gmra.mxu0 %v584
    %v1057 = vpop.f32.mrf.mxu0
    %v1058 = vadd.f32 0.0, %v1057
    %v1059 = vpop.f32.mrf.mxu0
    %v1060 = vpop.f32.mrf.mxu0
    %v1061 = vadd.f32 0.0, %v1060
    %v1062 = vpop.f32.mrf.mxu0
    %1063 = vmatprep.mubr.bf16.mxu0 0
    %1064 = vmatmul.mubr.bf16.gmra.mxu0 %v585
    %v1065 = vpop.f32.mrf.mxu0
    %v1066 = vadd.f32 0.0, %v1065
    %v1067 = vpop.f32.mrf.mxu0
    %v1068 = vpop.f32.mrf.mxu0
    %v1069 = vadd.f32 0.0, %v1068
    %v1070 = vpop.f32.mrf.mxu0
    %1071 = vmatprep.mubr.bf16.mxu0 0
    %1072 = vmatmul.mubr.bf16.gmra.mxu0 %v586
    %v1073 = vpop.f32.mrf.mxu0
    %v1074 = vadd.f32 0.0, %v1073
    %v1075 = vpop.f32.mrf.mxu0
    %v1076 = vpop.f32.mrf.mxu0
    %v1077 = vadd.f32 0.0, %v1076
    %v1078 = vpop.f32.mrf.mxu0
    %1079 = vmatprep.mubr.bf16.mxu0 0
    %1080 = vmatmul.mubr.bf16.gmra.mxu0 %v587
    %v1081 = vpop.f32.mrf.mxu0
    %v1082 = vadd.f32 0.0, %v1081
    %v1083 = vpop.f32.mrf.mxu0
    %v1084 = vpop.f32.mrf.mxu0
    %v1085 = vadd.f32 0.0, %v1084
    %v1086 = vpop.f32.mrf.mxu0
    %1087 = vmatprep.mubr.bf16.mxu0 0
    %1088 = vmatmul.mubr.bf16.gmra.mxu0 %v588
    %v1089 = vpop.f32.mrf.mxu0
    %v1090 = vadd.f32 0.0, %v1089
    %v1091 = vpop.f32.mrf.mxu0
    %v1092 = vpop.f32.mrf.mxu0
    %v1093 = vadd.f32 0.0, %v1092
    %v1094 = vpop.f32.mrf.mxu0
    %1095 = vmatprep.mubr.bf16.mxu0 0
    %1096 = vmatmul.mubr.bf16.gmra.mxu0 %v589
    %v1097 = vpop.f32.mrf.mxu0
    %v1098 = vadd.f32 0.0, %v1097
    %v1099 = vpop.f32.mrf.mxu0
    %v1100 = vpop.f32.mrf.mxu0
    %v1101 = vadd.f32 0.0, %v1100
    %v1102 = vpop.f32.mrf.mxu0
    %1103 = vdwg.mxu0
    %v1104 = vmul.f32 %v785, 0.088388346
    %v1105 = vmul.f32 %v789, 0.088388346
    %v1106 = vmul.f32 %v795, 0.088388346
    %v1107 = vmul.f32 %v799, 0.088388346
    %v1108 = vmul.f32 %v805, 0.088388346
    %v1109 = vmul.f32 %v809, 0.088388346
    %v1110 = vmul.f32 %v815, 0.088388346
    %v1111 = vmul.f32 %v819, 0.088388346
    %v1112 = vmul.f32 %v825, 0.088388346
    %v1113 = vmul.f32 %v829, 0.088388346
    %v1114 = vmul.f32 %v835, 0.088388346
    %v1115 = vmul.f32 %v839, 0.088388346
    %v1116 = vmul.f32 %v845, 0.088388346
    %v1117 = vmul.f32 %v849, 0.088388346
    %v1118 = vmul.f32 %v855, 0.088388346
    %v1119 = vmul.f32 %v859, 0.088388346
    %v1120 = vmul.f32 %v865, 0.088388346
    %v1121 = vmul.f32 %v869, 0.088388346
    %v1122 = vmul.f32 %v875, 0.088388346
    %v1123 = vmul.f32 %v879, 0.088388346
    %v1124 = vmul.f32 %v885, 0.088388346
    %v1125 = vmul.f32 %v889, 0.088388346
    %v1126 = vmul.f32 %v895, 0.088388346
    %v1127 = vmul.f32 %v899, 0.088388346
    %v1128 = vmul.f32 %v905, 0.088388346
    %v1129 = vmul.f32 %v909, 0.088388346
    %v1130 = vmul.f32 %v915, 0.088388346
    %v1131 = vmul.f32 %v919, 0.088388346
    %v1132 = vmul.f32 %v925, 0.088388346
    %v1133 = vmul.f32 %v929, 0.088388346
    %v1134 = vmul.f32 %v935, 0.088388346
    %v1135 = vmul.f32 %v939, 0.088388346
    %v1136 = vpack.c.bf16 %v1105, %v1104
    %v1137 = vpack.c.bf16 %v1107, %v1106
    %v1138 = vpack.c.bf16 %v1109, %v1108
    %v1139 = vpack.c.bf16 %v1111, %v1110
    %v1140 = vpack.c.bf16 %v1113, %v1112
    %v1141 = vpack.c.bf16 %v1115, %v1114
    %v1142 = vpack.c.bf16 %v1117, %v1116
    %v1143 = vpack.c.bf16 %v1119, %v1118
    %v1144 = vpack.c.bf16 %v1121, %v1120
    %v1145 = vpack.c.bf16 %v1123, %v1122
    %v1146 = vpack.c.bf16 %v1125, %v1124
    %v1147 = vpack.c.bf16 %v1127, %v1126
    %v1148 = vpack.c.bf16 %v1129, %v1128
    %v1149 = vpack.c.bf16 %v1131, %v1130
    %v1150 = vpack.c.bf16 %v1133, %v1132
    %v1151 = vpack.c.bf16 %v1135, %v1134
    %v1152 = vpack.c.bf16 %v791, %v787
    %v1153 = vpack.c.bf16 %v801, %v797
    %v1154 = vpack.c.bf16 %v811, %v807
    %v1155 = vpack.c.bf16 %v821, %v817
    %v1156 = vpack.c.bf16 %v831, %v827
    %v1157 = vpack.c.bf16 %v841, %v837
    %v1158 = vpack.c.bf16 %v851, %v847
    %v1159 = vpack.c.bf16 %v861, %v857
    %v1160 = vpack.c.bf16 %v871, %v867
    %v1161 = vpack.c.bf16 %v881, %v877
    %v1162 = vpack.c.bf16 %v891, %v887
    %v1163 = vpack.c.bf16 %v901, %v897
    %v1164 = vpack.c.bf16 %v911, %v907
    %v1165 = vpack.c.bf16 %v921, %v917
    %v1166 = vpack.c.bf16 %v931, %v927
    %v1167 = vpack.c.bf16 %v941, %v937
    %v1168 = vpack.c.bf16 %v981, %v978
    %v1169 = vpack.c.bf16 %v989, %v986
    %v1170 = vpack.c.bf16 %v997, %v994
    %v1171 = vpack.c.bf16 %v1005, %v1002
    %v1172 = vpack.c.bf16 %v1013, %v1010
    %v1173 = vpack.c.bf16 %v1021, %v1018
    %v1174 = vpack.c.bf16 %v1029, %v1026
    %v1175 = vpack.c.bf16 %v1037, %v1034
    %v1176 = vpack.c.bf16 %v1045, %v1042
    %v1177 = vpack.c.bf16 %v1053, %v1050
    %v1178 = vpack.c.bf16 %v1061, %v1058
    %v1179 = vpack.c.bf16 %v1069, %v1066
    %v1180 = vpack.c.bf16 %v1077, %v1074
    %v1181 = vpack.c.bf16 %v1085, %v1082
    %v1182 = vpack.c.bf16 %v1093, %v1090
    %v1183 = vpack.c.bf16 %v1101, %v1098
    %v1184 = vlaneseq
    %v1185 = vshrl.u32 %v1184, 7
    %v1186 = vadd.s32 %v1185, 8
    %v1187 = vlaneseq
    %v1188 = vand.u32 %v1187, 127
    %vm1189 = vcmp.ge.s32.totalorder %v1185, %v1188
    %vm1190 = vcmp.ge.s32.totalorder %v1186, %v1188
    %vm1191 = vcmask 261120
    %v1193 = vsel %vm1191, %v1136, 0
    %v1196 = vsel %vm1191, %v1152, 0
    %1198 = vmatprep.subr.bf16.mxu0 0
    %1199 = vmatpush1.bf16.xpose.msra.mxu0 0
    %1200 = vmatprep.subr.bf16.mxu0 0
    %1201 = vmatpush1.bf16.xpose.msra.mxu0 0
    %1202 = vmatprep.subr.bf16.mxu0 0
    %1203 = vmatpush1.bf16.xpose.msra.mxu0 0
    %1204 = vmatprep.subr.bf16.mxu0 0
    %1205 = vmatpush1.bf16.xpose.msra.mxu0 0
    %1206 = vmatprep.subr.bf16.mxu0 0
    %1207 = vmatpush1.bf16.xpose.msra.mxu0 0
    %1208 = vmatprep.subr.bf16.mxu0 0
    %1209 = vmatpush1.bf16.xpose.msra.mxu0 0
    %1210 = vmatprep.subr.bf16.mxu0 0
    %1211 = vmatpush1.bf16.xpose.msra.mxu0 0
    %1212 = vmatprep.subr.bf16.mxu0 0
    %1213 = vmatpush1.bf16.xpose.msra.mxu0 %v1196
    %1214 = vmatprep.subr.bf16.mxu0 0
    %1215 = vmatpush2.bf16.xpose.msra.mxu0 0
    %1216 = vmatprep.subr.bf16.mxu0 0
    %1217 = vmatpush2.bf16.xpose.msra.mxu0 0
    %1218 = vmatprep.subr.bf16.mxu0 0
    %1219 = vmatpush2.bf16.xpose.msra.mxu0 0
    %1220 = vmatprep.subr.bf16.mxu0 0
    %1221 = vmatpush2.bf16.xpose.msra.mxu0 0
    %1222 = vmatprep.subr.bf16.mxu0 0
    %1223 = vmatpush2.bf16.xpose.msra.mxu0 0
    %1224 = vmatprep.subr.bf16.mxu0 0
    %1225 = vmatpush2.bf16.xpose.msra.mxu0 0
    %1226 = vmatprep.subr.bf16.mxu0 0
    %1227 = vmatpush2.bf16.xpose.msra.mxu0 0
    %1228 = vmatprep.subr.bf16.mxu0 0
    %1229 = vmatpush2.bf16.xpose.msra.mxu0 0
    %1230 = vmatprep.mubr.bf16.mxu0 0
    %1231 = vmatmul.mubr.bf16.gmra.mxu0 %v1193
    %v1232 = vpop.f32.mrf.mxu0
    %v1233 = vadd.f32 0.0, %v1232
    %v1234 = vpop.f32.mrf.mxu0
    %v1235 = vpop.f32.mrf.mxu0
    %v1236 = vadd.f32 0.0, %v1235
    %v1237 = vpop.f32.mrf.mxu0
    %1238 = vdwg.mxu0
    %v1240 = vsel %vm1191, %v1137, 0
    %v1243 = vsel %vm1191, %v1153, 0
    %1245 = vmatprep.subr.bf16.mxu0 0
    %1246 = vmatpush1.bf16.xpose.msra.mxu0 0
    %1247 = vmatprep.subr.bf16.mxu0 0
    %1248 = vmatpush1.bf16.xpose.msra.mxu0 0
    %1249 = vmatprep.subr.bf16.mxu0 0
    %1250 = vmatpush1.bf16.xpose.msra.mxu0 0
    %1251 = vmatprep.subr.bf16.mxu0 0
    %1252 = vmatpush1.bf16.xpose.msra.mxu0 0
    %1253 = vmatprep.subr.bf16.mxu0 0
    %1254 = vmatpush1.bf16.xpose.msra.mxu0 0
    %1255 = vmatprep.subr.bf16.mxu0 0
    %1256 = vmatpush1.bf16.xpose.msra.mxu0 0
    %1257 = vmatprep.subr.bf16.mxu0 0
    %1258 = vmatpush1.bf16.xpose.msra.mxu0 0
    %1259 = vmatprep.subr.bf16.mxu0 0
    %1260 = vmatpush1.bf16.xpose.msra.mxu0 %v1243
    %1261 = vmatprep.subr.bf16.mxu0 0
    %1262 = vmatpush2.bf16.xpose.msra.mxu0 0
    %1263 = vmatprep.subr.bf16.mxu0 0
    %1264 = vmatpush2.bf16.xpose.msra.mxu0 0
    %1265 = vmatprep.subr.bf16.mxu0 0
    %1266 = vmatpush2.bf16.xpose.msra.mxu0 0
    %1267 = vmatprep.subr.bf16.mxu0 0
    %1268 = vmatpush2.bf16.xpose.msra.mxu0 0
    %1269 = vmatprep.subr.bf16.mxu0 0
    %1270 = vmatpush2.bf16.xpose.msra.mxu0 0
    %1271 = vmatprep.subr.bf16.mxu0 0
    %1272 = vmatpush2.bf16.xpose.msra.mxu0 0
    %1273 = vmatprep.subr.bf16.mxu0 0
    %1274 = vmatpush2.bf16.xpose.msra.mxu0 0
    %1275 = vmatprep.subr.bf16.mxu0 0
    %1276 = vmatpush2.bf16.xpose.msra.mxu0 0
    %1277 = vmatprep.mubr.bf16.mxu0 0
    %1278 = vmatmul.mubr.bf16.gmra.mxu0 %v1240
    %v1279 = vpop.f32.mrf.mxu0
    %v1280 = vadd.f32 0.0, %v1279
    %v1281 = vpop.f32.mrf.mxu0
    %v1282 = vpop.f32.mrf.mxu0
    %v1283 = vadd.f32 0.0, %v1282
    %v1284 = vpop.f32.mrf.mxu0
    %1285 = vdwg.mxu0
    %v1287 = vsel %vm1191, %v1138, 0
    %v1290 = vsel %vm1191, %v1154, 0
    %1292 = vmatprep.subr.bf16.mxu0 0
    %1293 = vmatpush1.bf16.xpose.msra.mxu0 0
    %1294 = vmatprep.subr.bf16.mxu0 0
    %1295 = vmatpush1.bf16.xpose.msra.mxu0 0
    %1296 = vmatprep.subr.bf16.mxu0 0
    %1297 = vmatpush1.bf16.xpose.msra.mxu0 0
    %1298 = vmatprep.subr.bf16.mxu0 0
    %1299 = vmatpush1.bf16.xpose.msra.mxu0 0
    %1300 = vmatprep.subr.bf16.mxu0 0
    %1301 = vmatpush1.bf16.xpose.msra.mxu0 0
    %1302 = vmatprep.subr.bf16.mxu0 0
    %1303 = vmatpush1.bf16.xpose.msra.mxu0 0
    %1304 = vmatprep.subr.bf16.mxu0 0
    %1305 = vmatpush1.bf16.xpose.msra.mxu0 0
    %1306 = vmatprep.subr.bf16.mxu0 0
    %1307 = vmatpush1.bf16.xpose.msra.mxu0 %v1290
    %1308 = vmatprep.subr.bf16.mxu0 0
    %1309 = vmatpush2.bf16.xpose.msra.mxu0 0
    %1310 = vmatprep.subr.bf16.mxu0 0
    %1311 = vmatpush2.bf16.xpose.msra.mxu0 0
    %1312 = vmatprep.subr.bf16.mxu0 0
    %1313 = vmatpush2.bf16.xpose.msra.mxu0 0
    %1314 = vmatprep.subr.bf16.mxu0 0
    %1315 = vmatpush2.bf16.xpose.msra.mxu0 0
    %1316 = vmatprep.subr.bf16.mxu0 0
    %1317 = vmatpush2.bf16.xpose.msra.mxu0 0
    %1318 = vmatprep.subr.bf16.mxu0 0
    %1319 = vmatpush2.bf16.xpose.msra.mxu0 0
    %1320 = vmatprep.subr.bf16.mxu0 0
    %1321 = vmatpush2.bf16.xpose.msra.mxu0 0
    %1322 = vmatprep.subr.bf16.mxu0 0
    %1323 = vmatpush2.bf16.xpose.msra.mxu0 0
    %1324 = vmatprep.mubr.bf16.mxu0 0
    %1325 = vmatmul.mubr.bf16.gmra.mxu0 %v1287
    %v1326 = vpop.f32.mrf.mxu0
    %v1327 = vadd.f32 0.0, %v1326
    %v1328 = vpop.f32.mrf.mxu0
    %v1329 = vpop.f32.mrf.mxu0
    %v1330 = vadd.f32 0.0, %v1329
    %v1331 = vpop.f32.mrf.mxu0
    %1332 = vdwg.mxu0
    %v1334 = vsel %vm1191, %v1139, 0
    %v1337 = vsel %vm1191, %v1155, 0
    %1339 = vmatprep.subr.bf16.mxu0 0
    %1340 = vmatpush1.bf16.xpose.msra.mxu0 0
    %1341 = vmatprep.subr.bf16.mxu0 0
    %1342 = vmatpush1.bf16.xpose.msra.mxu0 0
    %1343 = vmatprep.subr.bf16.mxu0 0
    %1344 = vmatpush1.bf16.xpose.msra.mxu0 0
    %1345 = vmatprep.subr.bf16.mxu0 0
    %1346 = vmatpush1.bf16.xpose.msra.mxu0 0
    %1347 = vmatprep.subr.bf16.mxu0 0
    %1348 = vmatpush1.bf16.xpose.msra.mxu0 0
    %1349 = vmatprep.subr.bf16.mxu0 0
    %1350 = vmatpush1.bf16.xpose.msra.mxu0 0
    %1351 = vmatprep.subr.bf16.mxu0 0
    %1352 = vmatpush1.bf16.xpose.msra.mxu0 0
    %1353 = vmatprep.subr.bf16.mxu0 0
    %1354 = vmatpush1.bf16.xpose.msra.mxu0 %v1337
    %1355 = vmatprep.subr.bf16.mxu0 0
    %1356 = vmatpush2.bf16.xpose.msra.mxu0 0
    %1357 = vmatprep.subr.bf16.mxu0 0
    %1358 = vmatpush2.bf16.xpose.msra.mxu0 0
    %1359 = vmatprep.subr.bf16.mxu0 0
    %1360 = vmatpush2.bf16.xpose.msra.mxu0 0
    %1361 = vmatprep.subr.bf16.mxu0 0
    %1362 = vmatpush2.bf16.xpose.msra.mxu0 0
    %1363 = vmatprep.subr.bf16.mxu0 0
    %1364 = vmatpush2.bf16.xpose.msra.mxu0 0
    %1365 = vmatprep.subr.bf16.mxu0 0
    %1366 = vmatpush2.bf16.xpose.msra.mxu0 0
    %1367 = vmatprep.subr.bf16.mxu0 0
    %1368 = vmatpush2.bf16.xpose.msra.mxu0 0
    %1369 = vmatprep.subr.bf16.mxu0 0
    %1370 = vmatpush2.bf16.xpose.msra.mxu0 0
    %1371 = vmatprep.mubr.bf16.mxu0 0
    %1372 = vmatmul.mubr.bf16.gmra.mxu0 %v1334
    %v1373 = vpop.f32.mrf.mxu0
    %v1374 = vadd.f32 0.0, %v1373
    %v1375 = vpop.f32.mrf.mxu0
    %v1376 = vpop.f32.mrf.mxu0
    %v1377 = vadd.f32 0.0, %v1376
    %v1378 = vpop.f32.mrf.mxu0
    %1379 = vdwg.mxu0
    %v1381 = vsel %vm1191, %v1140, 0
    %v1384 = vsel %vm1191, %v1156, 0
    %1386 = vmatprep.subr.bf16.mxu0 0
    %1387 = vmatpush1.bf16.xpose.msra.mxu0 0
    %1388 = vmatprep.subr.bf16.mxu0 0
    %1389 = vmatpush1.bf16.xpose.msra.mxu0 0
    %1390 = vmatprep.subr.bf16.mxu0 0
    %1391 = vmatpush1.bf16.xpose.msra.mxu0 0
    %1392 = vmatprep.subr.bf16.mxu0 0
    %1393 = vmatpush1.bf16.xpose.msra.mxu0 0
    %1394 = vmatprep.subr.bf16.mxu0 0
    %1395 = vmatpush1.bf16.xpose.msra.mxu0 0
    %1396 = vmatprep.subr.bf16.mxu0 0
    %1397 = vmatpush1.bf16.xpose.msra.mxu0 0
    %1398 = vmatprep.subr.bf16.mxu0 0
    %1399 = vmatpush1.bf16.xpose.msra.mxu0 0
    %1400 = vmatprep.subr.bf16.mxu0 0
    %1401 = vmatpush1.bf16.xpose.msra.mxu0 %v1384
    %1402 = vmatprep.subr.bf16.mxu0 0
    %1403 = vmatpush2.bf16.xpose.msra.mxu0 0
    %1404 = vmatprep.subr.bf16.mxu0 0
    %1405 = vmatpush2.bf16.xpose.msra.mxu0 0
    %1406 = vmatprep.subr.bf16.mxu0 0
    %1407 = vmatpush2.bf16.xpose.msra.mxu0 0
    %1408 = vmatprep.subr.bf16.mxu0 0
    %1409 = vmatpush2.bf16.xpose.msra.mxu0 0
    %1410 = vmatprep.subr.bf16.mxu0 0
    %1411 = vmatpush2.bf16.xpose.msra.mxu0 0
    %1412 = vmatprep.subr.bf16.mxu0 0
    %1413 = vmatpush2.bf16.xpose.msra.mxu0 0
    %1414 = vmatprep.subr.bf16.mxu0 0
    %1415 = vmatpush2.bf16.xpose.msra.mxu0 0
    %1416 = vmatprep.subr.bf16.mxu0 0
    %1417 = vmatpush2.bf16.xpose.msra.mxu0 0
    %1418 = vmatprep.mubr.bf16.mxu0 0
    %1419 = vmatmul.mubr.bf16.gmra.mxu0 %v1381
    %v1420 = vpop.f32.mrf.mxu0
    %v1421 = vadd.f32 0.0, %v1420
    %v1422 = vpop.f32.mrf.mxu0
    %v1423 = vpop.f32.mrf.mxu0
    %v1424 = vadd.f32 0.0, %v1423
    %v1425 = vpop.f32.mrf.mxu0
    %1426 = vdwg.mxu0
    %v1428 = vsel %vm1191, %v1141, 0
    %v1431 = vsel %vm1191, %v1157, 0
    %1433 = vmatprep.subr.bf16.mxu0 0
    %1434 = vmatpush1.bf16.xpose.msra.mxu0 0
    %1435 = vmatprep.subr.bf16.mxu0 0
    %1436 = vmatpush1.bf16.xpose.msra.mxu0 0
    %1437 = vmatprep.subr.bf16.mxu0 0
    %1438 = vmatpush1.bf16.xpose.msra.mxu0 0
    %1439 = vmatprep.subr.bf16.mxu0 0
    %1440 = vmatpush1.bf16.xpose.msra.mxu0 0
    %1441 = vmatprep.subr.bf16.mxu0 0
    %1442 = vmatpush1.bf16.xpose.msra.mxu0 0
    %1443 = vmatprep.subr.bf16.mxu0 0
    %1444 = vmatpush1.bf16.xpose.msra.mxu0 0
    %1445 = vmatprep.subr.bf16.mxu0 0
    %1446 = vmatpush1.bf16.xpose.msra.mxu0 0
    %1447 = vmatprep.subr.bf16.mxu0 0
    %1448 = vmatpush1.bf16.xpose.msra.mxu0 %v1431
    %1449 = vmatprep.subr.bf16.mxu0 0
    %1450 = vmatpush2.bf16.xpose.msra.mxu0 0
    %1451 = vmatprep.subr.bf16.mxu0 0
    %1452 = vmatpush2.bf16.xpose.msra.mxu0 0
    %1453 = vmatprep.subr.bf16.mxu0 0
    %1454 = vmatpush2.bf16.xpose.msra.mxu0 0
    %1455 = vmatprep.subr.bf16.mxu0 0
    %1456 = vmatpush2.bf16.xpose.msra.mxu0 0
    %1457 = vmatprep.subr.bf16.mxu0 0
    %1458 = vmatpush2.bf16.xpose.msra.mxu0 0
    %1459 = vmatprep.subr.bf16.mxu0 0
    %1460 = vmatpush2.bf16.xpose.msra.mxu0 0
    %1461 = vmatprep.subr.bf16.mxu0 0
    %1462 = vmatpush2.bf16.xpose.msra.mxu0 0
    %1463 = vmatprep.subr.bf16.mxu0 0
    %1464 = vmatpush2.bf16.xpose.msra.mxu0 0
    %1465 = vmatprep.mubr.bf16.mxu0 0
    %1466 = vmatmul.mubr.bf16.gmra.mxu0 %v1428
    %v1467 = vpop.f32.mrf.mxu0
    %v1468 = vadd.f32 0.0, %v1467
    %v1469 = vpop.f32.mrf.mxu0
    %v1470 = vpop.f32.mrf.mxu0
    %v1471 = vadd.f32 0.0, %v1470
    %v1472 = vpop.f32.mrf.mxu0
    %1473 = vdwg.mxu0
    %v1475 = vsel %vm1191, %v1142, 0
    %v1478 = vsel %vm1191, %v1158, 0
    %1480 = vmatprep.subr.bf16.mxu0 0
    %1481 = vmatpush1.bf16.xpose.msra.mxu0 0
    %1482 = vmatprep.subr.bf16.mxu0 0
    %1483 = vmatpush1.bf16.xpose.msra.mxu0 0
    %1484 = vmatprep.subr.bf16.mxu0 0
    %1485 = vmatpush1.bf16.xpose.msra.mxu0 0
    %1486 = vmatprep.subr.bf16.mxu0 0
    %1487 = vmatpush1.bf16.xpose.msra.mxu0 0
    %1488 = vmatprep.subr.bf16.mxu0 0
    %1489 = vmatpush1.bf16.xpose.msra.mxu0 0
    %1490 = vmatprep.subr.bf16.mxu0 0
    %1491 = vmatpush1.bf16.xpose.msra.mxu0 0
    %1492 = vmatprep.subr.bf16.mxu0 0
    %1493 = vmatpush1.bf16.xpose.msra.mxu0 0
    %1494 = vmatprep.subr.bf16.mxu0 0
    %1495 = vmatpush1.bf16.xpose.msra.mxu0 %v1478
    %1496 = vmatprep.subr.bf16.mxu0 0
    %1497 = vmatpush2.bf16.xpose.msra.mxu0 0
    %1498 = vmatprep.subr.bf16.mxu0 0
    %1499 = vmatpush2.bf16.xpose.msra.mxu0 0
    %1500 = vmatprep.subr.bf16.mxu0 0
    %1501 = vmatpush2.bf16.xpose.msra.mxu0 0
    %1502 = vmatprep.subr.bf16.mxu0 0
    %1503 = vmatpush2.bf16.xpose.msra.mxu0 0
    %1504 = vmatprep.subr.bf16.mxu0 0
    %1505 = vmatpush2.bf16.xpose.msra.mxu0 0
    %1506 = vmatprep.subr.bf16.mxu0 0
    %1507 = vmatpush2.bf16.xpose.msra.mxu0 0
    %1508 = vmatprep.subr.bf16.mxu0 0
    %1509 = vmatpush2.bf16.xpose.msra.mxu0 0
    %1510 = vmatprep.subr.bf16.mxu0 0
    %1511 = vmatpush2.bf16.xpose.msra.mxu0 0
    %1512 = vmatprep.mubr.bf16.mxu0 0
    %1513 = vmatmul.mubr.bf16.gmra.mxu0 %v1475
    %v1514 = vpop.f32.mrf.mxu0
    %v1515 = vadd.f32 0.0, %v1514
    %v1516 = vpop.f32.mrf.mxu0
    %v1517 = vpop.f32.mrf.mxu0
    %v1518 = vadd.f32 0.0, %v1517
    %v1519 = vpop.f32.mrf.mxu0
    %1520 = vdwg.mxu0
    %v1522 = vsel %vm1191, %v1143, 0
    %v1525 = vsel %vm1191, %v1159, 0
    %1527 = vmatprep.subr.bf16.mxu0 0
    %1528 = vmatpush1.bf16.xpose.msra.mxu0 0
    %1529 = vmatprep.subr.bf16.mxu0 0
    %1530 = vmatpush1.bf16.xpose.msra.mxu0 0
    %1531 = vmatprep.subr.bf16.mxu0 0
    %1532 = vmatpush1.bf16.xpose.msra.mxu0 0
    %1533 = vmatprep.subr.bf16.mxu0 0
    %1534 = vmatpush1.bf16.xpose.msra.mxu0 0
    %1535 = vmatprep.subr.bf16.mxu0 0
    %1536 = vmatpush1.bf16.xpose.msra.mxu0 0
    %1537 = vmatprep.subr.bf16.mxu0 0
    %1538 = vmatpush1.bf16.xpose.msra.mxu0 0
    %1539 = vmatprep.subr.bf16.mxu0 0
    %1540 = vmatpush1.bf16.xpose.msra.mxu0 0
    %1541 = vmatprep.subr.bf16.mxu0 0
    %1542 = vmatpush1.bf16.xpose.msra.mxu0 %v1525
    %1543 = vmatprep.subr.bf16.mxu0 0
    %1544 = vmatpush2.bf16.xpose.msra.mxu0 0
    %1545 = vmatprep.subr.bf16.mxu0 0
    %1546 = vmatpush2.bf16.xpose.msra.mxu0 0
    %1547 = vmatprep.subr.bf16.mxu0 0
    %1548 = vmatpush2.bf16.xpose.msra.mxu0 0
    %1549 = vmatprep.subr.bf16.mxu0 0
    %1550 = vmatpush2.bf16.xpose.msra.mxu0 0
    %1551 = vmatprep.subr.bf16.mxu0 0
    %1552 = vmatpush2.bf16.xpose.msra.mxu0 0
    %1553 = vmatprep.subr.bf16.mxu0 0
    %1554 = vmatpush2.bf16.xpose.msra.mxu0 0
    %1555 = vmatprep.subr.bf16.mxu0 0
    %1556 = vmatpush2.bf16.xpose.msra.mxu0 0
    %1557 = vmatprep.subr.bf16.mxu0 0
    %1558 = vmatpush2.bf16.xpose.msra.mxu0 0
    %1559 = vmatprep.mubr.bf16.mxu0 0
    %1560 = vmatmul.mubr.bf16.gmra.mxu0 %v1522
    %v1561 = vpop.f32.mrf.mxu0
    %v1562 = vadd.f32 0.0, %v1561
    %v1563 = vpop.f32.mrf.mxu0
    %v1564 = vpop.f32.mrf.mxu0
    %v1565 = vadd.f32 0.0, %v1564
    %v1566 = vpop.f32.mrf.mxu0
    %1567 = vdwg.mxu0
    %v1569 = vsel %vm1191, %v1144, 0
    %v1572 = vsel %vm1191, %v1160, 0
    %1574 = vmatprep.subr.bf16.mxu0 0
    %1575 = vmatpush1.bf16.xpose.msra.mxu0 0
    %1576 = vmatprep.subr.bf16.mxu0 0
    %1577 = vmatpush1.bf16.xpose.msra.mxu0 0
    %1578 = vmatprep.subr.bf16.mxu0 0
    %1579 = vmatpush1.bf16.xpose.msra.mxu0 0
    %1580 = vmatprep.subr.bf16.mxu0 0
    %1581 = vmatpush1.bf16.xpose.msra.mxu0 0
    %1582 = vmatprep.subr.bf16.mxu0 0
    %1583 = vmatpush1.bf16.xpose.msra.mxu0 0
    %1584 = vmatprep.subr.bf16.mxu0 0
    %1585 = vmatpush1.bf16.xpose.msra.mxu0 0
    %1586 = vmatprep.subr.bf16.mxu0 0
    %1587 = vmatpush1.bf16.xpose.msra.mxu0 0
    %1588 = vmatprep.subr.bf16.mxu0 0
    %1589 = vmatpush1.bf16.xpose.msra.mxu0 %v1572
    %1590 = vmatprep.subr.bf16.mxu0 0
    %1591 = vmatpush2.bf16.xpose.msra.mxu0 0
    %1592 = vmatprep.subr.bf16.mxu0 0
    %1593 = vmatpush2.bf16.xpose.msra.mxu0 0
    %1594 = vmatprep.subr.bf16.mxu0 0
    %1595 = vmatpush2.bf16.xpose.msra.mxu0 0
    %1596 = vmatprep.subr.bf16.mxu0 0
    %1597 = vmatpush2.bf16.xpose.msra.mxu0 0
    %1598 = vmatprep.subr.bf16.mxu0 0
    %1599 = vmatpush2.bf16.xpose.msra.mxu0 0
    %1600 = vmatprep.subr.bf16.mxu0 0
    %1601 = vmatpush2.bf16.xpose.msra.mxu0 0
    %1602 = vmatprep.subr.bf16.mxu0 0
    %1603 = vmatpush2.bf16.xpose.msra.mxu0 0
    %1604 = vmatprep.subr.bf16.mxu0 0
    %1605 = vmatpush2.bf16.xpose.msra.mxu0 0
    %1606 = vmatprep.mubr.bf16.mxu0 0
    %1607 = vmatmul.mubr.bf16.gmra.mxu0 %v1569
    %v1608 = vpop.f32.mrf.mxu0
    %v1609 = vadd.f32 0.0, %v1608
    %v1610 = vpop.f32.mrf.mxu0
    %v1611 = vpop.f32.mrf.mxu0
    %v1612 = vadd.f32 0.0, %v1611
    %v1613 = vpop.f32.mrf.mxu0
    %1614 = vdwg.mxu0
    %v1616 = vsel %vm1191, %v1145, 0
    %v1619 = vsel %vm1191, %v1161, 0
    %1621 = vmatprep.subr.bf16.mxu0 0
    %1622 = vmatpush1.bf16.xpose.msra.mxu0 0
    %1623 = vmatprep.subr.bf16.mxu0 0
    %1624 = vmatpush1.bf16.xpose.msra.mxu0 0
    %1625 = vmatprep.subr.bf16.mxu0 0
    %1626 = vmatpush1.bf16.xpose.msra.mxu0 0
    %1627 = vmatprep.subr.bf16.mxu0 0
    %1628 = vmatpush1.bf16.xpose.msra.mxu0 0
    %1629 = vmatprep.subr.bf16.mxu0 0
    %1630 = vmatpush1.bf16.xpose.msra.mxu0 0
    %1631 = vmatprep.subr.bf16.mxu0 0
    %1632 = vmatpush1.bf16.xpose.msra.mxu0 0
    %1633 = vmatprep.subr.bf16.mxu0 0
    %1634 = vmatpush1.bf16.xpose.msra.mxu0 0
    %1635 = vmatprep.subr.bf16.mxu0 0
    %1636 = vmatpush1.bf16.xpose.msra.mxu0 %v1619
    %1637 = vmatprep.subr.bf16.mxu0 0
    %1638 = vmatpush2.bf16.xpose.msra.mxu0 0
    %1639 = vmatprep.subr.bf16.mxu0 0
    %1640 = vmatpush2.bf16.xpose.msra.mxu0 0
    %1641 = vmatprep.subr.bf16.mxu0 0
    %1642 = vmatpush2.bf16.xpose.msra.mxu0 0
    %1643 = vmatprep.subr.bf16.mxu0 0
    %1644 = vmatpush2.bf16.xpose.msra.mxu0 0
    %1645 = vmatprep.subr.bf16.mxu0 0
    %1646 = vmatpush2.bf16.xpose.msra.mxu0 0
    %1647 = vmatprep.subr.bf16.mxu0 0
    %1648 = vmatpush2.bf16.xpose.msra.mxu0 0
    %1649 = vmatprep.subr.bf16.mxu0 0
    %1650 = vmatpush2.bf16.xpose.msra.mxu0 0
    %1651 = vmatprep.subr.bf16.mxu0 0
    %1652 = vmatpush2.bf16.xpose.msra.mxu0 0
    %1653 = vmatprep.mubr.bf16.mxu0 0
    %1654 = vmatmul.mubr.bf16.gmra.mxu0 %v1616
    %v1655 = vpop.f32.mrf.mxu0
    %v1656 = vadd.f32 0.0, %v1655
    %v1657 = vpop.f32.mrf.mxu0
    %v1658 = vpop.f32.mrf.mxu0
    %v1659 = vadd.f32 0.0, %v1658
    %v1660 = vpop.f32.mrf.mxu0
    %1661 = vdwg.mxu0
    %v1663 = vsel %vm1191, %v1146, 0
    %v1666 = vsel %vm1191, %v1162, 0
    %1668 = vmatprep.subr.bf16.mxu0 0
    %1669 = vmatpush1.bf16.xpose.msra.mxu0 0
    %1670 = vmatprep.subr.bf16.mxu0 0
    %1671 = vmatpush1.bf16.xpose.msra.mxu0 0
    %1672 = vmatprep.subr.bf16.mxu0 0
    %1673 = vmatpush1.bf16.xpose.msra.mxu0 0
    %1674 = vmatprep.subr.bf16.mxu0 0
    %1675 = vmatpush1.bf16.xpose.msra.mxu0 0
    %1676 = vmatprep.subr.bf16.mxu0 0
    %1677 = vmatpush1.bf16.xpose.msra.mxu0 0
    %1678 = vmatprep.subr.bf16.mxu0 0
    %1679 = vmatpush1.bf16.xpose.msra.mxu0 0
    %1680 = vmatprep.subr.bf16.mxu0 0
    %1681 = vmatpush1.bf16.xpose.msra.mxu0 0
    %1682 = vmatprep.subr.bf16.mxu0 0
    %1683 = vmatpush1.bf16.xpose.msra.mxu0 %v1666
    %1684 = vmatprep.subr.bf16.mxu0 0
    %1685 = vmatpush2.bf16.xpose.msra.mxu0 0
    %1686 = vmatprep.subr.bf16.mxu0 0
    %1687 = vmatpush2.bf16.xpose.msra.mxu0 0
    %1688 = vmatprep.subr.bf16.mxu0 0
    %1689 = vmatpush2.bf16.xpose.msra.mxu0 0
    %1690 = vmatprep.subr.bf16.mxu0 0
    %1691 = vmatpush2.bf16.xpose.msra.mxu0 0
    %1692 = vmatprep.subr.bf16.mxu0 0
    %1693 = vmatpush2.bf16.xpose.msra.mxu0 0
    %1694 = vmatprep.subr.bf16.mxu0 0
    %1695 = vmatpush2.bf16.xpose.msra.mxu0 0
    %1696 = vmatprep.subr.bf16.mxu0 0
    %1697 = vmatpush2.bf16.xpose.msra.mxu0 0
    %1698 = vmatprep.subr.bf16.mxu0 0
    %1699 = vmatpush2.bf16.xpose.msra.mxu0 0
    %1700 = vmatprep.mubr.bf16.mxu0 0
    %1701 = vmatmul.mubr.bf16.gmra.mxu0 %v1663
    %v1702 = vpop.f32.mrf.mxu0
    %v1703 = vadd.f32 0.0, %v1702
    %v1704 = vpop.f32.mrf.mxu0
    %v1705 = vpop.f32.mrf.mxu0
    %v1706 = vadd.f32 0.0, %v1705
    %v1707 = vpop.f32.mrf.mxu0
    %1708 = vdwg.mxu0
    %v1710 = vsel %vm1191, %v1147, 0
    %v1713 = vsel %vm1191, %v1163, 0
    %1715 = vmatprep.subr.bf16.mxu0 0
    %1716 = vmatpush1.bf16.xpose.msra.mxu0 0
    %1717 = vmatprep.subr.bf16.mxu0 0
    %1718 = vmatpush1.bf16.xpose.msra.mxu0 0
    %1719 = vmatprep.subr.bf16.mxu0 0
    %1720 = vmatpush1.bf16.xpose.msra.mxu0 0
    %1721 = vmatprep.subr.bf16.mxu0 0
    %1722 = vmatpush1.bf16.xpose.msra.mxu0 0
    %1723 = vmatprep.subr.bf16.mxu0 0
    %1724 = vmatpush1.bf16.xpose.msra.mxu0 0
    %1725 = vmatprep.subr.bf16.mxu0 0
    %1726 = vmatpush1.bf16.xpose.msra.mxu0 0
    %1727 = vmatprep.subr.bf16.mxu0 0
    %1728 = vmatpush1.bf16.xpose.msra.mxu0 0
    %1729 = vmatprep.subr.bf16.mxu0 0
    %1730 = vmatpush1.bf16.xpose.msra.mxu0 %v1713
    %1731 = vmatprep.subr.bf16.mxu0 0
    %1732 = vmatpush2.bf16.xpose.msra.mxu0 0
    %1733 = vmatprep.subr.bf16.mxu0 0
    %1734 = vmatpush2.bf16.xpose.msra.mxu0 0
    %1735 = vmatprep.subr.bf16.mxu0 0
    %1736 = vmatpush2.bf16.xpose.msra.mxu0 0
    %1737 = vmatprep.subr.bf16.mxu0 0
    %1738 = vmatpush2.bf16.xpose.msra.mxu0 0
    %1739 = vmatprep.subr.bf16.mxu0 0
    %1740 = vmatpush2.bf16.xpose.msra.mxu0 0
    %1741 = vmatprep.subr.bf16.mxu0 0
    %1742 = vmatpush2.bf16.xpose.msra.mxu0 0
    %1743 = vmatprep.subr.bf16.mxu0 0
    %1744 = vmatpush2.bf16.xpose.msra.mxu0 0
    %1745 = vmatprep.subr.bf16.mxu0 0
    %1746 = vmatpush2.bf16.xpose.msra.mxu0 0
    %1747 = vmatprep.mubr.bf16.mxu0 0
    %1748 = vmatmul.mubr.bf16.gmra.mxu0 %v1710
    %v1749 = vpop.f32.mrf.mxu0
    %v1750 = vadd.f32 0.0, %v1749
    %v1751 = vpop.f32.mrf.mxu0
    %v1752 = vpop.f32.mrf.mxu0
    %v1753 = vadd.f32 0.0, %v1752
    %v1754 = vpop.f32.mrf.mxu0
    %1755 = vdwg.mxu0
    %v1757 = vsel %vm1191, %v1148, 0
    %v1760 = vsel %vm1191, %v1164, 0
    %1762 = vmatprep.subr.bf16.mxu0 0
    %1763 = vmatpush1.bf16.xpose.msra.mxu0 0
    %1764 = vmatprep.subr.bf16.mxu0 0
    %1765 = vmatpush1.bf16.xpose.msra.mxu0 0
    %1766 = vmatprep.subr.bf16.mxu0 0
    %1767 = vmatpush1.bf16.xpose.msra.mxu0 0
    %1768 = vmatprep.subr.bf16.mxu0 0
    %1769 = vmatpush1.bf16.xpose.msra.mxu0 0
    %1770 = vmatprep.subr.bf16.mxu0 0
    %1771 = vmatpush1.bf16.xpose.msra.mxu0 0
    %1772 = vmatprep.subr.bf16.mxu0 0
    %1773 = vmatpush1.bf16.xpose.msra.mxu0 0
    %1774 = vmatprep.subr.bf16.mxu0 0
    %1775 = vmatpush1.bf16.xpose.msra.mxu0 0
    %1776 = vmatprep.subr.bf16.mxu0 0
    %1777 = vmatpush1.bf16.xpose.msra.mxu0 %v1760
    %1778 = vmatprep.subr.bf16.mxu0 0
    %1779 = vmatpush2.bf16.xpose.msra.mxu0 0
    %1780 = vmatprep.subr.bf16.mxu0 0
    %1781 = vmatpush2.bf16.xpose.msra.mxu0 0
    %1782 = vmatprep.subr.bf16.mxu0 0
    %1783 = vmatpush2.bf16.xpose.msra.mxu0 0
    %1784 = vmatprep.subr.bf16.mxu0 0
    %1785 = vmatpush2.bf16.xpose.msra.mxu0 0
    %1786 = vmatprep.subr.bf16.mxu0 0
    %1787 = vmatpush2.bf16.xpose.msra.mxu0 0
    %1788 = vmatprep.subr.bf16.mxu0 0
    %1789 = vmatpush2.bf16.xpose.msra.mxu0 0
    %1790 = vmatprep.subr.bf16.mxu0 0
    %1791 = vmatpush2.bf16.xpose.msra.mxu0 0
    %1792 = vmatprep.subr.bf16.mxu0 0
    %1793 = vmatpush2.bf16.xpose.msra.mxu0 0
    %1794 = vmatprep.mubr.bf16.mxu0 0
    %1795 = vmatmul.mubr.bf16.gmra.mxu0 %v1757
    %v1796 = vpop.f32.mrf.mxu0
    %v1797 = vadd.f32 0.0, %v1796
    %v1798 = vpop.f32.mrf.mxu0
    %v1799 = vpop.f32.mrf.mxu0
    %v1800 = vadd.f32 0.0, %v1799
    %v1801 = vpop.f32.mrf.mxu0
    %1802 = vdwg.mxu0
    %v1804 = vsel %vm1191, %v1149, 0
    %v1807 = vsel %vm1191, %v1165, 0
    %1809 = vmatprep.subr.bf16.mxu0 0
    %1810 = vmatpush1.bf16.xpose.msra.mxu0 0
    %1811 = vmatprep.subr.bf16.mxu0 0
    %1812 = vmatpush1.bf16.xpose.msra.mxu0 0
    %1813 = vmatprep.subr.bf16.mxu0 0
    %1814 = vmatpush1.bf16.xpose.msra.mxu0 0
    %1815 = vmatprep.subr.bf16.mxu0 0
    %1816 = vmatpush1.bf16.xpose.msra.mxu0 0
    %1817 = vmatprep.subr.bf16.mxu0 0
    %1818 = vmatpush1.bf16.xpose.msra.mxu0 0
    %1819 = vmatprep.subr.bf16.mxu0 0
    %1820 = vmatpush1.bf16.xpose.msra.mxu0 0
    %1821 = vmatprep.subr.bf16.mxu0 0
    %1822 = vmatpush1.bf16.xpose.msra.mxu0 0
    %1823 = vmatprep.subr.bf16.mxu0 0
    %1824 = vmatpush1.bf16.xpose.msra.mxu0 %v1807
    %1825 = vmatprep.subr.bf16.mxu0 0
    %1826 = vmatpush2.bf16.xpose.msra.mxu0 0
    %1827 = vmatprep.subr.bf16.mxu0 0
    %1828 = vmatpush2.bf16.xpose.msra.mxu0 0
    %1829 = vmatprep.subr.bf16.mxu0 0
    %1830 = vmatpush2.bf16.xpose.msra.mxu0 0
    %1831 = vmatprep.subr.bf16.mxu0 0
    %1832 = vmatpush2.bf16.xpose.msra.mxu0 0
    %1833 = vmatprep.subr.bf16.mxu0 0
    %1834 = vmatpush2.bf16.xpose.msra.mxu0 0
    %1835 = vmatprep.subr.bf16.mxu0 0
    %1836 = vmatpush2.bf16.xpose.msra.mxu0 0
    %1837 = vmatprep.subr.bf16.mxu0 0
    %1838 = vmatpush2.bf16.xpose.msra.mxu0 0
    %1839 = vmatprep.subr.bf16.mxu0 0
    %1840 = vmatpush2.bf16.xpose.msra.mxu0 0
    %1841 = vmatprep.mubr.bf16.mxu0 0
    %1842 = vmatmul.mubr.bf16.gmra.mxu0 %v1804
    %v1843 = vpop.f32.mrf.mxu0
    %v1844 = vadd.f32 0.0, %v1843
    %v1845 = vpop.f32.mrf.mxu0
    %v1846 = vpop.f32.mrf.mxu0
    %v1847 = vadd.f32 0.0, %v1846
    %v1848 = vpop.f32.mrf.mxu0
    %1849 = vdwg.mxu0
    %v1851 = vsel %vm1191, %v1150, 0
    %v1854 = vsel %vm1191, %v1166, 0
    %1856 = vmatprep.subr.bf16.mxu0 0
    %1857 = vmatpush1.bf16.xpose.msra.mxu0 0
    %1858 = vmatprep.subr.bf16.mxu0 0
    %1859 = vmatpush1.bf16.xpose.msra.mxu0 0
    %1860 = vmatprep.subr.bf16.mxu0 0
    %1861 = vmatpush1.bf16.xpose.msra.mxu0 0
    %1862 = vmatprep.subr.bf16.mxu0 0
    %1863 = vmatpush1.bf16.xpose.msra.mxu0 0
    %1864 = vmatprep.subr.bf16.mxu0 0
    %1865 = vmatpush1.bf16.xpose.msra.mxu0 0
    %1866 = vmatprep.subr.bf16.mxu0 0
    %1867 = vmatpush1.bf16.xpose.msra.mxu0 0
    %1868 = vmatprep.subr.bf16.mxu0 0
    %1869 = vmatpush1.bf16.xpose.msra.mxu0 0
    %1870 = vmatprep.subr.bf16.mxu0 0
    %1871 = vmatpush1.bf16.xpose.msra.mxu0 %v1854
    %1872 = vmatprep.subr.bf16.mxu0 0
    %1873 = vmatpush2.bf16.xpose.msra.mxu0 0
    %1874 = vmatprep.subr.bf16.mxu0 0
    %1875 = vmatpush2.bf16.xpose.msra.mxu0 0
    %1876 = vmatprep.subr.bf16.mxu0 0
    %1877 = vmatpush2.bf16.xpose.msra.mxu0 0
    %1878 = vmatprep.subr.bf16.mxu0 0
    %1879 = vmatpush2.bf16.xpose.msra.mxu0 0
    %1880 = vmatprep.subr.bf16.mxu0 0
    %1881 = vmatpush2.bf16.xpose.msra.mxu0 0
    %1882 = vmatprep.subr.bf16.mxu0 0
    %1883 = vmatpush2.bf16.xpose.msra.mxu0 0
    %1884 = vmatprep.subr.bf16.mxu0 0
    %1885 = vmatpush2.bf16.xpose.msra.mxu0 0
    %1886 = vmatprep.subr.bf16.mxu0 0
    %1887 = vmatpush2.bf16.xpose.msra.mxu0 0
    %1888 = vmatprep.mubr.bf16.mxu0 0
    %1889 = vmatmul.mubr.bf16.gmra.mxu0 %v1851
    %v1890 = vpop.f32.mrf.mxu0
    %v1891 = vadd.f32 0.0, %v1890
    %v1892 = vpop.f32.mrf.mxu0
    %v1893 = vpop.f32.mrf.mxu0
    %v1894 = vadd.f32 0.0, %v1893
    %v1895 = vpop.f32.mrf.mxu0
    %1896 = vdwg.mxu0
    %v1898 = vsel %vm1191, %v1151, 0
    %v1901 = vsel %vm1191, %v1167, 0
    %1903 = vmatprep.subr.bf16.mxu0 0
    %1904 = vmatpush1.bf16.xpose.msra.mxu0 0
    %1905 = vmatprep.subr.bf16.mxu0 0
    %1906 = vmatpush1.bf16.xpose.msra.mxu0 0
    %1907 = vmatprep.subr.bf16.mxu0 0
    %1908 = vmatpush1.bf16.xpose.msra.mxu0 0
    %1909 = vmatprep.subr.bf16.mxu0 0
    %1910 = vmatpush1.bf16.xpose.msra.mxu0 0
    %1911 = vmatprep.subr.bf16.mxu0 0
    %1912 = vmatpush1.bf16.xpose.msra.mxu0 0
    %1913 = vmatprep.subr.bf16.mxu0 0
    %1914 = vmatpush1.bf16.xpose.msra.mxu0 0
    %1915 = vmatprep.subr.bf16.mxu0 0
    %1916 = vmatpush1.bf16.xpose.msra.mxu0 0
    %1917 = vmatprep.subr.bf16.mxu0 0
    %1918 = vmatpush1.bf16.xpose.msra.mxu0 %v1901
    %1919 = vmatprep.subr.bf16.mxu0 0
    %1920 = vmatpush2.bf16.xpose.msra.mxu0 0
    %1921 = vmatprep.subr.bf16.mxu0 0
    %1922 = vmatpush2.bf16.xpose.msra.mxu0 0
    %1923 = vmatprep.subr.bf16.mxu0 0
    %1924 = vmatpush2.bf16.xpose.msra.mxu0 0
    %1925 = vmatprep.subr.bf16.mxu0 0
    %1926 = vmatpush2.bf16.xpose.msra.mxu0 0
    %1927 = vmatprep.subr.bf16.mxu0 0
    %1928 = vmatpush2.bf16.xpose.msra.mxu0 0
    %1929 = vmatprep.subr.bf16.mxu0 0
    %1930 = vmatpush2.bf16.xpose.msra.mxu0 0
    %1931 = vmatprep.subr.bf16.mxu0 0
    %1932 = vmatpush2.bf16.xpose.msra.mxu0 0
    %1933 = vmatprep.subr.bf16.mxu0 0
    %1934 = vmatpush2.bf16.xpose.msra.mxu0 0
    %1935 = vmatprep.mubr.bf16.mxu0 0
    %1936 = vmatmul.mubr.bf16.gmra.mxu0 %v1898
    %v1937 = vpop.f32.mrf.mxu0
    %v1938 = vadd.f32 0.0, %v1937
    %v1939 = vpop.f32.mrf.mxu0
    %v1940 = vpop.f32.mrf.mxu0
    %v1941 = vadd.f32 0.0, %v1940
    %v1942 = vpop.f32.mrf.mxu0
    %1943 = vdwg.mxu0
    %v1944 = vsel %vm1189, 1, 0
    %v1945 = vsel %vm1190, 1, 0
    %vm1946 = vcmp.eq.s32.totalorder %v1944, 1
    %vm1947 = vcmp.eq.s32.totalorder %v1945, 1
    %v1948 = vsel %vm1946, %v1233, -1e+30
    %v1949 = vsel %vm1947, %v1236, -1e+30
    %v1950 = vsel %vm1946, %v1280, -1e+30
    %v1951 = vsel %vm1947, %v1283, -1e+30
    %v1952 = vsel %vm1946, %v1327, -1e+30
    %v1953 = vsel %vm1947, %v1330, -1e+30
    %v1954 = vsel %vm1946, %v1374, -1e+30
    %v1955 = vsel %vm1947, %v1377, -1e+30
    %v1956 = vsel %vm1946, %v1421, -1e+30
    %v1957 = vsel %vm1947, %v1424, -1e+30
    %v1958 = vsel %vm1946, %v1468, -1e+30
    %v1959 = vsel %vm1947, %v1471, -1e+30
    %v1960 = vsel %vm1946, %v1515, -1e+30
    %v1961 = vsel %vm1947, %v1518, -1e+30
    %v1962 = vsel %vm1946, %v1562, -1e+30
    %v1963 = vsel %vm1947, %v1565, -1e+30
    %v1964 = vsel %vm1946, %v1609, -1e+30
    %v1965 = vsel %vm1947, %v1612, -1e+30
    %v1966 = vsel %vm1946, %v1656, -1e+30
    %v1967 = vsel %vm1947, %v1659, -1e+30
    %v1968 = vsel %vm1946, %v1703, -1e+30
    %v1969 = vsel %vm1947, %v1706, -1e+30
    %v1970 = vsel %vm1946, %v1750, -1e+30
    %v1971 = vsel %vm1947, %v1753, -1e+30
    %v1972 = vsel %vm1946, %v1797, -1e+30
    %v1973 = vsel %vm1947, %v1800, -1e+30
    %v1974 = vsel %vm1946, %v1844, -1e+30
    %v1975 = vsel %vm1947, %v1847, -1e+30
    %v1976 = vsel %vm1946, %v1891, -1e+30
    %v1977 = vsel %vm1947, %v1894, -1e+30
    %v1978 = vsel %vm1946, %v1938, -1e+30
    %v1979 = vsel %vm1947, %v1941, -1e+30
    %vm1980 = vcmask 130048
    %v1981 = vsel %vm1980, %v1948, -inf
    %1982 = vmax.xlane.f32.xlu0 %v1981
    %v1983 = vpop.xlane.xlu0 %1982
    %v1984 = vsel %vm1980, %v1949, -inf
    %1985 = vmax.xlane.f32.xlu0 %v1984
    %v1986 = vpop.xlane.xlu0 %1985
    %v1987 = vsel %vm1980, %v1950, -inf
    %1988 = vmax.xlane.f32.xlu0 %v1987
    %v1989 = vpop.xlane.xlu0 %1988
    %v1990 = vsel %vm1980, %v1951, -inf
    %1991 = vmax.xlane.f32.xlu0 %v1990
    %v1992 = vpop.xlane.xlu0 %1991
    %v1993 = vsel %vm1980, %v1952, -inf
    %1994 = vmax.xlane.f32.xlu0 %v1993
    %v1995 = vpop.xlane.xlu0 %1994
    %v1996 = vsel %vm1980, %v1953, -inf
    %1997 = vmax.xlane.f32.xlu0 %v1996
    %v1998 = vpop.xlane.xlu0 %1997
    %v1999 = vsel %vm1980, %v1954, -inf
    %2000 = vmax.xlane.f32.xlu0 %v1999
    %v2001 = vpop.xlane.xlu0 %2000
    %v2002 = vsel %vm1980, %v1955, -inf
    %2003 = vmax.xlane.f32.xlu0 %v2002
    %v2004 = vpop.xlane.xlu0 %2003
    %v2005 = vsel %vm1980, %v1956, -inf
    %2006 = vmax.xlane.f32.xlu0 %v2005
    %v2007 = vpop.xlane.xlu0 %2006
    %v2008 = vsel %vm1980, %v1957, -inf
    %2009 = vmax.xlane.f32.xlu0 %v2008
    %v2010 = vpop.xlane.xlu0 %2009
    %v2011 = vsel %vm1980, %v1958, -inf
    %2012 = vmax.xlane.f32.xlu0 %v2011
    %v2013 = vpop.xlane.xlu0 %2012
    %v2014 = vsel %vm1980, %v1959, -inf
    %2015 = vmax.xlane.f32.xlu0 %v2014
    %v2016 = vpop.xlane.xlu0 %2015
    %v2017 = vsel %vm1980, %v1960, -inf
    %2018 = vmax.xlane.f32.xlu0 %v2017
    %v2019 = vpop.xlane.xlu0 %2018
    %v2020 = vsel %vm1980, %v1961, -inf
    %2021 = vmax.xlane.f32.xlu0 %v2020
    %v2022 = vpop.xlane.xlu0 %2021
    %v2023 = vsel %vm1980, %v1962, -inf
    %2024 = vmax.xlane.f32.xlu0 %v2023
    %v2025 = vpop.xlane.xlu0 %2024
    %v2026 = vsel %vm1980, %v1963, -inf
    %2027 = vmax.xlane.f32.xlu0 %v2026
    %v2028 = vpop.xlane.xlu0 %2027
    %v2029 = vsel %vm1980, %v1964, -inf
    %2030 = vmax.xlane.f32.xlu0 %v2029
    %v2031 = vpop.xlane.xlu0 %2030
    %v2032 = vsel %vm1980, %v1965, -inf
    %2033 = vmax.xlane.f32.xlu0 %v2032
    %v2034 = vpop.xlane.xlu0 %2033
    %v2035 = vsel %vm1980, %v1966, -inf
    %2036 = vmax.xlane.f32.xlu0 %v2035
    %v2037 = vpop.xlane.xlu0 %2036
    %v2038 = vsel %vm1980, %v1967, -inf
    %2039 = vmax.xlane.f32.xlu0 %v2038
    %v2040 = vpop.xlane.xlu0 %2039
    %v2041 = vsel %vm1980, %v1968, -inf
    %2042 = vmax.xlane.f32.xlu0 %v2041
    %v2043 = vpop.xlane.xlu0 %2042
    %v2044 = vsel %vm1980, %v1969, -inf
    %2045 = vmax.xlane.f32.xlu0 %v2044
    %v2046 = vpop.xlane.xlu0 %2045
    %v2047 = vsel %vm1980, %v1970, -inf
    %2048 = vmax.xlane.f32.xlu0 %v2047
    %v2049 = vpop.xlane.xlu0 %2048
    %v2050 = vsel %vm1980, %v1971, -inf
    %2051 = vmax.xlane.f32.xlu0 %v2050
    %v2052 = vpop.xlane.xlu0 %2051
    %v2053 = vsel %vm1980, %v1972, -inf
    %2054 = vmax.xlane.f32.xlu0 %v2053
    %v2055 = vpop.xlane.xlu0 %2054
    %v2056 = vsel %vm1980, %v1973, -inf
    %2057 = vmax.xlane.f32.xlu0 %v2056
    %v2058 = vpop.xlane.xlu0 %2057
    %v2059 = vsel %vm1980, %v1974, -inf
    %2060 = vmax.xlane.f32.xlu0 %v2059
    %v2061 = vpop.xlane.xlu0 %2060
    %v2062 = vsel %vm1980, %v1975, -inf
    %2063 = vmax.xlane.f32.xlu0 %v2062
    %v2064 = vpop.xlane.xlu0 %2063
    %v2065 = vsel %vm1980, %v1976, -inf
    %2066 = vmax.xlane.f32.xlu0 %v2065
    %v2067 = vpop.xlane.xlu0 %2066
    %v2068 = vsel %vm1980, %v1977, -inf
    %2069 = vmax.xlane.f32.xlu0 %v2068
    %v2070 = vpop.xlane.xlu0 %2069
    %v2071 = vsel %vm1980, %v1978, -inf
    %2072 = vmax.xlane.f32.xlu0 %v2071
    %v2073 = vpop.xlane.xlu0 %2072
    %v2074 = vsel %vm1980, %v1979, -inf
    %2075 = vmax.xlane.f32.xlu0 %v2074
    %v2076 = vpop.xlane.xlu0 %2075
    %v2077 = vsub.f32 %v1948, %v1983
    %v2078 = vsub.f32 %v1949, %v1986
    %v2079 = vsub.f32 %v1950, %v1989
    %v2080 = vsub.f32 %v1951, %v1992
    %v2081 = vsub.f32 %v1952, %v1995
    %v2082 = vsub.f32 %v1953, %v1998
    %v2083 = vsub.f32 %v1954, %v2001
    %v2084 = vsub.f32 %v1955, %v2004
    %v2085 = vsub.f32 %v1956, %v2007
    %v2086 = vsub.f32 %v1957, %v2010
    %v2087 = vsub.f32 %v1958, %v2013
    %v2088 = vsub.f32 %v1959, %v2016
    %v2089 = vsub.f32 %v1960, %v2019
    %v2090 = vsub.f32 %v1961, %v2022
    %v2091 = vsub.f32 %v1962, %v2025
    %v2092 = vsub.f32 %v1963, %v2028
    %v2093 = vsub.f32 %v1964, %v2031
    %v2094 = vsub.f32 %v1965, %v2034
    %v2095 = vsub.f32 %v1966, %v2037
    %v2096 = vsub.f32 %v1967, %v2040
    %v2097 = vsub.f32 %v1968, %v2043
    %v2098 = vsub.f32 %v1969, %v2046
    %v2099 = vsub.f32 %v1970, %v2049
    %v2100 = vsub.f32 %v1971, %v2052
    %v2101 = vsub.f32 %v1972, %v2055
    %v2102 = vsub.f32 %v1973, %v2058
    %v2103 = vsub.f32 %v1974, %v2061
    %v2104 = vsub.f32 %v1975, %v2064
    %v2105 = vsub.f32 %v1976, %v2067
    %v2106 = vsub.f32 %v1977, %v2070
    %v2107 = vsub.f32 %v1978, %v2073
    %v2108 = vsub.f32 %v1979, %v2076
    %v2109 = vmul.f32 %v2077, 1.442695
    %v2110 = vpow.pop %v2109
    %v2111 = vmul.f32 %v2078, 1.442695
    %v2112 = vpow.pop %v2111
    %v2113 = vmul.f32 %v2079, 1.442695
    %v2114 = vpow.pop %v2113
    %v2115 = vmul.f32 %v2080, 1.442695
    %v2116 = vpow.pop %v2115
    %v2117 = vmul.f32 %v2081, 1.442695
    %v2118 = vpow.pop %v2117
    %v2119 = vmul.f32 %v2082, 1.442695
    %v2120 = vpow.pop %v2119
    %v2121 = vmul.f32 %v2083, 1.442695
    %v2122 = vpow.pop %v2121
    %v2123 = vmul.f32 %v2084, 1.442695
    %v2124 = vpow.pop %v2123
    %v2125 = vmul.f32 %v2085, 1.442695
    %v2126 = vpow.pop %v2125
    %v2127 = vmul.f32 %v2086, 1.442695
    %v2128 = vpow.pop %v2127
    %v2129 = vmul.f32 %v2087, 1.442695
    %v2130 = vpow.pop %v2129
    %v2131 = vmul.f32 %v2088, 1.442695
    %v2132 = vpow.pop %v2131
    %v2133 = vmul.f32 %v2089, 1.442695
    %v2134 = vpow.pop %v2133
    %v2135 = vmul.f32 %v2090, 1.442695
    %v2136 = vpow.pop %v2135
    %v2137 = vmul.f32 %v2091, 1.442695
    %v2138 = vpow.pop %v2137
    %v2139 = vmul.f32 %v2092, 1.442695
    %v2140 = vpow.pop %v2139
    %v2141 = vmul.f32 %v2093, 1.442695
    %v2142 = vpow.pop %v2141
    %v2143 = vmul.f32 %v2094, 1.442695
    %v2144 = vpow.pop %v2143
    %v2145 = vmul.f32 %v2095, 1.442695
    %v2146 = vpow.pop %v2145
    %v2147 = vmul.f32 %v2096, 1.442695
    %v2148 = vpow.pop %v2147
    %v2149 = vmul.f32 %v2097, 1.442695
    %v2150 = vpow.pop %v2149
    %v2151 = vmul.f32 %v2098, 1.442695
    %v2152 = vpow.pop %v2151
    %v2153 = vmul.f32 %v2099, 1.442695
    %v2154 = vpow.pop %v2153
    %v2155 = vmul.f32 %v2100, 1.442695
    %v2156 = vpow.pop %v2155
    %v2157 = vmul.f32 %v2101, 1.442695
    %v2158 = vpow.pop %v2157
    %v2159 = vmul.f32 %v2102, 1.442695
    %v2160 = vpow.pop %v2159
    %v2161 = vmul.f32 %v2103, 1.442695
    %v2162 = vpow.pop %v2161
    %v2163 = vmul.f32 %v2104, 1.442695
    %v2164 = vpow.pop %v2163
    %v2165 = vmul.f32 %v2105, 1.442695
    %v2166 = vpow.pop %v2165
    %v2167 = vmul.f32 %v2106, 1.442695
    %v2168 = vpow.pop %v2167
    %v2169 = vmul.f32 %v2107, 1.442695
    %v2170 = vpow.pop %v2169
    %v2171 = vmul.f32 %v2108, 1.442695
    %v2172 = vpow.pop %v2171
    %v2173 = vsel %vm1980, %v2110, 0.0
    %2174 = vadd.xlane.f32.xlu0 %v2173
    %v2175 = vpop.xlane.xlu0 %2174
    %v2176 = vsel %vm1980, %v2112, 0.0
    %2177 = vadd.xlane.f32.xlu0 %v2176
    %v2178 = vpop.xlane.xlu0 %2177
    %v2179 = vsel %vm1980, %v2114, 0.0
    %2180 = vadd.xlane.f32.xlu0 %v2179
    %v2181 = vpop.xlane.xlu0 %2180
    %v2182 = vsel %vm1980, %v2116, 0.0
    %2183 = vadd.xlane.f32.xlu0 %v2182
    %v2184 = vpop.xlane.xlu0 %2183
    %v2185 = vsel %vm1980, %v2118, 0.0
    %2186 = vadd.xlane.f32.xlu0 %v2185
    %v2187 = vpop.xlane.xlu0 %2186
    %v2188 = vsel %vm1980, %v2120, 0.0
    %2189 = vadd.xlane.f32.xlu0 %v2188
    %v2190 = vpop.xlane.xlu0 %2189
    %v2191 = vsel %vm1980, %v2122, 0.0
    %2192 = vadd.xlane.f32.xlu0 %v2191
    %v2193 = vpop.xlane.xlu0 %2192
    %v2194 = vsel %vm1980, %v2124, 0.0
    %2195 = vadd.xlane.f32.xlu0 %v2194
    %v2196 = vpop.xlane.xlu0 %2195
    %v2197 = vsel %vm1980, %v2126, 0.0
    %2198 = vadd.xlane.f32.xlu0 %v2197
    %v2199 = vpop.xlane.xlu0 %2198
    %v2200 = vsel %vm1980, %v2128, 0.0
    %2201 = vadd.xlane.f32.xlu0 %v2200
    %v2202 = vpop.xlane.xlu0 %2201
    %v2203 = vsel %vm1980, %v2130, 0.0
    %2204 = vadd.xlane.f32.xlu0 %v2203
    %v2205 = vpop.xlane.xlu0 %2204
    %v2206 = vsel %vm1980, %v2132, 0.0
    %2207 = vadd.xlane.f32.xlu0 %v2206
    %v2208 = vpop.xlane.xlu0 %2207
    %v2209 = vsel %vm1980, %v2134, 0.0
    %2210 = vadd.xlane.f32.xlu0 %v2209
    %v2211 = vpop.xlane.xlu0 %2210
    %v2212 = vsel %vm1980, %v2136, 0.0
    %2213 = vadd.xlane.f32.xlu0 %v2212
    %v2214 = vpop.xlane.xlu0 %2213
    %v2215 = vsel %vm1980, %v2138, 0.0
    %2216 = vadd.xlane.f32.xlu0 %v2215
    %v2217 = vpop.xlane.xlu0 %2216
    %v2218 = vsel %vm1980, %v2140, 0.0
    %2219 = vadd.xlane.f32.xlu0 %v2218
    %v2220 = vpop.xlane.xlu0 %2219
    %v2221 = vsel %vm1980, %v2142, 0.0
    %2222 = vadd.xlane.f32.xlu0 %v2221
    %v2223 = vpop.xlane.xlu0 %2222
    %v2224 = vsel %vm1980, %v2144, 0.0
    %2225 = vadd.xlane.f32.xlu0 %v2224
    %v2226 = vpop.xlane.xlu0 %2225
    %v2227 = vsel %vm1980, %v2146, 0.0
    %2228 = vadd.xlane.f32.xlu0 %v2227
    %v2229 = vpop.xlane.xlu0 %2228
    %v2230 = vsel %vm1980, %v2148, 0.0
    %2231 = vadd.xlane.f32.xlu0 %v2230
    %v2232 = vpop.xlane.xlu0 %2231
    %v2233 = vsel %vm1980, %v2150, 0.0
    %2234 = vadd.xlane.f32.xlu0 %v2233
    %v2235 = vpop.xlane.xlu0 %2234
    %v2236 = vsel %vm1980, %v2152, 0.0
    %2237 = vadd.xlane.f32.xlu0 %v2236
    %v2238 = vpop.xlane.xlu0 %2237
    %v2239 = vsel %vm1980, %v2154, 0.0
    %2240 = vadd.xlane.f32.xlu0 %v2239
    %v2241 = vpop.xlane.xlu0 %2240
    %v2242 = vsel %vm1980, %v2156, 0.0
    %2243 = vadd.xlane.f32.xlu0 %v2242
    %v2244 = vpop.xlane.xlu0 %2243
    %v2245 = vsel %vm1980, %v2158, 0.0
    %2246 = vadd.xlane.f32.xlu0 %v2245
    %v2247 = vpop.xlane.xlu0 %2246
    %v2248 = vsel %vm1980, %v2160, 0.0
    %2249 = vadd.xlane.f32.xlu0 %v2248
    %v2250 = vpop.xlane.xlu0 %2249
    %v2251 = vsel %vm1980, %v2162, 0.0
    %2252 = vadd.xlane.f32.xlu0 %v2251
    %v2253 = vpop.xlane.xlu0 %2252
    %v2254 = vsel %vm1980, %v2164, 0.0
    %2255 = vadd.xlane.f32.xlu0 %v2254
    %v2256 = vpop.xlane.xlu0 %2255
    %v2257 = vsel %vm1980, %v2166, 0.0
    %2258 = vadd.xlane.f32.xlu0 %v2257
    %v2259 = vpop.xlane.xlu0 %2258
    %v2260 = vsel %vm1980, %v2168, 0.0
    %2261 = vadd.xlane.f32.xlu0 %v2260
    %v2262 = vpop.xlane.xlu0 %2261
    %v2263 = vsel %vm1980, %v2170, 0.0
    %2264 = vadd.xlane.f32.xlu0 %v2263
    %v2265 = vpop.xlane.xlu0 %2264
    %v2266 = vsel %vm1980, %v2172, 0.0
    %2267 = vadd.xlane.f32.xlu0 %v2266
    %v2268 = vpop.xlane.xlu0 %2267
    %v2269 = vrcp.pop %v2175
    %v2270 = vrcp.pop %v2178
    %v2271 = vrcp.pop %v2181
    %v2272 = vrcp.pop %v2184
    %v2273 = vrcp.pop %v2187
    %v2274 = vrcp.pop %v2190
    %v2275 = vrcp.pop %v2193
    %v2276 = vrcp.pop %v2196
    %v2277 = vrcp.pop %v2199
    %v2278 = vrcp.pop %v2202
    %v2279 = vrcp.pop %v2205
    %v2280 = vrcp.pop %v2208
    %v2281 = vrcp.pop %v2211
    %v2282 = vrcp.pop %v2214
    %v2283 = vrcp.pop %v2217
    %v2284 = vrcp.pop %v2220
    %v2285 = vrcp.pop %v2223
    %v2286 = vrcp.pop %v2226
    %v2287 = vrcp.pop %v2229
    %v2288 = vrcp.pop %v2232
    %v2289 = vrcp.pop %v2235
    %v2290 = vrcp.pop %v2238
    %v2291 = vrcp.pop %v2241
    %v2292 = vrcp.pop %v2244
    %v2293 = vrcp.pop %v2247
    %v2294 = vrcp.pop %v2250
    %v2295 = vrcp.pop %v2253
    %v2296 = vrcp.pop %v2256
    %v2297 = vrcp.pop %v2259
    %v2298 = vrcp.pop %v2262
    %v2299 = vrcp.pop %v2265
    %v2300 = vrcp.pop %v2268
    %v2301 = vmul.f32 %v2110, %v2269
    %v2302 = vmul.f32 %v2112, %v2270
    %v2303 = vmul.f32 %v2114, %v2271
    %v2304 = vmul.f32 %v2116, %v2272
    %v2305 = vmul.f32 %v2118, %v2273
    %v2306 = vmul.f32 %v2120, %v2274
    %v2307 = vmul.f32 %v2122, %v2275
    %v2308 = vmul.f32 %v2124, %v2276
    %v2309 = vmul.f32 %v2126, %v2277
    %v2310 = vmul.f32 %v2128, %v2278
    %v2311 = vmul.f32 %v2130, %v2279
    %v2312 = vmul.f32 %v2132, %v2280
    %v2313 = vmul.f32 %v2134, %v2281
    %v2314 = vmul.f32 %v2136, %v2282
    %v2315 = vmul.f32 %v2138, %v2283
    %v2316 = vmul.f32 %v2140, %v2284
    %v2317 = vmul.f32 %v2142, %v2285
    %v2318 = vmul.f32 %v2144, %v2286
    %v2319 = vmul.f32 %v2146, %v2287
    %v2320 = vmul.f32 %v2148, %v2288
    %v2321 = vmul.f32 %v2150, %v2289
    %v2322 = vmul.f32 %v2152, %v2290
    %v2323 = vmul.f32 %v2154, %v2291
    %v2324 = vmul.f32 %v2156, %v2292
    %v2325 = vmul.f32 %v2158, %v2293
    %v2326 = vmul.f32 %v2160, %v2294
    %v2327 = vmul.f32 %v2162, %v2295
    %v2328 = vmul.f32 %v2164, %v2296
    %v2329 = vmul.f32 %v2166, %v2297
    %v2330 = vmul.f32 %v2168, %v2298
    %v2331 = vmul.f32 %v2170, %v2299
    %v2332 = vmul.f32 %v2172, %v2300
    %v2333 = vpack.c.bf16 %v2302, %v2301
    %v2334 = vpack.c.bf16 %v2304, %v2303
    %v2335 = vpack.c.bf16 %v2306, %v2305
    %v2336 = vpack.c.bf16 %v2308, %v2307
    %v2337 = vpack.c.bf16 %v2310, %v2309
    %v2338 = vpack.c.bf16 %v2312, %v2311
    %v2339 = vpack.c.bf16 %v2314, %v2313
    %v2340 = vpack.c.bf16 %v2316, %v2315
    %v2341 = vpack.c.bf16 %v2318, %v2317
    %v2342 = vpack.c.bf16 %v2320, %v2319
    %v2343 = vpack.c.bf16 %v2322, %v2321
    %v2344 = vpack.c.bf16 %v2324, %v2323
    %v2345 = vpack.c.bf16 %v2326, %v2325
    %v2346 = vpack.c.bf16 %v2328, %v2327
    %v2347 = vpack.c.bf16 %v2330, %v2329
    %v2348 = vpack.c.bf16 %v2332, %v2331
    %v2350 = vsel %vm1980, %v2333, 0
    %2352 = vmatprep.subr.bf16.mxu0 0
    %2353 = vmatpush1.bf16.msra.mxu0 0
    %2354 = vmatprep.subr.bf16.mxu0 0
    %2355 = vmatpush1.bf16.msra.mxu0 0
    %2356 = vmatprep.subr.bf16.mxu0 0
    %2357 = vmatpush1.bf16.msra.mxu0 0
    %2358 = vmatprep.subr.bf16.mxu0 0
    %2359 = vmatpush1.bf16.msra.mxu0 0
    %2360 = vmatprep.subr.bf16.mxu0 0
    %2361 = vmatpush1.bf16.msra.mxu0 0
    %2362 = vmatprep.subr.bf16.mxu0 0
    %2363 = vmatpush1.bf16.msra.mxu0 0
    %2364 = vmatprep.subr.bf16.mxu0 0
    %2365 = vmatpush1.bf16.msra.mxu0 0
    %2366 = vmatprep.subr.bf16.mxu0 0
    %2367 = vmatpush1.bf16.msra.mxu0 %v1168
    %2368 = vmatprep.subr.bf16.mxu0 0
    %2369 = vmatpush2.bf16.msra.mxu0 0
    %2370 = vmatprep.subr.bf16.mxu0 0
    %2371 = vmatpush2.bf16.msra.mxu0 0
    %2372 = vmatprep.subr.bf16.mxu0 0
    %2373 = vmatpush2.bf16.msra.mxu0 0
    %2374 = vmatprep.subr.bf16.mxu0 0
    %2375 = vmatpush2.bf16.msra.mxu0 0
    %2376 = vmatprep.subr.bf16.mxu0 0
    %2377 = vmatpush2.bf16.msra.mxu0 0
    %2378 = vmatprep.subr.bf16.mxu0 0
    %2379 = vmatpush2.bf16.msra.mxu0 0
    %2380 = vmatprep.subr.bf16.mxu0 0
    %2381 = vmatpush2.bf16.msra.mxu0 0
    %2382 = vmatprep.subr.bf16.mxu0 0
    %2383 = vmatpush2.bf16.msra.mxu0 0
    %2384 = vmatprep.mubr.bf16.mxu0 0
    %2385 = vmatmul.mubr.bf16.gmra.mxu0 %v2350
    %v2386 = vpop.f32.mrf.mxu0
    %v2387 = vadd.f32 0.0, %v2386
    %v2388 = vpop.f32.mrf.mxu0
    %v2389 = vpop.f32.mrf.mxu0
    %v2390 = vadd.f32 0.0, %v2389
    %v2391 = vpop.f32.mrf.mxu0
    %2392 = vdwg.mxu0
    %v2394 = vsel %vm1980, %v2334, 0
    %2396 = vmatprep.subr.bf16.mxu0 0
    %2397 = vmatpush1.bf16.msra.mxu0 0
    %2398 = vmatprep.subr.bf16.mxu0 0
    %2399 = vmatpush1.bf16.msra.mxu0 0
    %2400 = vmatprep.subr.bf16.mxu0 0
    %2401 = vmatpush1.bf16.msra.mxu0 0
    %2402 = vmatprep.subr.bf16.mxu0 0
    %2403 = vmatpush1.bf16.msra.mxu0 0
    %2404 = vmatprep.subr.bf16.mxu0 0
    %2405 = vmatpush1.bf16.msra.mxu0 0
    %2406 = vmatprep.subr.bf16.mxu0 0
    %2407 = vmatpush1.bf16.msra.mxu0 0
    %2408 = vmatprep.subr.bf16.mxu0 0
    %2409 = vmatpush1.bf16.msra.mxu0 0
    %2410 = vmatprep.subr.bf16.mxu0 0
    %2411 = vmatpush1.bf16.msra.mxu0 %v1169
    %2412 = vmatprep.subr.bf16.mxu0 0
    %2413 = vmatpush2.bf16.msra.mxu0 0
    %2414 = vmatprep.subr.bf16.mxu0 0
    %2415 = vmatpush2.bf16.msra.mxu0 0
    %2416 = vmatprep.subr.bf16.mxu0 0
    %2417 = vmatpush2.bf16.msra.mxu0 0
    %2418 = vmatprep.subr.bf16.mxu0 0
    %2419 = vmatpush2.bf16.msra.mxu0 0
    %2420 = vmatprep.subr.bf16.mxu0 0
    %2421 = vmatpush2.bf16.msra.mxu0 0
    %2422 = vmatprep.subr.bf16.mxu0 0
    %2423 = vmatpush2.bf16.msra.mxu0 0
    %2424 = vmatprep.subr.bf16.mxu0 0
    %2425 = vmatpush2.bf16.msra.mxu0 0
    %2426 = vmatprep.subr.bf16.mxu0 0
    %2427 = vmatpush2.bf16.msra.mxu0 0
    %2428 = vmatprep.mubr.bf16.mxu0 0
    %2429 = vmatmul.mubr.bf16.gmra.mxu0 %v2394
    %v2430 = vpop.f32.mrf.mxu0
    %v2431 = vadd.f32 0.0, %v2430
    %v2432 = vpop.f32.mrf.mxu0
    %v2433 = vpop.f32.mrf.mxu0
    %v2434 = vadd.f32 0.0, %v2433
    %v2435 = vpop.f32.mrf.mxu0
    %2436 = vdwg.mxu0
    %v2438 = vsel %vm1980, %v2335, 0
    %2440 = vmatprep.subr.bf16.mxu0 0
    %2441 = vmatpush1.bf16.msra.mxu0 0
    %2442 = vmatprep.subr.bf16.mxu0 0
    %2443 = vmatpush1.bf16.msra.mxu0 0
    %2444 = vmatprep.subr.bf16.mxu0 0
    %2445 = vmatpush1.bf16.msra.mxu0 0
    %2446 = vmatprep.subr.bf16.mxu0 0
    %2447 = vmatpush1.bf16.msra.mxu0 0
    %2448 = vmatprep.subr.bf16.mxu0 0
    %2449 = vmatpush1.bf16.msra.mxu0 0
    %2450 = vmatprep.subr.bf16.mxu0 0
    %2451 = vmatpush1.bf16.msra.mxu0 0
    %2452 = vmatprep.subr.bf16.mxu0 0
    %2453 = vmatpush1.bf16.msra.mxu0 0
    %2454 = vmatprep.subr.bf16.mxu0 0
    %2455 = vmatpush1.bf16.msra.mxu0 %v1170
    %2456 = vmatprep.subr.bf16.mxu0 0
    %2457 = vmatpush2.bf16.msra.mxu0 0
    %2458 = vmatprep.subr.bf16.mxu0 0
    %2459 = vmatpush2.bf16.msra.mxu0 0
    %2460 = vmatprep.subr.bf16.mxu0 0
    %2461 = vmatpush2.bf16.msra.mxu0 0
    %2462 = vmatprep.subr.bf16.mxu0 0
    %2463 = vmatpush2.bf16.msra.mxu0 0
    %2464 = vmatprep.subr.bf16.mxu0 0
    %2465 = vmatpush2.bf16.msra.mxu0 0
    %2466 = vmatprep.subr.bf16.mxu0 0
    %2467 = vmatpush2.bf16.msra.mxu0 0
    %2468 = vmatprep.subr.bf16.mxu0 0
    %2469 = vmatpush2.bf16.msra.mxu0 0
    %2470 = vmatprep.subr.bf16.mxu0 0
    %2471 = vmatpush2.bf16.msra.mxu0 0
    %2472 = vmatprep.mubr.bf16.mxu0 0
    %2473 = vmatmul.mubr.bf16.gmra.mxu0 %v2438
    %v2474 = vpop.f32.mrf.mxu0
    %v2475 = vadd.f32 0.0, %v2474
    %v2476 = vpop.f32.mrf.mxu0
    %v2477 = vpop.f32.mrf.mxu0
    %v2478 = vadd.f32 0.0, %v2477
    %v2479 = vpop.f32.mrf.mxu0
    %2480 = vdwg.mxu0
    %v2482 = vsel %vm1980, %v2336, 0
    %2484 = vmatprep.subr.bf16.mxu0 0
    %2485 = vmatpush1.bf16.msra.mxu0 0
    %2486 = vmatprep.subr.bf16.mxu0 0
    %2487 = vmatpush1.bf16.msra.mxu0 0
    %2488 = vmatprep.subr.bf16.mxu0 0
    %2489 = vmatpush1.bf16.msra.mxu0 0
    %2490 = vmatprep.subr.bf16.mxu0 0
    %2491 = vmatpush1.bf16.msra.mxu0 0
    %2492 = vmatprep.subr.bf16.mxu0 0
    %2493 = vmatpush1.bf16.msra.mxu0 0
    %2494 = vmatprep.subr.bf16.mxu0 0
    %2495 = vmatpush1.bf16.msra.mxu0 0
    %2496 = vmatprep.subr.bf16.mxu0 0
    %2497 = vmatpush1.bf16.msra.mxu0 0
    %2498 = vmatprep.subr.bf16.mxu0 0
    %2499 = vmatpush1.bf16.msra.mxu0 %v1171
    %2500 = vmatprep.subr.bf16.mxu0 0
    %2501 = vmatpush2.bf16.msra.mxu0 0
    %2502 = vmatprep.subr.bf16.mxu0 0
    %2503 = vmatpush2.bf16.msra.mxu0 0
    %2504 = vmatprep.subr.bf16.mxu0 0
    %2505 = vmatpush2.bf16.msra.mxu0 0
    %2506 = vmatprep.subr.bf16.mxu0 0
    %2507 = vmatpush2.bf16.msra.mxu0 0
    %2508 = vmatprep.subr.bf16.mxu0 0
    %2509 = vmatpush2.bf16.msra.mxu0 0
    %2510 = vmatprep.subr.bf16.mxu0 0
    %2511 = vmatpush2.bf16.msra.mxu0 0
    %2512 = vmatprep.subr.bf16.mxu0 0
    %2513 = vmatpush2.bf16.msra.mxu0 0
    %2514 = vmatprep.subr.bf16.mxu0 0
    %2515 = vmatpush2.bf16.msra.mxu0 0
    %2516 = vmatprep.mubr.bf16.mxu0 0
    %2517 = vmatmul.mubr.bf16.gmra.mxu0 %v2482
    %v2518 = vpop.f32.mrf.mxu0
    %v2519 = vadd.f32 0.0, %v2518
    %v2520 = vpop.f32.mrf.mxu0
    %v2521 = vpop.f32.mrf.mxu0
    %v2522 = vadd.f32 0.0, %v2521
    %v2523 = vpop.f32.mrf.mxu0
    %2524 = vdwg.mxu0
    %v2526 = vsel %vm1980, %v2337, 0
    %2528 = vmatprep.subr.bf16.mxu0 0
    %2529 = vmatpush1.bf16.msra.mxu0 0
    %2530 = vmatprep.subr.bf16.mxu0 0
    %2531 = vmatpush1.bf16.msra.mxu0 0
    %2532 = vmatprep.subr.bf16.mxu0 0
    %2533 = vmatpush1.bf16.msra.mxu0 0
    %2534 = vmatprep.subr.bf16.mxu0 0
    %2535 = vmatpush1.bf16.msra.mxu0 0
    %2536 = vmatprep.subr.bf16.mxu0 0
    %2537 = vmatpush1.bf16.msra.mxu0 0
    %2538 = vmatprep.subr.bf16.mxu0 0
    %2539 = vmatpush1.bf16.msra.mxu0 0
    %2540 = vmatprep.subr.bf16.mxu0 0
    %2541 = vmatpush1.bf16.msra.mxu0 0
    %2542 = vmatprep.subr.bf16.mxu0 0
    %2543 = vmatpush1.bf16.msra.mxu0 %v1172
    %2544 = vmatprep.subr.bf16.mxu0 0
    %2545 = vmatpush2.bf16.msra.mxu0 0
    %2546 = vmatprep.subr.bf16.mxu0 0
    %2547 = vmatpush2.bf16.msra.mxu0 0
    %2548 = vmatprep.subr.bf16.mxu0 0
    %2549 = vmatpush2.bf16.msra.mxu0 0
    %2550 = vmatprep.subr.bf16.mxu0 0
    %2551 = vmatpush2.bf16.msra.mxu0 0
    %2552 = vmatprep.subr.bf16.mxu0 0
    %2553 = vmatpush2.bf16.msra.mxu0 0
    %2554 = vmatprep.subr.bf16.mxu0 0
    %2555 = vmatpush2.bf16.msra.mxu0 0
    %2556 = vmatprep.subr.bf16.mxu0 0
    %2557 = vmatpush2.bf16.msra.mxu0 0
    %2558 = vmatprep.subr.bf16.mxu0 0
    %2559 = vmatpush2.bf16.msra.mxu0 0
    %2560 = vmatprep.mubr.bf16.mxu0 0
    %2561 = vmatmul.mubr.bf16.gmra.mxu0 %v2526
    %v2562 = vpop.f32.mrf.mxu0
    %v2563 = vadd.f32 0.0, %v2562
    %v2564 = vpop.f32.mrf.mxu0
    %v2565 = vpop.f32.mrf.mxu0
    %v2566 = vadd.f32 0.0, %v2565
    %v2567 = vpop.f32.mrf.mxu0
    %2568 = vdwg.mxu0
    %v2570 = vsel %vm1980, %v2338, 0
    %2572 = vmatprep.subr.bf16.mxu0 0
    %2573 = vmatpush1.bf16.msra.mxu0 0
    %2574 = vmatprep.subr.bf16.mxu0 0
    %2575 = vmatpush1.bf16.msra.mxu0 0
    %2576 = vmatprep.subr.bf16.mxu0 0
    %2577 = vmatpush1.bf16.msra.mxu0 0
    %2578 = vmatprep.subr.bf16.mxu0 0
    %2579 = vmatpush1.bf16.msra.mxu0 0
    %2580 = vmatprep.subr.bf16.mxu0 0
    %2581 = vmatpush1.bf16.msra.mxu0 0
    %2582 = vmatprep.subr.bf16.mxu0 0
    %2583 = vmatpush1.bf16.msra.mxu0 0
    %2584 = vmatprep.subr.bf16.mxu0 0
    %2585 = vmatpush1.bf16.msra.mxu0 0
    %2586 = vmatprep.subr.bf16.mxu0 0
    %2587 = vmatpush1.bf16.msra.mxu0 %v1173
    %2588 = vmatprep.subr.bf16.mxu0 0
    %2589 = vmatpush2.bf16.msra.mxu0 0
    %2590 = vmatprep.subr.bf16.mxu0 0
    %2591 = vmatpush2.bf16.msra.mxu0 0
    %2592 = vmatprep.subr.bf16.mxu0 0
    %2593 = vmatpush2.bf16.msra.mxu0 0
    %2594 = vmatprep.subr.bf16.mxu0 0
    %2595 = vmatpush2.bf16.msra.mxu0 0
    %2596 = vmatprep.subr.bf16.mxu0 0
    %2597 = vmatpush2.bf16.msra.mxu0 0
    %2598 = vmatprep.subr.bf16.mxu0 0
    %2599 = vmatpush2.bf16.msra.mxu0 0
    %2600 = vmatprep.subr.bf16.mxu0 0
    %2601 = vmatpush2.bf16.msra.mxu0 0
    %2602 = vmatprep.subr.bf16.mxu0 0
    %2603 = vmatpush2.bf16.msra.mxu0 0
    %2604 = vmatprep.mubr.bf16.mxu0 0
    %2605 = vmatmul.mubr.bf16.gmra.mxu0 %v2570
    %v2606 = vpop.f32.mrf.mxu0
    %v2607 = vadd.f32 0.0, %v2606
    %v2608 = vpop.f32.mrf.mxu0
    %v2609 = vpop.f32.mrf.mxu0
    %v2610 = vadd.f32 0.0, %v2609
    %v2611 = vpop.f32.mrf.mxu0
    %2612 = vdwg.mxu0
    %v2614 = vsel %vm1980, %v2339, 0
    %2616 = vmatprep.subr.bf16.mxu0 0
    %2617 = vmatpush1.bf16.msra.mxu0 0
    %2618 = vmatprep.subr.bf16.mxu0 0
    %2619 = vmatpush1.bf16.msra.mxu0 0
    %2620 = vmatprep.subr.bf16.mxu0 0
    %2621 = vmatpush1.bf16.msra.mxu0 0
    %2622 = vmatprep.subr.bf16.mxu0 0
    %2623 = vmatpush1.bf16.msra.mxu0 0
    %2624 = vmatprep.subr.bf16.mxu0 0
    %2625 = vmatpush1.bf16.msra.mxu0 0
    %2626 = vmatprep.subr.bf16.mxu0 0
    %2627 = vmatpush1.bf16.msra.mxu0 0
    %2628 = vmatprep.subr.bf16.mxu0 0
    %2629 = vmatpush1.bf16.msra.mxu0 0
    %2630 = vmatprep.subr.bf16.mxu0 0
    %2631 = vmatpush1.bf16.msra.mxu0 %v1174
    %2632 = vmatprep.subr.bf16.mxu0 0
    %2633 = vmatpush2.bf16.msra.mxu0 0
    %2634 = vmatprep.subr.bf16.mxu0 0
    %2635 = vmatpush2.bf16.msra.mxu0 0
    %2636 = vmatprep.subr.bf16.mxu0 0
    %2637 = vmatpush2.bf16.msra.mxu0 0
    %2638 = vmatprep.subr.bf16.mxu0 0
    %2639 = vmatpush2.bf16.msra.mxu0 0
    %2640 = vmatprep.subr.bf16.mxu0 0
    %2641 = vmatpush2.bf16.msra.mxu0 0
    %2642 = vmatprep.subr.bf16.mxu0 0
    %2643 = vmatpush2.bf16.msra.mxu0 0
    %2644 = vmatprep.subr.bf16.mxu0 0
    %2645 = vmatpush2.bf16.msra.mxu0 0
    %2646 = vmatprep.subr.bf16.mxu0 0
    %2647 = vmatpush2.bf16.msra.mxu0 0
    %2648 = vmatprep.mubr.bf16.mxu0 0
    %2649 = vmatmul.mubr.bf16.gmra.mxu0 %v2614
    %v2650 = vpop.f32.mrf.mxu0
    %v2651 = vadd.f32 0.0, %v2650
    %v2652 = vpop.f32.mrf.mxu0
    %v2653 = vpop.f32.mrf.mxu0
    %v2654 = vadd.f32 0.0, %v2653
    %v2655 = vpop.f32.mrf.mxu0
    %2656 = vdwg.mxu0
    %v2658 = vsel %vm1980, %v2340, 0
    %2660 = vmatprep.subr.bf16.mxu0 0
    %2661 = vmatpush1.bf16.msra.mxu0 0
    %2662 = vmatprep.subr.bf16.mxu0 0
    %2663 = vmatpush1.bf16.msra.mxu0 0
    %2664 = vmatprep.subr.bf16.mxu0 0
    %2665 = vmatpush1.bf16.msra.mxu0 0
    %2666 = vmatprep.subr.bf16.mxu0 0
    %2667 = vmatpush1.bf16.msra.mxu0 0
    %2668 = vmatprep.subr.bf16.mxu0 0
    %2669 = vmatpush1.bf16.msra.mxu0 0
    %2670 = vmatprep.subr.bf16.mxu0 0
    %2671 = vmatpush1.bf16.msra.mxu0 0
    %2672 = vmatprep.subr.bf16.mxu0 0
    %2673 = vmatpush1.bf16.msra.mxu0 0
    %2674 = vmatprep.subr.bf16.mxu0 0
    %2675 = vmatpush1.bf16.msra.mxu0 %v1175
    %2676 = vmatprep.subr.bf16.mxu0 0
    %2677 = vmatpush2.bf16.msra.mxu0 0
    %2678 = vmatprep.subr.bf16.mxu0 0
    %2679 = vmatpush2.bf16.msra.mxu0 0
    %2680 = vmatprep.subr.bf16.mxu0 0
    %2681 = vmatpush2.bf16.msra.mxu0 0
    %2682 = vmatprep.subr.bf16.mxu0 0
    %2683 = vmatpush2.bf16.msra.mxu0 0
    %2684 = vmatprep.subr.bf16.mxu0 0
    %2685 = vmatpush2.bf16.msra.mxu0 0
    %2686 = vmatprep.subr.bf16.mxu0 0
    %2687 = vmatpush2.bf16.msra.mxu0 0
    %2688 = vmatprep.subr.bf16.mxu0 0
    %2689 = vmatpush2.bf16.msra.mxu0 0
    %2690 = vmatprep.subr.bf16.mxu0 0
    %2691 = vmatpush2.bf16.msra.mxu0 0
    %2692 = vmatprep.mubr.bf16.mxu0 0
    %2693 = vmatmul.mubr.bf16.gmra.mxu0 %v2658
    %v2694 = vpop.f32.mrf.mxu0
    %v2695 = vadd.f32 0.0, %v2694
    %v2696 = vpop.f32.mrf.mxu0
    %v2697 = vpop.f32.mrf.mxu0
    %v2698 = vadd.f32 0.0, %v2697
    %v2699 = vpop.f32.mrf.mxu0
    %2700 = vdwg.mxu0
    %v2702 = vsel %vm1980, %v2341, 0
    %2704 = vmatprep.subr.bf16.mxu0 0
    %2705 = vmatpush1.bf16.msra.mxu0 0
    %2706 = vmatprep.subr.bf16.mxu0 0
    %2707 = vmatpush1.bf16.msra.mxu0 0
    %2708 = vmatprep.subr.bf16.mxu0 0
    %2709 = vmatpush1.bf16.msra.mxu0 0
    %2710 = vmatprep.subr.bf16.mxu0 0
    %2711 = vmatpush1.bf16.msra.mxu0 0
    %2712 = vmatprep.subr.bf16.mxu0 0
    %2713 = vmatpush1.bf16.msra.mxu0 0
    %2714 = vmatprep.subr.bf16.mxu0 0
    %2715 = vmatpush1.bf16.msra.mxu0 0
    %2716 = vmatprep.subr.bf16.mxu0 0
    %2717 = vmatpush1.bf16.msra.mxu0 0
    %2718 = vmatprep.subr.bf16.mxu0 0
    %2719 = vmatpush1.bf16.msra.mxu0 %v1176
    %2720 = vmatprep.subr.bf16.mxu0 0
    %2721 = vmatpush2.bf16.msra.mxu0 0
    %2722 = vmatprep.subr.bf16.mxu0 0
    %2723 = vmatpush2.bf16.msra.mxu0 0
    %2724 = vmatprep.subr.bf16.mxu0 0
    %2725 = vmatpush2.bf16.msra.mxu0 0
    %2726 = vmatprep.subr.bf16.mxu0 0
    %2727 = vmatpush2.bf16.msra.mxu0 0
    %2728 = vmatprep.subr.bf16.mxu0 0
    %2729 = vmatpush2.bf16.msra.mxu0 0
    %2730 = vmatprep.subr.bf16.mxu0 0
    %2731 = vmatpush2.bf16.msra.mxu0 0
    %2732 = vmatprep.subr.bf16.mxu0 0
    %2733 = vmatpush2.bf16.msra.mxu0 0
    %2734 = vmatprep.subr.bf16.mxu0 0
    %2735 = vmatpush2.bf16.msra.mxu0 0
    %2736 = vmatprep.mubr.bf16.mxu0 0
    %2737 = vmatmul.mubr.bf16.gmra.mxu0 %v2702
    %v2738 = vpop.f32.mrf.mxu0
    %v2739 = vadd.f32 0.0, %v2738
    %v2740 = vpop.f32.mrf.mxu0
    %v2741 = vpop.f32.mrf.mxu0
    %v2742 = vadd.f32 0.0, %v2741
    %v2743 = vpop.f32.mrf.mxu0
    %2744 = vdwg.mxu0
    %v2746 = vsel %vm1980, %v2342, 0
    %2748 = vmatprep.subr.bf16.mxu0 0
    %2749 = vmatpush1.bf16.msra.mxu0 0
    %2750 = vmatprep.subr.bf16.mxu0 0
    %2751 = vmatpush1.bf16.msra.mxu0 0
    %2752 = vmatprep.subr.bf16.mxu0 0
    %2753 = vmatpush1.bf16.msra.mxu0 0
    %2754 = vmatprep.subr.bf16.mxu0 0
    %2755 = vmatpush1.bf16.msra.mxu0 0
    %2756 = vmatprep.subr.bf16.mxu0 0
    %2757 = vmatpush1.bf16.msra.mxu0 0
    %2758 = vmatprep.subr.bf16.mxu0 0
    %2759 = vmatpush1.bf16.msra.mxu0 0
    %2760 = vmatprep.subr.bf16.mxu0 0
    %2761 = vmatpush1.bf16.msra.mxu0 0
    %2762 = vmatprep.subr.bf16.mxu0 0
    %2763 = vmatpush1.bf16.msra.mxu0 %v1177
    %2764 = vmatprep.subr.bf16.mxu0 0
    %2765 = vmatpush2.bf16.msra.mxu0 0
    %2766 = vmatprep.subr.bf16.mxu0 0
    %2767 = vmatpush2.bf16.msra.mxu0 0
    %2768 = vmatprep.subr.bf16.mxu0 0
    %2769 = vmatpush2.bf16.msra.mxu0 0
    %2770 = vmatprep.subr.bf16.mxu0 0
    %2771 = vmatpush2.bf16.msra.mxu0 0
    %2772 = vmatprep.subr.bf16.mxu0 0
    %2773 = vmatpush2.bf16.msra.mxu0 0
    %2774 = vmatprep.subr.bf16.mxu0 0
    %2775 = vmatpush2.bf16.msra.mxu0 0
    %2776 = vmatprep.subr.bf16.mxu0 0
    %2777 = vmatpush2.bf16.msra.mxu0 0
    %2778 = vmatprep.subr.bf16.mxu0 0
    %2779 = vmatpush2.bf16.msra.mxu0 0
    %2780 = vmatprep.mubr.bf16.mxu0 0
    %2781 = vmatmul.mubr.bf16.gmra.mxu0 %v2746
    %v2782 = vpop.f32.mrf.mxu0
    %v2783 = vadd.f32 0.0, %v2782
    %v2784 = vpop.f32.mrf.mxu0
    %v2785 = vpop.f32.mrf.mxu0
    %v2786 = vadd.f32 0.0, %v2785
    %v2787 = vpop.f32.mrf.mxu0
    %2788 = vdwg.mxu0
    %v2790 = vsel %vm1980, %v2343, 0
    %2792 = vmatprep.subr.bf16.mxu0 0
    %2793 = vmatpush1.bf16.msra.mxu0 0
    %2794 = vmatprep.subr.bf16.mxu0 0
    %2795 = vmatpush1.bf16.msra.mxu0 0
    %2796 = vmatprep.subr.bf16.mxu0 0
    %2797 = vmatpush1.bf16.msra.mxu0 0
    %2798 = vmatprep.subr.bf16.mxu0 0
    %2799 = vmatpush1.bf16.msra.mxu0 0
    %2800 = vmatprep.subr.bf16.mxu0 0
    %2801 = vmatpush1.bf16.msra.mxu0 0
    %2802 = vmatprep.subr.bf16.mxu0 0
    %2803 = vmatpush1.bf16.msra.mxu0 0
    %2804 = vmatprep.subr.bf16.mxu0 0
    %2805 = vmatpush1.bf16.msra.mxu0 0
    %2806 = vmatprep.subr.bf16.mxu0 0
    %2807 = vmatpush1.bf16.msra.mxu0 %v1178
    %2808 = vmatprep.subr.bf16.mxu0 0
    %2809 = vmatpush2.bf16.msra.mxu0 0
    %2810 = vmatprep.subr.bf16.mxu0 0
    %2811 = vmatpush2.bf16.msra.mxu0 0
    %2812 = vmatprep.subr.bf16.mxu0 0
    %2813 = vmatpush2.bf16.msra.mxu0 0
    %2814 = vmatprep.subr.bf16.mxu0 0
    %2815 = vmatpush2.bf16.msra.mxu0 0
    %2816 = vmatprep.subr.bf16.mxu0 0
    %2817 = vmatpush2.bf16.msra.mxu0 0
    %2818 = vmatprep.subr.bf16.mxu0 0
    %2819 = vmatpush2.bf16.msra.mxu0 0
    %2820 = vmatprep.subr.bf16.mxu0 0
    %2821 = vmatpush2.bf16.msra.mxu0 0
    %2822 = vmatprep.subr.bf16.mxu0 0
    %2823 = vmatpush2.bf16.msra.mxu0 0
    %2824 = vmatprep.mubr.bf16.mxu0 0
    %2825 = vmatmul.mubr.bf16.gmra.mxu0 %v2790
    %v2826 = vpop.f32.mrf.mxu0
    %v2827 = vadd.f32 0.0, %v2826
    %v2828 = vpop.f32.mrf.mxu0
    %v2829 = vpop.f32.mrf.mxu0
    %v2830 = vadd.f32 0.0, %v2829
    %v2831 = vpop.f32.mrf.mxu0
    %2832 = vdwg.mxu0
    %v2834 = vsel %vm1980, %v2344, 0
    %2836 = vmatprep.subr.bf16.mxu0 0
    %2837 = vmatpush1.bf16.msra.mxu0 0
    %2838 = vmatprep.subr.bf16.mxu0 0
    %2839 = vmatpush1.bf16.msra.mxu0 0
    %2840 = vmatprep.subr.bf16.mxu0 0
    %2841 = vmatpush1.bf16.msra.mxu0 0
    %2842 = vmatprep.subr.bf16.mxu0 0
    %2843 = vmatpush1.bf16.msra.mxu0 0
    %2844 = vmatprep.subr.bf16.mxu0 0
    %2845 = vmatpush1.bf16.msra.mxu0 0
    %2846 = vmatprep.subr.bf16.mxu0 0
    %2847 = vmatpush1.bf16.msra.mxu0 0
    %2848 = vmatprep.subr.bf16.mxu0 0
    %2849 = vmatpush1.bf16.msra.mxu0 0
    %2850 = vmatprep.subr.bf16.mxu0 0
    %2851 = vmatpush1.bf16.msra.mxu0 %v1179
    %2852 = vmatprep.subr.bf16.mxu0 0
    %2853 = vmatpush2.bf16.msra.mxu0 0
    %2854 = vmatprep.subr.bf16.mxu0 0
    %2855 = vmatpush2.bf16.msra.mxu0 0
    %2856 = vmatprep.subr.bf16.mxu0 0
    %2857 = vmatpush2.bf16.msra.mxu0 0
    %2858 = vmatprep.subr.bf16.mxu0 0
    %2859 = vmatpush2.bf16.msra.mxu0 0
    %2860 = vmatprep.subr.bf16.mxu0 0
    %2861 = vmatpush2.bf16.msra.mxu0 0
    %2862 = vmatprep.subr.bf16.mxu0 0
    %2863 = vmatpush2.bf16.msra.mxu0 0
    %2864 = vmatprep.subr.bf16.mxu0 0
    %2865 = vmatpush2.bf16.msra.mxu0 0
    %2866 = vmatprep.subr.bf16.mxu0 0
    %2867 = vmatpush2.bf16.msra.mxu0 0
    %2868 = vmatprep.mubr.bf16.mxu0 0
    %2869 = vmatmul.mubr.bf16.gmra.mxu0 %v2834
    %v2870 = vpop.f32.mrf.mxu0
    %v2871 = vadd.f32 0.0, %v2870
    %v2872 = vpop.f32.mrf.mxu0
    %v2873 = vpop.f32.mrf.mxu0
    %v2874 = vadd.f32 0.0, %v2873
    %v2875 = vpop.f32.mrf.mxu0
    %2876 = vdwg.mxu0
    %v2878 = vsel %vm1980, %v2345, 0
    %2880 = vmatprep.subr.bf16.mxu0 0
    %2881 = vmatpush1.bf16.msra.mxu0 0
    %2882 = vmatprep.subr.bf16.mxu0 0
    %2883 = vmatpush1.bf16.msra.mxu0 0
    %2884 = vmatprep.subr.bf16.mxu0 0
    %2885 = vmatpush1.bf16.msra.mxu0 0
    %2886 = vmatprep.subr.bf16.mxu0 0
    %2887 = vmatpush1.bf16.msra.mxu0 0
    %2888 = vmatprep.subr.bf16.mxu0 0
    %2889 = vmatpush1.bf16.msra.mxu0 0
    %2890 = vmatprep.subr.bf16.mxu0 0
    %2891 = vmatpush1.bf16.msra.mxu0 0
    %2892 = vmatprep.subr.bf16.mxu0 0
    %2893 = vmatpush1.bf16.msra.mxu0 0
    %2894 = vmatprep.subr.bf16.mxu0 0
    %2895 = vmatpush1.bf16.msra.mxu0 %v1180
    %2896 = vmatprep.subr.bf16.mxu0 0
    %2897 = vmatpush2.bf16.msra.mxu0 0
    %2898 = vmatprep.subr.bf16.mxu0 0
    %2899 = vmatpush2.bf16.msra.mxu0 0
    %2900 = vmatprep.subr.bf16.mxu0 0
    %2901 = vmatpush2.bf16.msra.mxu0 0
    %2902 = vmatprep.subr.bf16.mxu0 0
    %2903 = vmatpush2.bf16.msra.mxu0 0
    %2904 = vmatprep.subr.bf16.mxu0 0
    %2905 = vmatpush2.bf16.msra.mxu0 0
    %2906 = vmatprep.subr.bf16.mxu0 0
    %2907 = vmatpush2.bf16.msra.mxu0 0
    %2908 = vmatprep.subr.bf16.mxu0 0
    %2909 = vmatpush2.bf16.msra.mxu0 0
    %2910 = vmatprep.subr.bf16.mxu0 0
    %2911 = vmatpush2.bf16.msra.mxu0 0
    %2912 = vmatprep.mubr.bf16.mxu0 0
    %2913 = vmatmul.mubr.bf16.gmra.mxu0 %v2878
    %v2914 = vpop.f32.mrf.mxu0
    %v2915 = vadd.f32 0.0, %v2914
    %v2916 = vpop.f32.mrf.mxu0
    %v2917 = vpop.f32.mrf.mxu0
    %v2918 = vadd.f32 0.0, %v2917
    %v2919 = vpop.f32.mrf.mxu0
    %2920 = vdwg.mxu0
    %v2922 = vsel %vm1980, %v2346, 0
    %2924 = vmatprep.subr.bf16.mxu0 0
    %2925 = vmatpush1.bf16.msra.mxu0 0
    %2926 = vmatprep.subr.bf16.mxu0 0
    %2927 = vmatpush1.bf16.msra.mxu0 0
    %2928 = vmatprep.subr.bf16.mxu0 0
    %2929 = vmatpush1.bf16.msra.mxu0 0
    %2930 = vmatprep.subr.bf16.mxu0 0
    %2931 = vmatpush1.bf16.msra.mxu0 0
    %2932 = vmatprep.subr.bf16.mxu0 0
    %2933 = vmatpush1.bf16.msra.mxu0 0
    %2934 = vmatprep.subr.bf16.mxu0 0
    %2935 = vmatpush1.bf16.msra.mxu0 0
    %2936 = vmatprep.subr.bf16.mxu0 0
    %2937 = vmatpush1.bf16.msra.mxu0 0
    %2938 = vmatprep.subr.bf16.mxu0 0
    %2939 = vmatpush1.bf16.msra.mxu0 %v1181
    %2940 = vmatprep.subr.bf16.mxu0 0
    %2941 = vmatpush2.bf16.msra.mxu0 0
    %2942 = vmatprep.subr.bf16.mxu0 0
    %2943 = vmatpush2.bf16.msra.mxu0 0
    %2944 = vmatprep.subr.bf16.mxu0 0
    %2945 = vmatpush2.bf16.msra.mxu0 0
    %2946 = vmatprep.subr.bf16.mxu0 0
    %2947 = vmatpush2.bf16.msra.mxu0 0
    %2948 = vmatprep.subr.bf16.mxu0 0
    %2949 = vmatpush2.bf16.msra.mxu0 0
    %2950 = vmatprep.subr.bf16.mxu0 0
    %2951 = vmatpush2.bf16.msra.mxu0 0
    %2952 = vmatprep.subr.bf16.mxu0 0
    %2953 = vmatpush2.bf16.msra.mxu0 0
    %2954 = vmatprep.subr.bf16.mxu0 0
    %2955 = vmatpush2.bf16.msra.mxu0 0
    %2956 = vmatprep.mubr.bf16.mxu0 0
    %2957 = vmatmul.mubr.bf16.gmra.mxu0 %v2922
    %v2958 = vpop.f32.mrf.mxu0
    %v2959 = vadd.f32 0.0, %v2958
    %v2960 = vpop.f32.mrf.mxu0
    %v2961 = vpop.f32.mrf.mxu0
    %v2962 = vadd.f32 0.0, %v2961
    %v2963 = vpop.f32.mrf.mxu0
    %2964 = vdwg.mxu0
    %v2966 = vsel %vm1980, %v2347, 0
    %2968 = vmatprep.subr.bf16.mxu0 0
    %2969 = vmatpush1.bf16.msra.mxu0 0
    %2970 = vmatprep.subr.bf16.mxu0 0
    %2971 = vmatpush1.bf16.msra.mxu0 0
    %2972 = vmatprep.subr.bf16.mxu0 0
    %2973 = vmatpush1.bf16.msra.mxu0 0
    %2974 = vmatprep.subr.bf16.mxu0 0
    %2975 = vmatpush1.bf16.msra.mxu0 0
    %2976 = vmatprep.subr.bf16.mxu0 0
    %2977 = vmatpush1.bf16.msra.mxu0 0
    %2978 = vmatprep.subr.bf16.mxu0 0
    %2979 = vmatpush1.bf16.msra.mxu0 0
    %2980 = vmatprep.subr.bf16.mxu0 0
    %2981 = vmatpush1.bf16.msra.mxu0 0
    %2982 = vmatprep.subr.bf16.mxu0 0
    %2983 = vmatpush1.bf16.msra.mxu0 %v1182
    %2984 = vmatprep.subr.bf16.mxu0 0
    %2985 = vmatpush2.bf16.msra.mxu0 0
    %2986 = vmatprep.subr.bf16.mxu0 0
    %2987 = vmatpush2.bf16.msra.mxu0 0
    %2988 = vmatprep.subr.bf16.mxu0 0
    %2989 = vmatpush2.bf16.msra.mxu0 0
    %2990 = vmatprep.subr.bf16.mxu0 0
    %2991 = vmatpush2.bf16.msra.mxu0 0
    %2992 = vmatprep.subr.bf16.mxu0 0
    %2993 = vmatpush2.bf16.msra.mxu0 0
    %2994 = vmatprep.subr.bf16.mxu0 0
    %2995 = vmatpush2.bf16.msra.mxu0 0
    %2996 = vmatprep.subr.bf16.mxu0 0
    %2997 = vmatpush2.bf16.msra.mxu0 0
    %2998 = vmatprep.subr.bf16.mxu0 0
    %2999 = vmatpush2.bf16.msra.mxu0 0
    %3000 = vmatprep.mubr.bf16.mxu0 0
    %3001 = vmatmul.mubr.bf16.gmra.mxu0 %v2966
    %v3002 = vpop.f32.mrf.mxu0
    %v3003 = vadd.f32 0.0, %v3002
    %v3004 = vpop.f32.mrf.mxu0
    %v3005 = vpop.f32.mrf.mxu0
    %v3006 = vadd.f32 0.0, %v3005
    %v3007 = vpop.f32.mrf.mxu0
    %3008 = vdwg.mxu0
    %v3010 = vsel %vm1980, %v2348, 0
    %3012 = vmatprep.subr.bf16.mxu0 0
    %3013 = vmatpush1.bf16.msra.mxu0 0
    %3014 = vmatprep.subr.bf16.mxu0 0
    %3015 = vmatpush1.bf16.msra.mxu0 0
    %3016 = vmatprep.subr.bf16.mxu0 0
    %3017 = vmatpush1.bf16.msra.mxu0 0
    %3018 = vmatprep.subr.bf16.mxu0 0
    %3019 = vmatpush1.bf16.msra.mxu0 0
    %3020 = vmatprep.subr.bf16.mxu0 0
    %3021 = vmatpush1.bf16.msra.mxu0 0
    %3022 = vmatprep.subr.bf16.mxu0 0
    %3023 = vmatpush1.bf16.msra.mxu0 0
    %3024 = vmatprep.subr.bf16.mxu0 0
    %3025 = vmatpush1.bf16.msra.mxu0 0
    %3026 = vmatprep.subr.bf16.mxu0 0
    %3027 = vmatpush1.bf16.msra.mxu0 %v1183
    %3028 = vmatprep.subr.bf16.mxu0 0
    %3029 = vmatpush2.bf16.msra.mxu0 0
    %3030 = vmatprep.subr.bf16.mxu0 0
    %3031 = vmatpush2.bf16.msra.mxu0 0
    %3032 = vmatprep.subr.bf16.mxu0 0
    %3033 = vmatpush2.bf16.msra.mxu0 0
    %3034 = vmatprep.subr.bf16.mxu0 0
    %3035 = vmatpush2.bf16.msra.mxu0 0
    %3036 = vmatprep.subr.bf16.mxu0 0
    %3037 = vmatpush2.bf16.msra.mxu0 0
    %3038 = vmatprep.subr.bf16.mxu0 0
    %3039 = vmatpush2.bf16.msra.mxu0 0
    %3040 = vmatprep.subr.bf16.mxu0 0
    %3041 = vmatpush2.bf16.msra.mxu0 0
    %3042 = vmatprep.subr.bf16.mxu0 0
    %3043 = vmatpush2.bf16.msra.mxu0 0
    %3044 = vmatprep.mubr.bf16.mxu0 0
    %3045 = vmatmul.mubr.bf16.gmra.mxu0 %v3010
    %v3046 = vpop.f32.mrf.mxu0
    %v3047 = vadd.f32 0.0, %v3046
    %v3048 = vpop.f32.mrf.mxu0
    %v3049 = vpop.f32.mrf.mxu0
    %v3050 = vadd.f32 0.0, %v3049
    %v3051 = vpop.f32.mrf.mxu0
    %3052 = vdwg.mxu0
    %3054 = vrot.lane.b32.xlu0 %v1136, 96
    %v3055 = vpop.permute.xlu0 %3054
    %3057 = vrot.lane.b32.xlu0 %v1152, 96
    %v3058 = vpop.permute.xlu0 %3057
    %v3060 = vsel %vm1191, %v3055, 0
    %v3063 = vsel %vm1191, %v3058, 0
    %3065 = vmatprep.subr.bf16.mxu0 0
    %3066 = vmatpush1.bf16.xpose.msra.mxu0 0
    %3067 = vmatprep.subr.bf16.mxu0 0
    %3068 = vmatpush1.bf16.xpose.msra.mxu0 0
    %3069 = vmatprep.subr.bf16.mxu0 0
    %3070 = vmatpush1.bf16.xpose.msra.mxu0 0
    %3071 = vmatprep.subr.bf16.mxu0 0
    %3072 = vmatpush1.bf16.xpose.msra.mxu0 0
    %3073 = vmatprep.subr.bf16.mxu0 0
    %3074 = vmatpush1.bf16.xpose.msra.mxu0 0
    %3075 = vmatprep.subr.bf16.mxu0 0
    %3076 = vmatpush1.bf16.xpose.msra.mxu0 0
    %3077 = vmatprep.subr.bf16.mxu0 0
    %3078 = vmatpush1.bf16.xpose.msra.mxu0 0
    %3079 = vmatprep.subr.bf16.mxu0 0
    %3080 = vmatpush1.bf16.xpose.msra.mxu0 %v3063
    %3081 = vmatprep.subr.bf16.mxu0 0
    %3082 = vmatpush2.bf16.xpose.msra.mxu0 0
    %3083 = vmatprep.subr.bf16.mxu0 0
    %3084 = vmatpush2.bf16.xpose.msra.mxu0 0
    %3085 = vmatprep.subr.bf16.mxu0 0
    %3086 = vmatpush2.bf16.xpose.msra.mxu0 0
    %3087 = vmatprep.subr.bf16.mxu0 0
    %3088 = vmatpush2.bf16.xpose.msra.mxu0 0
    %3089 = vmatprep.subr.bf16.mxu0 0
    %3090 = vmatpush2.bf16.xpose.msra.mxu0 0
    %3091 = vmatprep.subr.bf16.mxu0 0
    %3092 = vmatpush2.bf16.xpose.msra.mxu0 0
    %3093 = vmatprep.subr.bf16.mxu0 0
    %3094 = vmatpush2.bf16.xpose.msra.mxu0 0
    %3095 = vmatprep.subr.bf16.mxu0 0
    %3096 = vmatpush2.bf16.xpose.msra.mxu0 0
    %3097 = vmatprep.mubr.bf16.mxu0 0
    %3098 = vmatmul.mubr.bf16.gmra.mxu0 %v3060
    %v3099 = vpop.f32.mrf.mxu0
    %v3100 = vadd.f32 0.0, %v3099
    %v3101 = vpop.f32.mrf.mxu0
    %v3102 = vpop.f32.mrf.mxu0
    %v3103 = vadd.f32 0.0, %v3102
    %v3104 = vpop.f32.mrf.mxu0
    %3105 = vdwg.mxu0
    %3107 = vrot.lane.b32.xlu0 %v1137, 96
    %v3108 = vpop.permute.xlu0 %3107
    %3110 = vrot.lane.b32.xlu0 %v1153, 96
    %v3111 = vpop.permute.xlu0 %3110
    %v3113 = vsel %vm1191, %v3108, 0
    %v3116 = vsel %vm1191, %v3111, 0
    %3118 = vmatprep.subr.bf16.mxu0 0
    %3119 = vmatpush1.bf16.xpose.msra.mxu0 0
    %3120 = vmatprep.subr.bf16.mxu0 0
    %3121 = vmatpush1.bf16.xpose.msra.mxu0 0
    %3122 = vmatprep.subr.bf16.mxu0 0
    %3123 = vmatpush1.bf16.xpose.msra.mxu0 0
    %3124 = vmatprep.subr.bf16.mxu0 0
    %3125 = vmatpush1.bf16.xpose.msra.mxu0 0
    %3126 = vmatprep.subr.bf16.mxu0 0
    %3127 = vmatpush1.bf16.xpose.msra.mxu0 0
    %3128 = vmatprep.subr.bf16.mxu0 0
    %3129 = vmatpush1.bf16.xpose.msra.mxu0 0
    %3130 = vmatprep.subr.bf16.mxu0 0
    %3131 = vmatpush1.bf16.xpose.msra.mxu0 0
    %3132 = vmatprep.subr.bf16.mxu0 0
    %3133 = vmatpush1.bf16.xpose.msra.mxu0 %v3116
    %3134 = vmatprep.subr.bf16.mxu0 0
    %3135 = vmatpush2.bf16.xpose.msra.mxu0 0
    %3136 = vmatprep.subr.bf16.mxu0 0
    %3137 = vmatpush2.bf16.xpose.msra.mxu0 0
    %3138 = vmatprep.subr.bf16.mxu0 0
    %3139 = vmatpush2.bf16.xpose.msra.mxu0 0
    %3140 = vmatprep.subr.bf16.mxu0 0
    %3141 = vmatpush2.bf16.xpose.msra.mxu0 0
    %3142 = vmatprep.subr.bf16.mxu0 0
    %3143 = vmatpush2.bf16.xpose.msra.mxu0 0
    %3144 = vmatprep.subr.bf16.mxu0 0
    %3145 = vmatpush2.bf16.xpose.msra.mxu0 0
    %3146 = vmatprep.subr.bf16.mxu0 0
    %3147 = vmatpush2.bf16.xpose.msra.mxu0 0
    %3148 = vmatprep.subr.bf16.mxu0 0
    %3149 = vmatpush2.bf16.xpose.msra.mxu0 0
    %3150 = vmatprep.mubr.bf16.mxu0 0
    %3151 = vmatmul.mubr.bf16.gmra.mxu0 %v3113
    %v3152 = vpop.f32.mrf.mxu0
    %v3153 = vadd.f32 0.0, %v3152
    %v3154 = vpop.f32.mrf.mxu0
    %v3155 = vpop.f32.mrf.mxu0
    %v3156 = vadd.f32 0.0, %v3155
    %v3157 = vpop.f32.mrf.mxu0
    %3158 = vdwg.mxu0
    %3160 = vrot.lane.b32.xlu0 %v1138, 96
    %v3161 = vpop.permute.xlu0 %3160
    %3163 = vrot.lane.b32.xlu0 %v1154, 96
    %v3164 = vpop.permute.xlu0 %3163
    %v3166 = vsel %vm1191, %v3161, 0
    %v3169 = vsel %vm1191, %v3164, 0
    %3171 = vmatprep.subr.bf16.mxu0 0
    %3172 = vmatpush1.bf16.xpose.msra.mxu0 0
    %3173 = vmatprep.subr.bf16.mxu0 0
    %3174 = vmatpush1.bf16.xpose.msra.mxu0 0
    %3175 = vmatprep.subr.bf16.mxu0 0
    %3176 = vmatpush1.bf16.xpose.msra.mxu0 0
    %3177 = vmatprep.subr.bf16.mxu0 0
    %3178 = vmatpush1.bf16.xpose.msra.mxu0 0
    %3179 = vmatprep.subr.bf16.mxu0 0
    %3180 = vmatpush1.bf16.xpose.msra.mxu0 0
    %3181 = vmatprep.subr.bf16.mxu0 0
    %3182 = vmatpush1.bf16.xpose.msra.mxu0 0
    %3183 = vmatprep.subr.bf16.mxu0 0
    %3184 = vmatpush1.bf16.xpose.msra.mxu0 0
    %3185 = vmatprep.subr.bf16.mxu0 0
    %3186 = vmatpush1.bf16.xpose.msra.mxu0 %v3169
    %3187 = vmatprep.subr.bf16.mxu0 0
    %3188 = vmatpush2.bf16.xpose.msra.mxu0 0
    %3189 = vmatprep.subr.bf16.mxu0 0
    %3190 = vmatpush2.bf16.xpose.msra.mxu0 0
    %3191 = vmatprep.subr.bf16.mxu0 0
    %3192 = vmatpush2.bf16.xpose.msra.mxu0 0
    %3193 = vmatprep.subr.bf16.mxu0 0
    %3194 = vmatpush2.bf16.xpose.msra.mxu0 0
    %3195 = vmatprep.subr.bf16.mxu0 0
    %3196 = vmatpush2.bf16.xpose.msra.mxu0 0
    %3197 = vmatprep.subr.bf16.mxu0 0
    %3198 = vmatpush2.bf16.xpose.msra.mxu0 0
    %3199 = vmatprep.subr.bf16.mxu0 0
    %3200 = vmatpush2.bf16.xpose.msra.mxu0 0
    %3201 = vmatprep.subr.bf16.mxu0 0
    %3202 = vmatpush2.bf16.xpose.msra.mxu0 0
    %3203 = vmatprep.mubr.bf16.mxu0 0
    %3204 = vmatmul.mubr.bf16.gmra.mxu0 %v3166
    %v3205 = vpop.f32.mrf.mxu0
    %v3206 = vadd.f32 0.0, %v3205
    %v3207 = vpop.f32.mrf.mxu0
    %v3208 = vpop.f32.mrf.mxu0
    %v3209 = vadd.f32 0.0, %v3208
    %v3210 = vpop.f32.mrf.mxu0
    %3211 = vdwg.mxu0
    %3213 = vrot.lane.b32.xlu0 %v1139, 96
    %v3214 = vpop.permute.xlu0 %3213
    %3216 = vrot.lane.b32.xlu0 %v1155, 96
    %v3217 = vpop.permute.xlu0 %3216
    %v3219 = vsel %vm1191, %v3214, 0
    %v3222 = vsel %vm1191, %v3217, 0
    %3224 = vmatprep.subr.bf16.mxu0 0
    %3225 = vmatpush1.bf16.xpose.msra.mxu0 0
    %3226 = vmatprep.subr.bf16.mxu0 0
    %3227 = vmatpush1.bf16.xpose.msra.mxu0 0
    %3228 = vmatprep.subr.bf16.mxu0 0
    %3229 = vmatpush1.bf16.xpose.msra.mxu0 0
    %3230 = vmatprep.subr.bf16.mxu0 0
    %3231 = vmatpush1.bf16.xpose.msra.mxu0 0
    %3232 = vmatprep.subr.bf16.mxu0 0
    %3233 = vmatpush1.bf16.xpose.msra.mxu0 0
    %3234 = vmatprep.subr.bf16.mxu0 0
    %3235 = vmatpush1.bf16.xpose.msra.mxu0 0
    %3236 = vmatprep.subr.bf16.mxu0 0
    %3237 = vmatpush1.bf16.xpose.msra.mxu0 0
    %3238 = vmatprep.subr.bf16.mxu0 0
    %3239 = vmatpush1.bf16.xpose.msra.mxu0 %v3222
    %3240 = vmatprep.subr.bf16.mxu0 0
    %3241 = vmatpush2.bf16.xpose.msra.mxu0 0
    %3242 = vmatprep.subr.bf16.mxu0 0
    %3243 = vmatpush2.bf16.xpose.msra.mxu0 0
    %3244 = vmatprep.subr.bf16.mxu0 0
    %3245 = vmatpush2.bf16.xpose.msra.mxu0 0
    %3246 = vmatprep.subr.bf16.mxu0 0
    %3247 = vmatpush2.bf16.xpose.msra.mxu0 0
    %3248 = vmatprep.subr.bf16.mxu0 0
    %3249 = vmatpush2.bf16.xpose.msra.mxu0 0
    %3250 = vmatprep.subr.bf16.mxu0 0
    %3251 = vmatpush2.bf16.xpose.msra.mxu0 0
    %3252 = vmatprep.subr.bf16.mxu0 0
    %3253 = vmatpush2.bf16.xpose.msra.mxu0 0
    %3254 = vmatprep.subr.bf16.mxu0 0
    %3255 = vmatpush2.bf16.xpose.msra.mxu0 0
    %3256 = vmatprep.mubr.bf16.mxu0 0
    %3257 = vmatmul.mubr.bf16.gmra.mxu0 %v3219
    %v3258 = vpop.f32.mrf.mxu0
    %v3259 = vadd.f32 0.0, %v3258
    %v3260 = vpop.f32.mrf.mxu0
    %v3261 = vpop.f32.mrf.mxu0
    %v3262 = vadd.f32 0.0, %v3261
    %v3263 = vpop.f32.mrf.mxu0
    %3264 = vdwg.mxu0
    %3266 = vrot.lane.b32.xlu0 %v1140, 96
    %v3267 = vpop.permute.xlu0 %3266
    %3269 = vrot.lane.b32.xlu0 %v1156, 96
    %v3270 = vpop.permute.xlu0 %3269
    %v3272 = vsel %vm1191, %v3267, 0
    %v3275 = vsel %vm1191, %v3270, 0
    %3277 = vmatprep.subr.bf16.mxu0 0
    %3278 = vmatpush1.bf16.xpose.msra.mxu0 0
    %3279 = vmatprep.subr.bf16.mxu0 0
    %3280 = vmatpush1.bf16.xpose.msra.mxu0 0
    %3281 = vmatprep.subr.bf16.mxu0 0
    %3282 = vmatpush1.bf16.xpose.msra.mxu0 0
    %3283 = vmatprep.subr.bf16.mxu0 0
    %3284 = vmatpush1.bf16.xpose.msra.mxu0 0
    %3285 = vmatprep.subr.bf16.mxu0 0
    %3286 = vmatpush1.bf16.xpose.msra.mxu0 0
    %3287 = vmatprep.subr.bf16.mxu0 0
    %3288 = vmatpush1.bf16.xpose.msra.mxu0 0
    %3289 = vmatprep.subr.bf16.mxu0 0
    %3290 = vmatpush1.bf16.xpose.msra.mxu0 0
    %3291 = vmatprep.subr.bf16.mxu0 0
    %3292 = vmatpush1.bf16.xpose.msra.mxu0 %v3275
    %3293 = vmatprep.subr.bf16.mxu0 0
    %3294 = vmatpush2.bf16.xpose.msra.mxu0 0
    %3295 = vmatprep.subr.bf16.mxu0 0
    %3296 = vmatpush2.bf16.xpose.msra.mxu0 0
    %3297 = vmatprep.subr.bf16.mxu0 0
    %3298 = vmatpush2.bf16.xpose.msra.mxu0 0
    %3299 = vmatprep.subr.bf16.mxu0 0
    %3300 = vmatpush2.bf16.xpose.msra.mxu0 0
    %3301 = vmatprep.subr.bf16.mxu0 0
    %3302 = vmatpush2.bf16.xpose.msra.mxu0 0
    %3303 = vmatprep.subr.bf16.mxu0 0
    %3304 = vmatpush2.bf16.xpose.msra.mxu0 0
    %3305 = vmatprep.subr.bf16.mxu0 0
    %3306 = vmatpush2.bf16.xpose.msra.mxu0 0
    %3307 = vmatprep.subr.bf16.mxu0 0
    %3308 = vmatpush2.bf16.xpose.msra.mxu0 0
    %3309 = vmatprep.mubr.bf16.mxu0 0
    %3310 = vmatmul.mubr.bf16.gmra.mxu0 %v3272
    %v3311 = vpop.f32.mrf.mxu0
    %v3312 = vadd.f32 0.0, %v3311
    %v3313 = vpop.f32.mrf.mxu0
    %v3314 = vpop.f32.mrf.mxu0
    %v3315 = vadd.f32 0.0, %v3314
    %v3316 = vpop.f32.mrf.mxu0
    %3317 = vdwg.mxu0
    %3319 = vrot.lane.b32.xlu0 %v1141, 96
    %v3320 = vpop.permute.xlu0 %3319
    %3322 = vrot.lane.b32.xlu0 %v1157, 96
    %v3323 = vpop.permute.xlu0 %3322
    %v3325 = vsel %vm1191, %v3320, 0
    %v3328 = vsel %vm1191, %v3323, 0
    %3330 = vmatprep.subr.bf16.mxu0 0
    %3331 = vmatpush1.bf16.xpose.msra.mxu0 0
    %3332 = vmatprep.subr.bf16.mxu0 0
    %3333 = vmatpush1.bf16.xpose.msra.mxu0 0
    %3334 = vmatprep.subr.bf16.mxu0 0
    %3335 = vmatpush1.bf16.xpose.msra.mxu0 0
    %3336 = vmatprep.subr.bf16.mxu0 0
    %3337 = vmatpush1.bf16.xpose.msra.mxu0 0
    %3338 = vmatprep.subr.bf16.mxu0 0
    %3339 = vmatpush1.bf16.xpose.msra.mxu0 0
    %3340 = vmatprep.subr.bf16.mxu0 0
    %3341 = vmatpush1.bf16.xpose.msra.mxu0 0
    %3342 = vmatprep.subr.bf16.mxu0 0
    %3343 = vmatpush1.bf16.xpose.msra.mxu0 0
    %3344 = vmatprep.subr.bf16.mxu0 0
    %3345 = vmatpush1.bf16.xpose.msra.mxu0 %v3328
    %3346 = vmatprep.subr.bf16.mxu0 0
    %3347 = vmatpush2.bf16.xpose.msra.mxu0 0
    %3348 = vmatprep.subr.bf16.mxu0 0
    %3349 = vmatpush2.bf16.xpose.msra.mxu0 0
    %3350 = vmatprep.subr.bf16.mxu0 0
    %3351 = vmatpush2.bf16.xpose.msra.mxu0 0
    %3352 = vmatprep.subr.bf16.mxu0 0
    %3353 = vmatpush2.bf16.xpose.msra.mxu0 0
    %3354 = vmatprep.subr.bf16.mxu0 0
    %3355 = vmatpush2.bf16.xpose.msra.mxu0 0
    %3356 = vmatprep.subr.bf16.mxu0 0
    %3357 = vmatpush2.bf16.xpose.msra.mxu0 0
    %3358 = vmatprep.subr.bf16.mxu0 0
    %3359 = vmatpush2.bf16.xpose.msra.mxu0 0
    %3360 = vmatprep.subr.bf16.mxu0 0
    %3361 = vmatpush2.bf16.xpose.msra.mxu0 0
    %3362 = vmatprep.mubr.bf16.mxu0 0
    %3363 = vmatmul.mubr.bf16.gmra.mxu0 %v3325
    %v3364 = vpop.f32.mrf.mxu0
    %v3365 = vadd.f32 0.0, %v3364
    %v3366 = vpop.f32.mrf.mxu0
    %v3367 = vpop.f32.mrf.mxu0
    %v3368 = vadd.f32 0.0, %v3367
    %v3369 = vpop.f32.mrf.mxu0
    %3370 = vdwg.mxu0
    %3372 = vrot.lane.b32.xlu0 %v1142, 96
    %v3373 = vpop.permute.xlu0 %3372
    %3375 = vrot.lane.b32.xlu0 %v1158, 96
    %v3376 = vpop.permute.xlu0 %3375
    %v3378 = vsel %vm1191, %v3373, 0
    %v3381 = vsel %vm1191, %v3376, 0
    %3383 = vmatprep.subr.bf16.mxu0 0
    %3384 = vmatpush1.bf16.xpose.msra.mxu0 0
    %3385 = vmatprep.subr.bf16.mxu0 0
    %3386 = vmatpush1.bf16.xpose.msra.mxu0 0
    %3387 = vmatprep.subr.bf16.mxu0 0
    %3388 = vmatpush1.bf16.xpose.msra.mxu0 0
    %3389 = vmatprep.subr.bf16.mxu0 0
    %3390 = vmatpush1.bf16.xpose.msra.mxu0 0
    %3391 = vmatprep.subr.bf16.mxu0 0
    %3392 = vmatpush1.bf16.xpose.msra.mxu0 0
    %3393 = vmatprep.subr.bf16.mxu0 0
    %3394 = vmatpush1.bf16.xpose.msra.mxu0 0
    %3395 = vmatprep.subr.bf16.mxu0 0
    %3396 = vmatpush1.bf16.xpose.msra.mxu0 0
    %3397 = vmatprep.subr.bf16.mxu0 0
    %3398 = vmatpush1.bf16.xpose.msra.mxu0 %v3381
    %3399 = vmatprep.subr.bf16.mxu0 0
    %3400 = vmatpush2.bf16.xpose.msra.mxu0 0
    %3401 = vmatprep.subr.bf16.mxu0 0
    %3402 = vmatpush2.bf16.xpose.msra.mxu0 0
    %3403 = vmatprep.subr.bf16.mxu0 0
    %3404 = vmatpush2.bf16.xpose.msra.mxu0 0
    %3405 = vmatprep.subr.bf16.mxu0 0
    %3406 = vmatpush2.bf16.xpose.msra.mxu0 0
    %3407 = vmatprep.subr.bf16.mxu0 0
    %3408 = vmatpush2.bf16.xpose.msra.mxu0 0
    %3409 = vmatprep.subr.bf16.mxu0 0
    %3410 = vmatpush2.bf16.xpose.msra.mxu0 0
    %3411 = vmatprep.subr.bf16.mxu0 0
    %3412 = vmatpush2.bf16.xpose.msra.mxu0 0
    %3413 = vmatprep.subr.bf16.mxu0 0
    %3414 = vmatpush2.bf16.xpose.msra.mxu0 0
    %3415 = vmatprep.mubr.bf16.mxu0 0
    %3416 = vmatmul.mubr.bf16.gmra.mxu0 %v3378
    %v3417 = vpop.f32.mrf.mxu0
    %v3418 = vadd.f32 0.0, %v3417
    %v3419 = vpop.f32.mrf.mxu0
    %v3420 = vpop.f32.mrf.mxu0
    %v3421 = vadd.f32 0.0, %v3420
    %v3422 = vpop.f32.mrf.mxu0
    %3423 = vdwg.mxu0
    %3425 = vrot.lane.b32.xlu0 %v1143, 96
    %v3426 = vpop.permute.xlu0 %3425
    %3428 = vrot.lane.b32.xlu0 %v1159, 96
    %v3429 = vpop.permute.xlu0 %3428
    %v3431 = vsel %vm1191, %v3426, 0
    %v3434 = vsel %vm1191, %v3429, 0
    %3436 = vmatprep.subr.bf16.mxu0 0
    %3437 = vmatpush1.bf16.xpose.msra.mxu0 0
    %3438 = vmatprep.subr.bf16.mxu0 0
    %3439 = vmatpush1.bf16.xpose.msra.mxu0 0
    %3440 = vmatprep.subr.bf16.mxu0 0
    %3441 = vmatpush1.bf16.xpose.msra.mxu0 0
    %3442 = vmatprep.subr.bf16.mxu0 0
    %3443 = vmatpush1.bf16.xpose.msra.mxu0 0
    %3444 = vmatprep.subr.bf16.mxu0 0
    %3445 = vmatpush1.bf16.xpose.msra.mxu0 0
    %3446 = vmatprep.subr.bf16.mxu0 0
    %3447 = vmatpush1.bf16.xpose.msra.mxu0 0
    %3448 = vmatprep.subr.bf16.mxu0 0
    %3449 = vmatpush1.bf16.xpose.msra.mxu0 0
    %3450 = vmatprep.subr.bf16.mxu0 0
    %3451 = vmatpush1.bf16.xpose.msra.mxu0 %v3434
    %3452 = vmatprep.subr.bf16.mxu0 0
    %3453 = vmatpush2.bf16.xpose.msra.mxu0 0
    %3454 = vmatprep.subr.bf16.mxu0 0
    %3455 = vmatpush2.bf16.xpose.msra.mxu0 0
    %3456 = vmatprep.subr.bf16.mxu0 0
    %3457 = vmatpush2.bf16.xpose.msra.mxu0 0
    %3458 = vmatprep.subr.bf16.mxu0 0
    %3459 = vmatpush2.bf16.xpose.msra.mxu0 0
    %3460 = vmatprep.subr.bf16.mxu0 0
    %3461 = vmatpush2.bf16.xpose.msra.mxu0 0
    %3462 = vmatprep.subr.bf16.mxu0 0
    %3463 = vmatpush2.bf16.xpose.msra.mxu0 0
    %3464 = vmatprep.subr.bf16.mxu0 0
    %3465 = vmatpush2.bf16.xpose.msra.mxu0 0
    %3466 = vmatprep.subr.bf16.mxu0 0
    %3467 = vmatpush2.bf16.xpose.msra.mxu0 0
    %3468 = vmatprep.mubr.bf16.mxu0 0
    %3469 = vmatmul.mubr.bf16.gmra.mxu0 %v3431
    %v3470 = vpop.f32.mrf.mxu0
    %v3471 = vadd.f32 0.0, %v3470
    %v3472 = vpop.f32.mrf.mxu0
    %v3473 = vpop.f32.mrf.mxu0
    %v3474 = vadd.f32 0.0, %v3473
    %v3475 = vpop.f32.mrf.mxu0
    %3476 = vdwg.mxu0
    %3478 = vrot.lane.b32.xlu0 %v1144, 96
    %v3479 = vpop.permute.xlu0 %3478
    %3481 = vrot.lane.b32.xlu0 %v1160, 96
    %v3482 = vpop.permute.xlu0 %3481
    %v3484 = vsel %vm1191, %v3479, 0
    %v3487 = vsel %vm1191, %v3482, 0
    %3489 = vmatprep.subr.bf16.mxu0 0
    %3490 = vmatpush1.bf16.xpose.msra.mxu0 0
    %3491 = vmatprep.subr.bf16.mxu0 0
    %3492 = vmatpush1.bf16.xpose.msra.mxu0 0
    %3493 = vmatprep.subr.bf16.mxu0 0
    %3494 = vmatpush1.bf16.xpose.msra.mxu0 0
    %3495 = vmatprep.subr.bf16.mxu0 0
    %3496 = vmatpush1.bf16.xpose.msra.mxu0 0
    %3497 = vmatprep.subr.bf16.mxu0 0
    %3498 = vmatpush1.bf16.xpose.msra.mxu0 0
    %3499 = vmatprep.subr.bf16.mxu0 0
    %3500 = vmatpush1.bf16.xpose.msra.mxu0 0
    %3501 = vmatprep.subr.bf16.mxu0 0
    %3502 = vmatpush1.bf16.xpose.msra.mxu0 0
    %3503 = vmatprep.subr.bf16.mxu0 0
    %3504 = vmatpush1.bf16.xpose.msra.mxu0 %v3487
    %3505 = vmatprep.subr.bf16.mxu0 0
    %3506 = vmatpush2.bf16.xpose.msra.mxu0 0
    %3507 = vmatprep.subr.bf16.mxu0 0
    %3508 = vmatpush2.bf16.xpose.msra.mxu0 0
    %3509 = vmatprep.subr.bf16.mxu0 0
    %3510 = vmatpush2.bf16.xpose.msra.mxu0 0
    %3511 = vmatprep.subr.bf16.mxu0 0
    %3512 = vmatpush2.bf16.xpose.msra.mxu0 0
    %3513 = vmatprep.subr.bf16.mxu0 0
    %3514 = vmatpush2.bf16.xpose.msra.mxu0 0
    %3515 = vmatprep.subr.bf16.mxu0 0
    %3516 = vmatpush2.bf16.xpose.msra.mxu0 0
    %3517 = vmatprep.subr.bf16.mxu0 0
    %3518 = vmatpush2.bf16.xpose.msra.mxu0 0
    %3519 = vmatprep.subr.bf16.mxu0 0
    %3520 = vmatpush2.bf16.xpose.msra.mxu0 0
    %3521 = vmatprep.mubr.bf16.mxu0 0
    %3522 = vmatmul.mubr.bf16.gmra.mxu0 %v3484
    %v3523 = vpop.f32.mrf.mxu0
    %v3524 = vadd.f32 0.0, %v3523
    %v3525 = vpop.f32.mrf.mxu0
    %v3526 = vpop.f32.mrf.mxu0
    %v3527 = vadd.f32 0.0, %v3526
    %v3528 = vpop.f32.mrf.mxu0
    %3529 = vdwg.mxu0
    %3531 = vrot.lane.b32.xlu0 %v1145, 96
    %v3532 = vpop.permute.xlu0 %3531
    %3534 = vrot.lane.b32.xlu0 %v1161, 96
    %v3535 = vpop.permute.xlu0 %3534
    %v3537 = vsel %vm1191, %v3532, 0
    %v3540 = vsel %vm1191, %v3535, 0
    %3542 = vmatprep.subr.bf16.mxu0 0
    %3543 = vmatpush1.bf16.xpose.msra.mxu0 0
    %3544 = vmatprep.subr.bf16.mxu0 0
    %3545 = vmatpush1.bf16.xpose.msra.mxu0 0
    %3546 = vmatprep.subr.bf16.mxu0 0
    %3547 = vmatpush1.bf16.xpose.msra.mxu0 0
    %3548 = vmatprep.subr.bf16.mxu0 0
    %3549 = vmatpush1.bf16.xpose.msra.mxu0 0
    %3550 = vmatprep.subr.bf16.mxu0 0
    %3551 = vmatpush1.bf16.xpose.msra.mxu0 0
    %3552 = vmatprep.subr.bf16.mxu0 0
    %3553 = vmatpush1.bf16.xpose.msra.mxu0 0
    %3554 = vmatprep.subr.bf16.mxu0 0
    %3555 = vmatpush1.bf16.xpose.msra.mxu0 0
    %3556 = vmatprep.subr.bf16.mxu0 0
    %3557 = vmatpush1.bf16.xpose.msra.mxu0 %v3540
    %3558 = vmatprep.subr.bf16.mxu0 0
    %3559 = vmatpush2.bf16.xpose.msra.mxu0 0
    %3560 = vmatprep.subr.bf16.mxu0 0
    %3561 = vmatpush2.bf16.xpose.msra.mxu0 0
    %3562 = vmatprep.subr.bf16.mxu0 0
    %3563 = vmatpush2.bf16.xpose.msra.mxu0 0
    %3564 = vmatprep.subr.bf16.mxu0 0
    %3565 = vmatpush2.bf16.xpose.msra.mxu0 0
    %3566 = vmatprep.subr.bf16.mxu0 0
    %3567 = vmatpush2.bf16.xpose.msra.mxu0 0
    %3568 = vmatprep.subr.bf16.mxu0 0
    %3569 = vmatpush2.bf16.xpose.msra.mxu0 0
    %3570 = vmatprep.subr.bf16.mxu0 0
    %3571 = vmatpush2.bf16.xpose.msra.mxu0 0
    %3572 = vmatprep.subr.bf16.mxu0 0
    %3573 = vmatpush2.bf16.xpose.msra.mxu0 0
    %3574 = vmatprep.mubr.bf16.mxu0 0
    %3575 = vmatmul.mubr.bf16.gmra.mxu0 %v3537
    %v3576 = vpop.f32.mrf.mxu0
    %v3577 = vadd.f32 0.0, %v3576
    %v3578 = vpop.f32.mrf.mxu0
    %v3579 = vpop.f32.mrf.mxu0
    %v3580 = vadd.f32 0.0, %v3579
    %v3581 = vpop.f32.mrf.mxu0
    %3582 = vdwg.mxu0
    %3584 = vrot.lane.b32.xlu0 %v1146, 96
    %v3585 = vpop.permute.xlu0 %3584
    %3587 = vrot.lane.b32.xlu0 %v1162, 96
    %v3588 = vpop.permute.xlu0 %3587
    %v3590 = vsel %vm1191, %v3585, 0
    %v3593 = vsel %vm1191, %v3588, 0
    %3595 = vmatprep.subr.bf16.mxu0 0
    %3596 = vmatpush1.bf16.xpose.msra.mxu0 0
    %3597 = vmatprep.subr.bf16.mxu0 0
    %3598 = vmatpush1.bf16.xpose.msra.mxu0 0
    %3599 = vmatprep.subr.bf16.mxu0 0
    %3600 = vmatpush1.bf16.xpose.msra.mxu0 0
    %3601 = vmatprep.subr.bf16.mxu0 0
    %3602 = vmatpush1.bf16.xpose.msra.mxu0 0
    %3603 = vmatprep.subr.bf16.mxu0 0
    %3604 = vmatpush1.bf16.xpose.msra.mxu0 0
    %3605 = vmatprep.subr.bf16.mxu0 0
    %3606 = vmatpush1.bf16.xpose.msra.mxu0 0
    %3607 = vmatprep.subr.bf16.mxu0 0
    %3608 = vmatpush1.bf16.xpose.msra.mxu0 0
    %3609 = vmatprep.subr.bf16.mxu0 0
    %3610 = vmatpush1.bf16.xpose.msra.mxu0 %v3593
    %3611 = vmatprep.subr.bf16.mxu0 0
    %3612 = vmatpush2.bf16.xpose.msra.mxu0 0
    %3613 = vmatprep.subr.bf16.mxu0 0
    %3614 = vmatpush2.bf16.xpose.msra.mxu0 0
    %3615 = vmatprep.subr.bf16.mxu0 0
    %3616 = vmatpush2.bf16.xpose.msra.mxu0 0
    %3617 = vmatprep.subr.bf16.mxu0 0
    %3618 = vmatpush2.bf16.xpose.msra.mxu0 0
    %3619 = vmatprep.subr.bf16.mxu0 0
    %3620 = vmatpush2.bf16.xpose.msra.mxu0 0
    %3621 = vmatprep.subr.bf16.mxu0 0
    %3622 = vmatpush2.bf16.xpose.msra.mxu0 0
    %3623 = vmatprep.subr.bf16.mxu0 0
    %3624 = vmatpush2.bf16.xpose.msra.mxu0 0
    %3625 = vmatprep.subr.bf16.mxu0 0
    %3626 = vmatpush2.bf16.xpose.msra.mxu0 0
    %3627 = vmatprep.mubr.bf16.mxu0 0
    %3628 = vmatmul.mubr.bf16.gmra.mxu0 %v3590
    %v3629 = vpop.f32.mrf.mxu0
    %v3630 = vadd.f32 0.0, %v3629
    %v3631 = vpop.f32.mrf.mxu0
    %v3632 = vpop.f32.mrf.mxu0
    %v3633 = vadd.f32 0.0, %v3632
    %v3634 = vpop.f32.mrf.mxu0
    %3635 = vdwg.mxu0
    %3637 = vrot.lane.b32.xlu0 %v1147, 96
    %v3638 = vpop.permute.xlu0 %3637
    %3640 = vrot.lane.b32.xlu0 %v1163, 96
    %v3641 = vpop.permute.xlu0 %3640
    %v3643 = vsel %vm1191, %v3638, 0
    %v3646 = vsel %vm1191, %v3641, 0
    %3648 = vmatprep.subr.bf16.mxu0 0
    %3649 = vmatpush1.bf16.xpose.msra.mxu0 0
    %3650 = vmatprep.subr.bf16.mxu0 0
    %3651 = vmatpush1.bf16.xpose.msra.mxu0 0
    %3652 = vmatprep.subr.bf16.mxu0 0
    %3653 = vmatpush1.bf16.xpose.msra.mxu0 0
    %3654 = vmatprep.subr.bf16.mxu0 0
    %3655 = vmatpush1.bf16.xpose.msra.mxu0 0
    %3656 = vmatprep.subr.bf16.mxu0 0
    %3657 = vmatpush1.bf16.xpose.msra.mxu0 0
    %3658 = vmatprep.subr.bf16.mxu0 0
    %3659 = vmatpush1.bf16.xpose.msra.mxu0 0
    %3660 = vmatprep.subr.bf16.mxu0 0
    %3661 = vmatpush1.bf16.xpose.msra.mxu0 0
    %3662 = vmatprep.subr.bf16.mxu0 0
    %3663 = vmatpush1.bf16.xpose.msra.mxu0 %v3646
    %3664 = vmatprep.subr.bf16.mxu0 0
    %3665 = vmatpush2.bf16.xpose.msra.mxu0 0
    %3666 = vmatprep.subr.bf16.mxu0 0
    %3667 = vmatpush2.bf16.xpose.msra.mxu0 0
    %3668 = vmatprep.subr.bf16.mxu0 0
    %3669 = vmatpush2.bf16.xpose.msra.mxu0 0
    %3670 = vmatprep.subr.bf16.mxu0 0
    %3671 = vmatpush2.bf16.xpose.msra.mxu0 0
    %3672 = vmatprep.subr.bf16.mxu0 0
    %3673 = vmatpush2.bf16.xpose.msra.mxu0 0
    %3674 = vmatprep.subr.bf16.mxu0 0
    %3675 = vmatpush2.bf16.xpose.msra.mxu0 0
    %3676 = vmatprep.subr.bf16.mxu0 0
    %3677 = vmatpush2.bf16.xpose.msra.mxu0 0
    %3678 = vmatprep.subr.bf16.mxu0 0
    %3679 = vmatpush2.bf16.xpose.msra.mxu0 0
    %3680 = vmatprep.mubr.bf16.mxu0 0
    %3681 = vmatmul.mubr.bf16.gmra.mxu0 %v3643
    %v3682 = vpop.f32.mrf.mxu0
    %v3683 = vadd.f32 0.0, %v3682
    %v3684 = vpop.f32.mrf.mxu0
    %v3685 = vpop.f32.mrf.mxu0
    %v3686 = vadd.f32 0.0, %v3685
    %v3687 = vpop.f32.mrf.mxu0
    %3688 = vdwg.mxu0
    %3690 = vrot.lane.b32.xlu0 %v1148, 96
    %v3691 = vpop.permute.xlu0 %3690
    %3693 = vrot.lane.b32.xlu0 %v1164, 96
    %v3694 = vpop.permute.xlu0 %3693
    %v3696 = vsel %vm1191, %v3691, 0
    %v3699 = vsel %vm1191, %v3694, 0
    %3701 = vmatprep.subr.bf16.mxu0 0
    %3702 = vmatpush1.bf16.xpose.msra.mxu0 0
    %3703 = vmatprep.subr.bf16.mxu0 0
    %3704 = vmatpush1.bf16.xpose.msra.mxu0 0
    %3705 = vmatprep.subr.bf16.mxu0 0
    %3706 = vmatpush1.bf16.xpose.msra.mxu0 0
    %3707 = vmatprep.subr.bf16.mxu0 0
    %3708 = vmatpush1.bf16.xpose.msra.mxu0 0
    %3709 = vmatprep.subr.bf16.mxu0 0
    %3710 = vmatpush1.bf16.xpose.msra.mxu0 0
    %3711 = vmatprep.subr.bf16.mxu0 0
    %3712 = vmatpush1.bf16.xpose.msra.mxu0 0
    %3713 = vmatprep.subr.bf16.mxu0 0
    %3714 = vmatpush1.bf16.xpose.msra.mxu0 0
    %3715 = vmatprep.subr.bf16.mxu0 0
    %3716 = vmatpush1.bf16.xpose.msra.mxu0 %v3699
    %3717 = vmatprep.subr.bf16.mxu0 0
    %3718 = vmatpush2.bf16.xpose.msra.mxu0 0
    %3719 = vmatprep.subr.bf16.mxu0 0
    %3720 = vmatpush2.bf16.xpose.msra.mxu0 0
    %3721 = vmatprep.subr.bf16.mxu0 0
    %3722 = vmatpush2.bf16.xpose.msra.mxu0 0
    %3723 = vmatprep.subr.bf16.mxu0 0
    %3724 = vmatpush2.bf16.xpose.msra.mxu0 0
    %3725 = vmatprep.subr.bf16.mxu0 0
    %3726 = vmatpush2.bf16.xpose.msra.mxu0 0
    %3727 = vmatprep.subr.bf16.mxu0 0
    %3728 = vmatpush2.bf16.xpose.msra.mxu0 0
    %3729 = vmatprep.subr.bf16.mxu0 0
    %3730 = vmatpush2.bf16.xpose.msra.mxu0 0
    %3731 = vmatprep.subr.bf16.mxu0 0
    %3732 = vmatpush2.bf16.xpose.msra.mxu0 0
    %3733 = vmatprep.mubr.bf16.mxu0 0
    %3734 = vmatmul.mubr.bf16.gmra.mxu0 %v3696
    %v3735 = vpop.f32.mrf.mxu0
    %v3736 = vadd.f32 0.0, %v3735
    %v3737 = vpop.f32.mrf.mxu0
    %v3738 = vpop.f32.mrf.mxu0
    %v3739 = vadd.f32 0.0, %v3738
    %v3740 = vpop.f32.mrf.mxu0
    %3741 = vdwg.mxu0
    %3743 = vrot.lane.b32.xlu0 %v1149, 96
    %v3744 = vpop.permute.xlu0 %3743
    %3746 = vrot.lane.b32.xlu0 %v1165, 96
    %v3747 = vpop.permute.xlu0 %3746
    %v3749 = vsel %vm1191, %v3744, 0
    %v3752 = vsel %vm1191, %v3747, 0
    %3754 = vmatprep.subr.bf16.mxu0 0
    %3755 = vmatpush1.bf16.xpose.msra.mxu0 0
    %3756 = vmatprep.subr.bf16.mxu0 0
    %3757 = vmatpush1.bf16.xpose.msra.mxu0 0
    %3758 = vmatprep.subr.bf16.mxu0 0
    %3759 = vmatpush1.bf16.xpose.msra.mxu0 0
    %3760 = vmatprep.subr.bf16.mxu0 0
    %3761 = vmatpush1.bf16.xpose.msra.mxu0 0
    %3762 = vmatprep.subr.bf16.mxu0 0
    %3763 = vmatpush1.bf16.xpose.msra.mxu0 0
    %3764 = vmatprep.subr.bf16.mxu0 0
    %3765 = vmatpush1.bf16.xpose.msra.mxu0 0
    %3766 = vmatprep.subr.bf16.mxu0 0
    %3767 = vmatpush1.bf16.xpose.msra.mxu0 0
    %3768 = vmatprep.subr.bf16.mxu0 0
    %3769 = vmatpush1.bf16.xpose.msra.mxu0 %v3752
    %3770 = vmatprep.subr.bf16.mxu0 0
    %3771 = vmatpush2.bf16.xpose.msra.mxu0 0
    %3772 = vmatprep.subr.bf16.mxu0 0
    %3773 = vmatpush2.bf16.xpose.msra.mxu0 0
    %3774 = vmatprep.subr.bf16.mxu0 0
    %3775 = vmatpush2.bf16.xpose.msra.mxu0 0
    %3776 = vmatprep.subr.bf16.mxu0 0
    %3777 = vmatpush2.bf16.xpose.msra.mxu0 0
    %3778 = vmatprep.subr.bf16.mxu0 0
    %3779 = vmatpush2.bf16.xpose.msra.mxu0 0
    %3780 = vmatprep.subr.bf16.mxu0 0
    %3781 = vmatpush2.bf16.xpose.msra.mxu0 0
    %3782 = vmatprep.subr.bf16.mxu0 0
    %3783 = vmatpush2.bf16.xpose.msra.mxu0 0
    %3784 = vmatprep.subr.bf16.mxu0 0
    %3785 = vmatpush2.bf16.xpose.msra.mxu0 0
    %3786 = vmatprep.mubr.bf16.mxu0 0
    %3787 = vmatmul.mubr.bf16.gmra.mxu0 %v3749
    %v3788 = vpop.f32.mrf.mxu0
    %v3789 = vadd.f32 0.0, %v3788
    %v3790 = vpop.f32.mrf.mxu0
    %v3791 = vpop.f32.mrf.mxu0
    %v3792 = vadd.f32 0.0, %v3791
    %v3793 = vpop.f32.mrf.mxu0
    %3794 = vdwg.mxu0
    %3796 = vrot.lane.b32.xlu0 %v1150, 96
    %v3797 = vpop.permute.xlu0 %3796
    %3799 = vrot.lane.b32.xlu0 %v1166, 96
    %v3800 = vpop.permute.xlu0 %3799
    %v3802 = vsel %vm1191, %v3797, 0
    %v3805 = vsel %vm1191, %v3800, 0
    %3807 = vmatprep.subr.bf16.mxu0 0
    %3808 = vmatpush1.bf16.xpose.msra.mxu0 0
    %3809 = vmatprep.subr.bf16.mxu0 0
    %3810 = vmatpush1.bf16.xpose.msra.mxu0 0
    %3811 = vmatprep.subr.bf16.mxu0 0
    %3812 = vmatpush1.bf16.xpose.msra.mxu0 0
    %3813 = vmatprep.subr.bf16.mxu0 0
    %3814 = vmatpush1.bf16.xpose.msra.mxu0 0
    %3815 = vmatprep.subr.bf16.mxu0 0
    %3816 = vmatpush1.bf16.xpose.msra.mxu0 0
    %3817 = vmatprep.subr.bf16.mxu0 0
    %3818 = vmatpush1.bf16.xpose.msra.mxu0 0
    %3819 = vmatprep.subr.bf16.mxu0 0
    %3820 = vmatpush1.bf16.xpose.msra.mxu0 0
    %3821 = vmatprep.subr.bf16.mxu0 0
    %3822 = vmatpush1.bf16.xpose.msra.mxu0 %v3805
    %3823 = vmatprep.subr.bf16.mxu0 0
    %3824 = vmatpush2.bf16.xpose.msra.mxu0 0
    %3825 = vmatprep.subr.bf16.mxu0 0
    %3826 = vmatpush2.bf16.xpose.msra.mxu0 0
    %3827 = vmatprep.subr.bf16.mxu0 0
    %3828 = vmatpush2.bf16.xpose.msra.mxu0 0
    %3829 = vmatprep.subr.bf16.mxu0 0
    %3830 = vmatpush2.bf16.xpose.msra.mxu0 0
    %3831 = vmatprep.subr.bf16.mxu0 0
    %3832 = vmatpush2.bf16.xpose.msra.mxu0 0
    %3833 = vmatprep.subr.bf16.mxu0 0
    %3834 = vmatpush2.bf16.xpose.msra.mxu0 0
    %3835 = vmatprep.subr.bf16.mxu0 0
    %3836 = vmatpush2.bf16.xpose.msra.mxu0 0
    %3837 = vmatprep.subr.bf16.mxu0 0
    %3838 = vmatpush2.bf16.xpose.msra.mxu0 0
    %3839 = vmatprep.mubr.bf16.mxu0 0
    %3840 = vmatmul.mubr.bf16.gmra.mxu0 %v3802
    %v3841 = vpop.f32.mrf.mxu0
    %v3842 = vadd.f32 0.0, %v3841
    %v3843 = vpop.f32.mrf.mxu0
    %v3844 = vpop.f32.mrf.mxu0
    %v3845 = vadd.f32 0.0, %v3844
    %v3846 = vpop.f32.mrf.mxu0
    %3847 = vdwg.mxu0
    %3849 = vrot.lane.b32.xlu0 %v1151, 96
    %v3850 = vpop.permute.xlu0 %3849
    %3852 = vrot.lane.b32.xlu0 %v1167, 96
    %v3853 = vpop.permute.xlu0 %3852
    %v3855 = vsel %vm1191, %v3850, 0
    %v3858 = vsel %vm1191, %v3853, 0
    %3860 = vmatprep.subr.bf16.mxu0 0
    %3861 = vmatpush1.bf16.xpose.msra.mxu0 0
    %3862 = vmatprep.subr.bf16.mxu0 0
    %3863 = vmatpush1.bf16.xpose.msra.mxu0 0
    %3864 = vmatprep.subr.bf16.mxu0 0
    %3865 = vmatpush1.bf16.xpose.msra.mxu0 0
    %3866 = vmatprep.subr.bf16.mxu0 0
    %3867 = vmatpush1.bf16.xpose.msra.mxu0 0
    %3868 = vmatprep.subr.bf16.mxu0 0
    %3869 = vmatpush1.bf16.xpose.msra.mxu0 0
    %3870 = vmatprep.subr.bf16.mxu0 0
    %3871 = vmatpush1.bf16.xpose.msra.mxu0 0
    %3872 = vmatprep.subr.bf16.mxu0 0
    %3873 = vmatpush1.bf16.xpose.msra.mxu0 0
    %3874 = vmatprep.subr.bf16.mxu0 0
    %3875 = vmatpush1.bf16.xpose.msra.mxu0 %v3858
    %3876 = vmatprep.subr.bf16.mxu0 0
    %3877 = vmatpush2.bf16.xpose.msra.mxu0 0
    %3878 = vmatprep.subr.bf16.mxu0 0
    %3879 = vmatpush2.bf16.xpose.msra.mxu0 0
    %3880 = vmatprep.subr.bf16.mxu0 0
    %3881 = vmatpush2.bf16.xpose.msra.mxu0 0
    %3882 = vmatprep.subr.bf16.mxu0 0
    %3883 = vmatpush2.bf16.xpose.msra.mxu0 0
    %3884 = vmatprep.subr.bf16.mxu0 0
    %3885 = vmatpush2.bf16.xpose.msra.mxu0 0
    %3886 = vmatprep.subr.bf16.mxu0 0
    %3887 = vmatpush2.bf16.xpose.msra.mxu0 0
    %3888 = vmatprep.subr.bf16.mxu0 0
    %3889 = vmatpush2.bf16.xpose.msra.mxu0 0
    %3890 = vmatprep.subr.bf16.mxu0 0
    %3891 = vmatpush2.bf16.xpose.msra.mxu0 0
    %3892 = vmatprep.mubr.bf16.mxu0 0
    %3893 = vmatmul.mubr.bf16.gmra.mxu0 %v3855
    %v3894 = vpop.f32.mrf.mxu0
    %v3895 = vadd.f32 0.0, %v3894
    %v3896 = vpop.f32.mrf.mxu0
    %v3897 = vpop.f32.mrf.mxu0
    %v3898 = vadd.f32 0.0, %v3897
    %v3899 = vpop.f32.mrf.mxu0
    %3900 = vdwg.mxu0
    %v3901 = vsel %vm1946, %v3100, -1e+30
    %v3902 = vsel %vm1947, %v3103, -1e+30
    %v3903 = vsel %vm1946, %v3153, -1e+30
    %v3904 = vsel %vm1947, %v3156, -1e+30
    %v3905 = vsel %vm1946, %v3206, -1e+30
    %v3906 = vsel %vm1947, %v3209, -1e+30
    %v3907 = vsel %vm1946, %v3259, -1e+30
    %v3908 = vsel %vm1947, %v3262, -1e+30
    %v3909 = vsel %vm1946, %v3312, -1e+30
    %v3910 = vsel %vm1947, %v3315, -1e+30
    %v3911 = vsel %vm1946, %v3365, -1e+30
    %v3912 = vsel %vm1947, %v3368, -1e+30
    %v3913 = vsel %vm1946, %v3418, -1e+30
    %v3914 = vsel %vm1947, %v3421, -1e+30
    %v3915 = vsel %vm1946, %v3471, -1e+30
    %v3916 = vsel %vm1947, %v3474, -1e+30
    %v3917 = vsel %vm1946, %v3524, -1e+30
    %v3918 = vsel %vm1947, %v3527, -1e+30
    %v3919 = vsel %vm1946, %v3577, -1e+30
    %v3920 = vsel %vm1947, %v3580, -1e+30
    %v3921 = vsel %vm1946, %v3630, -1e+30
    %v3922 = vsel %vm1947, %v3633, -1e+30
    %v3923 = vsel %vm1946, %v3683, -1e+30
    %v3924 = vsel %vm1947, %v3686, -1e+30
    %v3925 = vsel %vm1946, %v3736, -1e+30
    %v3926 = vsel %vm1947, %v3739, -1e+30
    %v3927 = vsel %vm1946, %v3789, -1e+30
    %v3928 = vsel %vm1947, %v3792, -1e+30
    %v3929 = vsel %vm1946, %v3842, -1e+30
    %v3930 = vsel %vm1947, %v3845, -1e+30
    %v3931 = vsel %vm1946, %v3895, -1e+30
    %v3932 = vsel %vm1947, %v3898, -1e+30
    %v3933 = vsel %vm1980, %v3901, -inf
    %3934 = vmax.xlane.f32.xlu0 %v3933
    %v3935 = vpop.xlane.xlu0 %3934
    %v3936 = vsel %vm1980, %v3902, -inf
    %3937 = vmax.xlane.f32.xlu0 %v3936
    %v3938 = vpop.xlane.xlu0 %3937
    %v3939 = vsel %vm1980, %v3903, -inf
    %3940 = vmax.xlane.f32.xlu0 %v3939
    %v3941 = vpop.xlane.xlu0 %3940
    %v3942 = vsel %vm1980, %v3904, -inf
    %3943 = vmax.xlane.f32.xlu0 %v3942
    %v3944 = vpop.xlane.xlu0 %3943
    %v3945 = vsel %vm1980, %v3905, -inf
    %3946 = vmax.xlane.f32.xlu0 %v3945
    %v3947 = vpop.xlane.xlu0 %3946
    %v3948 = vsel %vm1980, %v3906, -inf
    %3949 = vmax.xlane.f32.xlu0 %v3948
    %v3950 = vpop.xlane.xlu0 %3949
    %v3951 = vsel %vm1980, %v3907, -inf
    %3952 = vmax.xlane.f32.xlu0 %v3951
    %v3953 = vpop.xlane.xlu0 %3952
    %v3954 = vsel %vm1980, %v3908, -inf
    %3955 = vmax.xlane.f32.xlu0 %v3954
    %v3956 = vpop.xlane.xlu0 %3955
    %v3957 = vsel %vm1980, %v3909, -inf
    %3958 = vmax.xlane.f32.xlu0 %v3957
    %v3959 = vpop.xlane.xlu0 %3958
    %v3960 = vsel %vm1980, %v3910, -inf
    %3961 = vmax.xlane.f32.xlu0 %v3960
    %v3962 = vpop.xlane.xlu0 %3961
    %v3963 = vsel %vm1980, %v3911, -inf
    %3964 = vmax.xlane.f32.xlu0 %v3963
    %v3965 = vpop.xlane.xlu0 %3964
    %v3966 = vsel %vm1980, %v3912, -inf
    %3967 = vmax.xlane.f32.xlu0 %v3966
    %v3968 = vpop.xlane.xlu0 %3967
    %v3969 = vsel %vm1980, %v3913, -inf
    %3970 = vmax.xlane.f32.xlu0 %v3969
    %v3971 = vpop.xlane.xlu0 %3970
    %v3972 = vsel %vm1980, %v3914, -inf
    %3973 = vmax.xlane.f32.xlu0 %v3972
    %v3974 = vpop.xlane.xlu0 %3973
    %v3975 = vsel %vm1980, %v3915, -inf
    %3976 = vmax.xlane.f32.xlu0 %v3975
    %v3977 = vpop.xlane.xlu0 %3976
    %v3978 = vsel %vm1980, %v3916, -inf
    %3979 = vmax.xlane.f32.xlu0 %v3978
    %v3980 = vpop.xlane.xlu0 %3979
    %v3981 = vsel %vm1980, %v3917, -inf
    %3982 = vmax.xlane.f32.xlu0 %v3981
    %v3983 = vpop.xlane.xlu0 %3982
    %v3984 = vsel %vm1980, %v3918, -inf
    %3985 = vmax.xlane.f32.xlu0 %v3984
    %v3986 = vpop.xlane.xlu0 %3985
    %v3987 = vsel %vm1980, %v3919, -inf
    %3988 = vmax.xlane.f32.xlu0 %v3987
    %v3989 = vpop.xlane.xlu0 %3988
    %v3990 = vsel %vm1980, %v3920, -inf
    %3991 = vmax.xlane.f32.xlu0 %v3990
    %v3992 = vpop.xlane.xlu0 %3991
    %v3993 = vsel %vm1980, %v3921, -inf
    %3994 = vmax.xlane.f32.xlu0 %v3993
    %v3995 = vpop.xlane.xlu0 %3994
    %v3996 = vsel %vm1980, %v3922, -inf
    %3997 = vmax.xlane.f32.xlu0 %v3996
    %v3998 = vpop.xlane.xlu0 %3997
    %v3999 = vsel %vm1980, %v3923, -inf
    %4000 = vmax.xlane.f32.xlu0 %v3999
    %v4001 = vpop.xlane.xlu0 %4000
    %v4002 = vsel %vm1980, %v3924, -inf
    %4003 = vmax.xlane.f32.xlu0 %v4002
    %v4004 = vpop.xlane.xlu0 %4003
    %v4005 = vsel %vm1980, %v3925, -inf
    %4006 = vmax.xlane.f32.xlu0 %v4005
    %v4007 = vpop.xlane.xlu0 %4006
    %v4008 = vsel %vm1980, %v3926, -inf
    %4009 = vmax.xlane.f32.xlu0 %v4008
    %v4010 = vpop.xlane.xlu0 %4009
    %v4011 = vsel %vm1980, %v3927, -inf
    %4012 = vmax.xlane.f32.xlu0 %v4011
    %v4013 = vpop.xlane.xlu0 %4012
    %v4014 = vsel %vm1980, %v3928, -inf
    %4015 = vmax.xlane.f32.xlu0 %v4014
    %v4016 = vpop.xlane.xlu0 %4015
    %v4017 = vsel %vm1980, %v3929, -inf
    %4018 = vmax.xlane.f32.xlu0 %v4017
    %v4019 = vpop.xlane.xlu0 %4018
    %v4020 = vsel %vm1980, %v3930, -inf
    %4021 = vmax.xlane.f32.xlu0 %v4020
    %v4022 = vpop.xlane.xlu0 %4021
    %v4023 = vsel %vm1980, %v3931, -inf
    %4024 = vmax.xlane.f32.xlu0 %v4023
    %v4025 = vpop.xlane.xlu0 %4024
    %v4026 = vsel %vm1980, %v3932, -inf
    %4027 = vmax.xlane.f32.xlu0 %v4026
    %v4028 = vpop.xlane.xlu0 %4027
    %v4029 = vsub.f32 %v3901, %v3935
    %v4030 = vsub.f32 %v3902, %v3938
    %v4031 = vsub.f32 %v3903, %v3941
    %v4032 = vsub.f32 %v3904, %v3944
    %v4033 = vsub.f32 %v3905, %v3947
    %v4034 = vsub.f32 %v3906, %v3950
    %v4035 = vsub.f32 %v3907, %v3953
    %v4036 = vsub.f32 %v3908, %v3956
    %v4037 = vsub.f32 %v3909, %v3959
    %v4038 = vsub.f32 %v3910, %v3962
    %v4039 = vsub.f32 %v3911, %v3965
    %v4040 = vsub.f32 %v3912, %v3968
    %v4041 = vsub.f32 %v3913, %v3971
    %v4042 = vsub.f32 %v3914, %v3974
    %v4043 = vsub.f32 %v3915, %v3977
    %v4044 = vsub.f32 %v3916, %v3980
    %v4045 = vsub.f32 %v3917, %v3983
    %v4046 = vsub.f32 %v3918, %v3986
    %v4047 = vsub.f32 %v3919, %v3989
    %v4048 = vsub.f32 %v3920, %v3992
    %v4049 = vsub.f32 %v3921, %v3995
    %v4050 = vsub.f32 %v3922, %v3998
    %v4051 = vsub.f32 %v3923, %v4001
    %v4052 = vsub.f32 %v3924, %v4004
    %v4053 = vsub.f32 %v3925, %v4007
    %v4054 = vsub.f32 %v3926, %v4010
    %v4055 = vsub.f32 %v3927, %v4013
    %v4056 = vsub.f32 %v3928, %v4016
    %v4057 = vsub.f32 %v3929, %v4019
    %v4058 = vsub.f32 %v3930, %v4022
    %v4059 = vsub.f32 %v3931, %v4025
    %v4060 = vsub.f32 %v3932, %v4028
    %v4061 = vmul.f32 %v4029, 1.442695
    %v4062 = vpow.pop %v4061
    %v4063 = vmul.f32 %v4030, 1.442695
    %v4064 = vpow.pop %v4063
    %v4065 = vmul.f32 %v4031, 1.442695
    %v4066 = vpow.pop %v4065
    %v4067 = vmul.f32 %v4032, 1.442695
    %v4068 = vpow.pop %v4067
    %v4069 = vmul.f32 %v4033, 1.442695
    %v4070 = vpow.pop %v4069
    %v4071 = vmul.f32 %v4034, 1.442695
    %v4072 = vpow.pop %v4071
    %v4073 = vmul.f32 %v4035, 1.442695
    %v4074 = vpow.pop %v4073
    %v4075 = vmul.f32 %v4036, 1.442695
    %v4076 = vpow.pop %v4075
    %v4077 = vmul.f32 %v4037, 1.442695
    %v4078 = vpow.pop %v4077
    %v4079 = vmul.f32 %v4038, 1.442695
    %v4080 = vpow.pop %v4079
    %v4081 = vmul.f32 %v4039, 1.442695
    %v4082 = vpow.pop %v4081
    %v4083 = vmul.f32 %v4040, 1.442695
    %v4084 = vpow.pop %v4083
    %v4085 = vmul.f32 %v4041, 1.442695
    %v4086 = vpow.pop %v4085
    %v4087 = vmul.f32 %v4042, 1.442695
    %v4088 = vpow.pop %v4087
    %v4089 = vmul.f32 %v4043, 1.442695
    %v4090 = vpow.pop %v4089
    %v4091 = vmul.f32 %v4044, 1.442695
    %v4092 = vpow.pop %v4091
    %v4093 = vmul.f32 %v4045, 1.442695
    %v4094 = vpow.pop %v4093
    %v4095 = vmul.f32 %v4046, 1.442695
    %v4096 = vpow.pop %v4095
    %v4097 = vmul.f32 %v4047, 1.442695
    %v4098 = vpow.pop %v4097
    %v4099 = vmul.f32 %v4048, 1.442695
    %v4100 = vpow.pop %v4099
    %v4101 = vmul.f32 %v4049, 1.442695
    %v4102 = vpow.pop %v4101
    %v4103 = vmul.f32 %v4050, 1.442695
    %v4104 = vpow.pop %v4103
    %v4105 = vmul.f32 %v4051, 1.442695
    %v4106 = vpow.pop %v4105
    %v4107 = vmul.f32 %v4052, 1.442695
    %v4108 = vpow.pop %v4107
    %v4109 = vmul.f32 %v4053, 1.442695
    %v4110 = vpow.pop %v4109
    %v4111 = vmul.f32 %v4054, 1.442695
    %v4112 = vpow.pop %v4111
    %v4113 = vmul.f32 %v4055, 1.442695
    %v4114 = vpow.pop %v4113
    %v4115 = vmul.f32 %v4056, 1.442695
    %v4116 = vpow.pop %v4115
    %v4117 = vmul.f32 %v4057, 1.442695
    %v4118 = vpow.pop %v4117
    %v4119 = vmul.f32 %v4058, 1.442695
    %v4120 = vpow.pop %v4119
    %v4121 = vmul.f32 %v4059, 1.442695
    %v4122 = vpow.pop %v4121
    %v4123 = vmul.f32 %v4060, 1.442695
    %v4124 = vpow.pop %v4123
    %v4125 = vsel %vm1980, %v4062, 0.0
    %4126 = vadd.xlane.f32.xlu0 %v4125
    %v4127 = vpop.xlane.xlu0 %4126
    %v4128 = vsel %vm1980, %v4064, 0.0
    %4129 = vadd.xlane.f32.xlu0 %v4128
    %v4130 = vpop.xlane.xlu0 %4129
    %v4131 = vsel %vm1980, %v4066, 0.0
    %4132 = vadd.xlane.f32.xlu0 %v4131
    %v4133 = vpop.xlane.xlu0 %4132
    %v4134 = vsel %vm1980, %v4068, 0.0
    %4135 = vadd.xlane.f32.xlu0 %v4134
    %v4136 = vpop.xlane.xlu0 %4135
    %v4137 = vsel %vm1980, %v4070, 0.0
    %4138 = vadd.xlane.f32.xlu0 %v4137
    %v4139 = vpop.xlane.xlu0 %4138
    %v4140 = vsel %vm1980, %v4072, 0.0
    %4141 = vadd.xlane.f32.xlu0 %v4140
    %v4142 = vpop.xlane.xlu0 %4141
    %v4143 = vsel %vm1980, %v4074, 0.0
    %4144 = vadd.xlane.f32.xlu0 %v4143
    %v4145 = vpop.xlane.xlu0 %4144
    %v4146 = vsel %vm1980, %v4076, 0.0
    %4147 = vadd.xlane.f32.xlu0 %v4146
    %v4148 = vpop.xlane.xlu0 %4147
    %v4149 = vsel %vm1980, %v4078, 0.0
    %4150 = vadd.xlane.f32.xlu0 %v4149
    %v4151 = vpop.xlane.xlu0 %4150
    %v4152 = vsel %vm1980, %v4080, 0.0
    %4153 = vadd.xlane.f32.xlu0 %v4152
    %v4154 = vpop.xlane.xlu0 %4153
    %v4155 = vsel %vm1980, %v4082, 0.0
    %4156 = vadd.xlane.f32.xlu0 %v4155
    %v4157 = vpop.xlane.xlu0 %4156
    %v4158 = vsel %vm1980, %v4084, 0.0
    %4159 = vadd.xlane.f32.xlu0 %v4158
    %v4160 = vpop.xlane.xlu0 %4159
    %v4161 = vsel %vm1980, %v4086, 0.0
    %4162 = vadd.xlane.f32.xlu0 %v4161
    %v4163 = vpop.xlane.xlu0 %4162
    %v4164 = vsel %vm1980, %v4088, 0.0
    %4165 = vadd.xlane.f32.xlu0 %v4164
    %v4166 = vpop.xlane.xlu0 %4165
    %v4167 = vsel %vm1980, %v4090, 0.0
    %4168 = vadd.xlane.f32.xlu0 %v4167
    %v4169 = vpop.xlane.xlu0 %4168
    %v4170 = vsel %vm1980, %v4092, 0.0
    %4171 = vadd.xlane.f32.xlu0 %v4170
    %v4172 = vpop.xlane.xlu0 %4171
    %v4173 = vsel %vm1980, %v4094, 0.0
    %4174 = vadd.xlane.f32.xlu0 %v4173
    %v4175 = vpop.xlane.xlu0 %4174
    %v4176 = vsel %vm1980, %v4096, 0.0
    %4177 = vadd.xlane.f32.xlu0 %v4176
    %v4178 = vpop.xlane.xlu0 %4177
    %v4179 = vsel %vm1980, %v4098, 0.0
    %4180 = vadd.xlane.f32.xlu0 %v4179
    %v4181 = vpop.xlane.xlu0 %4180
    %v4182 = vsel %vm1980, %v4100, 0.0
    %4183 = vadd.xlane.f32.xlu0 %v4182
    %v4184 = vpop.xlane.xlu0 %4183
    %v4185 = vsel %vm1980, %v4102, 0.0
    %4186 = vadd.xlane.f32.xlu0 %v4185
    %v4187 = vpop.xlane.xlu0 %4186
    %v4188 = vsel %vm1980, %v4104, 0.0
    %4189 = vadd.xlane.f32.xlu0 %v4188
    %v4190 = vpop.xlane.xlu0 %4189
    %v4191 = vsel %vm1980, %v4106, 0.0
    %4192 = vadd.xlane.f32.xlu0 %v4191
    %v4193 = vpop.xlane.xlu0 %4192
    %v4194 = vsel %vm1980, %v4108, 0.0
    %4195 = vadd.xlane.f32.xlu0 %v4194
    %v4196 = vpop.xlane.xlu0 %4195
    %v4197 = vsel %vm1980, %v4110, 0.0
    %4198 = vadd.xlane.f32.xlu0 %v4197
    %v4199 = vpop.xlane.xlu0 %4198
    %v4200 = vsel %vm1980, %v4112, 0.0
    %4201 = vadd.xlane.f32.xlu0 %v4200
    %v4202 = vpop.xlane.xlu0 %4201
    %v4203 = vsel %vm1980, %v4114, 0.0
    %4204 = vadd.xlane.f32.xlu0 %v4203
    %v4205 = vpop.xlane.xlu0 %4204
    %v4206 = vsel %vm1980, %v4116, 0.0
    %4207 = vadd.xlane.f32.xlu0 %v4206
    %v4208 = vpop.xlane.xlu0 %4207
    %v4209 = vsel %vm1980, %v4118, 0.0
    %4210 = vadd.xlane.f32.xlu0 %v4209
    %v4211 = vpop.xlane.xlu0 %4210
    %v4212 = vsel %vm1980, %v4120, 0.0
    %4213 = vadd.xlane.f32.xlu0 %v4212
    %v4214 = vpop.xlane.xlu0 %4213
    %v4215 = vsel %vm1980, %v4122, 0.0
    %4216 = vadd.xlane.f32.xlu0 %v4215
    %v4217 = vpop.xlane.xlu0 %4216
    %v4218 = vsel %vm1980, %v4124, 0.0
    %4219 = vadd.xlane.f32.xlu0 %v4218
    %v4220 = vpop.xlane.xlu0 %4219
    %v4221 = vrcp.pop %v4127
    %v4222 = vrcp.pop %v4130
    %v4223 = vrcp.pop %v4133
    %v4224 = vrcp.pop %v4136
    %v4225 = vrcp.pop %v4139
    %v4226 = vrcp.pop %v4142
    %v4227 = vrcp.pop %v4145
    %v4228 = vrcp.pop %v4148
    %v4229 = vrcp.pop %v4151
    %v4230 = vrcp.pop %v4154
    %v4231 = vrcp.pop %v4157
    %v4232 = vrcp.pop %v4160
    %v4233 = vrcp.pop %v4163
    %v4234 = vrcp.pop %v4166
    %v4235 = vrcp.pop %v4169
    %v4236 = vrcp.pop %v4172
    %v4237 = vrcp.pop %v4175
    %v4238 = vrcp.pop %v4178
    %v4239 = vrcp.pop %v4181
    %v4240 = vrcp.pop %v4184
    %v4241 = vrcp.pop %v4187
    %v4242 = vrcp.pop %v4190
    %v4243 = vrcp.pop %v4193
    %v4244 = vrcp.pop %v4196
    %v4245 = vrcp.pop %v4199
    %v4246 = vrcp.pop %v4202
    %v4247 = vrcp.pop %v4205
    %v4248 = vrcp.pop %v4208
    %v4249 = vrcp.pop %v4211
    %v4250 = vrcp.pop %v4214
    %v4251 = vrcp.pop %v4217
    %v4252 = vrcp.pop %v4220
    %v4253 = vmul.f32 %v4062, %v4221
    %v4254 = vmul.f32 %v4064, %v4222
    %v4255 = vmul.f32 %v4066, %v4223
    %v4256 = vmul.f32 %v4068, %v4224
    %v4257 = vmul.f32 %v4070, %v4225
    %v4258 = vmul.f32 %v4072, %v4226
    %v4259 = vmul.f32 %v4074, %v4227
    %v4260 = vmul.f32 %v4076, %v4228
    %v4261 = vmul.f32 %v4078, %v4229
    %v4262 = vmul.f32 %v4080, %v4230
    %v4263 = vmul.f32 %v4082, %v4231
    %v4264 = vmul.f32 %v4084, %v4232
    %v4265 = vmul.f32 %v4086, %v4233
    %v4266 = vmul.f32 %v4088, %v4234
    %v4267 = vmul.f32 %v4090, %v4235
    %v4268 = vmul.f32 %v4092, %v4236
    %v4269 = vmul.f32 %v4094, %v4237
    %v4270 = vmul.f32 %v4096, %v4238
    %v4271 = vmul.f32 %v4098, %v4239
    %v4272 = vmul.f32 %v4100, %v4240
    %v4273 = vmul.f32 %v4102, %v4241
    %v4274 = vmul.f32 %v4104, %v4242
    %v4275 = vmul.f32 %v4106, %v4243
    %v4276 = vmul.f32 %v4108, %v4244
    %v4277 = vmul.f32 %v4110, %v4245
    %v4278 = vmul.f32 %v4112, %v4246
    %v4279 = vmul.f32 %v4114, %v4247
    %v4280 = vmul.f32 %v4116, %v4248
    %v4281 = vmul.f32 %v4118, %v4249
    %v4282 = vmul.f32 %v4120, %v4250
    %v4283 = vmul.f32 %v4122, %v4251
    %v4284 = vmul.f32 %v4124, %v4252
    %v4285 = vpack.c.bf16 %v4254, %v4253
    %v4286 = vpack.c.bf16 %v4256, %v4255
    %v4287 = vpack.c.bf16 %v4258, %v4257
    %v4288 = vpack.c.bf16 %v4260, %v4259
    %v4289 = vpack.c.bf16 %v4262, %v4261
    %v4290 = vpack.c.bf16 %v4264, %v4263
    %v4291 = vpack.c.bf16 %v4266, %v4265
    %v4292 = vpack.c.bf16 %v4268, %v4267
    %v4293 = vpack.c.bf16 %v4270, %v4269
    %v4294 = vpack.c.bf16 %v4272, %v4271
    %v4295 = vpack.c.bf16 %v4274, %v4273
    %v4296 = vpack.c.bf16 %v4276, %v4275
    %v4297 = vpack.c.bf16 %v4278, %v4277
    %v4298 = vpack.c.bf16 %v4280, %v4279
    %v4299 = vpack.c.bf16 %v4282, %v4281
    %v4300 = vpack.c.bf16 %v4284, %v4283
    %4302 = vrot.lane.b32.xlu0 %v1168, 96
    %v4303 = vpop.permute.xlu0 %4302
    %v4306 = vsel %vm1980, %v4285, 0
    %4308 = vmatprep.subr.bf16.mxu0 0
    %4309 = vmatpush1.bf16.msra.mxu0 0
    %4310 = vmatprep.subr.bf16.mxu0 0
    %4311 = vmatpush1.bf16.msra.mxu0 0
    %4312 = vmatprep.subr.bf16.mxu0 0
    %4313 = vmatpush1.bf16.msra.mxu0 0
    %4314 = vmatprep.subr.bf16.mxu0 0
    %4315 = vmatpush1.bf16.msra.mxu0 0
    %4316 = vmatprep.subr.bf16.mxu0 0
    %4317 = vmatpush1.bf16.msra.mxu0 0
    %4318 = vmatprep.subr.bf16.mxu0 0
    %4319 = vmatpush1.bf16.msra.mxu0 0
    %4320 = vmatprep.subr.bf16.mxu0 0
    %4321 = vmatpush1.bf16.msra.mxu0 0
    %4322 = vmatprep.subr.bf16.mxu0 0
    %4323 = vmatpush1.bf16.msra.mxu0 %v4303
    %4324 = vmatprep.subr.bf16.mxu0 0
    %4325 = vmatpush2.bf16.msra.mxu0 0
    %4326 = vmatprep.subr.bf16.mxu0 0
    %4327 = vmatpush2.bf16.msra.mxu0 0
    %4328 = vmatprep.subr.bf16.mxu0 0
    %4329 = vmatpush2.bf16.msra.mxu0 0
    %4330 = vmatprep.subr.bf16.mxu0 0
    %4331 = vmatpush2.bf16.msra.mxu0 0
    %4332 = vmatprep.subr.bf16.mxu0 0
    %4333 = vmatpush2.bf16.msra.mxu0 0
    %4334 = vmatprep.subr.bf16.mxu0 0
    %4335 = vmatpush2.bf16.msra.mxu0 0
    %4336 = vmatprep.subr.bf16.mxu0 0
    %4337 = vmatpush2.bf16.msra.mxu0 0
    %4338 = vmatprep.subr.bf16.mxu0 0
    %4339 = vmatpush2.bf16.msra.mxu0 0
    %4340 = vmatprep.mubr.bf16.mxu0 0
    %4341 = vmatmul.mubr.bf16.gmra.mxu0 %v4306
    %v4342 = vpop.f32.mrf.mxu0
    %v4343 = vadd.f32 0.0, %v4342
    %v4344 = vpop.f32.mrf.mxu0
    %v4345 = vpop.f32.mrf.mxu0
    %v4346 = vadd.f32 0.0, %v4345
    %v4347 = vpop.f32.mrf.mxu0
    %4348 = vdwg.mxu0
    %4350 = vrot.lane.b32.xlu0 %v1169, 96
    %v4351 = vpop.permute.xlu0 %4350
    %v4354 = vsel %vm1980, %v4286, 0
    %4356 = vmatprep.subr.bf16.mxu0 0
    %4357 = vmatpush1.bf16.msra.mxu0 0
    %4358 = vmatprep.subr.bf16.mxu0 0
    %4359 = vmatpush1.bf16.msra.mxu0 0
    %4360 = vmatprep.subr.bf16.mxu0 0
    %4361 = vmatpush1.bf16.msra.mxu0 0
    %4362 = vmatprep.subr.bf16.mxu0 0
    %4363 = vmatpush1.bf16.msra.mxu0 0
    %4364 = vmatprep.subr.bf16.mxu0 0
    %4365 = vmatpush1.bf16.msra.mxu0 0
    %4366 = vmatprep.subr.bf16.mxu0 0
    %4367 = vmatpush1.bf16.msra.mxu0 0
    %4368 = vmatprep.subr.bf16.mxu0 0
    %4369 = vmatpush1.bf16.msra.mxu0 0
    %4370 = vmatprep.subr.bf16.mxu0 0
    %4371 = vmatpush1.bf16.msra.mxu0 %v4351
    %4372 = vmatprep.subr.bf16.mxu0 0
    %4373 = vmatpush2.bf16.msra.mxu0 0
    %4374 = vmatprep.subr.bf16.mxu0 0
    %4375 = vmatpush2.bf16.msra.mxu0 0
    %4376 = vmatprep.subr.bf16.mxu0 0
    %4377 = vmatpush2.bf16.msra.mxu0 0
    %4378 = vmatprep.subr.bf16.mxu0 0
    %4379 = vmatpush2.bf16.msra.mxu0 0
    %4380 = vmatprep.subr.bf16.mxu0 0
    %4381 = vmatpush2.bf16.msra.mxu0 0
    %4382 = vmatprep.subr.bf16.mxu0 0
    %4383 = vmatpush2.bf16.msra.mxu0 0
    %4384 = vmatprep.subr.bf16.mxu0 0
    %4385 = vmatpush2.bf16.msra.mxu0 0
    %4386 = vmatprep.subr.bf16.mxu0 0
    %4387 = vmatpush2.bf16.msra.mxu0 0
    %4388 = vmatprep.mubr.bf16.mxu0 0
    %4389 = vmatmul.mubr.bf16.gmra.mxu0 %v4354
    %v4390 = vpop.f32.mrf.mxu0
    %v4391 = vadd.f32 0.0, %v4390
    %v4392 = vpop.f32.mrf.mxu0
    %v4393 = vpop.f32.mrf.mxu0
    %v4394 = vadd.f32 0.0, %v4393
    %v4395 = vpop.f32.mrf.mxu0
    %4396 = vdwg.mxu0
    %4398 = vrot.lane.b32.xlu0 %v1170, 96
    %v4399 = vpop.permute.xlu0 %4398
    %v4402 = vsel %vm1980, %v4287, 0
    %4404 = vmatprep.subr.bf16.mxu0 0
    %4405 = vmatpush1.bf16.msra.mxu0 0
    %4406 = vmatprep.subr.bf16.mxu0 0
    %4407 = vmatpush1.bf16.msra.mxu0 0
    %4408 = vmatprep.subr.bf16.mxu0 0
    %4409 = vmatpush1.bf16.msra.mxu0 0
    %4410 = vmatprep.subr.bf16.mxu0 0
    %4411 = vmatpush1.bf16.msra.mxu0 0
    %4412 = vmatprep.subr.bf16.mxu0 0
    %4413 = vmatpush1.bf16.msra.mxu0 0
    %4414 = vmatprep.subr.bf16.mxu0 0
    %4415 = vmatpush1.bf16.msra.mxu0 0
    %4416 = vmatprep.subr.bf16.mxu0 0
    %4417 = vmatpush1.bf16.msra.mxu0 0
    %4418 = vmatprep.subr.bf16.mxu0 0
    %4419 = vmatpush1.bf16.msra.mxu0 %v4399
    %4420 = vmatprep.subr.bf16.mxu0 0
    %4421 = vmatpush2.bf16.msra.mxu0 0
    %4422 = vmatprep.subr.bf16.mxu0 0
    %4423 = vmatpush2.bf16.msra.mxu0 0
    %4424 = vmatprep.subr.bf16.mxu0 0
    %4425 = vmatpush2.bf16.msra.mxu0 0
    %4426 = vmatprep.subr.bf16.mxu0 0
    %4427 = vmatpush2.bf16.msra.mxu0 0
    %4428 = vmatprep.subr.bf16.mxu0 0
    %4429 = vmatpush2.bf16.msra.mxu0 0
    %4430 = vmatprep.subr.bf16.mxu0 0
    %4431 = vmatpush2.bf16.msra.mxu0 0
    %4432 = vmatprep.subr.bf16.mxu0 0
    %4433 = vmatpush2.bf16.msra.mxu0 0
    %4434 = vmatprep.subr.bf16.mxu0 0
    %4435 = vmatpush2.bf16.msra.mxu0 0
    %4436 = vmatprep.mubr.bf16.mxu0 0
    %4437 = vmatmul.mubr.bf16.gmra.mxu0 %v4402
    %v4438 = vpop.f32.mrf.mxu0
    %v4439 = vadd.f32 0.0, %v4438
    %v4440 = vpop.f32.mrf.mxu0
    %v4441 = vpop.f32.mrf.mxu0
    %v4442 = vadd.f32 0.0, %v4441
    %v4443 = vpop.f32.mrf.mxu0
    %4444 = vdwg.mxu0
    %4446 = vrot.lane.b32.xlu0 %v1171, 96
    %v4447 = vpop.permute.xlu0 %4446
    %v4450 = vsel %vm1980, %v4288, 0
    %4452 = vmatprep.subr.bf16.mxu0 0
    %4453 = vmatpush1.bf16.msra.mxu0 0
    %4454 = vmatprep.subr.bf16.mxu0 0
    %4455 = vmatpush1.bf16.msra.mxu0 0
    %4456 = vmatprep.subr.bf16.mxu0 0
    %4457 = vmatpush1.bf16.msra.mxu0 0
    %4458 = vmatprep.subr.bf16.mxu0 0
    %4459 = vmatpush1.bf16.msra.mxu0 0
    %4460 = vmatprep.subr.bf16.mxu0 0
    %4461 = vmatpush1.bf16.msra.mxu0 0
    %4462 = vmatprep.subr.bf16.mxu0 0
    %4463 = vmatpush1.bf16.msra.mxu0 0
    %4464 = vmatprep.subr.bf16.mxu0 0
    %4465 = vmatpush1.bf16.msra.mxu0 0
    %4466 = vmatprep.subr.bf16.mxu0 0
    %4467 = vmatpush1.bf16.msra.mxu0 %v4447
    %4468 = vmatprep.subr.bf16.mxu0 0
    %4469 = vmatpush2.bf16.msra.mxu0 0
    %4470 = vmatprep.subr.bf16.mxu0 0
    %4471 = vmatpush2.bf16.msra.mxu0 0
    %4472 = vmatprep.subr.bf16.mxu0 0
    %4473 = vmatpush2.bf16.msra.mxu0 0
    %4474 = vmatprep.subr.bf16.mxu0 0
    %4475 = vmatpush2.bf16.msra.mxu0 0
    %4476 = vmatprep.subr.bf16.mxu0 0
    %4477 = vmatpush2.bf16.msra.mxu0 0
    %4478 = vmatprep.subr.bf16.mxu0 0
    %4479 = vmatpush2.bf16.msra.mxu0 0
    %4480 = vmatprep.subr.bf16.mxu0 0
    %4481 = vmatpush2.bf16.msra.mxu0 0
    %4482 = vmatprep.subr.bf16.mxu0 0
    %4483 = vmatpush2.bf16.msra.mxu0 0
    %4484 = vmatprep.mubr.bf16.mxu0 0
    %4485 = vmatmul.mubr.bf16.gmra.mxu0 %v4450
    %v4486 = vpop.f32.mrf.mxu0
    %v4487 = vadd.f32 0.0, %v4486
    %v4488 = vpop.f32.mrf.mxu0
    %v4489 = vpop.f32.mrf.mxu0
    %v4490 = vadd.f32 0.0, %v4489
    %v4491 = vpop.f32.mrf.mxu0
    %4492 = vdwg.mxu0
    %4494 = vrot.lane.b32.xlu0 %v1172, 96
    %v4495 = vpop.permute.xlu0 %4494
    %v4498 = vsel %vm1980, %v4289, 0
    %4500 = vmatprep.subr.bf16.mxu0 0
    %4501 = vmatpush1.bf16.msra.mxu0 0
    %4502 = vmatprep.subr.bf16.mxu0 0
    %4503 = vmatpush1.bf16.msra.mxu0 0
    %4504 = vmatprep.subr.bf16.mxu0 0
    %4505 = vmatpush1.bf16.msra.mxu0 0
    %4506 = vmatprep.subr.bf16.mxu0 0
    %4507 = vmatpush1.bf16.msra.mxu0 0
    %4508 = vmatprep.subr.bf16.mxu0 0
    %4509 = vmatpush1.bf16.msra.mxu0 0
    %4510 = vmatprep.subr.bf16.mxu0 0
    %4511 = vmatpush1.bf16.msra.mxu0 0
    %4512 = vmatprep.subr.bf16.mxu0 0
    %4513 = vmatpush1.bf16.msra.mxu0 0
    %4514 = vmatprep.subr.bf16.mxu0 0
    %4515 = vmatpush1.bf16.msra.mxu0 %v4495
    %4516 = vmatprep.subr.bf16.mxu0 0
    %4517 = vmatpush2.bf16.msra.mxu0 0
    %4518 = vmatprep.subr.bf16.mxu0 0
    %4519 = vmatpush2.bf16.msra.mxu0 0
    %4520 = vmatprep.subr.bf16.mxu0 0
    %4521 = vmatpush2.bf16.msra.mxu0 0
    %4522 = vmatprep.subr.bf16.mxu0 0
    %4523 = vmatpush2.bf16.msra.mxu0 0
    %4524 = vmatprep.subr.bf16.mxu0 0
    %4525 = vmatpush2.bf16.msra.mxu0 0
    %4526 = vmatprep.subr.bf16.mxu0 0
    %4527 = vmatpush2.bf16.msra.mxu0 0
    %4528 = vmatprep.subr.bf16.mxu0 0
    %4529 = vmatpush2.bf16.msra.mxu0 0
    %4530 = vmatprep.subr.bf16.mxu0 0
    %4531 = vmatpush2.bf16.msra.mxu0 0
    %4532 = vmatprep.mubr.bf16.mxu0 0
    %4533 = vmatmul.mubr.bf16.gmra.mxu0 %v4498
    %v4534 = vpop.f32.mrf.mxu0
    %v4535 = vadd.f32 0.0, %v4534
    %v4536 = vpop.f32.mrf.mxu0
    %v4537 = vpop.f32.mrf.mxu0
    %v4538 = vadd.f32 0.0, %v4537
    %v4539 = vpop.f32.mrf.mxu0
    %4540 = vdwg.mxu0
    %4542 = vrot.lane.b32.xlu0 %v1173, 96
    %v4543 = vpop.permute.xlu0 %4542
    %v4546 = vsel %vm1980, %v4290, 0
    %4548 = vmatprep.subr.bf16.mxu0 0
    %4549 = vmatpush1.bf16.msra.mxu0 0
    %4550 = vmatprep.subr.bf16.mxu0 0
    %4551 = vmatpush1.bf16.msra.mxu0 0
    %4552 = vmatprep.subr.bf16.mxu0 0
    %4553 = vmatpush1.bf16.msra.mxu0 0
    %4554 = vmatprep.subr.bf16.mxu0 0
    %4555 = vmatpush1.bf16.msra.mxu0 0
    %4556 = vmatprep.subr.bf16.mxu0 0
    %4557 = vmatpush1.bf16.msra.mxu0 0
    %4558 = vmatprep.subr.bf16.mxu0 0
    %4559 = vmatpush1.bf16.msra.mxu0 0
    %4560 = vmatprep.subr.bf16.mxu0 0
    %4561 = vmatpush1.bf16.msra.mxu0 0
    %4562 = vmatprep.subr.bf16.mxu0 0
    %4563 = vmatpush1.bf16.msra.mxu0 %v4543
    %4564 = vmatprep.subr.bf16.mxu0 0
    %4565 = vmatpush2.bf16.msra.mxu0 0
    %4566 = vmatprep.subr.bf16.mxu0 0
    %4567 = vmatpush2.bf16.msra.mxu0 0
    %4568 = vmatprep.subr.bf16.mxu0 0
    %4569 = vmatpush2.bf16.msra.mxu0 0
    %4570 = vmatprep.subr.bf16.mxu0 0
    %4571 = vmatpush2.bf16.msra.mxu0 0
    %4572 = vmatprep.subr.bf16.mxu0 0
    %4573 = vmatpush2.bf16.msra.mxu0 0
    %4574 = vmatprep.subr.bf16.mxu0 0
    %4575 = vmatpush2.bf16.msra.mxu0 0
    %4576 = vmatprep.subr.bf16.mxu0 0
    %4577 = vmatpush2.bf16.msra.mxu0 0
    %4578 = vmatprep.subr.bf16.mxu0 0
    %4579 = vmatpush2.bf16.msra.mxu0 0
    %4580 = vmatprep.mubr.bf16.mxu0 0
    %4581 = vmatmul.mubr.bf16.gmra.mxu0 %v4546
    %v4582 = vpop.f32.mrf.mxu0
    %v4583 = vadd.f32 0.0, %v4582
    %v4584 = vpop.f32.mrf.mxu0
    %v4585 = vpop.f32.mrf.mxu0
    %v4586 = vadd.f32 0.0, %v4585
    %v4587 = vpop.f32.mrf.mxu0
    %4588 = vdwg.mxu0
    %4590 = vrot.lane.b32.xlu0 %v1174, 96
    %v4591 = vpop.permute.xlu0 %4590
    %v4594 = vsel %vm1980, %v4291, 0
    %4596 = vmatprep.subr.bf16.mxu0 0
    %4597 = vmatpush1.bf16.msra.mxu0 0
    %4598 = vmatprep.subr.bf16.mxu0 0
    %4599 = vmatpush1.bf16.msra.mxu0 0
    %4600 = vmatprep.subr.bf16.mxu0 0
    %4601 = vmatpush1.bf16.msra.mxu0 0
    %4602 = vmatprep.subr.bf16.mxu0 0
    %4603 = vmatpush1.bf16.msra.mxu0 0
    %4604 = vmatprep.subr.bf16.mxu0 0
    %4605 = vmatpush1.bf16.msra.mxu0 0
    %4606 = vmatprep.subr.bf16.mxu0 0
    %4607 = vmatpush1.bf16.msra.mxu0 0
    %4608 = vmatprep.subr.bf16.mxu0 0
    %4609 = vmatpush1.bf16.msra.mxu0 0
    %4610 = vmatprep.subr.bf16.mxu0 0
    %4611 = vmatpush1.bf16.msra.mxu0 %v4591
    %4612 = vmatprep.subr.bf16.mxu0 0
    %4613 = vmatpush2.bf16.msra.mxu0 0
    %4614 = vmatprep.subr.bf16.mxu0 0
    %4615 = vmatpush2.bf16.msra.mxu0 0
    %4616 = vmatprep.subr.bf16.mxu0 0
    %4617 = vmatpush2.bf16.msra.mxu0 0
    %4618 = vmatprep.subr.bf16.mxu0 0
    %4619 = vmatpush2.bf16.msra.mxu0 0
    %4620 = vmatprep.subr.bf16.mxu0 0
    %4621 = vmatpush2.bf16.msra.mxu0 0
    %4622 = vmatprep.subr.bf16.mxu0 0
    %4623 = vmatpush2.bf16.msra.mxu0 0
    %4624 = vmatprep.subr.bf16.mxu0 0
    %4625 = vmatpush2.bf16.msra.mxu0 0
    %4626 = vmatprep.subr.bf16.mxu0 0
    %4627 = vmatpush2.bf16.msra.mxu0 0
    %4628 = vmatprep.mubr.bf16.mxu0 0
    %4629 = vmatmul.mubr.bf16.gmra.mxu0 %v4594
    %v4630 = vpop.f32.mrf.mxu0
    %v4631 = vadd.f32 0.0, %v4630
    %v4632 = vpop.f32.mrf.mxu0
    %v4633 = vpop.f32.mrf.mxu0
    %v4634 = vadd.f32 0.0, %v4633
    %v4635 = vpop.f32.mrf.mxu0
    %4636 = vdwg.mxu0
    %4638 = vrot.lane.b32.xlu0 %v1175, 96
    %v4639 = vpop.permute.xlu0 %4638
    %v4642 = vsel %vm1980, %v4292, 0
    %4644 = vmatprep.subr.bf16.mxu0 0
    %4645 = vmatpush1.bf16.msra.mxu0 0
    %4646 = vmatprep.subr.bf16.mxu0 0
    %4647 = vmatpush1.bf16.msra.mxu0 0
    %4648 = vmatprep.subr.bf16.mxu0 0
    %4649 = vmatpush1.bf16.msra.mxu0 0
    %4650 = vmatprep.subr.bf16.mxu0 0
    %4651 = vmatpush1.bf16.msra.mxu0 0
    %4652 = vmatprep.subr.bf16.mxu0 0
    %4653 = vmatpush1.bf16.msra.mxu0 0
    %4654 = vmatprep.subr.bf16.mxu0 0
    %4655 = vmatpush1.bf16.msra.mxu0 0
    %4656 = vmatprep.subr.bf16.mxu0 0
    %4657 = vmatpush1.bf16.msra.mxu0 0
    %4658 = vmatprep.subr.bf16.mxu0 0
    %4659 = vmatpush1.bf16.msra.mxu0 %v4639
    %4660 = vmatprep.subr.bf16.mxu0 0
    %4661 = vmatpush2.bf16.msra.mxu0 0
    %4662 = vmatprep.subr.bf16.mxu0 0
    %4663 = vmatpush2.bf16.msra.mxu0 0
    %4664 = vmatprep.subr.bf16.mxu0 0
    %4665 = vmatpush2.bf16.msra.mxu0 0
    %4666 = vmatprep.subr.bf16.mxu0 0
    %4667 = vmatpush2.bf16.msra.mxu0 0
    %4668 = vmatprep.subr.bf16.mxu0 0
    %4669 = vmatpush2.bf16.msra.mxu0 0
    %4670 = vmatprep.subr.bf16.mxu0 0
    %4671 = vmatpush2.bf16.msra.mxu0 0
    %4672 = vmatprep.subr.bf16.mxu0 0
    %4673 = vmatpush2.bf16.msra.mxu0 0
    %4674 = vmatprep.subr.bf16.mxu0 0
    %4675 = vmatpush2.bf16.msra.mxu0 0
    %4676 = vmatprep.mubr.bf16.mxu0 0
    %4677 = vmatmul.mubr.bf16.gmra.mxu0 %v4642
    %v4678 = vpop.f32.mrf.mxu0
    %v4679 = vadd.f32 0.0, %v4678
    %v4680 = vpop.f32.mrf.mxu0
    %v4681 = vpop.f32.mrf.mxu0
    %v4682 = vadd.f32 0.0, %v4681
    %v4683 = vpop.f32.mrf.mxu0
    %4684 = vdwg.mxu0
    %4686 = vrot.lane.b32.xlu0 %v1176, 96
    %v4687 = vpop.permute.xlu0 %4686
    %v4690 = vsel %vm1980, %v4293, 0
    %4692 = vmatprep.subr.bf16.mxu0 0
    %4693 = vmatpush1.bf16.msra.mxu0 0
    %4694 = vmatprep.subr.bf16.mxu0 0
    %4695 = vmatpush1.bf16.msra.mxu0 0
    %4696 = vmatprep.subr.bf16.mxu0 0
    %4697 = vmatpush1.bf16.msra.mxu0 0
    %4698 = vmatprep.subr.bf16.mxu0 0
    %4699 = vmatpush1.bf16.msra.mxu0 0
    %4700 = vmatprep.subr.bf16.mxu0 0
    %4701 = vmatpush1.bf16.msra.mxu0 0
    %4702 = vmatprep.subr.bf16.mxu0 0
    %4703 = vmatpush1.bf16.msra.mxu0 0
    %4704 = vmatprep.subr.bf16.mxu0 0
    %4705 = vmatpush1.bf16.msra.mxu0 0
    %4706 = vmatprep.subr.bf16.mxu0 0
    %4707 = vmatpush1.bf16.msra.mxu0 %v4687
    %4708 = vmatprep.subr.bf16.mxu0 0
    %4709 = vmatpush2.bf16.msra.mxu0 0
    %4710 = vmatprep.subr.bf16.mxu0 0
    %4711 = vmatpush2.bf16.msra.mxu0 0
    %4712 = vmatprep.subr.bf16.mxu0 0
    %4713 = vmatpush2.bf16.msra.mxu0 0
    %4714 = vmatprep.subr.bf16.mxu0 0
    %4715 = vmatpush2.bf16.msra.mxu0 0
    %4716 = vmatprep.subr.bf16.mxu0 0
    %4717 = vmatpush2.bf16.msra.mxu0 0
    %4718 = vmatprep.subr.bf16.mxu0 0
    %4719 = vmatpush2.bf16.msra.mxu0 0
    %4720 = vmatprep.subr.bf16.mxu0 0
    %4721 = vmatpush2.bf16.msra.mxu0 0
    %4722 = vmatprep.subr.bf16.mxu0 0
    %4723 = vmatpush2.bf16.msra.mxu0 0
    %4724 = vmatprep.mubr.bf16.mxu0 0
    %4725 = vmatmul.mubr.bf16.gmra.mxu0 %v4690
    %v4726 = vpop.f32.mrf.mxu0
    %v4727 = vadd.f32 0.0, %v4726
    %v4728 = vpop.f32.mrf.mxu0
    %v4729 = vpop.f32.mrf.mxu0
    %v4730 = vadd.f32 0.0, %v4729
    %v4731 = vpop.f32.mrf.mxu0
    %4732 = vdwg.mxu0
    %4734 = vrot.lane.b32.xlu0 %v1177, 96
    %v4735 = vpop.permute.xlu0 %4734
    %v4738 = vsel %vm1980, %v4294, 0
    %4740 = vmatprep.subr.bf16.mxu0 0
    %4741 = vmatpush1.bf16.msra.mxu0 0
    %4742 = vmatprep.subr.bf16.mxu0 0
    %4743 = vmatpush1.bf16.msra.mxu0 0
    %4744 = vmatprep.subr.bf16.mxu0 0
    %4745 = vmatpush1.bf16.msra.mxu0 0
    %4746 = vmatprep.subr.bf16.mxu0 0
    %4747 = vmatpush1.bf16.msra.mxu0 0
    %4748 = vmatprep.subr.bf16.mxu0 0
    %4749 = vmatpush1.bf16.msra.mxu0 0
    %4750 = vmatprep.subr.bf16.mxu0 0
    %4751 = vmatpush1.bf16.msra.mxu0 0
    %4752 = vmatprep.subr.bf16.mxu0 0
    %4753 = vmatpush1.bf16.msra.mxu0 0
    %4754 = vmatprep.subr.bf16.mxu0 0
    %4755 = vmatpush1.bf16.msra.mxu0 %v4735
    %4756 = vmatprep.subr.bf16.mxu0 0
    %4757 = vmatpush2.bf16.msra.mxu0 0
    %4758 = vmatprep.subr.bf16.mxu0 0
    %4759 = vmatpush2.bf16.msra.mxu0 0
    %4760 = vmatprep.subr.bf16.mxu0 0
    %4761 = vmatpush2.bf16.msra.mxu0 0
    %4762 = vmatprep.subr.bf16.mxu0 0
    %4763 = vmatpush2.bf16.msra.mxu0 0
    %4764 = vmatprep.subr.bf16.mxu0 0
    %4765 = vmatpush2.bf16.msra.mxu0 0
    %4766 = vmatprep.subr.bf16.mxu0 0
    %4767 = vmatpush2.bf16.msra.mxu0 0
    %4768 = vmatprep.subr.bf16.mxu0 0
    %4769 = vmatpush2.bf16.msra.mxu0 0
    %4770 = vmatprep.subr.bf16.mxu0 0
    %4771 = vmatpush2.bf16.msra.mxu0 0
    %4772 = vmatprep.mubr.bf16.mxu0 0
    %4773 = vmatmul.mubr.bf16.gmra.mxu0 %v4738
    %v4774 = vpop.f32.mrf.mxu0
    %v4775 = vadd.f32 0.0, %v4774
    %v4776 = vpop.f32.mrf.mxu0
    %v4777 = vpop.f32.mrf.mxu0
    %v4778 = vadd.f32 0.0, %v4777
    %v4779 = vpop.f32.mrf.mxu0
    %4780 = vdwg.mxu0
    %4782 = vrot.lane.b32.xlu0 %v1178, 96
    %v4783 = vpop.permute.xlu0 %4782
    %v4786 = vsel %vm1980, %v4295, 0
    %4788 = vmatprep.subr.bf16.mxu0 0
    %4789 = vmatpush1.bf16.msra.mxu0 0
    %4790 = vmatprep.subr.bf16.mxu0 0
    %4791 = vmatpush1.bf16.msra.mxu0 0
    %4792 = vmatprep.subr.bf16.mxu0 0
    %4793 = vmatpush1.bf16.msra.mxu0 0
    %4794 = vmatprep.subr.bf16.mxu0 0
    %4795 = vmatpush1.bf16.msra.mxu0 0
    %4796 = vmatprep.subr.bf16.mxu0 0
    %4797 = vmatpush1.bf16.msra.mxu0 0
    %4798 = vmatprep.subr.bf16.mxu0 0
    %4799 = vmatpush1.bf16.msra.mxu0 0
    %4800 = vmatprep.subr.bf16.mxu0 0
    %4801 = vmatpush1.bf16.msra.mxu0 0
    %4802 = vmatprep.subr.bf16.mxu0 0
    %4803 = vmatpush1.bf16.msra.mxu0 %v4783
    %4804 = vmatprep.subr.bf16.mxu0 0
    %4805 = vmatpush2.bf16.msra.mxu0 0
    %4806 = vmatprep.subr.bf16.mxu0 0
    %4807 = vmatpush2.bf16.msra.mxu0 0
    %4808 = vmatprep.subr.bf16.mxu0 0
    %4809 = vmatpush2.bf16.msra.mxu0 0
    %4810 = vmatprep.subr.bf16.mxu0 0
    %4811 = vmatpush2.bf16.msra.mxu0 0
    %4812 = vmatprep.subr.bf16.mxu0 0
    %4813 = vmatpush2.bf16.msra.mxu0 0
    %4814 = vmatprep.subr.bf16.mxu0 0
    %4815 = vmatpush2.bf16.msra.mxu0 0
    %4816 = vmatprep.subr.bf16.mxu0 0
    %4817 = vmatpush2.bf16.msra.mxu0 0
    %4818 = vmatprep.subr.bf16.mxu0 0
    %4819 = vmatpush2.bf16.msra.mxu0 0
    %4820 = vmatprep.mubr.bf16.mxu0 0
    %4821 = vmatmul.mubr.bf16.gmra.mxu0 %v4786
    %v4822 = vpop.f32.mrf.mxu0
    %v4823 = vadd.f32 0.0, %v4822
    %v4824 = vpop.f32.mrf.mxu0
    %v4825 = vpop.f32.mrf.mxu0
    %v4826 = vadd.f32 0.0, %v4825
    %v4827 = vpop.f32.mrf.mxu0
    %4828 = vdwg.mxu0
    %4830 = vrot.lane.b32.xlu0 %v1179, 96
    %v4831 = vpop.permute.xlu0 %4830
    %v4834 = vsel %vm1980, %v4296, 0
    %4836 = vmatprep.subr.bf16.mxu0 0
    %4837 = vmatpush1.bf16.msra.mxu0 0
    %4838 = vmatprep.subr.bf16.mxu0 0
    %4839 = vmatpush1.bf16.msra.mxu0 0
    %4840 = vmatprep.subr.bf16.mxu0 0
    %4841 = vmatpush1.bf16.msra.mxu0 0
    %4842 = vmatprep.subr.bf16.mxu0 0
    %4843 = vmatpush1.bf16.msra.mxu0 0
    %4844 = vmatprep.subr.bf16.mxu0 0
    %4845 = vmatpush1.bf16.msra.mxu0 0
    %4846 = vmatprep.subr.bf16.mxu0 0
    %4847 = vmatpush1.bf16.msra.mxu0 0
    %4848 = vmatprep.subr.bf16.mxu0 0
    %4849 = vmatpush1.bf16.msra.mxu0 0
    %4850 = vmatprep.subr.bf16.mxu0 0
    %4851 = vmatpush1.bf16.msra.mxu0 %v4831
    %4852 = vmatprep.subr.bf16.mxu0 0
    %4853 = vmatpush2.bf16.msra.mxu0 0
    %4854 = vmatprep.subr.bf16.mxu0 0
    %4855 = vmatpush2.bf16.msra.mxu0 0
    %4856 = vmatprep.subr.bf16.mxu0 0
    %4857 = vmatpush2.bf16.msra.mxu0 0
    %4858 = vmatprep.subr.bf16.mxu0 0
    %4859 = vmatpush2.bf16.msra.mxu0 0
    %4860 = vmatprep.subr.bf16.mxu0 0
    %4861 = vmatpush2.bf16.msra.mxu0 0
    %4862 = vmatprep.subr.bf16.mxu0 0
    %4863 = vmatpush2.bf16.msra.mxu0 0
    %4864 = vmatprep.subr.bf16.mxu0 0
    %4865 = vmatpush2.bf16.msra.mxu0 0
    %4866 = vmatprep.subr.bf16.mxu0 0
    %4867 = vmatpush2.bf16.msra.mxu0 0
    %4868 = vmatprep.mubr.bf16.mxu0 0
    %4869 = vmatmul.mubr.bf16.gmra.mxu0 %v4834
    %v4870 = vpop.f32.mrf.mxu0
    %v4871 = vadd.f32 0.0, %v4870
    %v4872 = vpop.f32.mrf.mxu0
    %v4873 = vpop.f32.mrf.mxu0
    %v4874 = vadd.f32 0.0, %v4873
    %v4875 = vpop.f32.mrf.mxu0
    %4876 = vdwg.mxu0
    %4878 = vrot.lane.b32.xlu0 %v1180, 96
    %v4879 = vpop.permute.xlu0 %4878
    %v4882 = vsel %vm1980, %v4297, 0
    %4884 = vmatprep.subr.bf16.mxu0 0
    %4885 = vmatpush1.bf16.msra.mxu0 0
    %4886 = vmatprep.subr.bf16.mxu0 0
    %4887 = vmatpush1.bf16.msra.mxu0 0
    %4888 = vmatprep.subr.bf16.mxu0 0
    %4889 = vmatpush1.bf16.msra.mxu0 0
    %4890 = vmatprep.subr.bf16.mxu0 0
    %4891 = vmatpush1.bf16.msra.mxu0 0
    %4892 = vmatprep.subr.bf16.mxu0 0
    %4893 = vmatpush1.bf16.msra.mxu0 0
    %4894 = vmatprep.subr.bf16.mxu0 0
    %4895 = vmatpush1.bf16.msra.mxu0 0
    %4896 = vmatprep.subr.bf16.mxu0 0
    %4897 = vmatpush1.bf16.msra.mxu0 0
    %4898 = vmatprep.subr.bf16.mxu0 0
    %4899 = vmatpush1.bf16.msra.mxu0 %v4879
    %4900 = vmatprep.subr.bf16.mxu0 0
    %4901 = vmatpush2.bf16.msra.mxu0 0
    %4902 = vmatprep.subr.bf16.mxu0 0
    %4903 = vmatpush2.bf16.msra.mxu0 0
    %4904 = vmatprep.subr.bf16.mxu0 0
    %4905 = vmatpush2.bf16.msra.mxu0 0
    %4906 = vmatprep.subr.bf16.mxu0 0
    %4907 = vmatpush2.bf16.msra.mxu0 0
    %4908 = vmatprep.subr.bf16.mxu0 0
    %4909 = vmatpush2.bf16.msra.mxu0 0
    %4910 = vmatprep.subr.bf16.mxu0 0
    %4911 = vmatpush2.bf16.msra.mxu0 0
    %4912 = vmatprep.subr.bf16.mxu0 0
    %4913 = vmatpush2.bf16.msra.mxu0 0
    %4914 = vmatprep.subr.bf16.mxu0 0
    %4915 = vmatpush2.bf16.msra.mxu0 0
    %4916 = vmatprep.mubr.bf16.mxu0 0
    %4917 = vmatmul.mubr.bf16.gmra.mxu0 %v4882
    %v4918 = vpop.f32.mrf.mxu0
    %v4919 = vadd.f32 0.0, %v4918
    %v4920 = vpop.f32.mrf.mxu0
    %v4921 = vpop.f32.mrf.mxu0
    %v4922 = vadd.f32 0.0, %v4921
    %v4923 = vpop.f32.mrf.mxu0
    %4924 = vdwg.mxu0
    %4926 = vrot.lane.b32.xlu0 %v1181, 96
    %v4927 = vpop.permute.xlu0 %4926
    %v4930 = vsel %vm1980, %v4298, 0
    %4932 = vmatprep.subr.bf16.mxu0 0
    %4933 = vmatpush1.bf16.msra.mxu0 0
    %4934 = vmatprep.subr.bf16.mxu0 0
    %4935 = vmatpush1.bf16.msra.mxu0 0
    %4936 = vmatprep.subr.bf16.mxu0 0
    %4937 = vmatpush1.bf16.msra.mxu0 0
    %4938 = vmatprep.subr.bf16.mxu0 0
    %4939 = vmatpush1.bf16.msra.mxu0 0
    %4940 = vmatprep.subr.bf16.mxu0 0
    %4941 = vmatpush1.bf16.msra.mxu0 0
    %4942 = vmatprep.subr.bf16.mxu0 0
    %4943 = vmatpush1.bf16.msra.mxu0 0
    %4944 = vmatprep.subr.bf16.mxu0 0
    %4945 = vmatpush1.bf16.msra.mxu0 0
    %4946 = vmatprep.subr.bf16.mxu0 0
    %4947 = vmatpush1.bf16.msra.mxu0 %v4927
    %4948 = vmatprep.subr.bf16.mxu0 0
    %4949 = vmatpush2.bf16.msra.mxu0 0
    %4950 = vmatprep.subr.bf16.mxu0 0
    %4951 = vmatpush2.bf16.msra.mxu0 0
    %4952 = vmatprep.subr.bf16.mxu0 0
    %4953 = vmatpush2.bf16.msra.mxu0 0
    %4954 = vmatprep.subr.bf16.mxu0 0
    %4955 = vmatpush2.bf16.msra.mxu0 0
    %4956 = vmatprep.subr.bf16.mxu0 0
    %4957 = vmatpush2.bf16.msra.mxu0 0
    %4958 = vmatprep.subr.bf16.mxu0 0
    %4959 = vmatpush2.bf16.msra.mxu0 0
    %4960 = vmatprep.subr.bf16.mxu0 0
    %4961 = vmatpush2.bf16.msra.mxu0 0
    %4962 = vmatprep.subr.bf16.mxu0 0
    %4963 = vmatpush2.bf16.msra.mxu0 0
    %4964 = vmatprep.mubr.bf16.mxu0 0
    %4965 = vmatmul.mubr.bf16.gmra.mxu0 %v4930
    %v4966 = vpop.f32.mrf.mxu0
    %v4967 = vadd.f32 0.0, %v4966
    %v4968 = vpop.f32.mrf.mxu0
    %v4969 = vpop.f32.mrf.mxu0
    %v4970 = vadd.f32 0.0, %v4969
    %v4971 = vpop.f32.mrf.mxu0
    %4972 = vdwg.mxu0
    %4974 = vrot.lane.b32.xlu0 %v1182, 96
    %v4975 = vpop.permute.xlu0 %4974
    %v4978 = vsel %vm1980, %v4299, 0
    %4980 = vmatprep.subr.bf16.mxu0 0
    %4981 = vmatpush1.bf16.msra.mxu0 0
    %4982 = vmatprep.subr.bf16.mxu0 0
    %4983 = vmatpush1.bf16.msra.mxu0 0
    %4984 = vmatprep.subr.bf16.mxu0 0
    %4985 = vmatpush1.bf16.msra.mxu0 0
    %4986 = vmatprep.subr.bf16.mxu0 0
    %4987 = vmatpush1.bf16.msra.mxu0 0
    %4988 = vmatprep.subr.bf16.mxu0 0
    %4989 = vmatpush1.bf16.msra.mxu0 0
    %4990 = vmatprep.subr.bf16.mxu0 0
    %4991 = vmatpush1.bf16.msra.mxu0 0
    %4992 = vmatprep.subr.bf16.mxu0 0
    %4993 = vmatpush1.bf16.msra.mxu0 0
    %4994 = vmatprep.subr.bf16.mxu0 0
    %4995 = vmatpush1.bf16.msra.mxu0 %v4975
    %4996 = vmatprep.subr.bf16.mxu0 0
    %4997 = vmatpush2.bf16.msra.mxu0 0
    %4998 = vmatprep.subr.bf16.mxu0 0
    %4999 = vmatpush2.bf16.msra.mxu0 0
    %5000 = vmatprep.subr.bf16.mxu0 0
    %5001 = vmatpush2.bf16.msra.mxu0 0
    %5002 = vmatprep.subr.bf16.mxu0 0
    %5003 = vmatpush2.bf16.msra.mxu0 0
    %5004 = vmatprep.subr.bf16.mxu0 0
    %5005 = vmatpush2.bf16.msra.mxu0 0
    %5006 = vmatprep.subr.bf16.mxu0 0
    %5007 = vmatpush2.bf16.msra.mxu0 0
    %5008 = vmatprep.subr.bf16.mxu0 0
    %5009 = vmatpush2.bf16.msra.mxu0 0
    %5010 = vmatprep.subr.bf16.mxu0 0
    %5011 = vmatpush2.bf16.msra.mxu0 0
    %5012 = vmatprep.mubr.bf16.mxu0 0
    %5013 = vmatmul.mubr.bf16.gmra.mxu0 %v4978
    %v5014 = vpop.f32.mrf.mxu0
    %v5015 = vadd.f32 0.0, %v5014
    %v5016 = vpop.f32.mrf.mxu0
    %v5017 = vpop.f32.mrf.mxu0
    %v5018 = vadd.f32 0.0, %v5017
    %v5019 = vpop.f32.mrf.mxu0
    %5020 = vdwg.mxu0
    %5022 = vrot.lane.b32.xlu0 %v1183, 96
    %v5023 = vpop.permute.xlu0 %5022
    %v5026 = vsel %vm1980, %v4300, 0
    %5028 = vmatprep.subr.bf16.mxu0 0
    %5029 = vmatpush1.bf16.msra.mxu0 0
    %5030 = vmatprep.subr.bf16.mxu0 0
    %5031 = vmatpush1.bf16.msra.mxu0 0
    %5032 = vmatprep.subr.bf16.mxu0 0
    %5033 = vmatpush1.bf16.msra.mxu0 0
    %5034 = vmatprep.subr.bf16.mxu0 0
    %5035 = vmatpush1.bf16.msra.mxu0 0
    %5036 = vmatprep.subr.bf16.mxu0 0
    %5037 = vmatpush1.bf16.msra.mxu0 0
    %5038 = vmatprep.subr.bf16.mxu0 0
    %5039 = vmatpush1.bf16.msra.mxu0 0
    %5040 = vmatprep.subr.bf16.mxu0 0
    %5041 = vmatpush1.bf16.msra.mxu0 0
    %5042 = vmatprep.subr.bf16.mxu0 0
    %5043 = vmatpush1.bf16.msra.mxu0 %v5023
    %5044 = vmatprep.subr.bf16.mxu0 0
    %5045 = vmatpush2.bf16.msra.mxu0 0
    %5046 = vmatprep.subr.bf16.mxu0 0
    %5047 = vmatpush2.bf16.msra.mxu0 0
    %5048 = vmatprep.subr.bf16.mxu0 0
    %5049 = vmatpush2.bf16.msra.mxu0 0
    %5050 = vmatprep.subr.bf16.mxu0 0
    %5051 = vmatpush2.bf16.msra.mxu0 0
    %5052 = vmatprep.subr.bf16.mxu0 0
    %5053 = vmatpush2.bf16.msra.mxu0 0
    %5054 = vmatprep.subr.bf16.mxu0 0
    %5055 = vmatpush2.bf16.msra.mxu0 0
    %5056 = vmatprep.subr.bf16.mxu0 0
    %5057 = vmatpush2.bf16.msra.mxu0 0
    %5058 = vmatprep.subr.bf16.mxu0 0
    %5059 = vmatpush2.bf16.msra.mxu0 0
    %5060 = vmatprep.mubr.bf16.mxu0 0
    %5061 = vmatmul.mubr.bf16.gmra.mxu0 %v5026
    %v5062 = vpop.f32.mrf.mxu0
    %v5063 = vadd.f32 0.0, %v5062
    %v5064 = vpop.f32.mrf.mxu0
    %v5065 = vpop.f32.mrf.mxu0
    %v5066 = vadd.f32 0.0, %v5065
    %v5067 = vpop.f32.mrf.mxu0
    %5068 = vdwg.mxu0
    %5069 = vrot.lane.b32.xlu0 %v1136, 64
    %v5070 = vpop.permute.xlu0 %5069
    %5071 = vrot.lane.b32.xlu0 %v1152, 64
    %v5072 = vpop.permute.xlu0 %5071
    %v5074 = vsel %vm1191, %v5070, 0
    %v5077 = vsel %vm1191, %v5072, 0
    %5079 = vmatprep.subr.bf16.mxu0 0
    %5080 = vmatpush1.bf16.xpose.msra.mxu0 0
    %5081 = vmatprep.subr.bf16.mxu0 0
    %5082 = vmatpush1.bf16.xpose.msra.mxu0 0
    %5083 = vmatprep.subr.bf16.mxu0 0
    %5084 = vmatpush1.bf16.xpose.msra.mxu0 0
    %5085 = vmatprep.subr.bf16.mxu0 0
    %5086 = vmatpush1.bf16.xpose.msra.mxu0 0
    %5087 = vmatprep.subr.bf16.mxu0 0
    %5088 = vmatpush1.bf16.xpose.msra.mxu0 0
    %5089 = vmatprep.subr.bf16.mxu0 0
    %5090 = vmatpush1.bf16.xpose.msra.mxu0 0
    %5091 = vmatprep.subr.bf16.mxu0 0
    %5092 = vmatpush1.bf16.xpose.msra.mxu0 0
    %5093 = vmatprep.subr.bf16.mxu0 0
    %5094 = vmatpush1.bf16.xpose.msra.mxu0 %v5077
    %5095 = vmatprep.subr.bf16.mxu0 0
    %5096 = vmatpush2.bf16.xpose.msra.mxu0 0
    %5097 = vmatprep.subr.bf16.mxu0 0
    %5098 = vmatpush2.bf16.xpose.msra.mxu0 0
    %5099 = vmatprep.subr.bf16.mxu0 0
    %5100 = vmatpush2.bf16.xpose.msra.mxu0 0
    %5101 = vmatprep.subr.bf16.mxu0 0
    %5102 = vmatpush2.bf16.xpose.msra.mxu0 0
    %5103 = vmatprep.subr.bf16.mxu0 0
    %5104 = vmatpush2.bf16.xpose.msra.mxu0 0
    %5105 = vmatprep.subr.bf16.mxu0 0
    %5106 = vmatpush2.bf16.xpose.msra.mxu0 0
    %5107 = vmatprep.subr.bf16.mxu0 0
    %5108 = vmatpush2.bf16.xpose.msra.mxu0 0
    %5109 = vmatprep.subr.bf16.mxu0 0
    %5110 = vmatpush2.bf16.xpose.msra.mxu0 0
    %5111 = vmatprep.mubr.bf16.mxu0 0
    %5112 = vmatmul.mubr.bf16.gmra.mxu0 %v5074
    %v5113 = vpop.f32.mrf.mxu0
    %v5114 = vadd.f32 0.0, %v5113
    %v5115 = vpop.f32.mrf.mxu0
    %v5116 = vpop.f32.mrf.mxu0
    %v5117 = vadd.f32 0.0, %v5116
    %v5118 = vpop.f32.mrf.mxu0
    %5119 = vdwg.mxu0
    %5120 = vrot.lane.b32.xlu0 %v1137, 64
    %v5121 = vpop.permute.xlu0 %5120
    %5122 = vrot.lane.b32.xlu0 %v1153, 64
    %v5123 = vpop.permute.xlu0 %5122
    %v5125 = vsel %vm1191, %v5121, 0
    %v5128 = vsel %vm1191, %v5123, 0
    %5130 = vmatprep.subr.bf16.mxu0 0
    %5131 = vmatpush1.bf16.xpose.msra.mxu0 0
    %5132 = vmatprep.subr.bf16.mxu0 0
    %5133 = vmatpush1.bf16.xpose.msra.mxu0 0
    %5134 = vmatprep.subr.bf16.mxu0 0
    %5135 = vmatpush1.bf16.xpose.msra.mxu0 0
    %5136 = vmatprep.subr.bf16.mxu0 0
    %5137 = vmatpush1.bf16.xpose.msra.mxu0 0
    %5138 = vmatprep.subr.bf16.mxu0 0
    %5139 = vmatpush1.bf16.xpose.msra.mxu0 0
    %5140 = vmatprep.subr.bf16.mxu0 0
    %5141 = vmatpush1.bf16.xpose.msra.mxu0 0
    %5142 = vmatprep.subr.bf16.mxu0 0
    %5143 = vmatpush1.bf16.xpose.msra.mxu0 0
    %5144 = vmatprep.subr.bf16.mxu0 0
    %5145 = vmatpush1.bf16.xpose.msra.mxu0 %v5128
    %5146 = vmatprep.subr.bf16.mxu0 0
    %5147 = vmatpush2.bf16.xpose.msra.mxu0 0
    %5148 = vmatprep.subr.bf16.mxu0 0
    %5149 = vmatpush2.bf16.xpose.msra.mxu0 0
    %5150 = vmatprep.subr.bf16.mxu0 0
    %5151 = vmatpush2.bf16.xpose.msra.mxu0 0
    %5152 = vmatprep.subr.bf16.mxu0 0
    %5153 = vmatpush2.bf16.xpose.msra.mxu0 0
    %5154 = vmatprep.subr.bf16.mxu0 0
    %5155 = vmatpush2.bf16.xpose.msra.mxu0 0
    %5156 = vmatprep.subr.bf16.mxu0 0
    %5157 = vmatpush2.bf16.xpose.msra.mxu0 0
    %5158 = vmatprep.subr.bf16.mxu0 0
    %5159 = vmatpush2.bf16.xpose.msra.mxu0 0
    %5160 = vmatprep.subr.bf16.mxu0 0
    %5161 = vmatpush2.bf16.xpose.msra.mxu0 0
    %5162 = vmatprep.mubr.bf16.mxu0 0
    %5163 = vmatmul.mubr.bf16.gmra.mxu0 %v5125
    %v5164 = vpop.f32.mrf.mxu0
    %v5165 = vadd.f32 0.0, %v5164
    %v5166 = vpop.f32.mrf.mxu0
    %v5167 = vpop.f32.mrf.mxu0
    %v5168 = vadd.f32 0.0, %v5167
    %v5169 = vpop.f32.mrf.mxu0
    %5170 = vdwg.mxu0
    %5171 = vrot.lane.b32.xlu0 %v1138, 64
    %v5172 = vpop.permute.xlu0 %5171
    %5173 = vrot.lane.b32.xlu0 %v1154, 64
    %v5174 = vpop.permute.xlu0 %5173
    %v5176 = vsel %vm1191, %v5172, 0
    %v5179 = vsel %vm1191, %v5174, 0
    %5181 = vmatprep.subr.bf16.mxu0 0
    %5182 = vmatpush1.bf16.xpose.msra.mxu0 0
    %5183 = vmatprep.subr.bf16.mxu0 0
    %5184 = vmatpush1.bf16.xpose.msra.mxu0 0
    %5185 = vmatprep.subr.bf16.mxu0 0
    %5186 = vmatpush1.bf16.xpose.msra.mxu0 0
    %5187 = vmatprep.subr.bf16.mxu0 0
    %5188 = vmatpush1.bf16.xpose.msra.mxu0 0
    %5189 = vmatprep.subr.bf16.mxu0 0
    %5190 = vmatpush1.bf16.xpose.msra.mxu0 0
    %5191 = vmatprep.subr.bf16.mxu0 0
    %5192 = vmatpush1.bf16.xpose.msra.mxu0 0
    %5193 = vmatprep.subr.bf16.mxu0 0
    %5194 = vmatpush1.bf16.xpose.msra.mxu0 0
    %5195 = vmatprep.subr.bf16.mxu0 0
    %5196 = vmatpush1.bf16.xpose.msra.mxu0 %v5179
    %5197 = vmatprep.subr.bf16.mxu0 0
    %5198 = vmatpush2.bf16.xpose.msra.mxu0 0
    %5199 = vmatprep.subr.bf16.mxu0 0
    %5200 = vmatpush2.bf16.xpose.msra.mxu0 0
    %5201 = vmatprep.subr.bf16.mxu0 0
    %5202 = vmatpush2.bf16.xpose.msra.mxu0 0
    %5203 = vmatprep.subr.bf16.mxu0 0
    %5204 = vmatpush2.bf16.xpose.msra.mxu0 0
    %5205 = vmatprep.subr.bf16.mxu0 0
    %5206 = vmatpush2.bf16.xpose.msra.mxu0 0
    %5207 = vmatprep.subr.bf16.mxu0 0
    %5208 = vmatpush2.bf16.xpose.msra.mxu0 0
    %5209 = vmatprep.subr.bf16.mxu0 0
    %5210 = vmatpush2.bf16.xpose.msra.mxu0 0
    %5211 = vmatprep.subr.bf16.mxu0 0
    %5212 = vmatpush2.bf16.xpose.msra.mxu0 0
    %5213 = vmatprep.mubr.bf16.mxu0 0
    %5214 = vmatmul.mubr.bf16.gmra.mxu0 %v5176
    %v5215 = vpop.f32.mrf.mxu0
    %v5216 = vadd.f32 0.0, %v5215
    %v5217 = vpop.f32.mrf.mxu0
    %v5218 = vpop.f32.mrf.mxu0
    %v5219 = vadd.f32 0.0, %v5218
    %v5220 = vpop.f32.mrf.mxu0
    %5221 = vdwg.mxu0
    %5222 = vrot.lane.b32.xlu0 %v1139, 64
    %v5223 = vpop.permute.xlu0 %5222
    %5224 = vrot.lane.b32.xlu0 %v1155, 64
    %v5225 = vpop.permute.xlu0 %5224
    %v5227 = vsel %vm1191, %v5223, 0
    %v5230 = vsel %vm1191, %v5225, 0
    %5232 = vmatprep.subr.bf16.mxu0 0
    %5233 = vmatpush1.bf16.xpose.msra.mxu0 0
    %5234 = vmatprep.subr.bf16.mxu0 0
    %5235 = vmatpush1.bf16.xpose.msra.mxu0 0
    %5236 = vmatprep.subr.bf16.mxu0 0
    %5237 = vmatpush1.bf16.xpose.msra.mxu0 0
    %5238 = vmatprep.subr.bf16.mxu0 0
    %5239 = vmatpush1.bf16.xpose.msra.mxu0 0
    %5240 = vmatprep.subr.bf16.mxu0 0
    %5241 = vmatpush1.bf16.xpose.msra.mxu0 0
    %5242 = vmatprep.subr.bf16.mxu0 0
    %5243 = vmatpush1.bf16.xpose.msra.mxu0 0
    %5244 = vmatprep.subr.bf16.mxu0 0
    %5245 = vmatpush1.bf16.xpose.msra.mxu0 0
    %5246 = vmatprep.subr.bf16.mxu0 0
    %5247 = vmatpush1.bf16.xpose.msra.mxu0 %v5230
    %5248 = vmatprep.subr.bf16.mxu0 0
    %5249 = vmatpush2.bf16.xpose.msra.mxu0 0
    %5250 = vmatprep.subr.bf16.mxu0 0
    %5251 = vmatpush2.bf16.xpose.msra.mxu0 0
    %5252 = vmatprep.subr.bf16.mxu0 0
    %5253 = vmatpush2.bf16.xpose.msra.mxu0 0
    %5254 = vmatprep.subr.bf16.mxu0 0
    %5255 = vmatpush2.bf16.xpose.msra.mxu0 0
    %5256 = vmatprep.subr.bf16.mxu0 0
    %5257 = vmatpush2.bf16.xpose.msra.mxu0 0
    %5258 = vmatprep.subr.bf16.mxu0 0
    %5259 = vmatpush2.bf16.xpose.msra.mxu0 0
    %5260 = vmatprep.subr.bf16.mxu0 0
    %5261 = vmatpush2.bf16.xpose.msra.mxu0 0
    %5262 = vmatprep.subr.bf16.mxu0 0
    %5263 = vmatpush2.bf16.xpose.msra.mxu0 0
    %5264 = vmatprep.mubr.bf16.mxu0 0
    %5265 = vmatmul.mubr.bf16.gmra.mxu0 %v5227
    %v5266 = vpop.f32.mrf.mxu0
    %v5267 = vadd.f32 0.0, %v5266
    %v5268 = vpop.f32.mrf.mxu0
    %v5269 = vpop.f32.mrf.mxu0
    %v5270 = vadd.f32 0.0, %v5269
    %v5271 = vpop.f32.mrf.mxu0
    %5272 = vdwg.mxu0
    %5273 = vrot.lane.b32.xlu0 %v1140, 64
    %v5274 = vpop.permute.xlu0 %5273
    %5275 = vrot.lane.b32.xlu0 %v1156, 64
    %v5276 = vpop.permute.xlu0 %5275
    %v5278 = vsel %vm1191, %v5274, 0
    %v5281 = vsel %vm1191, %v5276, 0
    %5283 = vmatprep.subr.bf16.mxu0 0
    %5284 = vmatpush1.bf16.xpose.msra.mxu0 0
    %5285 = vmatprep.subr.bf16.mxu0 0
    %5286 = vmatpush1.bf16.xpose.msra.mxu0 0
    %5287 = vmatprep.subr.bf16.mxu0 0
    %5288 = vmatpush1.bf16.xpose.msra.mxu0 0
    %5289 = vmatprep.subr.bf16.mxu0 0
    %5290 = vmatpush1.bf16.xpose.msra.mxu0 0
    %5291 = vmatprep.subr.bf16.mxu0 0
    %5292 = vmatpush1.bf16.xpose.msra.mxu0 0
    %5293 = vmatprep.subr.bf16.mxu0 0
    %5294 = vmatpush1.bf16.xpose.msra.mxu0 0
    %5295 = vmatprep.subr.bf16.mxu0 0
    %5296 = vmatpush1.bf16.xpose.msra.mxu0 0
    %5297 = vmatprep.subr.bf16.mxu0 0
    %5298 = vmatpush1.bf16.xpose.msra.mxu0 %v5281
    %5299 = vmatprep.subr.bf16.mxu0 0
    %5300 = vmatpush2.bf16.xpose.msra.mxu0 0
    %5301 = vmatprep.subr.bf16.mxu0 0
    %5302 = vmatpush2.bf16.xpose.msra.mxu0 0
    %5303 = vmatprep.subr.bf16.mxu0 0
    %5304 = vmatpush2.bf16.xpose.msra.mxu0 0
    %5305 = vmatprep.subr.bf16.mxu0 0
    %5306 = vmatpush2.bf16.xpose.msra.mxu0 0
    %5307 = vmatprep.subr.bf16.mxu0 0
    %5308 = vmatpush2.bf16.xpose.msra.mxu0 0
    %5309 = vmatprep.subr.bf16.mxu0 0
    %5310 = vmatpush2.bf16.xpose.msra.mxu0 0
    %5311 = vmatprep.subr.bf16.mxu0 0
    %5312 = vmatpush2.bf16.xpose.msra.mxu0 0
    %5313 = vmatprep.subr.bf16.mxu0 0
    %5314 = vmatpush2.bf16.xpose.msra.mxu0 0
    %5315 = vmatprep.mubr.bf16.mxu0 0
    %5316 = vmatmul.mubr.bf16.gmra.mxu0 %v5278
    %v5317 = vpop.f32.mrf.mxu0
    %v5318 = vadd.f32 0.0, %v5317
    %v5319 = vpop.f32.mrf.mxu0
    %v5320 = vpop.f32.mrf.mxu0
    %v5321 = vadd.f32 0.0, %v5320
    %v5322 = vpop.f32.mrf.mxu0
    %5323 = vdwg.mxu0
    %5324 = vrot.lane.b32.xlu0 %v1141, 64
    %v5325 = vpop.permute.xlu0 %5324
    %5326 = vrot.lane.b32.xlu0 %v1157, 64
    %v5327 = vpop.permute.xlu0 %5326
    %v5329 = vsel %vm1191, %v5325, 0
    %v5332 = vsel %vm1191, %v5327, 0
    %5334 = vmatprep.subr.bf16.mxu0 0
    %5335 = vmatpush1.bf16.xpose.msra.mxu0 0
    %5336 = vmatprep.subr.bf16.mxu0 0
    %5337 = vmatpush1.bf16.xpose.msra.mxu0 0
    %5338 = vmatprep.subr.bf16.mxu0 0
    %5339 = vmatpush1.bf16.xpose.msra.mxu0 0
    %5340 = vmatprep.subr.bf16.mxu0 0
    %5341 = vmatpush1.bf16.xpose.msra.mxu0 0
    %5342 = vmatprep.subr.bf16.mxu0 0
    %5343 = vmatpush1.bf16.xpose.msra.mxu0 0
    %5344 = vmatprep.subr.bf16.mxu0 0
    %5345 = vmatpush1.bf16.xpose.msra.mxu0 0
    %5346 = vmatprep.subr.bf16.mxu0 0
    %5347 = vmatpush1.bf16.xpose.msra.mxu0 0
    %5348 = vmatprep.subr.bf16.mxu0 0
    %5349 = vmatpush1.bf16.xpose.msra.mxu0 %v5332
    %5350 = vmatprep.subr.bf16.mxu0 0
    %5351 = vmatpush2.bf16.xpose.msra.mxu0 0
    %5352 = vmatprep.subr.bf16.mxu0 0
    %5353 = vmatpush2.bf16.xpose.msra.mxu0 0
    %5354 = vmatprep.subr.bf16.mxu0 0
    %5355 = vmatpush2.bf16.xpose.msra.mxu0 0
    %5356 = vmatprep.subr.bf16.mxu0 0
    %5357 = vmatpush2.bf16.xpose.msra.mxu0 0
    %5358 = vmatprep.subr.bf16.mxu0 0
    %5359 = vmatpush2.bf16.xpose.msra.mxu0 0
    %5360 = vmatprep.subr.bf16.mxu0 0
    %5361 = vmatpush2.bf16.xpose.msra.mxu0 0
    %5362 = vmatprep.subr.bf16.mxu0 0
    %5363 = vmatpush2.bf16.xpose.msra.mxu0 0
    %5364 = vmatprep.subr.bf16.mxu0 0
    %5365 = vmatpush2.bf16.xpose.msra.mxu0 0
    %5366 = vmatprep.mubr.bf16.mxu0 0
    %5367 = vmatmul.mubr.bf16.gmra.mxu0 %v5329
    %v5368 = vpop.f32.mrf.mxu0
    %v5369 = vadd.f32 0.0, %v5368
    %v5370 = vpop.f32.mrf.mxu0
    %v5371 = vpop.f32.mrf.mxu0
    %v5372 = vadd.f32 0.0, %v5371
    %v5373 = vpop.f32.mrf.mxu0
    %5374 = vdwg.mxu0
    %5375 = vrot.lane.b32.xlu0 %v1142, 64
    %v5376 = vpop.permute.xlu0 %5375
    %5377 = vrot.lane.b32.xlu0 %v1158, 64
    %v5378 = vpop.permute.xlu0 %5377
    %v5380 = vsel %vm1191, %v5376, 0
    %v5383 = vsel %vm1191, %v5378, 0
    %5385 = vmatprep.subr.bf16.mxu0 0
    %5386 = vmatpush1.bf16.xpose.msra.mxu0 0
    %5387 = vmatprep.subr.bf16.mxu0 0
    %5388 = vmatpush1.bf16.xpose.msra.mxu0 0
    %5389 = vmatprep.subr.bf16.mxu0 0
    %5390 = vmatpush1.bf16.xpose.msra.mxu0 0
    %5391 = vmatprep.subr.bf16.mxu0 0
    %5392 = vmatpush1.bf16.xpose.msra.mxu0 0
    %5393 = vmatprep.subr.bf16.mxu0 0
    %5394 = vmatpush1.bf16.xpose.msra.mxu0 0
    %5395 = vmatprep.subr.bf16.mxu0 0
    %5396 = vmatpush1.bf16.xpose.msra.mxu0 0
    %5397 = vmatprep.subr.bf16.mxu0 0
    %5398 = vmatpush1.bf16.xpose.msra.mxu0 0
    %5399 = vmatprep.subr.bf16.mxu0 0
    %5400 = vmatpush1.bf16.xpose.msra.mxu0 %v5383
    %5401 = vmatprep.subr.bf16.mxu0 0
    %5402 = vmatpush2.bf16.xpose.msra.mxu0 0
    %5403 = vmatprep.subr.bf16.mxu0 0
    %5404 = vmatpush2.bf16.xpose.msra.mxu0 0
    %5405 = vmatprep.subr.bf16.mxu0 0
    %5406 = vmatpush2.bf16.xpose.msra.mxu0 0
    %5407 = vmatprep.subr.bf16.mxu0 0
    %5408 = vmatpush2.bf16.xpose.msra.mxu0 0
    %5409 = vmatprep.subr.bf16.mxu0 0
    %5410 = vmatpush2.bf16.xpose.msra.mxu0 0
    %5411 = vmatprep.subr.bf16.mxu0 0
    %5412 = vmatpush2.bf16.xpose.msra.mxu0 0
    %5413 = vmatprep.subr.bf16.mxu0 0
    %5414 = vmatpush2.bf16.xpose.msra.mxu0 0
    %5415 = vmatprep.subr.bf16.mxu0 0
    %5416 = vmatpush2.bf16.xpose.msra.mxu0 0
    %5417 = vmatprep.mubr.bf16.mxu0 0
    %5418 = vmatmul.mubr.bf16.gmra.mxu0 %v5380
    %v5419 = vpop.f32.mrf.mxu0
    %v5420 = vadd.f32 0.0, %v5419
    %v5421 = vpop.f32.mrf.mxu0
    %v5422 = vpop.f32.mrf.mxu0
    %v5423 = vadd.f32 0.0, %v5422
    %v5424 = vpop.f32.mrf.mxu0
    %5425 = vdwg.mxu0
    %5426 = vrot.lane.b32.xlu0 %v1143, 64
    %v5427 = vpop.permute.xlu0 %5426
    %5428 = vrot.lane.b32.xlu0 %v1159, 64
    %v5429 = vpop.permute.xlu0 %5428
    %v5431 = vsel %vm1191, %v5427, 0
    %v5434 = vsel %vm1191, %v5429, 0
    %5436 = vmatprep.subr.bf16.mxu0 0
    %5437 = vmatpush1.bf16.xpose.msra.mxu0 0
    %5438 = vmatprep.subr.bf16.mxu0 0
    %5439 = vmatpush1.bf16.xpose.msra.mxu0 0
    %5440 = vmatprep.subr.bf16.mxu0 0
    %5441 = vmatpush1.bf16.xpose.msra.mxu0 0
    %5442 = vmatprep.subr.bf16.mxu0 0
    %5443 = vmatpush1.bf16.xpose.msra.mxu0 0
    %5444 = vmatprep.subr.bf16.mxu0 0
    %5445 = vmatpush1.bf16.xpose.msra.mxu0 0
    %5446 = vmatprep.subr.bf16.mxu0 0
    %5447 = vmatpush1.bf16.xpose.msra.mxu0 0
    %5448 = vmatprep.subr.bf16.mxu0 0
    %5449 = vmatpush1.bf16.xpose.msra.mxu0 0
    %5450 = vmatprep.subr.bf16.mxu0 0
    %5451 = vmatpush1.bf16.xpose.msra.mxu0 %v5434
    %5452 = vmatprep.subr.bf16.mxu0 0
    %5453 = vmatpush2.bf16.xpose.msra.mxu0 0
    %5454 = vmatprep.subr.bf16.mxu0 0
    %5455 = vmatpush2.bf16.xpose.msra.mxu0 0
    %5456 = vmatprep.subr.bf16.mxu0 0
    %5457 = vmatpush2.bf16.xpose.msra.mxu0 0
    %5458 = vmatprep.subr.bf16.mxu0 0
    %5459 = vmatpush2.bf16.xpose.msra.mxu0 0
    %5460 = vmatprep.subr.bf16.mxu0 0
    %5461 = vmatpush2.bf16.xpose.msra.mxu0 0
    %5462 = vmatprep.subr.bf16.mxu0 0
    %5463 = vmatpush2.bf16.xpose.msra.mxu0 0
    %5464 = vmatprep.subr.bf16.mxu0 0
    %5465 = vmatpush2.bf16.xpose.msra.mxu0 0
    %5466 = vmatprep.subr.bf16.mxu0 0
    %5467 = vmatpush2.bf16.xpose.msra.mxu0 0
    %5468 = vmatprep.mubr.bf16.mxu0 0
    %5469 = vmatmul.mubr.bf16.gmra.mxu0 %v5431
    %v5470 = vpop.f32.mrf.mxu0
    %v5471 = vadd.f32 0.0, %v5470
    %v5472 = vpop.f32.mrf.mxu0
    %v5473 = vpop.f32.mrf.mxu0
    %v5474 = vadd.f32 0.0, %v5473
    %v5475 = vpop.f32.mrf.mxu0
    %5476 = vdwg.mxu0
    %5477 = vrot.lane.b32.xlu0 %v1144, 64
    %v5478 = vpop.permute.xlu0 %5477
    %5479 = vrot.lane.b32.xlu0 %v1160, 64
    %v5480 = vpop.permute.xlu0 %5479
    %v5482 = vsel %vm1191, %v5478, 0
    %v5485 = vsel %vm1191, %v5480, 0
    %5487 = vmatprep.subr.bf16.mxu0 0
    %5488 = vmatpush1.bf16.xpose.msra.mxu0 0
    %5489 = vmatprep.subr.bf16.mxu0 0
    %5490 = vmatpush1.bf16.xpose.msra.mxu0 0
    %5491 = vmatprep.subr.bf16.mxu0 0
    %5492 = vmatpush1.bf16.xpose.msra.mxu0 0
    %5493 = vmatprep.subr.bf16.mxu0 0
    %5494 = vmatpush1.bf16.xpose.msra.mxu0 0
    %5495 = vmatprep.subr.bf16.mxu0 0
    %5496 = vmatpush1.bf16.xpose.msra.mxu0 0
    %5497 = vmatprep.subr.bf16.mxu0 0
    %5498 = vmatpush1.bf16.xpose.msra.mxu0 0
    %5499 = vmatprep.subr.bf16.mxu0 0
    %5500 = vmatpush1.bf16.xpose.msra.mxu0 0
    %5501 = vmatprep.subr.bf16.mxu0 0
    %5502 = vmatpush1.bf16.xpose.msra.mxu0 %v5485
    %5503 = vmatprep.subr.bf16.mxu0 0
    %5504 = vmatpush2.bf16.xpose.msra.mxu0 0
    %5505 = vmatprep.subr.bf16.mxu0 0
    %5506 = vmatpush2.bf16.xpose.msra.mxu0 0
    %5507 = vmatprep.subr.bf16.mxu0 0
    %5508 = vmatpush2.bf16.xpose.msra.mxu0 0
    %5509 = vmatprep.subr.bf16.mxu0 0
    %5510 = vmatpush2.bf16.xpose.msra.mxu0 0
    %5511 = vmatprep.subr.bf16.mxu0 0
    %5512 = vmatpush2.bf16.xpose.msra.mxu0 0
    %5513 = vmatprep.subr.bf16.mxu0 0
    %5514 = vmatpush2.bf16.xpose.msra.mxu0 0
    %5515 = vmatprep.subr.bf16.mxu0 0
    %5516 = vmatpush2.bf16.xpose.msra.mxu0 0
    %5517 = vmatprep.subr.bf16.mxu0 0
    %5518 = vmatpush2.bf16.xpose.msra.mxu0 0
    %5519 = vmatprep.mubr.bf16.mxu0 0
    %5520 = vmatmul.mubr.bf16.gmra.mxu0 %v5482
    %v5521 = vpop.f32.mrf.mxu0
    %v5522 = vadd.f32 0.0, %v5521
    %v5523 = vpop.f32.mrf.mxu0
    %v5524 = vpop.f32.mrf.mxu0
    %v5525 = vadd.f32 0.0, %v5524
    %v5526 = vpop.f32.mrf.mxu0
    %5527 = vdwg.mxu0
    %5528 = vrot.lane.b32.xlu0 %v1145, 64
    %v5529 = vpop.permute.xlu0 %5528
    %5530 = vrot.lane.b32.xlu0 %v1161, 64
    %v5531 = vpop.permute.xlu0 %5530
    %v5533 = vsel %vm1191, %v5529, 0
    %v5536 = vsel %vm1191, %v5531, 0
    %5538 = vmatprep.subr.bf16.mxu0 0
    %5539 = vmatpush1.bf16.xpose.msra.mxu0 0
    %5540 = vmatprep.subr.bf16.mxu0 0
    %5541 = vmatpush1.bf16.xpose.msra.mxu0 0
    %5542 = vmatprep.subr.bf16.mxu0 0
    %5543 = vmatpush1.bf16.xpose.msra.mxu0 0
    %5544 = vmatprep.subr.bf16.mxu0 0
    %5545 = vmatpush1.bf16.xpose.msra.mxu0 0
    %5546 = vmatprep.subr.bf16.mxu0 0
    %5547 = vmatpush1.bf16.xpose.msra.mxu0 0
    %5548 = vmatprep.subr.bf16.mxu0 0
    %5549 = vmatpush1.bf16.xpose.msra.mxu0 0
    %5550 = vmatprep.subr.bf16.mxu0 0
    %5551 = vmatpush1.bf16.xpose.msra.mxu0 0
    %5552 = vmatprep.subr.bf16.mxu0 0
    %5553 = vmatpush1.bf16.xpose.msra.mxu0 %v5536
    %5554 = vmatprep.subr.bf16.mxu0 0
    %5555 = vmatpush2.bf16.xpose.msra.mxu0 0
    %5556 = vmatprep.subr.bf16.mxu0 0
    %5557 = vmatpush2.bf16.xpose.msra.mxu0 0
    %5558 = vmatprep.subr.bf16.mxu0 0
    %5559 = vmatpush2.bf16.xpose.msra.mxu0 0
    %5560 = vmatprep.subr.bf16.mxu0 0
    %5561 = vmatpush2.bf16.xpose.msra.mxu0 0
    %5562 = vmatprep.subr.bf16.mxu0 0
    %5563 = vmatpush2.bf16.xpose.msra.mxu0 0
    %5564 = vmatprep.subr.bf16.mxu0 0
    %5565 = vmatpush2.bf16.xpose.msra.mxu0 0
    %5566 = vmatprep.subr.bf16.mxu0 0
    %5567 = vmatpush2.bf16.xpose.msra.mxu0 0
    %5568 = vmatprep.subr.bf16.mxu0 0
    %5569 = vmatpush2.bf16.xpose.msra.mxu0 0
    %5570 = vmatprep.mubr.bf16.mxu0 0
    %5571 = vmatmul.mubr.bf16.gmra.mxu0 %v5533
    %v5572 = vpop.f32.mrf.mxu0
    %v5573 = vadd.f32 0.0, %v5572
    %v5574 = vpop.f32.mrf.mxu0
    %v5575 = vpop.f32.mrf.mxu0
    %v5576 = vadd.f32 0.0, %v5575
    %v5577 = vpop.f32.mrf.mxu0
    %5578 = vdwg.mxu0
    %5579 = vrot.lane.b32.xlu0 %v1146, 64
    %v5580 = vpop.permute.xlu0 %5579
    %5581 = vrot.lane.b32.xlu0 %v1162, 64
    %v5582 = vpop.permute.xlu0 %5581
    %v5584 = vsel %vm1191, %v5580, 0
    %v5587 = vsel %vm1191, %v5582, 0
    %5589 = vmatprep.subr.bf16.mxu0 0
    %5590 = vmatpush1.bf16.xpose.msra.mxu0 0
    %5591 = vmatprep.subr.bf16.mxu0 0
    %5592 = vmatpush1.bf16.xpose.msra.mxu0 0
    %5593 = vmatprep.subr.bf16.mxu0 0
    %5594 = vmatpush1.bf16.xpose.msra.mxu0 0
    %5595 = vmatprep.subr.bf16.mxu0 0
    %5596 = vmatpush1.bf16.xpose.msra.mxu0 0
    %5597 = vmatprep.subr.bf16.mxu0 0
    %5598 = vmatpush1.bf16.xpose.msra.mxu0 0
    %5599 = vmatprep.subr.bf16.mxu0 0
    %5600 = vmatpush1.bf16.xpose.msra.mxu0 0
    %5601 = vmatprep.subr.bf16.mxu0 0
    %5602 = vmatpush1.bf16.xpose.msra.mxu0 0
    %5603 = vmatprep.subr.bf16.mxu0 0
    %5604 = vmatpush1.bf16.xpose.msra.mxu0 %v5587
    %5605 = vmatprep.subr.bf16.mxu0 0
    %5606 = vmatpush2.bf16.xpose.msra.mxu0 0
    %5607 = vmatprep.subr.bf16.mxu0 0
    %5608 = vmatpush2.bf16.xpose.msra.mxu0 0
    %5609 = vmatprep.subr.bf16.mxu0 0
    %5610 = vmatpush2.bf16.xpose.msra.mxu0 0
    %5611 = vmatprep.subr.bf16.mxu0 0
    %5612 = vmatpush2.bf16.xpose.msra.mxu0 0
    %5613 = vmatprep.subr.bf16.mxu0 0
    %5614 = vmatpush2.bf16.xpose.msra.mxu0 0
    %5615 = vmatprep.subr.bf16.mxu0 0
    %5616 = vmatpush2.bf16.xpose.msra.mxu0 0
    %5617 = vmatprep.subr.bf16.mxu0 0
    %5618 = vmatpush2.bf16.xpose.msra.mxu0 0
    %5619 = vmatprep.subr.bf16.mxu0 0
    %5620 = vmatpush2.bf16.xpose.msra.mxu0 0
    %5621 = vmatprep.mubr.bf16.mxu0 0
    %5622 = vmatmul.mubr.bf16.gmra.mxu0 %v5584
    %v5623 = vpop.f32.mrf.mxu0
    %v5624 = vadd.f32 0.0, %v5623
    %v5625 = vpop.f32.mrf.mxu0
    %v5626 = vpop.f32.mrf.mxu0
    %v5627 = vadd.f32 0.0, %v5626
    %v5628 = vpop.f32.mrf.mxu0
    %5629 = vdwg.mxu0
    %5630 = vrot.lane.b32.xlu0 %v1147, 64
    %v5631 = vpop.permute.xlu0 %5630
    %5632 = vrot.lane.b32.xlu0 %v1163, 64
    %v5633 = vpop.permute.xlu0 %5632
    %v5635 = vsel %vm1191, %v5631, 0
    %v5638 = vsel %vm1191, %v5633, 0
    %5640 = vmatprep.subr.bf16.mxu0 0
    %5641 = vmatpush1.bf16.xpose.msra.mxu0 0
    %5642 = vmatprep.subr.bf16.mxu0 0
    %5643 = vmatpush1.bf16.xpose.msra.mxu0 0
    %5644 = vmatprep.subr.bf16.mxu0 0
    %5645 = vmatpush1.bf16.xpose.msra.mxu0 0
    %5646 = vmatprep.subr.bf16.mxu0 0
    %5647 = vmatpush1.bf16.xpose.msra.mxu0 0
    %5648 = vmatprep.subr.bf16.mxu0 0
    %5649 = vmatpush1.bf16.xpose.msra.mxu0 0
    %5650 = vmatprep.subr.bf16.mxu0 0
    %5651 = vmatpush1.bf16.xpose.msra.mxu0 0
    %5652 = vmatprep.subr.bf16.mxu0 0
    %5653 = vmatpush1.bf16.xpose.msra.mxu0 0
    %5654 = vmatprep.subr.bf16.mxu0 0
    %5655 = vmatpush1.bf16.xpose.msra.mxu0 %v5638
    %5656 = vmatprep.subr.bf16.mxu0 0
    %5657 = vmatpush2.bf16.xpose.msra.mxu0 0
    %5658 = vmatprep.subr.bf16.mxu0 0
    %5659 = vmatpush2.bf16.xpose.msra.mxu0 0
    %5660 = vmatprep.subr.bf16.mxu0 0
    %5661 = vmatpush2.bf16.xpose.msra.mxu0 0
    %5662 = vmatprep.subr.bf16.mxu0 0
    %5663 = vmatpush2.bf16.xpose.msra.mxu0 0
    %5664 = vmatprep.subr.bf16.mxu0 0
    %5665 = vmatpush2.bf16.xpose.msra.mxu0 0
    %5666 = vmatprep.subr.bf16.mxu0 0
    %5667 = vmatpush2.bf16.xpose.msra.mxu0 0
    %5668 = vmatprep.subr.bf16.mxu0 0
    %5669 = vmatpush2.bf16.xpose.msra.mxu0 0
    %5670 = vmatprep.subr.bf16.mxu0 0
    %5671 = vmatpush2.bf16.xpose.msra.mxu0 0
    %5672 = vmatprep.mubr.bf16.mxu0 0
    %5673 = vmatmul.mubr.bf16.gmra.mxu0 %v5635
    %v5674 = vpop.f32.mrf.mxu0
    %v5675 = vadd.f32 0.0, %v5674
    %v5676 = vpop.f32.mrf.mxu0
    %v5677 = vpop.f32.mrf.mxu0
    %v5678 = vadd.f32 0.0, %v5677
    %v5679 = vpop.f32.mrf.mxu0
    %5680 = vdwg.mxu0
    %5681 = vrot.lane.b32.xlu0 %v1148, 64
    %v5682 = vpop.permute.xlu0 %5681
    %5683 = vrot.lane.b32.xlu0 %v1164, 64
    %v5684 = vpop.permute.xlu0 %5683
    %v5686 = vsel %vm1191, %v5682, 0
    %v5689 = vsel %vm1191, %v5684, 0
    %5691 = vmatprep.subr.bf16.mxu0 0
    %5692 = vmatpush1.bf16.xpose.msra.mxu0 0
    %5693 = vmatprep.subr.bf16.mxu0 0
    %5694 = vmatpush1.bf16.xpose.msra.mxu0 0
    %5695 = vmatprep.subr.bf16.mxu0 0
    %5696 = vmatpush1.bf16.xpose.msra.mxu0 0
    %5697 = vmatprep.subr.bf16.mxu0 0
    %5698 = vmatpush1.bf16.xpose.msra.mxu0 0
    %5699 = vmatprep.subr.bf16.mxu0 0
    %5700 = vmatpush1.bf16.xpose.msra.mxu0 0
    %5701 = vmatprep.subr.bf16.mxu0 0
    %5702 = vmatpush1.bf16.xpose.msra.mxu0 0
    %5703 = vmatprep.subr.bf16.mxu0 0
    %5704 = vmatpush1.bf16.xpose.msra.mxu0 0
    %5705 = vmatprep.subr.bf16.mxu0 0
    %5706 = vmatpush1.bf16.xpose.msra.mxu0 %v5689
    %5707 = vmatprep.subr.bf16.mxu0 0
    %5708 = vmatpush2.bf16.xpose.msra.mxu0 0
    %5709 = vmatprep.subr.bf16.mxu0 0
    %5710 = vmatpush2.bf16.xpose.msra.mxu0 0
    %5711 = vmatprep.subr.bf16.mxu0 0
    %5712 = vmatpush2.bf16.xpose.msra.mxu0 0
    %5713 = vmatprep.subr.bf16.mxu0 0
    %5714 = vmatpush2.bf16.xpose.msra.mxu0 0
    %5715 = vmatprep.subr.bf16.mxu0 0
    %5716 = vmatpush2.bf16.xpose.msra.mxu0 0
    %5717 = vmatprep.subr.bf16.mxu0 0
    %5718 = vmatpush2.bf16.xpose.msra.mxu0 0
    %5719 = vmatprep.subr.bf16.mxu0 0
    %5720 = vmatpush2.bf16.xpose.msra.mxu0 0
    %5721 = vmatprep.subr.bf16.mxu0 0
    %5722 = vmatpush2.bf16.xpose.msra.mxu0 0
    %5723 = vmatprep.mubr.bf16.mxu0 0
    %5724 = vmatmul.mubr.bf16.gmra.mxu0 %v5686
    %v5725 = vpop.f32.mrf.mxu0
    %v5726 = vadd.f32 0.0, %v5725
    %v5727 = vpop.f32.mrf.mxu0
    %v5728 = vpop.f32.mrf.mxu0
    %v5729 = vadd.f32 0.0, %v5728
    %v5730 = vpop.f32.mrf.mxu0
    %5731 = vdwg.mxu0
    %5732 = vrot.lane.b32.xlu0 %v1149, 64
    %v5733 = vpop.permute.xlu0 %5732
    %5734 = vrot.lane.b32.xlu0 %v1165, 64
    %v5735 = vpop.permute.xlu0 %5734
    %v5737 = vsel %vm1191, %v5733, 0
    %v5740 = vsel %vm1191, %v5735, 0
    %5742 = vmatprep.subr.bf16.mxu0 0
    %5743 = vmatpush1.bf16.xpose.msra.mxu0 0
    %5744 = vmatprep.subr.bf16.mxu0 0
    %5745 = vmatpush1.bf16.xpose.msra.mxu0 0
    %5746 = vmatprep.subr.bf16.mxu0 0
    %5747 = vmatpush1.bf16.xpose.msra.mxu0 0
    %5748 = vmatprep.subr.bf16.mxu0 0
    %5749 = vmatpush1.bf16.xpose.msra.mxu0 0
    %5750 = vmatprep.subr.bf16.mxu0 0
    %5751 = vmatpush1.bf16.xpose.msra.mxu0 0
    %5752 = vmatprep.subr.bf16.mxu0 0
    %5753 = vmatpush1.bf16.xpose.msra.mxu0 0
    %5754 = vmatprep.subr.bf16.mxu0 0
    %5755 = vmatpush1.bf16.xpose.msra.mxu0 0
    %5756 = vmatprep.subr.bf16.mxu0 0
    %5757 = vmatpush1.bf16.xpose.msra.mxu0 %v5740
    %5758 = vmatprep.subr.bf16.mxu0 0
    %5759 = vmatpush2.bf16.xpose.msra.mxu0 0
    %5760 = vmatprep.subr.bf16.mxu0 0
    %5761 = vmatpush2.bf16.xpose.msra.mxu0 0
    %5762 = vmatprep.subr.bf16.mxu0 0
    %5763 = vmatpush2.bf16.xpose.msra.mxu0 0
    %5764 = vmatprep.subr.bf16.mxu0 0
    %5765 = vmatpush2.bf16.xpose.msra.mxu0 0
    %5766 = vmatprep.subr.bf16.mxu0 0
    %5767 = vmatpush2.bf16.xpose.msra.mxu0 0
    %5768 = vmatprep.subr.bf16.mxu0 0
    %5769 = vmatpush2.bf16.xpose.msra.mxu0 0
    %5770 = vmatprep.subr.bf16.mxu0 0
    %5771 = vmatpush2.bf16.xpose.msra.mxu0 0
    %5772 = vmatprep.subr.bf16.mxu0 0
    %5773 = vmatpush2.bf16.xpose.msra.mxu0 0
    %5774 = vmatprep.mubr.bf16.mxu0 0
    %5775 = vmatmul.mubr.bf16.gmra.mxu0 %v5737
    %v5776 = vpop.f32.mrf.mxu0
    %v5777 = vadd.f32 0.0, %v5776
    %v5778 = vpop.f32.mrf.mxu0
    %v5779 = vpop.f32.mrf.mxu0
    %v5780 = vadd.f32 0.0, %v5779
    %v5781 = vpop.f32.mrf.mxu0
    %5782 = vdwg.mxu0
    %5783 = vrot.lane.b32.xlu0 %v1150, 64
    %v5784 = vpop.permute.xlu0 %5783
    %5785 = vrot.lane.b32.xlu0 %v1166, 64
    %v5786 = vpop.permute.xlu0 %5785
    %v5788 = vsel %vm1191, %v5784, 0
    %v5791 = vsel %vm1191, %v5786, 0
    %5793 = vmatprep.subr.bf16.mxu0 0
    %5794 = vmatpush1.bf16.xpose.msra.mxu0 0
    %5795 = vmatprep.subr.bf16.mxu0 0
    %5796 = vmatpush1.bf16.xpose.msra.mxu0 0
    %5797 = vmatprep.subr.bf16.mxu0 0
    %5798 = vmatpush1.bf16.xpose.msra.mxu0 0
    %5799 = vmatprep.subr.bf16.mxu0 0
    %5800 = vmatpush1.bf16.xpose.msra.mxu0 0
    %5801 = vmatprep.subr.bf16.mxu0 0
    %5802 = vmatpush1.bf16.xpose.msra.mxu0 0
    %5803 = vmatprep.subr.bf16.mxu0 0
    %5804 = vmatpush1.bf16.xpose.msra.mxu0 0
    %5805 = vmatprep.subr.bf16.mxu0 0
    %5806 = vmatpush1.bf16.xpose.msra.mxu0 0
    %5807 = vmatprep.subr.bf16.mxu0 0
    %5808 = vmatpush1.bf16.xpose.msra.mxu0 %v5791
    %5809 = vmatprep.subr.bf16.mxu0 0
    %5810 = vmatpush2.bf16.xpose.msra.mxu0 0
    %5811 = vmatprep.subr.bf16.mxu0 0
    %5812 = vmatpush2.bf16.xpose.msra.mxu0 0
    %5813 = vmatprep.subr.bf16.mxu0 0
    %5814 = vmatpush2.bf16.xpose.msra.mxu0 0
    %5815 = vmatprep.subr.bf16.mxu0 0
    %5816 = vmatpush2.bf16.xpose.msra.mxu0 0
    %5817 = vmatprep.subr.bf16.mxu0 0
    %5818 = vmatpush2.bf16.xpose.msra.mxu0 0
    %5819 = vmatprep.subr.bf16.mxu0 0
    %5820 = vmatpush2.bf16.xpose.msra.mxu0 0
    %5821 = vmatprep.subr.bf16.mxu0 0
    %5822 = vmatpush2.bf16.xpose.msra.mxu0 0
    %5823 = vmatprep.subr.bf16.mxu0 0
    %5824 = vmatpush2.bf16.xpose.msra.mxu0 0
    %5825 = vmatprep.mubr.bf16.mxu0 0
    %5826 = vmatmul.mubr.bf16.gmra.mxu0 %v5788
    %v5827 = vpop.f32.mrf.mxu0
    %v5828 = vadd.f32 0.0, %v5827
    %v5829 = vpop.f32.mrf.mxu0
    %v5830 = vpop.f32.mrf.mxu0
    %v5831 = vadd.f32 0.0, %v5830
    %v5832 = vpop.f32.mrf.mxu0
    %5833 = vdwg.mxu0
    %5834 = vrot.lane.b32.xlu0 %v1151, 64
    %v5835 = vpop.permute.xlu0 %5834
    %5836 = vrot.lane.b32.xlu0 %v1167, 64
    %v5837 = vpop.permute.xlu0 %5836
    %v5839 = vsel %vm1191, %v5835, 0
    %v5842 = vsel %vm1191, %v5837, 0
    %5844 = vmatprep.subr.bf16.mxu0 0
    %5845 = vmatpush1.bf16.xpose.msra.mxu0 0
    %5846 = vmatprep.subr.bf16.mxu0 0
    %5847 = vmatpush1.bf16.xpose.msra.mxu0 0
    %5848 = vmatprep.subr.bf16.mxu0 0
    %5849 = vmatpush1.bf16.xpose.msra.mxu0 0
    %5850 = vmatprep.subr.bf16.mxu0 0
    %5851 = vmatpush1.bf16.xpose.msra.mxu0 0
    %5852 = vmatprep.subr.bf16.mxu0 0
    %5853 = vmatpush1.bf16.xpose.msra.mxu0 0
    %5854 = vmatprep.subr.bf16.mxu0 0
    %5855 = vmatpush1.bf16.xpose.msra.mxu0 0
    %5856 = vmatprep.subr.bf16.mxu0 0
    %5857 = vmatpush1.bf16.xpose.msra.mxu0 0
    %5858 = vmatprep.subr.bf16.mxu0 0
    %5859 = vmatpush1.bf16.xpose.msra.mxu0 %v5842
    %5860 = vmatprep.subr.bf16.mxu0 0
    %5861 = vmatpush2.bf16.xpose.msra.mxu0 0
    %5862 = vmatprep.subr.bf16.mxu0 0
    %5863 = vmatpush2.bf16.xpose.msra.mxu0 0
    %5864 = vmatprep.subr.bf16.mxu0 0
    %5865 = vmatpush2.bf16.xpose.msra.mxu0 0
    %5866 = vmatprep.subr.bf16.mxu0 0
    %5867 = vmatpush2.bf16.xpose.msra.mxu0 0
    %5868 = vmatprep.subr.bf16.mxu0 0
    %5869 = vmatpush2.bf16.xpose.msra.mxu0 0
    %5870 = vmatprep.subr.bf16.mxu0 0
    %5871 = vmatpush2.bf16.xpose.msra.mxu0 0
    %5872 = vmatprep.subr.bf16.mxu0 0
    %5873 = vmatpush2.bf16.xpose.msra.mxu0 0
    %5874 = vmatprep.subr.bf16.mxu0 0
    %5875 = vmatpush2.bf16.xpose.msra.mxu0 0
    %5876 = vmatprep.mubr.bf16.mxu0 0
    %5877 = vmatmul.mubr.bf16.gmra.mxu0 %v5839
    %v5878 = vpop.f32.mrf.mxu0
    %v5879 = vadd.f32 0.0, %v5878
    %v5880 = vpop.f32.mrf.mxu0
    %v5881 = vpop.f32.mrf.mxu0
    %v5882 = vadd.f32 0.0, %v5881
    %v5883 = vpop.f32.mrf.mxu0
    %5884 = vdwg.mxu0
    %v5885 = vsel %vm1946, %v5114, -1e+30
    %v5886 = vsel %vm1947, %v5117, -1e+30
    %v5887 = vsel %vm1946, %v5165, -1e+30
    %v5888 = vsel %vm1947, %v5168, -1e+30
    %v5889 = vsel %vm1946, %v5216, -1e+30
    %v5890 = vsel %vm1947, %v5219, -1e+30
    %v5891 = vsel %vm1946, %v5267, -1e+30
    %v5892 = vsel %vm1947, %v5270, -1e+30
    %v5893 = vsel %vm1946, %v5318, -1e+30
    %v5894 = vsel %vm1947, %v5321, -1e+30
    %v5895 = vsel %vm1946, %v5369, -1e+30
    %v5896 = vsel %vm1947, %v5372, -1e+30
    %v5897 = vsel %vm1946, %v5420, -1e+30
    %v5898 = vsel %vm1947, %v5423, -1e+30
    %v5899 = vsel %vm1946, %v5471, -1e+30
    %v5900 = vsel %vm1947, %v5474, -1e+30
    %v5901 = vsel %vm1946, %v5522, -1e+30
    %v5902 = vsel %vm1947, %v5525, -1e+30
    %v5903 = vsel %vm1946, %v5573, -1e+30
    %v5904 = vsel %vm1947, %v5576, -1e+30
    %v5905 = vsel %vm1946, %v5624, -1e+30
    %v5906 = vsel %vm1947, %v5627, -1e+30
    %v5907 = vsel %vm1946, %v5675, -1e+30
    %v5908 = vsel %vm1947, %v5678, -1e+30
    %v5909 = vsel %vm1946, %v5726, -1e+30
    %v5910 = vsel %vm1947, %v5729, -1e+30
    %v5911 = vsel %vm1946, %v5777, -1e+30
    %v5912 = vsel %vm1947, %v5780, -1e+30
    %v5913 = vsel %vm1946, %v5828, -1e+30
    %v5914 = vsel %vm1947, %v5831, -1e+30
    %v5915 = vsel %vm1946, %v5879, -1e+30
    %v5916 = vsel %vm1947, %v5882, -1e+30
    %v5917 = vsel %vm1980, %v5885, -inf
    %5918 = vmax.xlane.f32.xlu0 %v5917
    %v5919 = vpop.xlane.xlu0 %5918
    %v5920 = vsel %vm1980, %v5886, -inf
    %5921 = vmax.xlane.f32.xlu0 %v5920
    %v5922 = vpop.xlane.xlu0 %5921
    %v5923 = vsel %vm1980, %v5887, -inf
    %5924 = vmax.xlane.f32.xlu0 %v5923
    %v5925 = vpop.xlane.xlu0 %5924
    %v5926 = vsel %vm1980, %v5888, -inf
    %5927 = vmax.xlane.f32.xlu0 %v5926
    %v5928 = vpop.xlane.xlu0 %5927
    %v5929 = vsel %vm1980, %v5889, -inf
    %5930 = vmax.xlane.f32.xlu0 %v5929
    %v5931 = vpop.xlane.xlu0 %5930
    %v5932 = vsel %vm1980, %v5890, -inf
    %5933 = vmax.xlane.f32.xlu0 %v5932
    %v5934 = vpop.xlane.xlu0 %5933
    %v5935 = vsel %vm1980, %v5891, -inf
    %5936 = vmax.xlane.f32.xlu0 %v5935
    %v5937 = vpop.xlane.xlu0 %5936
    %v5938 = vsel %vm1980, %v5892, -inf
    %5939 = vmax.xlane.f32.xlu0 %v5938
    %v5940 = vpop.xlane.xlu0 %5939
    %v5941 = vsel %vm1980, %v5893, -inf
    %5942 = vmax.xlane.f32.xlu0 %v5941
    %v5943 = vpop.xlane.xlu0 %5942
    %v5944 = vsel %vm1980, %v5894, -inf
    %5945 = vmax.xlane.f32.xlu0 %v5944
    %v5946 = vpop.xlane.xlu0 %5945
    %v5947 = vsel %vm1980, %v5895, -inf
    %5948 = vmax.xlane.f32.xlu0 %v5947
    %v5949 = vpop.xlane.xlu0 %5948
    %v5950 = vsel %vm1980, %v5896, -inf
    %5951 = vmax.xlane.f32.xlu0 %v5950
    %v5952 = vpop.xlane.xlu0 %5951
    %v5953 = vsel %vm1980, %v5897, -inf
    %5954 = vmax.xlane.f32.xlu0 %v5953
    %v5955 = vpop.xlane.xlu0 %5954
    %v5956 = vsel %vm1980, %v5898, -inf
    %5957 = vmax.xlane.f32.xlu0 %v5956
    %v5958 = vpop.xlane.xlu0 %5957
    %v5959 = vsel %vm1980, %v5899, -inf
    %5960 = vmax.xlane.f32.xlu0 %v5959
    %v5961 = vpop.xlane.xlu0 %5960
    %v5962 = vsel %vm1980, %v5900, -inf
    %5963 = vmax.xlane.f32.xlu0 %v5962
    %v5964 = vpop.xlane.xlu0 %5963
    %v5965 = vsel %vm1980, %v5901, -inf
    %5966 = vmax.xlane.f32.xlu0 %v5965
    %v5967 = vpop.xlane.xlu0 %5966
    %v5968 = vsel %vm1980, %v5902, -inf
    %5969 = vmax.xlane.f32.xlu0 %v5968
    %v5970 = vpop.xlane.xlu0 %5969
    %v5971 = vsel %vm1980, %v5903, -inf
    %5972 = vmax.xlane.f32.xlu0 %v5971
    %v5973 = vpop.xlane.xlu0 %5972
    %v5974 = vsel %vm1980, %v5904, -inf
    %5975 = vmax.xlane.f32.xlu0 %v5974
    %v5976 = vpop.xlane.xlu0 %5975
    %v5977 = vsel %vm1980, %v5905, -inf
    %5978 = vmax.xlane.f32.xlu0 %v5977
    %v5979 = vpop.xlane.xlu0 %5978
    %v5980 = vsel %vm1980, %v5906, -inf
    %5981 = vmax.xlane.f32.xlu0 %v5980
    %v5982 = vpop.xlane.xlu0 %5981
    %v5983 = vsel %vm1980, %v5907, -inf
    %5984 = vmax.xlane.f32.xlu0 %v5983
    %v5985 = vpop.xlane.xlu0 %5984
    %v5986 = vsel %vm1980, %v5908, -inf
    %5987 = vmax.xlane.f32.xlu0 %v5986
    %v5988 = vpop.xlane.xlu0 %5987
    %v5989 = vsel %vm1980, %v5909, -inf
    %5990 = vmax.xlane.f32.xlu0 %v5989
    %v5991 = vpop.xlane.xlu0 %5990
    %v5992 = vsel %vm1980, %v5910, -inf
    %5993 = vmax.xlane.f32.xlu0 %v5992
    %v5994 = vpop.xlane.xlu0 %5993
    %v5995 = vsel %vm1980, %v5911, -inf
    %5996 = vmax.xlane.f32.xlu0 %v5995
    %v5997 = vpop.xlane.xlu0 %5996
    %v5998 = vsel %vm1980, %v5912, -inf
    %5999 = vmax.xlane.f32.xlu0 %v5998
    %v6000 = vpop.xlane.xlu0 %5999
    %v6001 = vsel %vm1980, %v5913, -inf
    %6002 = vmax.xlane.f32.xlu0 %v6001
    %v6003 = vpop.xlane.xlu0 %6002
    %v6004 = vsel %vm1980, %v5914, -inf
    %6005 = vmax.xlane.f32.xlu0 %v6004
    %v6006 = vpop.xlane.xlu0 %6005
    %v6007 = vsel %vm1980, %v5915, -inf
    %6008 = vmax.xlane.f32.xlu0 %v6007
    %v6009 = vpop.xlane.xlu0 %6008
    %v6010 = vsel %vm1980, %v5916, -inf
    %6011 = vmax.xlane.f32.xlu0 %v6010
    %v6012 = vpop.xlane.xlu0 %6011
    %v6013 = vsub.f32 %v5885, %v5919
    %v6014 = vsub.f32 %v5886, %v5922
    %v6015 = vsub.f32 %v5887, %v5925
    %v6016 = vsub.f32 %v5888, %v5928
    %v6017 = vsub.f32 %v5889, %v5931
    %v6018 = vsub.f32 %v5890, %v5934
    %v6019 = vsub.f32 %v5891, %v5937
    %v6020 = vsub.f32 %v5892, %v5940
    %v6021 = vsub.f32 %v5893, %v5943
    %v6022 = vsub.f32 %v5894, %v5946
    %v6023 = vsub.f32 %v5895, %v5949
    %v6024 = vsub.f32 %v5896, %v5952
    %v6025 = vsub.f32 %v5897, %v5955
    %v6026 = vsub.f32 %v5898, %v5958
    %v6027 = vsub.f32 %v5899, %v5961
    %v6028 = vsub.f32 %v5900, %v5964
    %v6029 = vsub.f32 %v5901, %v5967
    %v6030 = vsub.f32 %v5902, %v5970
    %v6031 = vsub.f32 %v5903, %v5973
    %v6032 = vsub.f32 %v5904, %v5976
    %v6033 = vsub.f32 %v5905, %v5979
    %v6034 = vsub.f32 %v5906, %v5982
    %v6035 = vsub.f32 %v5907, %v5985
    %v6036 = vsub.f32 %v5908, %v5988
    %v6037 = vsub.f32 %v5909, %v5991
    %v6038 = vsub.f32 %v5910, %v5994
    %v6039 = vsub.f32 %v5911, %v5997
    %v6040 = vsub.f32 %v5912, %v6000
    %v6041 = vsub.f32 %v5913, %v6003
    %v6042 = vsub.f32 %v5914, %v6006
    %v6043 = vsub.f32 %v5915, %v6009
    %v6044 = vsub.f32 %v5916, %v6012
    %v6045 = vmul.f32 %v6013, 1.442695
    %v6046 = vpow.pop %v6045
    %v6047 = vmul.f32 %v6014, 1.442695
    %v6048 = vpow.pop %v6047
    %v6049 = vmul.f32 %v6015, 1.442695
    %v6050 = vpow.pop %v6049
    %v6051 = vmul.f32 %v6016, 1.442695
    %v6052 = vpow.pop %v6051
    %v6053 = vmul.f32 %v6017, 1.442695
    %v6054 = vpow.pop %v6053
    %v6055 = vmul.f32 %v6018, 1.442695
    %v6056 = vpow.pop %v6055
    %v6057 = vmul.f32 %v6019, 1.442695
    %v6058 = vpow.pop %v6057
    %v6059 = vmul.f32 %v6020, 1.442695
    %v6060 = vpow.pop %v6059
    %v6061 = vmul.f32 %v6021, 1.442695
    %v6062 = vpow.pop %v6061
    %v6063 = vmul.f32 %v6022, 1.442695
    %v6064 = vpow.pop %v6063
    %v6065 = vmul.f32 %v6023, 1.442695
    %v6066 = vpow.pop %v6065
    %v6067 = vmul.f32 %v6024, 1.442695
    %v6068 = vpow.pop %v6067
    %v6069 = vmul.f32 %v6025, 1.442695
    %v6070 = vpow.pop %v6069
    %v6071 = vmul.f32 %v6026, 1.442695
    %v6072 = vpow.pop %v6071
    %v6073 = vmul.f32 %v6027, 1.442695
    %v6074 = vpow.pop %v6073
    %v6075 = vmul.f32 %v6028, 1.442695
    %v6076 = vpow.pop %v6075
    %v6077 = vmul.f32 %v6029, 1.442695
    %v6078 = vpow.pop %v6077
    %v6079 = vmul.f32 %v6030, 1.442695
    %v6080 = vpow.pop %v6079
    %v6081 = vmul.f32 %v6031, 1.442695
    %v6082 = vpow.pop %v6081
    %v6083 = vmul.f32 %v6032, 1.442695
    %v6084 = vpow.pop %v6083
    %v6085 = vmul.f32 %v6033, 1.442695
    %v6086 = vpow.pop %v6085
    %v6087 = vmul.f32 %v6034, 1.442695
    %v6088 = vpow.pop %v6087
    %v6089 = vmul.f32 %v6035, 1.442695
    %v6090 = vpow.pop %v6089
    %v6091 = vmul.f32 %v6036, 1.442695
    %v6092 = vpow.pop %v6091
    %v6093 = vmul.f32 %v6037, 1.442695
    %v6094 = vpow.pop %v6093
    %v6095 = vmul.f32 %v6038, 1.442695
    %v6096 = vpow.pop %v6095
    %v6097 = vmul.f32 %v6039, 1.442695
    %v6098 = vpow.pop %v6097
    %v6099 = vmul.f32 %v6040, 1.442695
    %v6100 = vpow.pop %v6099
    %v6101 = vmul.f32 %v6041, 1.442695
    %v6102 = vpow.pop %v6101
    %v6103 = vmul.f32 %v6042, 1.442695
    %v6104 = vpow.pop %v6103
    %v6105 = vmul.f32 %v6043, 1.442695
    %v6106 = vpow.pop %v6105
    %v6107 = vmul.f32 %v6044, 1.442695
    %v6108 = vpow.pop %v6107
    %v6109 = vsel %vm1980, %v6046, 0.0
    %6110 = vadd.xlane.f32.xlu0 %v6109
    %v6111 = vpop.xlane.xlu0 %6110
    %v6112 = vsel %vm1980, %v6048, 0.0
    %6113 = vadd.xlane.f32.xlu0 %v6112
    %v6114 = vpop.xlane.xlu0 %6113
    %v6115 = vsel %vm1980, %v6050, 0.0
    %6116 = vadd.xlane.f32.xlu0 %v6115
    %v6117 = vpop.xlane.xlu0 %6116
    %v6118 = vsel %vm1980, %v6052, 0.0
    %6119 = vadd.xlane.f32.xlu0 %v6118
    %v6120 = vpop.xlane.xlu0 %6119
    %v6121 = vsel %vm1980, %v6054, 0.0
    %6122 = vadd.xlane.f32.xlu0 %v6121
    %v6123 = vpop.xlane.xlu0 %6122
    %v6124 = vsel %vm1980, %v6056, 0.0
    %6125 = vadd.xlane.f32.xlu0 %v6124
    %v6126 = vpop.xlane.xlu0 %6125
    %v6127 = vsel %vm1980, %v6058, 0.0
    %6128 = vadd.xlane.f32.xlu0 %v6127
    %v6129 = vpop.xlane.xlu0 %6128
    %v6130 = vsel %vm1980, %v6060, 0.0
    %6131 = vadd.xlane.f32.xlu0 %v6130
    %v6132 = vpop.xlane.xlu0 %6131
    %v6133 = vsel %vm1980, %v6062, 0.0
    %6134 = vadd.xlane.f32.xlu0 %v6133
    %v6135 = vpop.xlane.xlu0 %6134
    %v6136 = vsel %vm1980, %v6064, 0.0
    %6137 = vadd.xlane.f32.xlu0 %v6136
    %v6138 = vpop.xlane.xlu0 %6137
    %v6139 = vsel %vm1980, %v6066, 0.0
    %6140 = vadd.xlane.f32.xlu0 %v6139
    %v6141 = vpop.xlane.xlu0 %6140
    %v6142 = vsel %vm1980, %v6068, 0.0
    %6143 = vadd.xlane.f32.xlu0 %v6142
    %v6144 = vpop.xlane.xlu0 %6143
    %v6145 = vsel %vm1980, %v6070, 0.0
    %6146 = vadd.xlane.f32.xlu0 %v6145
    %v6147 = vpop.xlane.xlu0 %6146
    %v6148 = vsel %vm1980, %v6072, 0.0
    %6149 = vadd.xlane.f32.xlu0 %v6148
    %v6150 = vpop.xlane.xlu0 %6149
    %v6151 = vsel %vm1980, %v6074, 0.0
    %6152 = vadd.xlane.f32.xlu0 %v6151
    %v6153 = vpop.xlane.xlu0 %6152
    %v6154 = vsel %vm1980, %v6076, 0.0
    %6155 = vadd.xlane.f32.xlu0 %v6154
    %v6156 = vpop.xlane.xlu0 %6155
    %v6157 = vsel %vm1980, %v6078, 0.0
    %6158 = vadd.xlane.f32.xlu0 %v6157
    %v6159 = vpop.xlane.xlu0 %6158
    %v6160 = vsel %vm1980, %v6080, 0.0
    %6161 = vadd.xlane.f32.xlu0 %v6160
    %v6162 = vpop.xlane.xlu0 %6161
    %v6163 = vsel %vm1980, %v6082, 0.0
    %6164 = vadd.xlane.f32.xlu0 %v6163
    %v6165 = vpop.xlane.xlu0 %6164
    %v6166 = vsel %vm1980, %v6084, 0.0
    %6167 = vadd.xlane.f32.xlu0 %v6166
    %v6168 = vpop.xlane.xlu0 %6167
    %v6169 = vsel %vm1980, %v6086, 0.0
    %6170 = vadd.xlane.f32.xlu0 %v6169
    %v6171 = vpop.xlane.xlu0 %6170
    %v6172 = vsel %vm1980, %v6088, 0.0
    %6173 = vadd.xlane.f32.xlu0 %v6172
    %v6174 = vpop.xlane.xlu0 %6173
    %v6175 = vsel %vm1980, %v6090, 0.0
    %6176 = vadd.xlane.f32.xlu0 %v6175
    %v6177 = vpop.xlane.xlu0 %6176
    %v6178 = vsel %vm1980, %v6092, 0.0
    %6179 = vadd.xlane.f32.xlu0 %v6178
    %v6180 = vpop.xlane.xlu0 %6179
    %v6181 = vsel %vm1980, %v6094, 0.0
    %6182 = vadd.xlane.f32.xlu0 %v6181
    %v6183 = vpop.xlane.xlu0 %6182
    %v6184 = vsel %vm1980, %v6096, 0.0
    %6185 = vadd.xlane.f32.xlu0 %v6184
    %v6186 = vpop.xlane.xlu0 %6185
    %v6187 = vsel %vm1980, %v6098, 0.0
    %6188 = vadd.xlane.f32.xlu0 %v6187
    %v6189 = vpop.xlane.xlu0 %6188
    %v6190 = vsel %vm1980, %v6100, 0.0
    %6191 = vadd.xlane.f32.xlu0 %v6190
    %v6192 = vpop.xlane.xlu0 %6191
    %v6193 = vsel %vm1980, %v6102, 0.0
    %6194 = vadd.xlane.f32.xlu0 %v6193
    %v6195 = vpop.xlane.xlu0 %6194
    %v6196 = vsel %vm1980, %v6104, 0.0
    %6197 = vadd.xlane.f32.xlu0 %v6196
    %v6198 = vpop.xlane.xlu0 %6197
    %v6199 = vsel %vm1980, %v6106, 0.0
    %6200 = vadd.xlane.f32.xlu0 %v6199
    %v6201 = vpop.xlane.xlu0 %6200
    %v6202 = vsel %vm1980, %v6108, 0.0
    %6203 = vadd.xlane.f32.xlu0 %v6202
    %v6204 = vpop.xlane.xlu0 %6203
    %v6205 = vrcp.pop %v6111
    %v6206 = vrcp.pop %v6114
    %v6207 = vrcp.pop %v6117
    %v6208 = vrcp.pop %v6120
    %v6209 = vrcp.pop %v6123
    %v6210 = vrcp.pop %v6126
    %v6211 = vrcp.pop %v6129
    %v6212 = vrcp.pop %v6132
    %v6213 = vrcp.pop %v6135
    %v6214 = vrcp.pop %v6138
    %v6215 = vrcp.pop %v6141
    %v6216 = vrcp.pop %v6144
    %v6217 = vrcp.pop %v6147
    %v6218 = vrcp.pop %v6150
    %v6219 = vrcp.pop %v6153
    %v6220 = vrcp.pop %v6156
    %v6221 = vrcp.pop %v6159
    %v6222 = vrcp.pop %v6162
    %v6223 = vrcp.pop %v6165
    %v6224 = vrcp.pop %v6168
    %v6225 = vrcp.pop %v6171
    %v6226 = vrcp.pop %v6174
    %v6227 = vrcp.pop %v6177
    %v6228 = vrcp.pop %v6180
    %v6229 = vrcp.pop %v6183
    %v6230 = vrcp.pop %v6186
    %v6231 = vrcp.pop %v6189
    %v6232 = vrcp.pop %v6192
    %v6233 = vrcp.pop %v6195
    %v6234 = vrcp.pop %v6198
    %v6235 = vrcp.pop %v6201
    %v6236 = vrcp.pop %v6204
    %v6237 = vmul.f32 %v6046, %v6205
    %v6238 = vmul.f32 %v6048, %v6206
    %v6239 = vmul.f32 %v6050, %v6207
    %v6240 = vmul.f32 %v6052, %v6208
    %v6241 = vmul.f32 %v6054, %v6209
    %v6242 = vmul.f32 %v6056, %v6210
    %v6243 = vmul.f32 %v6058, %v6211
    %v6244 = vmul.f32 %v6060, %v6212
    %v6245 = vmul.f32 %v6062, %v6213
    %v6246 = vmul.f32 %v6064, %v6214
    %v6247 = vmul.f32 %v6066, %v6215
    %v6248 = vmul.f32 %v6068, %v6216
    %v6249 = vmul.f32 %v6070, %v6217
    %v6250 = vmul.f32 %v6072, %v6218
    %v6251 = vmul.f32 %v6074, %v6219
    %v6252 = vmul.f32 %v6076, %v6220
    %v6253 = vmul.f32 %v6078, %v6221
    %v6254 = vmul.f32 %v6080, %v6222
    %v6255 = vmul.f32 %v6082, %v6223
    %v6256 = vmul.f32 %v6084, %v6224
    %v6257 = vmul.f32 %v6086, %v6225
    %v6258 = vmul.f32 %v6088, %v6226
    %v6259 = vmul.f32 %v6090, %v6227
    %v6260 = vmul.f32 %v6092, %v6228
    %v6261 = vmul.f32 %v6094, %v6229
    %v6262 = vmul.f32 %v6096, %v6230
    %v6263 = vmul.f32 %v6098, %v6231
    %v6264 = vmul.f32 %v6100, %v6232
    %v6265 = vmul.f32 %v6102, %v6233
    %v6266 = vmul.f32 %v6104, %v6234
    %v6267 = vmul.f32 %v6106, %v6235
    %v6268 = vmul.f32 %v6108, %v6236
    %v6269 = vpack.c.bf16 %v6238, %v6237
    %v6270 = vpack.c.bf16 %v6240, %v6239
    %v6271 = vpack.c.bf16 %v6242, %v6241
    %v6272 = vpack.c.bf16 %v6244, %v6243
    %v6273 = vpack.c.bf16 %v6246, %v6245
    %v6274 = vpack.c.bf16 %v6248, %v6247
    %v6275 = vpack.c.bf16 %v6250, %v6249
    %v6276 = vpack.c.bf16 %v6252, %v6251
    %v6277 = vpack.c.bf16 %v6254, %v6253
    %v6278 = vpack.c.bf16 %v6256, %v6255
    %v6279 = vpack.c.bf16 %v6258, %v6257
    %v6280 = vpack.c.bf16 %v6260, %v6259
    %v6281 = vpack.c.bf16 %v6262, %v6261
    %v6282 = vpack.c.bf16 %v6264, %v6263
    %v6283 = vpack.c.bf16 %v6266, %v6265
    %v6284 = vpack.c.bf16 %v6268, %v6267
    %6285 = vrot.lane.b32.xlu0 %v1168, 64
    %v6286 = vpop.permute.xlu0 %6285
    %v6289 = vsel %vm1980, %v6269, 0
    %6291 = vmatprep.subr.bf16.mxu0 0
    %6292 = vmatpush1.bf16.msra.mxu0 0
    %6293 = vmatprep.subr.bf16.mxu0 0
    %6294 = vmatpush1.bf16.msra.mxu0 0
    %6295 = vmatprep.subr.bf16.mxu0 0
    %6296 = vmatpush1.bf16.msra.mxu0 0
    %6297 = vmatprep.subr.bf16.mxu0 0
    %6298 = vmatpush1.bf16.msra.mxu0 0
    %6299 = vmatprep.subr.bf16.mxu0 0
    %6300 = vmatpush1.bf16.msra.mxu0 0
    %6301 = vmatprep.subr.bf16.mxu0 0
    %6302 = vmatpush1.bf16.msra.mxu0 0
    %6303 = vmatprep.subr.bf16.mxu0 0
    %6304 = vmatpush1.bf16.msra.mxu0 0
    %6305 = vmatprep.subr.bf16.mxu0 0
    %6306 = vmatpush1.bf16.msra.mxu0 %v6286
    %6307 = vmatprep.subr.bf16.mxu0 0
    %6308 = vmatpush2.bf16.msra.mxu0 0
    %6309 = vmatprep.subr.bf16.mxu0 0
    %6310 = vmatpush2.bf16.msra.mxu0 0
    %6311 = vmatprep.subr.bf16.mxu0 0
    %6312 = vmatpush2.bf16.msra.mxu0 0
    %6313 = vmatprep.subr.bf16.mxu0 0
    %6314 = vmatpush2.bf16.msra.mxu0 0
    %6315 = vmatprep.subr.bf16.mxu0 0
    %6316 = vmatpush2.bf16.msra.mxu0 0
    %6317 = vmatprep.subr.bf16.mxu0 0
    %6318 = vmatpush2.bf16.msra.mxu0 0
    %6319 = vmatprep.subr.bf16.mxu0 0
    %6320 = vmatpush2.bf16.msra.mxu0 0
    %6321 = vmatprep.subr.bf16.mxu0 0
    %6322 = vmatpush2.bf16.msra.mxu0 0
    %6323 = vmatprep.mubr.bf16.mxu0 0
    %6324 = vmatmul.mubr.bf16.gmra.mxu0 %v6289
    %v6325 = vpop.f32.mrf.mxu0
    %v6326 = vadd.f32 0.0, %v6325
    %v6327 = vpop.f32.mrf.mxu0
    %v6328 = vpop.f32.mrf.mxu0
    %v6329 = vadd.f32 0.0, %v6328
    %v6330 = vpop.f32.mrf.mxu0
    %6331 = vdwg.mxu0
    %6332 = vrot.lane.b32.xlu0 %v1169, 64
    %v6333 = vpop.permute.xlu0 %6332
    %v6336 = vsel %vm1980, %v6270, 0
    %6338 = vmatprep.subr.bf16.mxu0 0
    %6339 = vmatpush1.bf16.msra.mxu0 0
    %6340 = vmatprep.subr.bf16.mxu0 0
    %6341 = vmatpush1.bf16.msra.mxu0 0
    %6342 = vmatprep.subr.bf16.mxu0 0
    %6343 = vmatpush1.bf16.msra.mxu0 0
    %6344 = vmatprep.subr.bf16.mxu0 0
    %6345 = vmatpush1.bf16.msra.mxu0 0
    %6346 = vmatprep.subr.bf16.mxu0 0
    %6347 = vmatpush1.bf16.msra.mxu0 0
    %6348 = vmatprep.subr.bf16.mxu0 0
    %6349 = vmatpush1.bf16.msra.mxu0 0
    %6350 = vmatprep.subr.bf16.mxu0 0
    %6351 = vmatpush1.bf16.msra.mxu0 0
    %6352 = vmatprep.subr.bf16.mxu0 0
    %6353 = vmatpush1.bf16.msra.mxu0 %v6333
    %6354 = vmatprep.subr.bf16.mxu0 0
    %6355 = vmatpush2.bf16.msra.mxu0 0
    %6356 = vmatprep.subr.bf16.mxu0 0
    %6357 = vmatpush2.bf16.msra.mxu0 0
    %6358 = vmatprep.subr.bf16.mxu0 0
    %6359 = vmatpush2.bf16.msra.mxu0 0
    %6360 = vmatprep.subr.bf16.mxu0 0
    %6361 = vmatpush2.bf16.msra.mxu0 0
    %6362 = vmatprep.subr.bf16.mxu0 0
    %6363 = vmatpush2.bf16.msra.mxu0 0
    %6364 = vmatprep.subr.bf16.mxu0 0
    %6365 = vmatpush2.bf16.msra.mxu0 0
    %6366 = vmatprep.subr.bf16.mxu0 0
    %6367 = vmatpush2.bf16.msra.mxu0 0
    %6368 = vmatprep.subr.bf16.mxu0 0
    %6369 = vmatpush2.bf16.msra.mxu0 0
    %6370 = vmatprep.mubr.bf16.mxu0 0
    %6371 = vmatmul.mubr.bf16.gmra.mxu0 %v6336
    %v6372 = vpop.f32.mrf.mxu0
    %v6373 = vadd.f32 0.0, %v6372
    %v6374 = vpop.f32.mrf.mxu0
    %v6375 = vpop.f32.mrf.mxu0
    %v6376 = vadd.f32 0.0, %v6375
    %v6377 = vpop.f32.mrf.mxu0
    %6378 = vdwg.mxu0
    %6379 = vrot.lane.b32.xlu0 %v1170, 64
    %v6380 = vpop.permute.xlu0 %6379
    %v6383 = vsel %vm1980, %v6271, 0
    %6385 = vmatprep.subr.bf16.mxu0 0
    %6386 = vmatpush1.bf16.msra.mxu0 0
    %6387 = vmatprep.subr.bf16.mxu0 0
    %6388 = vmatpush1.bf16.msra.mxu0 0
    %6389 = vmatprep.subr.bf16.mxu0 0
    %6390 = vmatpush1.bf16.msra.mxu0 0
    %6391 = vmatprep.subr.bf16.mxu0 0
    %6392 = vmatpush1.bf16.msra.mxu0 0
    %6393 = vmatprep.subr.bf16.mxu0 0
    %6394 = vmatpush1.bf16.msra.mxu0 0
    %6395 = vmatprep.subr.bf16.mxu0 0
    %6396 = vmatpush1.bf16.msra.mxu0 0
    %6397 = vmatprep.subr.bf16.mxu0 0
    %6398 = vmatpush1.bf16.msra.mxu0 0
    %6399 = vmatprep.subr.bf16.mxu0 0
    %6400 = vmatpush1.bf16.msra.mxu0 %v6380
    %6401 = vmatprep.subr.bf16.mxu0 0
    %6402 = vmatpush2.bf16.msra.mxu0 0
    %6403 = vmatprep.subr.bf16.mxu0 0
    %6404 = vmatpush2.bf16.msra.mxu0 0
    %6405 = vmatprep.subr.bf16.mxu0 0
    %6406 = vmatpush2.bf16.msra.mxu0 0
    %6407 = vmatprep.subr.bf16.mxu0 0
    %6408 = vmatpush2.bf16.msra.mxu0 0
    %6409 = vmatprep.subr.bf16.mxu0 0
    %6410 = vmatpush2.bf16.msra.mxu0 0
    %6411 = vmatprep.subr.bf16.mxu0 0
    %6412 = vmatpush2.bf16.msra.mxu0 0
    %6413 = vmatprep.subr.bf16.mxu0 0
    %6414 = vmatpush2.bf16.msra.mxu0 0
    %6415 = vmatprep.subr.bf16.mxu0 0
    %6416 = vmatpush2.bf16.msra.mxu0 0
    %6417 = vmatprep.mubr.bf16.mxu0 0
    %6418 = vmatmul.mubr.bf16.gmra.mxu0 %v6383
    %v6419 = vpop.f32.mrf.mxu0
    %v6420 = vadd.f32 0.0, %v6419
    %v6421 = vpop.f32.mrf.mxu0
    %v6422 = vpop.f32.mrf.mxu0
    %v6423 = vadd.f32 0.0, %v6422
    %v6424 = vpop.f32.mrf.mxu0
    %6425 = vdwg.mxu0
    %6426 = vrot.lane.b32.xlu0 %v1171, 64
    %v6427 = vpop.permute.xlu0 %6426
    %v6430 = vsel %vm1980, %v6272, 0
    %6432 = vmatprep.subr.bf16.mxu0 0
    %6433 = vmatpush1.bf16.msra.mxu0 0
    %6434 = vmatprep.subr.bf16.mxu0 0
    %6435 = vmatpush1.bf16.msra.mxu0 0
    %6436 = vmatprep.subr.bf16.mxu0 0
    %6437 = vmatpush1.bf16.msra.mxu0 0
    %6438 = vmatprep.subr.bf16.mxu0 0
    %6439 = vmatpush1.bf16.msra.mxu0 0
    %6440 = vmatprep.subr.bf16.mxu0 0
    %6441 = vmatpush1.bf16.msra.mxu0 0
    %6442 = vmatprep.subr.bf16.mxu0 0
    %6443 = vmatpush1.bf16.msra.mxu0 0
    %6444 = vmatprep.subr.bf16.mxu0 0
    %6445 = vmatpush1.bf16.msra.mxu0 0
    %6446 = vmatprep.subr.bf16.mxu0 0
    %6447 = vmatpush1.bf16.msra.mxu0 %v6427
    %6448 = vmatprep.subr.bf16.mxu0 0
    %6449 = vmatpush2.bf16.msra.mxu0 0
    %6450 = vmatprep.subr.bf16.mxu0 0
    %6451 = vmatpush2.bf16.msra.mxu0 0
    %6452 = vmatprep.subr.bf16.mxu0 0
    %6453 = vmatpush2.bf16.msra.mxu0 0
    %6454 = vmatprep.subr.bf16.mxu0 0
    %6455 = vmatpush2.bf16.msra.mxu0 0
    %6456 = vmatprep.subr.bf16.mxu0 0
    %6457 = vmatpush2.bf16.msra.mxu0 0
    %6458 = vmatprep.subr.bf16.mxu0 0
    %6459 = vmatpush2.bf16.msra.mxu0 0
    %6460 = vmatprep.subr.bf16.mxu0 0
    %6461 = vmatpush2.bf16.msra.mxu0 0
    %6462 = vmatprep.subr.bf16.mxu0 0
    %6463 = vmatpush2.bf16.msra.mxu0 0
    %6464 = vmatprep.mubr.bf16.mxu0 0
    %6465 = vmatmul.mubr.bf16.gmra.mxu0 %v6430
    %v6466 = vpop.f32.mrf.mxu0
    %v6467 = vadd.f32 0.0, %v6466
    %v6468 = vpop.f32.mrf.mxu0
    %v6469 = vpop.f32.mrf.mxu0
    %v6470 = vadd.f32 0.0, %v6469
    %v6471 = vpop.f32.mrf.mxu0
    %6472 = vdwg.mxu0
    %6473 = vrot.lane.b32.xlu0 %v1172, 64
    %v6474 = vpop.permute.xlu0 %6473
    %v6477 = vsel %vm1980, %v6273, 0
    %6479 = vmatprep.subr.bf16.mxu0 0
    %6480 = vmatpush1.bf16.msra.mxu0 0
    %6481 = vmatprep.subr.bf16.mxu0 0
    %6482 = vmatpush1.bf16.msra.mxu0 0
    %6483 = vmatprep.subr.bf16.mxu0 0
    %6484 = vmatpush1.bf16.msra.mxu0 0
    %6485 = vmatprep.subr.bf16.mxu0 0
    %6486 = vmatpush1.bf16.msra.mxu0 0
    %6487 = vmatprep.subr.bf16.mxu0 0
    %6488 = vmatpush1.bf16.msra.mxu0 0
    %6489 = vmatprep.subr.bf16.mxu0 0
    %6490 = vmatpush1.bf16.msra.mxu0 0
    %6491 = vmatprep.subr.bf16.mxu0 0
    %6492 = vmatpush1.bf16.msra.mxu0 0
    %6493 = vmatprep.subr.bf16.mxu0 0
    %6494 = vmatpush1.bf16.msra.mxu0 %v6474
    %6495 = vmatprep.subr.bf16.mxu0 0
    %6496 = vmatpush2.bf16.msra.mxu0 0
    %6497 = vmatprep.subr.bf16.mxu0 0
    %6498 = vmatpush2.bf16.msra.mxu0 0
    %6499 = vmatprep.subr.bf16.mxu0 0
    %6500 = vmatpush2.bf16.msra.mxu0 0
    %6501 = vmatprep.subr.bf16.mxu0 0
    %6502 = vmatpush2.bf16.msra.mxu0 0
    %6503 = vmatprep.subr.bf16.mxu0 0
    %6504 = vmatpush2.bf16.msra.mxu0 0
    %6505 = vmatprep.subr.bf16.mxu0 0
    %6506 = vmatpush2.bf16.msra.mxu0 0
    %6507 = vmatprep.subr.bf16.mxu0 0
    %6508 = vmatpush2.bf16.msra.mxu0 0
    %6509 = vmatprep.subr.bf16.mxu0 0
    %6510 = vmatpush2.bf16.msra.mxu0 0
    %6511 = vmatprep.mubr.bf16.mxu0 0
    %6512 = vmatmul.mubr.bf16.gmra.mxu0 %v6477
    %v6513 = vpop.f32.mrf.mxu0
    %v6514 = vadd.f32 0.0, %v6513
    %v6515 = vpop.f32.mrf.mxu0
    %v6516 = vpop.f32.mrf.mxu0
    %v6517 = vadd.f32 0.0, %v6516
    %v6518 = vpop.f32.mrf.mxu0
    %6519 = vdwg.mxu0
    %6520 = vrot.lane.b32.xlu0 %v1173, 64
    %v6521 = vpop.permute.xlu0 %6520
    %v6524 = vsel %vm1980, %v6274, 0
    %6526 = vmatprep.subr.bf16.mxu0 0
    %6527 = vmatpush1.bf16.msra.mxu0 0
    %6528 = vmatprep.subr.bf16.mxu0 0
    %6529 = vmatpush1.bf16.msra.mxu0 0
    %6530 = vmatprep.subr.bf16.mxu0 0
    %6531 = vmatpush1.bf16.msra.mxu0 0
    %6532 = vmatprep.subr.bf16.mxu0 0
    %6533 = vmatpush1.bf16.msra.mxu0 0
    %6534 = vmatprep.subr.bf16.mxu0 0
    %6535 = vmatpush1.bf16.msra.mxu0 0
    %6536 = vmatprep.subr.bf16.mxu0 0
    %6537 = vmatpush1.bf16.msra.mxu0 0
    %6538 = vmatprep.subr.bf16.mxu0 0
    %6539 = vmatpush1.bf16.msra.mxu0 0
    %6540 = vmatprep.subr.bf16.mxu0 0
    %6541 = vmatpush1.bf16.msra.mxu0 %v6521
    %6542 = vmatprep.subr.bf16.mxu0 0
    %6543 = vmatpush2.bf16.msra.mxu0 0
    %6544 = vmatprep.subr.bf16.mxu0 0
    %6545 = vmatpush2.bf16.msra.mxu0 0
    %6546 = vmatprep.subr.bf16.mxu0 0
    %6547 = vmatpush2.bf16.msra.mxu0 0
    %6548 = vmatprep.subr.bf16.mxu0 0
    %6549 = vmatpush2.bf16.msra.mxu0 0
    %6550 = vmatprep.subr.bf16.mxu0 0
    %6551 = vmatpush2.bf16.msra.mxu0 0
    %6552 = vmatprep.subr.bf16.mxu0 0
    %6553 = vmatpush2.bf16.msra.mxu0 0
    %6554 = vmatprep.subr.bf16.mxu0 0
    %6555 = vmatpush2.bf16.msra.mxu0 0
    %6556 = vmatprep.subr.bf16.mxu0 0
    %6557 = vmatpush2.bf16.msra.mxu0 0
    %6558 = vmatprep.mubr.bf16.mxu0 0
    %6559 = vmatmul.mubr.bf16.gmra.mxu0 %v6524
    %v6560 = vpop.f32.mrf.mxu0
    %v6561 = vadd.f32 0.0, %v6560
    %v6562 = vpop.f32.mrf.mxu0
    %v6563 = vpop.f32.mrf.mxu0
    %v6564 = vadd.f32 0.0, %v6563
    %v6565 = vpop.f32.mrf.mxu0
    %6566 = vdwg.mxu0
    %6567 = vrot.lane.b32.xlu0 %v1174, 64
    %v6568 = vpop.permute.xlu0 %6567
    %v6571 = vsel %vm1980, %v6275, 0
    %6573 = vmatprep.subr.bf16.mxu0 0
    %6574 = vmatpush1.bf16.msra.mxu0 0
    %6575 = vmatprep.subr.bf16.mxu0 0
    %6576 = vmatpush1.bf16.msra.mxu0 0
    %6577 = vmatprep.subr.bf16.mxu0 0
    %6578 = vmatpush1.bf16.msra.mxu0 0
    %6579 = vmatprep.subr.bf16.mxu0 0
    %6580 = vmatpush1.bf16.msra.mxu0 0
    %6581 = vmatprep.subr.bf16.mxu0 0
    %6582 = vmatpush1.bf16.msra.mxu0 0
    %6583 = vmatprep.subr.bf16.mxu0 0
    %6584 = vmatpush1.bf16.msra.mxu0 0
    %6585 = vmatprep.subr.bf16.mxu0 0
    %6586 = vmatpush1.bf16.msra.mxu0 0
    %6587 = vmatprep.subr.bf16.mxu0 0
    %6588 = vmatpush1.bf16.msra.mxu0 %v6568
    %6589 = vmatprep.subr.bf16.mxu0 0
    %6590 = vmatpush2.bf16.msra.mxu0 0
    %6591 = vmatprep.subr.bf16.mxu0 0
    %6592 = vmatpush2.bf16.msra.mxu0 0
    %6593 = vmatprep.subr.bf16.mxu0 0
    %6594 = vmatpush2.bf16.msra.mxu0 0
    %6595 = vmatprep.subr.bf16.mxu0 0
    %6596 = vmatpush2.bf16.msra.mxu0 0
    %6597 = vmatprep.subr.bf16.mxu0 0
    %6598 = vmatpush2.bf16.msra.mxu0 0
    %6599 = vmatprep.subr.bf16.mxu0 0
    %6600 = vmatpush2.bf16.msra.mxu0 0
    %6601 = vmatprep.subr.bf16.mxu0 0
    %6602 = vmatpush2.bf16.msra.mxu0 0
    %6603 = vmatprep.subr.bf16.mxu0 0
    %6604 = vmatpush2.bf16.msra.mxu0 0
    %6605 = vmatprep.mubr.bf16.mxu0 0
    %6606 = vmatmul.mubr.bf16.gmra.mxu0 %v6571
    %v6607 = vpop.f32.mrf.mxu0
    %v6608 = vadd.f32 0.0, %v6607
    %v6609 = vpop.f32.mrf.mxu0
    %v6610 = vpop.f32.mrf.mxu0
    %v6611 = vadd.f32 0.0, %v6610
    %v6612 = vpop.f32.mrf.mxu0
    %6613 = vdwg.mxu0
    %6614 = vrot.lane.b32.xlu0 %v1175, 64
    %v6615 = vpop.permute.xlu0 %6614
    %v6618 = vsel %vm1980, %v6276, 0
    %6620 = vmatprep.subr.bf16.mxu0 0
    %6621 = vmatpush1.bf16.msra.mxu0 0
    %6622 = vmatprep.subr.bf16.mxu0 0
    %6623 = vmatpush1.bf16.msra.mxu0 0
    %6624 = vmatprep.subr.bf16.mxu0 0
    %6625 = vmatpush1.bf16.msra.mxu0 0
    %6626 = vmatprep.subr.bf16.mxu0 0
    %6627 = vmatpush1.bf16.msra.mxu0 0
    %6628 = vmatprep.subr.bf16.mxu0 0
    %6629 = vmatpush1.bf16.msra.mxu0 0
    %6630 = vmatprep.subr.bf16.mxu0 0
    %6631 = vmatpush1.bf16.msra.mxu0 0
    %6632 = vmatprep.subr.bf16.mxu0 0
    %6633 = vmatpush1.bf16.msra.mxu0 0
    %6634 = vmatprep.subr.bf16.mxu0 0
    %6635 = vmatpush1.bf16.msra.mxu0 %v6615
    %6636 = vmatprep.subr.bf16.mxu0 0
    %6637 = vmatpush2.bf16.msra.mxu0 0
    %6638 = vmatprep.subr.bf16.mxu0 0
    %6639 = vmatpush2.bf16.msra.mxu0 0
    %6640 = vmatprep.subr.bf16.mxu0 0
    %6641 = vmatpush2.bf16.msra.mxu0 0
    %6642 = vmatprep.subr.bf16.mxu0 0
    %6643 = vmatpush2.bf16.msra.mxu0 0
    %6644 = vmatprep.subr.bf16.mxu0 0
    %6645 = vmatpush2.bf16.msra.mxu0 0
    %6646 = vmatprep.subr.bf16.mxu0 0
    %6647 = vmatpush2.bf16.msra.mxu0 0
    %6648 = vmatprep.subr.bf16.mxu0 0
    %6649 = vmatpush2.bf16.msra.mxu0 0
    %6650 = vmatprep.subr.bf16.mxu0 0
    %6651 = vmatpush2.bf16.msra.mxu0 0
    %6652 = vmatprep.mubr.bf16.mxu0 0
    %6653 = vmatmul.mubr.bf16.gmra.mxu0 %v6618
    %v6654 = vpop.f32.mrf.mxu0
    %v6655 = vadd.f32 0.0, %v6654
    %v6656 = vpop.f32.mrf.mxu0
    %v6657 = vpop.f32.mrf.mxu0
    %v6658 = vadd.f32 0.0, %v6657
    %v6659 = vpop.f32.mrf.mxu0
    %6660 = vdwg.mxu0
    %6661 = vrot.lane.b32.xlu0 %v1176, 64
    %v6662 = vpop.permute.xlu0 %6661
    %v6665 = vsel %vm1980, %v6277, 0
    %6667 = vmatprep.subr.bf16.mxu0 0
    %6668 = vmatpush1.bf16.msra.mxu0 0
    %6669 = vmatprep.subr.bf16.mxu0 0
    %6670 = vmatpush1.bf16.msra.mxu0 0
    %6671 = vmatprep.subr.bf16.mxu0 0
    %6672 = vmatpush1.bf16.msra.mxu0 0
    %6673 = vmatprep.subr.bf16.mxu0 0
    %6674 = vmatpush1.bf16.msra.mxu0 0
    %6675 = vmatprep.subr.bf16.mxu0 0
    %6676 = vmatpush1.bf16.msra.mxu0 0
    %6677 = vmatprep.subr.bf16.mxu0 0
    %6678 = vmatpush1.bf16.msra.mxu0 0
    %6679 = vmatprep.subr.bf16.mxu0 0
    %6680 = vmatpush1.bf16.msra.mxu0 0
    %6681 = vmatprep.subr.bf16.mxu0 0
    %6682 = vmatpush1.bf16.msra.mxu0 %v6662
    %6683 = vmatprep.subr.bf16.mxu0 0
    %6684 = vmatpush2.bf16.msra.mxu0 0
    %6685 = vmatprep.subr.bf16.mxu0 0
    %6686 = vmatpush2.bf16.msra.mxu0 0
    %6687 = vmatprep.subr.bf16.mxu0 0
    %6688 = vmatpush2.bf16.msra.mxu0 0
    %6689 = vmatprep.subr.bf16.mxu0 0
    %6690 = vmatpush2.bf16.msra.mxu0 0
    %6691 = vmatprep.subr.bf16.mxu0 0
    %6692 = vmatpush2.bf16.msra.mxu0 0
    %6693 = vmatprep.subr.bf16.mxu0 0
    %6694 = vmatpush2.bf16.msra.mxu0 0
    %6695 = vmatprep.subr.bf16.mxu0 0
    %6696 = vmatpush2.bf16.msra.mxu0 0
    %6697 = vmatprep.subr.bf16.mxu0 0
    %6698 = vmatpush2.bf16.msra.mxu0 0
    %6699 = vmatprep.mubr.bf16.mxu0 0
    %6700 = vmatmul.mubr.bf16.gmra.mxu0 %v6665
    %v6701 = vpop.f32.mrf.mxu0
    %v6702 = vadd.f32 0.0, %v6701
    %v6703 = vpop.f32.mrf.mxu0
    %v6704 = vpop.f32.mrf.mxu0
    %v6705 = vadd.f32 0.0, %v6704
    %v6706 = vpop.f32.mrf.mxu0
    %6707 = vdwg.mxu0
    %6708 = vrot.lane.b32.xlu0 %v1177, 64
    %v6709 = vpop.permute.xlu0 %6708
    %v6712 = vsel %vm1980, %v6278, 0
    %6714 = vmatprep.subr.bf16.mxu0 0
    %6715 = vmatpush1.bf16.msra.mxu0 0
    %6716 = vmatprep.subr.bf16.mxu0 0
    %6717 = vmatpush1.bf16.msra.mxu0 0
    %6718 = vmatprep.subr.bf16.mxu0 0
    %6719 = vmatpush1.bf16.msra.mxu0 0
    %6720 = vmatprep.subr.bf16.mxu0 0
    %6721 = vmatpush1.bf16.msra.mxu0 0
    %6722 = vmatprep.subr.bf16.mxu0 0
    %6723 = vmatpush1.bf16.msra.mxu0 0
    %6724 = vmatprep.subr.bf16.mxu0 0
    %6725 = vmatpush1.bf16.msra.mxu0 0
    %6726 = vmatprep.subr.bf16.mxu0 0
    %6727 = vmatpush1.bf16.msra.mxu0 0
    %6728 = vmatprep.subr.bf16.mxu0 0
    %6729 = vmatpush1.bf16.msra.mxu0 %v6709
    %6730 = vmatprep.subr.bf16.mxu0 0
    %6731 = vmatpush2.bf16.msra.mxu0 0
    %6732 = vmatprep.subr.bf16.mxu0 0
    %6733 = vmatpush2.bf16.msra.mxu0 0
    %6734 = vmatprep.subr.bf16.mxu0 0
    %6735 = vmatpush2.bf16.msra.mxu0 0
    %6736 = vmatprep.subr.bf16.mxu0 0
    %6737 = vmatpush2.bf16.msra.mxu0 0
    %6738 = vmatprep.subr.bf16.mxu0 0
    %6739 = vmatpush2.bf16.msra.mxu0 0
    %6740 = vmatprep.subr.bf16.mxu0 0
    %6741 = vmatpush2.bf16.msra.mxu0 0
    %6742 = vmatprep.subr.bf16.mxu0 0
    %6743 = vmatpush2.bf16.msra.mxu0 0
    %6744 = vmatprep.subr.bf16.mxu0 0
    %6745 = vmatpush2.bf16.msra.mxu0 0
    %6746 = vmatprep.mubr.bf16.mxu0 0
    %6747 = vmatmul.mubr.bf16.gmra.mxu0 %v6712
    %v6748 = vpop.f32.mrf.mxu0
    %v6749 = vadd.f32 0.0, %v6748
    %v6750 = vpop.f32.mrf.mxu0
    %v6751 = vpop.f32.mrf.mxu0
    %v6752 = vadd.f32 0.0, %v6751
    %v6753 = vpop.f32.mrf.mxu0
    %6754 = vdwg.mxu0
    %6755 = vrot.lane.b32.xlu0 %v1178, 64
    %v6756 = vpop.permute.xlu0 %6755
    %v6759 = vsel %vm1980, %v6279, 0
    %6761 = vmatprep.subr.bf16.mxu0 0
    %6762 = vmatpush1.bf16.msra.mxu0 0
    %6763 = vmatprep.subr.bf16.mxu0 0
    %6764 = vmatpush1.bf16.msra.mxu0 0
    %6765 = vmatprep.subr.bf16.mxu0 0
    %6766 = vmatpush1.bf16.msra.mxu0 0
    %6767 = vmatprep.subr.bf16.mxu0 0
    %6768 = vmatpush1.bf16.msra.mxu0 0
    %6769 = vmatprep.subr.bf16.mxu0 0
    %6770 = vmatpush1.bf16.msra.mxu0 0
    %6771 = vmatprep.subr.bf16.mxu0 0
    %6772 = vmatpush1.bf16.msra.mxu0 0
    %6773 = vmatprep.subr.bf16.mxu0 0
    %6774 = vmatpush1.bf16.msra.mxu0 0
    %6775 = vmatprep.subr.bf16.mxu0 0
    %6776 = vmatpush1.bf16.msra.mxu0 %v6756
    %6777 = vmatprep.subr.bf16.mxu0 0
    %6778 = vmatpush2.bf16.msra.mxu0 0
    %6779 = vmatprep.subr.bf16.mxu0 0
    %6780 = vmatpush2.bf16.msra.mxu0 0
    %6781 = vmatprep.subr.bf16.mxu0 0
    %6782 = vmatpush2.bf16.msra.mxu0 0
    %6783 = vmatprep.subr.bf16.mxu0 0
    %6784 = vmatpush2.bf16.msra.mxu0 0
    %6785 = vmatprep.subr.bf16.mxu0 0
    %6786 = vmatpush2.bf16.msra.mxu0 0
    %6787 = vmatprep.subr.bf16.mxu0 0
    %6788 = vmatpush2.bf16.msra.mxu0 0
    %6789 = vmatprep.subr.bf16.mxu0 0
    %6790 = vmatpush2.bf16.msra.mxu0 0
    %6791 = vmatprep.subr.bf16.mxu0 0
    %6792 = vmatpush2.bf16.msra.mxu0 0
    %6793 = vmatprep.mubr.bf16.mxu0 0
    %6794 = vmatmul.mubr.bf16.gmra.mxu0 %v6759
    %v6795 = vpop.f32.mrf.mxu0
    %v6796 = vadd.f32 0.0, %v6795
    %v6797 = vpop.f32.mrf.mxu0
    %v6798 = vpop.f32.mrf.mxu0
    %v6799 = vadd.f32 0.0, %v6798
    %v6800 = vpop.f32.mrf.mxu0
    %6801 = vdwg.mxu0
    %6802 = vrot.lane.b32.xlu0 %v1179, 64
    %v6803 = vpop.permute.xlu0 %6802
    %v6806 = vsel %vm1980, %v6280, 0
    %6808 = vmatprep.subr.bf16.mxu0 0
    %6809 = vmatpush1.bf16.msra.mxu0 0
    %6810 = vmatprep.subr.bf16.mxu0 0
    %6811 = vmatpush1.bf16.msra.mxu0 0
    %6812 = vmatprep.subr.bf16.mxu0 0
    %6813 = vmatpush1.bf16.msra.mxu0 0
    %6814 = vmatprep.subr.bf16.mxu0 0
    %6815 = vmatpush1.bf16.msra.mxu0 0
    %6816 = vmatprep.subr.bf16.mxu0 0
    %6817 = vmatpush1.bf16.msra.mxu0 0
    %6818 = vmatprep.subr.bf16.mxu0 0
    %6819 = vmatpush1.bf16.msra.mxu0 0
    %6820 = vmatprep.subr.bf16.mxu0 0
    %6821 = vmatpush1.bf16.msra.mxu0 0
    %6822 = vmatprep.subr.bf16.mxu0 0
    %6823 = vmatpush1.bf16.msra.mxu0 %v6803
    %6824 = vmatprep.subr.bf16.mxu0 0
    %6825 = vmatpush2.bf16.msra.mxu0 0
    %6826 = vmatprep.subr.bf16.mxu0 0
    %6827 = vmatpush2.bf16.msra.mxu0 0
    %6828 = vmatprep.subr.bf16.mxu0 0
    %6829 = vmatpush2.bf16.msra.mxu0 0
    %6830 = vmatprep.subr.bf16.mxu0 0
    %6831 = vmatpush2.bf16.msra.mxu0 0
    %6832 = vmatprep.subr.bf16.mxu0 0
    %6833 = vmatpush2.bf16.msra.mxu0 0
    %6834 = vmatprep.subr.bf16.mxu0 0
    %6835 = vmatpush2.bf16.msra.mxu0 0
    %6836 = vmatprep.subr.bf16.mxu0 0
    %6837 = vmatpush2.bf16.msra.mxu0 0
    %6838 = vmatprep.subr.bf16.mxu0 0
    %6839 = vmatpush2.bf16.msra.mxu0 0
    %6840 = vmatprep.mubr.bf16.mxu0 0
    %6841 = vmatmul.mubr.bf16.gmra.mxu0 %v6806
    %v6842 = vpop.f32.mrf.mxu0
    %v6843 = vadd.f32 0.0, %v6842
    %v6844 = vpop.f32.mrf.mxu0
    %v6845 = vpop.f32.mrf.mxu0
    %v6846 = vadd.f32 0.0, %v6845
    %v6847 = vpop.f32.mrf.mxu0
    %6848 = vdwg.mxu0
    %6849 = vrot.lane.b32.xlu0 %v1180, 64
    %v6850 = vpop.permute.xlu0 %6849
    %v6853 = vsel %vm1980, %v6281, 0
    %6855 = vmatprep.subr.bf16.mxu0 0
    %6856 = vmatpush1.bf16.msra.mxu0 0
    %6857 = vmatprep.subr.bf16.mxu0 0
    %6858 = vmatpush1.bf16.msra.mxu0 0
    %6859 = vmatprep.subr.bf16.mxu0 0
    %6860 = vmatpush1.bf16.msra.mxu0 0
    %6861 = vmatprep.subr.bf16.mxu0 0
    %6862 = vmatpush1.bf16.msra.mxu0 0
    %6863 = vmatprep.subr.bf16.mxu0 0
    %6864 = vmatpush1.bf16.msra.mxu0 0
    %6865 = vmatprep.subr.bf16.mxu0 0
    %6866 = vmatpush1.bf16.msra.mxu0 0
    %6867 = vmatprep.subr.bf16.mxu0 0
    %6868 = vmatpush1.bf16.msra.mxu0 0
    %6869 = vmatprep.subr.bf16.mxu0 0
    %6870 = vmatpush1.bf16.msra.mxu0 %v6850
    %6871 = vmatprep.subr.bf16.mxu0 0
    %6872 = vmatpush2.bf16.msra.mxu0 0
    %6873 = vmatprep.subr.bf16.mxu0 0
    %6874 = vmatpush2.bf16.msra.mxu0 0
    %6875 = vmatprep.subr.bf16.mxu0 0
    %6876 = vmatpush2.bf16.msra.mxu0 0
    %6877 = vmatprep.subr.bf16.mxu0 0
    %6878 = vmatpush2.bf16.msra.mxu0 0
    %6879 = vmatprep.subr.bf16.mxu0 0
    %6880 = vmatpush2.bf16.msra.mxu0 0
    %6881 = vmatprep.subr.bf16.mxu0 0
    %6882 = vmatpush2.bf16.msra.mxu0 0
    %6883 = vmatprep.subr.bf16.mxu0 0
    %6884 = vmatpush2.bf16.msra.mxu0 0
    %6885 = vmatprep.subr.bf16.mxu0 0
    %6886 = vmatpush2.bf16.msra.mxu0 0
    %6887 = vmatprep.mubr.bf16.mxu0 0
    %6888 = vmatmul.mubr.bf16.gmra.mxu0 %v6853
    %v6889 = vpop.f32.mrf.mxu0
    %v6890 = vadd.f32 0.0, %v6889
    %v6891 = vpop.f32.mrf.mxu0
    %v6892 = vpop.f32.mrf.mxu0
    %v6893 = vadd.f32 0.0, %v6892
    %v6894 = vpop.f32.mrf.mxu0
    %6895 = vdwg.mxu0
    %6896 = vrot.lane.b32.xlu0 %v1181, 64
    %v6897 = vpop.permute.xlu0 %6896
    %v6900 = vsel %vm1980, %v6282, 0
    %6902 = vmatprep.subr.bf16.mxu0 0
    %6903 = vmatpush1.bf16.msra.mxu0 0
    %6904 = vmatprep.subr.bf16.mxu0 0
    %6905 = vmatpush1.bf16.msra.mxu0 0
    %6906 = vmatprep.subr.bf16.mxu0 0
    %6907 = vmatpush1.bf16.msra.mxu0 0
    %6908 = vmatprep.subr.bf16.mxu0 0
    %6909 = vmatpush1.bf16.msra.mxu0 0
    %6910 = vmatprep.subr.bf16.mxu0 0
    %6911 = vmatpush1.bf16.msra.mxu0 0
    %6912 = vmatprep.subr.bf16.mxu0 0
    %6913 = vmatpush1.bf16.msra.mxu0 0
    %6914 = vmatprep.subr.bf16.mxu0 0
    %6915 = vmatpush1.bf16.msra.mxu0 0
    %6916 = vmatprep.subr.bf16.mxu0 0
    %6917 = vmatpush1.bf16.msra.mxu0 %v6897
    %6918 = vmatprep.subr.bf16.mxu0 0
    %6919 = vmatpush2.bf16.msra.mxu0 0
    %6920 = vmatprep.subr.bf16.mxu0 0
    %6921 = vmatpush2.bf16.msra.mxu0 0
    %6922 = vmatprep.subr.bf16.mxu0 0
    %6923 = vmatpush2.bf16.msra.mxu0 0
    %6924 = vmatprep.subr.bf16.mxu0 0
    %6925 = vmatpush2.bf16.msra.mxu0 0
    %6926 = vmatprep.subr.bf16.mxu0 0
    %6927 = vmatpush2.bf16.msra.mxu0 0
    %6928 = vmatprep.subr.bf16.mxu0 0
    %6929 = vmatpush2.bf16.msra.mxu0 0
    %6930 = vmatprep.subr.bf16.mxu0 0
    %6931 = vmatpush2.bf16.msra.mxu0 0
    %6932 = vmatprep.subr.bf16.mxu0 0
    %6933 = vmatpush2.bf16.msra.mxu0 0
    %6934 = vmatprep.mubr.bf16.mxu0 0
    %6935 = vmatmul.mubr.bf16.gmra.mxu0 %v6900
    %v6936 = vpop.f32.mrf.mxu0
    %v6937 = vadd.f32 0.0, %v6936
    %v6938 = vpop.f32.mrf.mxu0
    %v6939 = vpop.f32.mrf.mxu0
    %v6940 = vadd.f32 0.0, %v6939
    %v6941 = vpop.f32.mrf.mxu0
    %6942 = vdwg.mxu0
    %6943 = vrot.lane.b32.xlu0 %v1182, 64
    %v6944 = vpop.permute.xlu0 %6943
    %v6947 = vsel %vm1980, %v6283, 0
    %6949 = vmatprep.subr.bf16.mxu0 0
    %6950 = vmatpush1.bf16.msra.mxu0 0
    %6951 = vmatprep.subr.bf16.mxu0 0
    %6952 = vmatpush1.bf16.msra.mxu0 0
    %6953 = vmatprep.subr.bf16.mxu0 0
    %6954 = vmatpush1.bf16.msra.mxu0 0
    %6955 = vmatprep.subr.bf16.mxu0 0
    %6956 = vmatpush1.bf16.msra.mxu0 0
    %6957 = vmatprep.subr.bf16.mxu0 0
    %6958 = vmatpush1.bf16.msra.mxu0 0
    %6959 = vmatprep.subr.bf16.mxu0 0
    %6960 = vmatpush1.bf16.msra.mxu0 0
    %6961 = vmatprep.subr.bf16.mxu0 0
    %6962 = vmatpush1.bf16.msra.mxu0 0
    %6963 = vmatprep.subr.bf16.mxu0 0
    %6964 = vmatpush1.bf16.msra.mxu0 %v6944
    %6965 = vmatprep.subr.bf16.mxu0 0
    %6966 = vmatpush2.bf16.msra.mxu0 0
    %6967 = vmatprep.subr.bf16.mxu0 0
    %6968 = vmatpush2.bf16.msra.mxu0 0
    %6969 = vmatprep.subr.bf16.mxu0 0
    %6970 = vmatpush2.bf16.msra.mxu0 0
    %6971 = vmatprep.subr.bf16.mxu0 0
    %6972 = vmatpush2.bf16.msra.mxu0 0
    %6973 = vmatprep.subr.bf16.mxu0 0
    %6974 = vmatpush2.bf16.msra.mxu0 0
    %6975 = vmatprep.subr.bf16.mxu0 0
    %6976 = vmatpush2.bf16.msra.mxu0 0
    %6977 = vmatprep.subr.bf16.mxu0 0
    %6978 = vmatpush2.bf16.msra.mxu0 0
    %6979 = vmatprep.subr.bf16.mxu0 0
    %6980 = vmatpush2.bf16.msra.mxu0 0
    %6981 = vmatprep.mubr.bf16.mxu0 0
    %6982 = vmatmul.mubr.bf16.gmra.mxu0 %v6947
    %v6983 = vpop.f32.mrf.mxu0
    %v6984 = vadd.f32 0.0, %v6983
    %v6985 = vpop.f32.mrf.mxu0
    %v6986 = vpop.f32.mrf.mxu0
    %v6987 = vadd.f32 0.0, %v6986
    %v6988 = vpop.f32.mrf.mxu0
    %6989 = vdwg.mxu0
    %6990 = vrot.lane.b32.xlu0 %v1183, 64
    %v6991 = vpop.permute.xlu0 %6990
    %v6994 = vsel %vm1980, %v6284, 0
    %6996 = vmatprep.subr.bf16.mxu0 0
    %6997 = vmatpush1.bf16.msra.mxu0 0
    %6998 = vmatprep.subr.bf16.mxu0 0
    %6999 = vmatpush1.bf16.msra.mxu0 0
    %7000 = vmatprep.subr.bf16.mxu0 0
    %7001 = vmatpush1.bf16.msra.mxu0 0
    %7002 = vmatprep.subr.bf16.mxu0 0
    %7003 = vmatpush1.bf16.msra.mxu0 0
    %7004 = vmatprep.subr.bf16.mxu0 0
    %7005 = vmatpush1.bf16.msra.mxu0 0
    %7006 = vmatprep.subr.bf16.mxu0 0
    %7007 = vmatpush1.bf16.msra.mxu0 0
    %7008 = vmatprep.subr.bf16.mxu0 0
    %7009 = vmatpush1.bf16.msra.mxu0 0
    %7010 = vmatprep.subr.bf16.mxu0 0
    %7011 = vmatpush1.bf16.msra.mxu0 %v6991
    %7012 = vmatprep.subr.bf16.mxu0 0
    %7013 = vmatpush2.bf16.msra.mxu0 0
    %7014 = vmatprep.subr.bf16.mxu0 0
    %7015 = vmatpush2.bf16.msra.mxu0 0
    %7016 = vmatprep.subr.bf16.mxu0 0
    %7017 = vmatpush2.bf16.msra.mxu0 0
    %7018 = vmatprep.subr.bf16.mxu0 0
    %7019 = vmatpush2.bf16.msra.mxu0 0
    %7020 = vmatprep.subr.bf16.mxu0 0
    %7021 = vmatpush2.bf16.msra.mxu0 0
    %7022 = vmatprep.subr.bf16.mxu0 0
    %7023 = vmatpush2.bf16.msra.mxu0 0
    %7024 = vmatprep.subr.bf16.mxu0 0
    %7025 = vmatpush2.bf16.msra.mxu0 0
    %7026 = vmatprep.subr.bf16.mxu0 0
    %7027 = vmatpush2.bf16.msra.mxu0 0
    %7028 = vmatprep.mubr.bf16.mxu0 0
    %7029 = vmatmul.mubr.bf16.gmra.mxu0 %v6994
    %v7030 = vpop.f32.mrf.mxu0
    %v7031 = vadd.f32 0.0, %v7030
    %v7032 = vpop.f32.mrf.mxu0
    %v7033 = vpop.f32.mrf.mxu0
    %v7034 = vadd.f32 0.0, %v7033
    %v7035 = vpop.f32.mrf.mxu0
    %7036 = vdwg.mxu0
    %7037 = vrot.lane.b32.xlu0 %v1136, 32
    %v7038 = vpop.permute.xlu0 %7037
    %7039 = vrot.lane.b32.xlu0 %v1152, 32
    %v7040 = vpop.permute.xlu0 %7039
    %v7042 = vsel %vm1191, %v7038, 0
    %v7045 = vsel %vm1191, %v7040, 0
    %7047 = vmatprep.subr.bf16.mxu0 0
    %7048 = vmatpush1.bf16.xpose.msra.mxu0 0
    %7049 = vmatprep.subr.bf16.mxu0 0
    %7050 = vmatpush1.bf16.xpose.msra.mxu0 0
    %7051 = vmatprep.subr.bf16.mxu0 0
    %7052 = vmatpush1.bf16.xpose.msra.mxu0 0
    %7053 = vmatprep.subr.bf16.mxu0 0
    %7054 = vmatpush1.bf16.xpose.msra.mxu0 0
    %7055 = vmatprep.subr.bf16.mxu0 0
    %7056 = vmatpush1.bf16.xpose.msra.mxu0 0
    %7057 = vmatprep.subr.bf16.mxu0 0
    %7058 = vmatpush1.bf16.xpose.msra.mxu0 0
    %7059 = vmatprep.subr.bf16.mxu0 0
    %7060 = vmatpush1.bf16.xpose.msra.mxu0 0
    %7061 = vmatprep.subr.bf16.mxu0 0
    %7062 = vmatpush1.bf16.xpose.msra.mxu0 %v7045
    %7063 = vmatprep.subr.bf16.mxu0 0
    %7064 = vmatpush2.bf16.xpose.msra.mxu0 0
    %7065 = vmatprep.subr.bf16.mxu0 0
    %7066 = vmatpush2.bf16.xpose.msra.mxu0 0
    %7067 = vmatprep.subr.bf16.mxu0 0
    %7068 = vmatpush2.bf16.xpose.msra.mxu0 0
    %7069 = vmatprep.subr.bf16.mxu0 0
    %7070 = vmatpush2.bf16.xpose.msra.mxu0 0
    %7071 = vmatprep.subr.bf16.mxu0 0
    %7072 = vmatpush2.bf16.xpose.msra.mxu0 0
    %7073 = vmatprep.subr.bf16.mxu0 0
    %7074 = vmatpush2.bf16.xpose.msra.mxu0 0
    %7075 = vmatprep.subr.bf16.mxu0 0
    %7076 = vmatpush2.bf16.xpose.msra.mxu0 0
    %7077 = vmatprep.subr.bf16.mxu0 0
    %7078 = vmatpush2.bf16.xpose.msra.mxu0 0
    %7079 = vmatprep.mubr.bf16.mxu0 0
    %7080 = vmatmul.mubr.bf16.gmra.mxu0 %v7042
    %v7081 = vpop.f32.mrf.mxu0
    %v7082 = vadd.f32 0.0, %v7081
    %v7083 = vpop.f32.mrf.mxu0
    %v7084 = vpop.f32.mrf.mxu0
    %v7085 = vadd.f32 0.0, %v7084
    %v7086 = vpop.f32.mrf.mxu0
    %7087 = vdwg.mxu0
    %7088 = vrot.lane.b32.xlu0 %v1137, 32
    %v7089 = vpop.permute.xlu0 %7088
    %7090 = vrot.lane.b32.xlu0 %v1153, 32
    %v7091 = vpop.permute.xlu0 %7090
    %v7093 = vsel %vm1191, %v7089, 0
    %v7096 = vsel %vm1191, %v7091, 0
    %7098 = vmatprep.subr.bf16.mxu0 0
    %7099 = vmatpush1.bf16.xpose.msra.mxu0 0
    %7100 = vmatprep.subr.bf16.mxu0 0
    %7101 = vmatpush1.bf16.xpose.msra.mxu0 0
    %7102 = vmatprep.subr.bf16.mxu0 0
    %7103 = vmatpush1.bf16.xpose.msra.mxu0 0
    %7104 = vmatprep.subr.bf16.mxu0 0
    %7105 = vmatpush1.bf16.xpose.msra.mxu0 0
    %7106 = vmatprep.subr.bf16.mxu0 0
    %7107 = vmatpush1.bf16.xpose.msra.mxu0 0
    %7108 = vmatprep.subr.bf16.mxu0 0
    %7109 = vmatpush1.bf16.xpose.msra.mxu0 0
    %7110 = vmatprep.subr.bf16.mxu0 0
    %7111 = vmatpush1.bf16.xpose.msra.mxu0 0
    %7112 = vmatprep.subr.bf16.mxu0 0
    %7113 = vmatpush1.bf16.xpose.msra.mxu0 %v7096
    %7114 = vmatprep.subr.bf16.mxu0 0
    %7115 = vmatpush2.bf16.xpose.msra.mxu0 0
    %7116 = vmatprep.subr.bf16.mxu0 0
    %7117 = vmatpush2.bf16.xpose.msra.mxu0 0
    %7118 = vmatprep.subr.bf16.mxu0 0
    %7119 = vmatpush2.bf16.xpose.msra.mxu0 0
    %7120 = vmatprep.subr.bf16.mxu0 0
    %7121 = vmatpush2.bf16.xpose.msra.mxu0 0
    %7122 = vmatprep.subr.bf16.mxu0 0
    %7123 = vmatpush2.bf16.xpose.msra.mxu0 0
    %7124 = vmatprep.subr.bf16.mxu0 0
    %7125 = vmatpush2.bf16.xpose.msra.mxu0 0
    %7126 = vmatprep.subr.bf16.mxu0 0
    %7127 = vmatpush2.bf16.xpose.msra.mxu0 0
    %7128 = vmatprep.subr.bf16.mxu0 0
    %7129 = vmatpush2.bf16.xpose.msra.mxu0 0
    %7130 = vmatprep.mubr.bf16.mxu0 0
    %7131 = vmatmul.mubr.bf16.gmra.mxu0 %v7093
    %v7132 = vpop.f32.mrf.mxu0
    %v7133 = vadd.f32 0.0, %v7132
    %v7134 = vpop.f32.mrf.mxu0
    %v7135 = vpop.f32.mrf.mxu0
    %v7136 = vadd.f32 0.0, %v7135
    %v7137 = vpop.f32.mrf.mxu0
    %7138 = vdwg.mxu0
    %7139 = vrot.lane.b32.xlu0 %v1138, 32
    %v7140 = vpop.permute.xlu0 %7139
    %7141 = vrot.lane.b32.xlu0 %v1154, 32
    %v7142 = vpop.permute.xlu0 %7141
    %v7144 = vsel %vm1191, %v7140, 0
    %v7147 = vsel %vm1191, %v7142, 0
    %7149 = vmatprep.subr.bf16.mxu0 0
    %7150 = vmatpush1.bf16.xpose.msra.mxu0 0
    %7151 = vmatprep.subr.bf16.mxu0 0
    %7152 = vmatpush1.bf16.xpose.msra.mxu0 0
    %7153 = vmatprep.subr.bf16.mxu0 0
    %7154 = vmatpush1.bf16.xpose.msra.mxu0 0
    %7155 = vmatprep.subr.bf16.mxu0 0
    %7156 = vmatpush1.bf16.xpose.msra.mxu0 0
    %7157 = vmatprep.subr.bf16.mxu0 0
    %7158 = vmatpush1.bf16.xpose.msra.mxu0 0
    %7159 = vmatprep.subr.bf16.mxu0 0
    %7160 = vmatpush1.bf16.xpose.msra.mxu0 0
    %7161 = vmatprep.subr.bf16.mxu0 0
    %7162 = vmatpush1.bf16.xpose.msra.mxu0 0
    %7163 = vmatprep.subr.bf16.mxu0 0
    %7164 = vmatpush1.bf16.xpose.msra.mxu0 %v7147
    %7165 = vmatprep.subr.bf16.mxu0 0
    %7166 = vmatpush2.bf16.xpose.msra.mxu0 0
    %7167 = vmatprep.subr.bf16.mxu0 0
    %7168 = vmatpush2.bf16.xpose.msra.mxu0 0
    %7169 = vmatprep.subr.bf16.mxu0 0
    %7170 = vmatpush2.bf16.xpose.msra.mxu0 0
    %7171 = vmatprep.subr.bf16.mxu0 0
    %7172 = vmatpush2.bf16.xpose.msra.mxu0 0
    %7173 = vmatprep.subr.bf16.mxu0 0
    %7174 = vmatpush2.bf16.xpose.msra.mxu0 0
    %7175 = vmatprep.subr.bf16.mxu0 0
    %7176 = vmatpush2.bf16.xpose.msra.mxu0 0
    %7177 = vmatprep.subr.bf16.mxu0 0
    %7178 = vmatpush2.bf16.xpose.msra.mxu0 0
    %7179 = vmatprep.subr.bf16.mxu0 0
    %7180 = vmatpush2.bf16.xpose.msra.mxu0 0
    %7181 = vmatprep.mubr.bf16.mxu0 0
    %7182 = vmatmul.mubr.bf16.gmra.mxu0 %v7144
    %v7183 = vpop.f32.mrf.mxu0
    %v7184 = vadd.f32 0.0, %v7183
    %v7185 = vpop.f32.mrf.mxu0
    %v7186 = vpop.f32.mrf.mxu0
    %v7187 = vadd.f32 0.0, %v7186
    %v7188 = vpop.f32.mrf.mxu0
    %7189 = vdwg.mxu0
    %7190 = vrot.lane.b32.xlu0 %v1139, 32
    %v7191 = vpop.permute.xlu0 %7190
    %7192 = vrot.lane.b32.xlu0 %v1155, 32
    %v7193 = vpop.permute.xlu0 %7192
    %v7195 = vsel %vm1191, %v7191, 0
    %v7198 = vsel %vm1191, %v7193, 0
    %7200 = vmatprep.subr.bf16.mxu0 0
    %7201 = vmatpush1.bf16.xpose.msra.mxu0 0
    %7202 = vmatprep.subr.bf16.mxu0 0
    %7203 = vmatpush1.bf16.xpose.msra.mxu0 0
    %7204 = vmatprep.subr.bf16.mxu0 0
    %7205 = vmatpush1.bf16.xpose.msra.mxu0 0
    %7206 = vmatprep.subr.bf16.mxu0 0
    %7207 = vmatpush1.bf16.xpose.msra.mxu0 0
    %7208 = vmatprep.subr.bf16.mxu0 0
    %7209 = vmatpush1.bf16.xpose.msra.mxu0 0
    %7210 = vmatprep.subr.bf16.mxu0 0
    %7211 = vmatpush1.bf16.xpose.msra.mxu0 0
    %7212 = vmatprep.subr.bf16.mxu0 0
    %7213 = vmatpush1.bf16.xpose.msra.mxu0 0
    %7214 = vmatprep.subr.bf16.mxu0 0
    %7215 = vmatpush1.bf16.xpose.msra.mxu0 %v7198
    %7216 = vmatprep.subr.bf16.mxu0 0
    %7217 = vmatpush2.bf16.xpose.msra.mxu0 0
    %7218 = vmatprep.subr.bf16.mxu0 0
    %7219 = vmatpush2.bf16.xpose.msra.mxu0 0
    %7220 = vmatprep.subr.bf16.mxu0 0
    %7221 = vmatpush2.bf16.xpose.msra.mxu0 0
    %7222 = vmatprep.subr.bf16.mxu0 0
    %7223 = vmatpush2.bf16.xpose.msra.mxu0 0
    %7224 = vmatprep.subr.bf16.mxu0 0
    %7225 = vmatpush2.bf16.xpose.msra.mxu0 0
    %7226 = vmatprep.subr.bf16.mxu0 0
    %7227 = vmatpush2.bf16.xpose.msra.mxu0 0
    %7228 = vmatprep.subr.bf16.mxu0 0
    %7229 = vmatpush2.bf16.xpose.msra.mxu0 0
    %7230 = vmatprep.subr.bf16.mxu0 0
    %7231 = vmatpush2.bf16.xpose.msra.mxu0 0
    %7232 = vmatprep.mubr.bf16.mxu0 0
    %7233 = vmatmul.mubr.bf16.gmra.mxu0 %v7195
    %v7234 = vpop.f32.mrf.mxu0
    %v7235 = vadd.f32 0.0, %v7234
    %v7236 = vpop.f32.mrf.mxu0
    %v7237 = vpop.f32.mrf.mxu0
    %v7238 = vadd.f32 0.0, %v7237
    %v7239 = vpop.f32.mrf.mxu0
    %7240 = vdwg.mxu0
    %7241 = vrot.lane.b32.xlu0 %v1140, 32
    %v7242 = vpop.permute.xlu0 %7241
    %7243 = vrot.lane.b32.xlu0 %v1156, 32
    %v7244 = vpop.permute.xlu0 %7243
    %v7246 = vsel %vm1191, %v7242, 0
    %v7249 = vsel %vm1191, %v7244, 0
    %7251 = vmatprep.subr.bf16.mxu0 0
    %7252 = vmatpush1.bf16.xpose.msra.mxu0 0
    %7253 = vmatprep.subr.bf16.mxu0 0
    %7254 = vmatpush1.bf16.xpose.msra.mxu0 0
    %7255 = vmatprep.subr.bf16.mxu0 0
    %7256 = vmatpush1.bf16.xpose.msra.mxu0 0
    %7257 = vmatprep.subr.bf16.mxu0 0
    %7258 = vmatpush1.bf16.xpose.msra.mxu0 0
    %7259 = vmatprep.subr.bf16.mxu0 0
    %7260 = vmatpush1.bf16.xpose.msra.mxu0 0
    %7261 = vmatprep.subr.bf16.mxu0 0
    %7262 = vmatpush1.bf16.xpose.msra.mxu0 0
    %7263 = vmatprep.subr.bf16.mxu0 0
    %7264 = vmatpush1.bf16.xpose.msra.mxu0 0
    %7265 = vmatprep.subr.bf16.mxu0 0
    %7266 = vmatpush1.bf16.xpose.msra.mxu0 %v7249
    %7267 = vmatprep.subr.bf16.mxu0 0
    %7268 = vmatpush2.bf16.xpose.msra.mxu0 0
    %7269 = vmatprep.subr.bf16.mxu0 0
    %7270 = vmatpush2.bf16.xpose.msra.mxu0 0
    %7271 = vmatprep.subr.bf16.mxu0 0
    %7272 = vmatpush2.bf16.xpose.msra.mxu0 0
    %7273 = vmatprep.subr.bf16.mxu0 0
    %7274 = vmatpush2.bf16.xpose.msra.mxu0 0
    %7275 = vmatprep.subr.bf16.mxu0 0
    %7276 = vmatpush2.bf16.xpose.msra.mxu0 0
    %7277 = vmatprep.subr.bf16.mxu0 0
    %7278 = vmatpush2.bf16.xpose.msra.mxu0 0
    %7279 = vmatprep.subr.bf16.mxu0 0
    %7280 = vmatpush2.bf16.xpose.msra.mxu0 0
    %7281 = vmatprep.subr.bf16.mxu0 0
    %7282 = vmatpush2.bf16.xpose.msra.mxu0 0
    %7283 = vmatprep.mubr.bf16.mxu0 0
    %7284 = vmatmul.mubr.bf16.gmra.mxu0 %v7246
    %v7285 = vpop.f32.mrf.mxu0
    %v7286 = vadd.f32 0.0, %v7285
    %v7287 = vpop.f32.mrf.mxu0
    %v7288 = vpop.f32.mrf.mxu0
    %v7289 = vadd.f32 0.0, %v7288
    %v7290 = vpop.f32.mrf.mxu0
    %7291 = vdwg.mxu0
    %7292 = vrot.lane.b32.xlu0 %v1141, 32
    %v7293 = vpop.permute.xlu0 %7292
    %7294 = vrot.lane.b32.xlu0 %v1157, 32
    %v7295 = vpop.permute.xlu0 %7294
    %v7297 = vsel %vm1191, %v7293, 0
    %v7300 = vsel %vm1191, %v7295, 0
    %7302 = vmatprep.subr.bf16.mxu0 0
    %7303 = vmatpush1.bf16.xpose.msra.mxu0 0
    %7304 = vmatprep.subr.bf16.mxu0 0
    %7305 = vmatpush1.bf16.xpose.msra.mxu0 0
    %7306 = vmatprep.subr.bf16.mxu0 0
    %7307 = vmatpush1.bf16.xpose.msra.mxu0 0
    %7308 = vmatprep.subr.bf16.mxu0 0
    %7309 = vmatpush1.bf16.xpose.msra.mxu0 0
    %7310 = vmatprep.subr.bf16.mxu0 0
    %7311 = vmatpush1.bf16.xpose.msra.mxu0 0
    %7312 = vmatprep.subr.bf16.mxu0 0
    %7313 = vmatpush1.bf16.xpose.msra.mxu0 0
    %7314 = vmatprep.subr.bf16.mxu0 0
    %7315 = vmatpush1.bf16.xpose.msra.mxu0 0
    %7316 = vmatprep.subr.bf16.mxu0 0
    %7317 = vmatpush1.bf16.xpose.msra.mxu0 %v7300
    %7318 = vmatprep.subr.bf16.mxu0 0
    %7319 = vmatpush2.bf16.xpose.msra.mxu0 0
    %7320 = vmatprep.subr.bf16.mxu0 0
    %7321 = vmatpush2.bf16.xpose.msra.mxu0 0
    %7322 = vmatprep.subr.bf16.mxu0 0
    %7323 = vmatpush2.bf16.xpose.msra.mxu0 0
    %7324 = vmatprep.subr.bf16.mxu0 0
    %7325 = vmatpush2.bf16.xpose.msra.mxu0 0
    %7326 = vmatprep.subr.bf16.mxu0 0
    %7327 = vmatpush2.bf16.xpose.msra.mxu0 0
    %7328 = vmatprep.subr.bf16.mxu0 0
    %7329 = vmatpush2.bf16.xpose.msra.mxu0 0
    %7330 = vmatprep.subr.bf16.mxu0 0
    %7331 = vmatpush2.bf16.xpose.msra.mxu0 0
    %7332 = vmatprep.subr.bf16.mxu0 0
    %7333 = vmatpush2.bf16.xpose.msra.mxu0 0
    %7334 = vmatprep.mubr.bf16.mxu0 0
    %7335 = vmatmul.mubr.bf16.gmra.mxu0 %v7297
    %v7336 = vpop.f32.mrf.mxu0
    %v7337 = vadd.f32 0.0, %v7336
    %v7338 = vpop.f32.mrf.mxu0
    %v7339 = vpop.f32.mrf.mxu0
    %v7340 = vadd.f32 0.0, %v7339
    %v7341 = vpop.f32.mrf.mxu0
    %7342 = vdwg.mxu0
    %7343 = vrot.lane.b32.xlu0 %v1142, 32
    %v7344 = vpop.permute.xlu0 %7343
    %7345 = vrot.lane.b32.xlu0 %v1158, 32
    %v7346 = vpop.permute.xlu0 %7345
    %v7348 = vsel %vm1191, %v7344, 0
    %v7351 = vsel %vm1191, %v7346, 0
    %7353 = vmatprep.subr.bf16.mxu0 0
    %7354 = vmatpush1.bf16.xpose.msra.mxu0 0
    %7355 = vmatprep.subr.bf16.mxu0 0
    %7356 = vmatpush1.bf16.xpose.msra.mxu0 0
    %7357 = vmatprep.subr.bf16.mxu0 0
    %7358 = vmatpush1.bf16.xpose.msra.mxu0 0
    %7359 = vmatprep.subr.bf16.mxu0 0
    %7360 = vmatpush1.bf16.xpose.msra.mxu0 0
    %7361 = vmatprep.subr.bf16.mxu0 0
    %7362 = vmatpush1.bf16.xpose.msra.mxu0 0
    %7363 = vmatprep.subr.bf16.mxu0 0
    %7364 = vmatpush1.bf16.xpose.msra.mxu0 0
    %7365 = vmatprep.subr.bf16.mxu0 0
    %7366 = vmatpush1.bf16.xpose.msra.mxu0 0
    %7367 = vmatprep.subr.bf16.mxu0 0
    %7368 = vmatpush1.bf16.xpose.msra.mxu0 %v7351
    %7369 = vmatprep.subr.bf16.mxu0 0
    %7370 = vmatpush2.bf16.xpose.msra.mxu0 0
    %7371 = vmatprep.subr.bf16.mxu0 0
    %7372 = vmatpush2.bf16.xpose.msra.mxu0 0
    %7373 = vmatprep.subr.bf16.mxu0 0
    %7374 = vmatpush2.bf16.xpose.msra.mxu0 0
    %7375 = vmatprep.subr.bf16.mxu0 0
    %7376 = vmatpush2.bf16.xpose.msra.mxu0 0
    %7377 = vmatprep.subr.bf16.mxu0 0
    %7378 = vmatpush2.bf16.xpose.msra.mxu0 0
    %7379 = vmatprep.subr.bf16.mxu0 0
    %7380 = vmatpush2.bf16.xpose.msra.mxu0 0
    %7381 = vmatprep.subr.bf16.mxu0 0
    %7382 = vmatpush2.bf16.xpose.msra.mxu0 0
    %7383 = vmatprep.subr.bf16.mxu0 0
    %7384 = vmatpush2.bf16.xpose.msra.mxu0 0
    %7385 = vmatprep.mubr.bf16.mxu0 0
    %7386 = vmatmul.mubr.bf16.gmra.mxu0 %v7348
    %v7387 = vpop.f32.mrf.mxu0
    %v7388 = vadd.f32 0.0, %v7387
    %v7389 = vpop.f32.mrf.mxu0
    %v7390 = vpop.f32.mrf.mxu0
    %v7391 = vadd.f32 0.0, %v7390
    %v7392 = vpop.f32.mrf.mxu0
    %7393 = vdwg.mxu0
    %7394 = vrot.lane.b32.xlu0 %v1143, 32
    %v7395 = vpop.permute.xlu0 %7394
    %7396 = vrot.lane.b32.xlu0 %v1159, 32
    %v7397 = vpop.permute.xlu0 %7396
    %v7399 = vsel %vm1191, %v7395, 0
    %v7402 = vsel %vm1191, %v7397, 0
    %7404 = vmatprep.subr.bf16.mxu0 0
    %7405 = vmatpush1.bf16.xpose.msra.mxu0 0
    %7406 = vmatprep.subr.bf16.mxu0 0
    %7407 = vmatpush1.bf16.xpose.msra.mxu0 0
    %7408 = vmatprep.subr.bf16.mxu0 0
    %7409 = vmatpush1.bf16.xpose.msra.mxu0 0
    %7410 = vmatprep.subr.bf16.mxu0 0
    %7411 = vmatpush1.bf16.xpose.msra.mxu0 0
    %7412 = vmatprep.subr.bf16.mxu0 0
    %7413 = vmatpush1.bf16.xpose.msra.mxu0 0
    %7414 = vmatprep.subr.bf16.mxu0 0
    %7415 = vmatpush1.bf16.xpose.msra.mxu0 0
    %7416 = vmatprep.subr.bf16.mxu0 0
    %7417 = vmatpush1.bf16.xpose.msra.mxu0 0
    %7418 = vmatprep.subr.bf16.mxu0 0
    %7419 = vmatpush1.bf16.xpose.msra.mxu0 %v7402
    %7420 = vmatprep.subr.bf16.mxu0 0
    %7421 = vmatpush2.bf16.xpose.msra.mxu0 0
    %7422 = vmatprep.subr.bf16.mxu0 0
    %7423 = vmatpush2.bf16.xpose.msra.mxu0 0
    %7424 = vmatprep.subr.bf16.mxu0 0
    %7425 = vmatpush2.bf16.xpose.msra.mxu0 0
    %7426 = vmatprep.subr.bf16.mxu0 0
    %7427 = vmatpush2.bf16.xpose.msra.mxu0 0
    %7428 = vmatprep.subr.bf16.mxu0 0
    %7429 = vmatpush2.bf16.xpose.msra.mxu0 0
    %7430 = vmatprep.subr.bf16.mxu0 0
    %7431 = vmatpush2.bf16.xpose.msra.mxu0 0
    %7432 = vmatprep.subr.bf16.mxu0 0
    %7433 = vmatpush2.bf16.xpose.msra.mxu0 0
    %7434 = vmatprep.subr.bf16.mxu0 0
    %7435 = vmatpush2.bf16.xpose.msra.mxu0 0
    %7436 = vmatprep.mubr.bf16.mxu0 0
    %7437 = vmatmul.mubr.bf16.gmra.mxu0 %v7399
    %v7438 = vpop.f32.mrf.mxu0
    %v7439 = vadd.f32 0.0, %v7438
    %v7440 = vpop.f32.mrf.mxu0
    %v7441 = vpop.f32.mrf.mxu0
    %v7442 = vadd.f32 0.0, %v7441
    %v7443 = vpop.f32.mrf.mxu0
    %7444 = vdwg.mxu0
    %7445 = vrot.lane.b32.xlu0 %v1144, 32
    %v7446 = vpop.permute.xlu0 %7445
    %7447 = vrot.lane.b32.xlu0 %v1160, 32
    %v7448 = vpop.permute.xlu0 %7447
    %v7450 = vsel %vm1191, %v7446, 0
    %v7453 = vsel %vm1191, %v7448, 0
    %7455 = vmatprep.subr.bf16.mxu0 0
    %7456 = vmatpush1.bf16.xpose.msra.mxu0 0
    %7457 = vmatprep.subr.bf16.mxu0 0
    %7458 = vmatpush1.bf16.xpose.msra.mxu0 0
    %7459 = vmatprep.subr.bf16.mxu0 0
    %7460 = vmatpush1.bf16.xpose.msra.mxu0 0
    %7461 = vmatprep.subr.bf16.mxu0 0
    %7462 = vmatpush1.bf16.xpose.msra.mxu0 0
    %7463 = vmatprep.subr.bf16.mxu0 0
    %7464 = vmatpush1.bf16.xpose.msra.mxu0 0
    %7465 = vmatprep.subr.bf16.mxu0 0
    %7466 = vmatpush1.bf16.xpose.msra.mxu0 0
    %7467 = vmatprep.subr.bf16.mxu0 0
    %7468 = vmatpush1.bf16.xpose.msra.mxu0 0
    %7469 = vmatprep.subr.bf16.mxu0 0
    %7470 = vmatpush1.bf16.xpose.msra.mxu0 %v7453
    %7471 = vmatprep.subr.bf16.mxu0 0
    %7472 = vmatpush2.bf16.xpose.msra.mxu0 0
    %7473 = vmatprep.subr.bf16.mxu0 0
    %7474 = vmatpush2.bf16.xpose.msra.mxu0 0
    %7475 = vmatprep.subr.bf16.mxu0 0
    %7476 = vmatpush2.bf16.xpose.msra.mxu0 0
    %7477 = vmatprep.subr.bf16.mxu0 0
    %7478 = vmatpush2.bf16.xpose.msra.mxu0 0
    %7479 = vmatprep.subr.bf16.mxu0 0
    %7480 = vmatpush2.bf16.xpose.msra.mxu0 0
    %7481 = vmatprep.subr.bf16.mxu0 0
    %7482 = vmatpush2.bf16.xpose.msra.mxu0 0
    %7483 = vmatprep.subr.bf16.mxu0 0
    %7484 = vmatpush2.bf16.xpose.msra.mxu0 0
    %7485 = vmatprep.subr.bf16.mxu0 0
    %7486 = vmatpush2.bf16.xpose.msra.mxu0 0
    %7487 = vmatprep.mubr.bf16.mxu0 0
    %7488 = vmatmul.mubr.bf16.gmra.mxu0 %v7450
    %v7489 = vpop.f32.mrf.mxu0
    %v7490 = vadd.f32 0.0, %v7489
    %v7491 = vpop.f32.mrf.mxu0
    %v7492 = vpop.f32.mrf.mxu0
    %v7493 = vadd.f32 0.0, %v7492
    %v7494 = vpop.f32.mrf.mxu0
    %7495 = vdwg.mxu0
    %7496 = vrot.lane.b32.xlu0 %v1145, 32
    %v7497 = vpop.permute.xlu0 %7496
    %7498 = vrot.lane.b32.xlu0 %v1161, 32
    %v7499 = vpop.permute.xlu0 %7498
    %v7501 = vsel %vm1191, %v7497, 0
    %v7504 = vsel %vm1191, %v7499, 0
    %7506 = vmatprep.subr.bf16.mxu0 0
    %7507 = vmatpush1.bf16.xpose.msra.mxu0 0
    %7508 = vmatprep.subr.bf16.mxu0 0
    %7509 = vmatpush1.bf16.xpose.msra.mxu0 0
    %7510 = vmatprep.subr.bf16.mxu0 0
    %7511 = vmatpush1.bf16.xpose.msra.mxu0 0
    %7512 = vmatprep.subr.bf16.mxu0 0
    %7513 = vmatpush1.bf16.xpose.msra.mxu0 0
    %7514 = vmatprep.subr.bf16.mxu0 0
    %7515 = vmatpush1.bf16.xpose.msra.mxu0 0
    %7516 = vmatprep.subr.bf16.mxu0 0
    %7517 = vmatpush1.bf16.xpose.msra.mxu0 0
    %7518 = vmatprep.subr.bf16.mxu0 0
    %7519 = vmatpush1.bf16.xpose.msra.mxu0 0
    %7520 = vmatprep.subr.bf16.mxu0 0
    %7521 = vmatpush1.bf16.xpose.msra.mxu0 %v7504
    %7522 = vmatprep.subr.bf16.mxu0 0
    %7523 = vmatpush2.bf16.xpose.msra.mxu0 0
    %7524 = vmatprep.subr.bf16.mxu0 0
    %7525 = vmatpush2.bf16.xpose.msra.mxu0 0
    %7526 = vmatprep.subr.bf16.mxu0 0
    %7527 = vmatpush2.bf16.xpose.msra.mxu0 0
    %7528 = vmatprep.subr.bf16.mxu0 0
    %7529 = vmatpush2.bf16.xpose.msra.mxu0 0
    %7530 = vmatprep.subr.bf16.mxu0 0
    %7531 = vmatpush2.bf16.xpose.msra.mxu0 0
    %7532 = vmatprep.subr.bf16.mxu0 0
    %7533 = vmatpush2.bf16.xpose.msra.mxu0 0
    %7534 = vmatprep.subr.bf16.mxu0 0
    %7535 = vmatpush2.bf16.xpose.msra.mxu0 0
    %7536 = vmatprep.subr.bf16.mxu0 0
    %7537 = vmatpush2.bf16.xpose.msra.mxu0 0
    %7538 = vmatprep.mubr.bf16.mxu0 0
    %7539 = vmatmul.mubr.bf16.gmra.mxu0 %v7501
    %v7540 = vpop.f32.mrf.mxu0
    %v7541 = vadd.f32 0.0, %v7540
    %v7542 = vpop.f32.mrf.mxu0
    %v7543 = vpop.f32.mrf.mxu0
    %v7544 = vadd.f32 0.0, %v7543
    %v7545 = vpop.f32.mrf.mxu0
    %7546 = vdwg.mxu0
    %7547 = vrot.lane.b32.xlu0 %v1146, 32
    %v7548 = vpop.permute.xlu0 %7547
    %7549 = vrot.lane.b32.xlu0 %v1162, 32
    %v7550 = vpop.permute.xlu0 %7549
    %v7552 = vsel %vm1191, %v7548, 0
    %v7555 = vsel %vm1191, %v7550, 0
    %7557 = vmatprep.subr.bf16.mxu0 0
    %7558 = vmatpush1.bf16.xpose.msra.mxu0 0
    %7559 = vmatprep.subr.bf16.mxu0 0
    %7560 = vmatpush1.bf16.xpose.msra.mxu0 0
    %7561 = vmatprep.subr.bf16.mxu0 0
    %7562 = vmatpush1.bf16.xpose.msra.mxu0 0
    %7563 = vmatprep.subr.bf16.mxu0 0
    %7564 = vmatpush1.bf16.xpose.msra.mxu0 0
    %7565 = vmatprep.subr.bf16.mxu0 0
    %7566 = vmatpush1.bf16.xpose.msra.mxu0 0
    %7567 = vmatprep.subr.bf16.mxu0 0
    %7568 = vmatpush1.bf16.xpose.msra.mxu0 0
    %7569 = vmatprep.subr.bf16.mxu0 0
    %7570 = vmatpush1.bf16.xpose.msra.mxu0 0
    %7571 = vmatprep.subr.bf16.mxu0 0
    %7572 = vmatpush1.bf16.xpose.msra.mxu0 %v7555
    %7573 = vmatprep.subr.bf16.mxu0 0
    %7574 = vmatpush2.bf16.xpose.msra.mxu0 0
    %7575 = vmatprep.subr.bf16.mxu0 0
    %7576 = vmatpush2.bf16.xpose.msra.mxu0 0
    %7577 = vmatprep.subr.bf16.mxu0 0
    %7578 = vmatpush2.bf16.xpose.msra.mxu0 0
    %7579 = vmatprep.subr.bf16.mxu0 0
    %7580 = vmatpush2.bf16.xpose.msra.mxu0 0
    %7581 = vmatprep.subr.bf16.mxu0 0
    %7582 = vmatpush2.bf16.xpose.msra.mxu0 0
    %7583 = vmatprep.subr.bf16.mxu0 0
    %7584 = vmatpush2.bf16.xpose.msra.mxu0 0
    %7585 = vmatprep.subr.bf16.mxu0 0
    %7586 = vmatpush2.bf16.xpose.msra.mxu0 0
    %7587 = vmatprep.subr.bf16.mxu0 0
    %7588 = vmatpush2.bf16.xpose.msra.mxu0 0
    %7589 = vmatprep.mubr.bf16.mxu0 0
    %7590 = vmatmul.mubr.bf16.gmra.mxu0 %v7552
    %v7591 = vpop.f32.mrf.mxu0
    %v7592 = vadd.f32 0.0, %v7591
    %v7593 = vpop.f32.mrf.mxu0
    %v7594 = vpop.f32.mrf.mxu0
    %v7595 = vadd.f32 0.0, %v7594
    %v7596 = vpop.f32.mrf.mxu0
    %7597 = vdwg.mxu0
    %7598 = vrot.lane.b32.xlu0 %v1147, 32
    %v7599 = vpop.permute.xlu0 %7598
    %7600 = vrot.lane.b32.xlu0 %v1163, 32
    %v7601 = vpop.permute.xlu0 %7600
    %v7603 = vsel %vm1191, %v7599, 0
    %v7606 = vsel %vm1191, %v7601, 0
    %7608 = vmatprep.subr.bf16.mxu0 0
    %7609 = vmatpush1.bf16.xpose.msra.mxu0 0
    %7610 = vmatprep.subr.bf16.mxu0 0
    %7611 = vmatpush1.bf16.xpose.msra.mxu0 0
    %7612 = vmatprep.subr.bf16.mxu0 0
    %7613 = vmatpush1.bf16.xpose.msra.mxu0 0
    %7614 = vmatprep.subr.bf16.mxu0 0
    %7615 = vmatpush1.bf16.xpose.msra.mxu0 0
    %7616 = vmatprep.subr.bf16.mxu0 0
    %7617 = vmatpush1.bf16.xpose.msra.mxu0 0
    %7618 = vmatprep.subr.bf16.mxu0 0
    %7619 = vmatpush1.bf16.xpose.msra.mxu0 0
    %7620 = vmatprep.subr.bf16.mxu0 0
    %7621 = vmatpush1.bf16.xpose.msra.mxu0 0
    %7622 = vmatprep.subr.bf16.mxu0 0
    %7623 = vmatpush1.bf16.xpose.msra.mxu0 %v7606
    %7624 = vmatprep.subr.bf16.mxu0 0
    %7625 = vmatpush2.bf16.xpose.msra.mxu0 0
    %7626 = vmatprep.subr.bf16.mxu0 0
    %7627 = vmatpush2.bf16.xpose.msra.mxu0 0
    %7628 = vmatprep.subr.bf16.mxu0 0
    %7629 = vmatpush2.bf16.xpose.msra.mxu0 0
    %7630 = vmatprep.subr.bf16.mxu0 0
    %7631 = vmatpush2.bf16.xpose.msra.mxu0 0
    %7632 = vmatprep.subr.bf16.mxu0 0
    %7633 = vmatpush2.bf16.xpose.msra.mxu0 0
    %7634 = vmatprep.subr.bf16.mxu0 0
    %7635 = vmatpush2.bf16.xpose.msra.mxu0 0
    %7636 = vmatprep.subr.bf16.mxu0 0
    %7637 = vmatpush2.bf16.xpose.msra.mxu0 0
    %7638 = vmatprep.subr.bf16.mxu0 0
    %7639 = vmatpush2.bf16.xpose.msra.mxu0 0
    %7640 = vmatprep.mubr.bf16.mxu0 0
    %7641 = vmatmul.mubr.bf16.gmra.mxu0 %v7603
    %v7642 = vpop.f32.mrf.mxu0
    %v7643 = vadd.f32 0.0, %v7642
    %v7644 = vpop.f32.mrf.mxu0
    %v7645 = vpop.f32.mrf.mxu0
    %v7646 = vadd.f32 0.0, %v7645
    %v7647 = vpop.f32.mrf.mxu0
    %7648 = vdwg.mxu0
    %7649 = vrot.lane.b32.xlu0 %v1148, 32
    %v7650 = vpop.permute.xlu0 %7649
    %7651 = vrot.lane.b32.xlu0 %v1164, 32
    %v7652 = vpop.permute.xlu0 %7651
    %v7654 = vsel %vm1191, %v7650, 0
    %v7657 = vsel %vm1191, %v7652, 0
    %7659 = vmatprep.subr.bf16.mxu0 0
    %7660 = vmatpush1.bf16.xpose.msra.mxu0 0
    %7661 = vmatprep.subr.bf16.mxu0 0
    %7662 = vmatpush1.bf16.xpose.msra.mxu0 0
    %7663 = vmatprep.subr.bf16.mxu0 0
    %7664 = vmatpush1.bf16.xpose.msra.mxu0 0
    %7665 = vmatprep.subr.bf16.mxu0 0
    %7666 = vmatpush1.bf16.xpose.msra.mxu0 0
    %7667 = vmatprep.subr.bf16.mxu0 0
    %7668 = vmatpush1.bf16.xpose.msra.mxu0 0
    %7669 = vmatprep.subr.bf16.mxu0 0
    %7670 = vmatpush1.bf16.xpose.msra.mxu0 0
    %7671 = vmatprep.subr.bf16.mxu0 0
    %7672 = vmatpush1.bf16.xpose.msra.mxu0 0
    %7673 = vmatprep.subr.bf16.mxu0 0
    %7674 = vmatpush1.bf16.xpose.msra.mxu0 %v7657
    %7675 = vmatprep.subr.bf16.mxu0 0
    %7676 = vmatpush2.bf16.xpose.msra.mxu0 0
    %7677 = vmatprep.subr.bf16.mxu0 0
    %7678 = vmatpush2.bf16.xpose.msra.mxu0 0
    %7679 = vmatprep.subr.bf16.mxu0 0
    %7680 = vmatpush2.bf16.xpose.msra.mxu0 0
    %7681 = vmatprep.subr.bf16.mxu0 0
    %7682 = vmatpush2.bf16.xpose.msra.mxu0 0
    %7683 = vmatprep.subr.bf16.mxu0 0
    %7684 = vmatpush2.bf16.xpose.msra.mxu0 0
    %7685 = vmatprep.subr.bf16.mxu0 0
    %7686 = vmatpush2.bf16.xpose.msra.mxu0 0
    %7687 = vmatprep.subr.bf16.mxu0 0
    %7688 = vmatpush2.bf16.xpose.msra.mxu0 0
    %7689 = vmatprep.subr.bf16.mxu0 0
    %7690 = vmatpush2.bf16.xpose.msra.mxu0 0
    %7691 = vmatprep.mubr.bf16.mxu0 0
    %7692 = vmatmul.mubr.bf16.gmra.mxu0 %v7654
    %v7693 = vpop.f32.mrf.mxu0
    %v7694 = vadd.f32 0.0, %v7693
    %v7695 = vpop.f32.mrf.mxu0
    %v7696 = vpop.f32.mrf.mxu0
    %v7697 = vadd.f32 0.0, %v7696
    %v7698 = vpop.f32.mrf.mxu0
    %7699 = vdwg.mxu0
    %7700 = vrot.lane.b32.xlu0 %v1149, 32
    %v7701 = vpop.permute.xlu0 %7700
    %7702 = vrot.lane.b32.xlu0 %v1165, 32
    %v7703 = vpop.permute.xlu0 %7702
    %v7705 = vsel %vm1191, %v7701, 0
    %v7708 = vsel %vm1191, %v7703, 0
    %7710 = vmatprep.subr.bf16.mxu0 0
    %7711 = vmatpush1.bf16.xpose.msra.mxu0 0
    %7712 = vmatprep.subr.bf16.mxu0 0
    %7713 = vmatpush1.bf16.xpose.msra.mxu0 0
    %7714 = vmatprep.subr.bf16.mxu0 0
    %7715 = vmatpush1.bf16.xpose.msra.mxu0 0
    %7716 = vmatprep.subr.bf16.mxu0 0
    %7717 = vmatpush1.bf16.xpose.msra.mxu0 0
    %7718 = vmatprep.subr.bf16.mxu0 0
    %7719 = vmatpush1.bf16.xpose.msra.mxu0 0
    %7720 = vmatprep.subr.bf16.mxu0 0
    %7721 = vmatpush1.bf16.xpose.msra.mxu0 0
    %7722 = vmatprep.subr.bf16.mxu0 0
    %7723 = vmatpush1.bf16.xpose.msra.mxu0 0
    %7724 = vmatprep.subr.bf16.mxu0 0
    %7725 = vmatpush1.bf16.xpose.msra.mxu0 %v7708
    %7726 = vmatprep.subr.bf16.mxu0 0
    %7727 = vmatpush2.bf16.xpose.msra.mxu0 0
    %7728 = vmatprep.subr.bf16.mxu0 0
    %7729 = vmatpush2.bf16.xpose.msra.mxu0 0
    %7730 = vmatprep.subr.bf16.mxu0 0
    %7731 = vmatpush2.bf16.xpose.msra.mxu0 0
    %7732 = vmatprep.subr.bf16.mxu0 0
    %7733 = vmatpush2.bf16.xpose.msra.mxu0 0
    %7734 = vmatprep.subr.bf16.mxu0 0
    %7735 = vmatpush2.bf16.xpose.msra.mxu0 0
    %7736 = vmatprep.subr.bf16.mxu0 0
    %7737 = vmatpush2.bf16.xpose.msra.mxu0 0
    %7738 = vmatprep.subr.bf16.mxu0 0
    %7739 = vmatpush2.bf16.xpose.msra.mxu0 0
    %7740 = vmatprep.subr.bf16.mxu0 0
    %7741 = vmatpush2.bf16.xpose.msra.mxu0 0
    %7742 = vmatprep.mubr.bf16.mxu0 0
    %7743 = vmatmul.mubr.bf16.gmra.mxu0 %v7705
    %v7744 = vpop.f32.mrf.mxu0
    %v7745 = vadd.f32 0.0, %v7744
    %v7746 = vpop.f32.mrf.mxu0
    %v7747 = vpop.f32.mrf.mxu0
    %v7748 = vadd.f32 0.0, %v7747
    %v7749 = vpop.f32.mrf.mxu0
    %7750 = vdwg.mxu0
    %7751 = vrot.lane.b32.xlu0 %v1150, 32
    %v7752 = vpop.permute.xlu0 %7751
    %7753 = vrot.lane.b32.xlu0 %v1166, 32
    %v7754 = vpop.permute.xlu0 %7753
    %v7756 = vsel %vm1191, %v7752, 0
    %v7759 = vsel %vm1191, %v7754, 0
    %7761 = vmatprep.subr.bf16.mxu0 0
    %7762 = vmatpush1.bf16.xpose.msra.mxu0 0
    %7763 = vmatprep.subr.bf16.mxu0 0
    %7764 = vmatpush1.bf16.xpose.msra.mxu0 0
    %7765 = vmatprep.subr.bf16.mxu0 0
    %7766 = vmatpush1.bf16.xpose.msra.mxu0 0
    %7767 = vmatprep.subr.bf16.mxu0 0
    %7768 = vmatpush1.bf16.xpose.msra.mxu0 0
    %7769 = vmatprep.subr.bf16.mxu0 0
    %7770 = vmatpush1.bf16.xpose.msra.mxu0 0
    %7771 = vmatprep.subr.bf16.mxu0 0
    %7772 = vmatpush1.bf16.xpose.msra.mxu0 0
    %7773 = vmatprep.subr.bf16.mxu0 0
    %7774 = vmatpush1.bf16.xpose.msra.mxu0 0
    %7775 = vmatprep.subr.bf16.mxu0 0
    %7776 = vmatpush1.bf16.xpose.msra.mxu0 %v7759
    %7777 = vmatprep.subr.bf16.mxu0 0
    %7778 = vmatpush2.bf16.xpose.msra.mxu0 0
    %7779 = vmatprep.subr.bf16.mxu0 0
    %7780 = vmatpush2.bf16.xpose.msra.mxu0 0
    %7781 = vmatprep.subr.bf16.mxu0 0
    %7782 = vmatpush2.bf16.xpose.msra.mxu0 0
    %7783 = vmatprep.subr.bf16.mxu0 0
    %7784 = vmatpush2.bf16.xpose.msra.mxu0 0
    %7785 = vmatprep.subr.bf16.mxu0 0
    %7786 = vmatpush2.bf16.xpose.msra.mxu0 0
    %7787 = vmatprep.subr.bf16.mxu0 0
    %7788 = vmatpush2.bf16.xpose.msra.mxu0 0
    %7789 = vmatprep.subr.bf16.mxu0 0
    %7790 = vmatpush2.bf16.xpose.msra.mxu0 0
    %7791 = vmatprep.subr.bf16.mxu0 0
    %7792 = vmatpush2.bf16.xpose.msra.mxu0 0
    %7793 = vmatprep.mubr.bf16.mxu0 0
    %7794 = vmatmul.mubr.bf16.gmra.mxu0 %v7756
    %v7795 = vpop.f32.mrf.mxu0
    %v7796 = vadd.f32 0.0, %v7795
    %v7797 = vpop.f32.mrf.mxu0
    %v7798 = vpop.f32.mrf.mxu0
    %v7799 = vadd.f32 0.0, %v7798
    %v7800 = vpop.f32.mrf.mxu0
    %7801 = vdwg.mxu0
    %7802 = vrot.lane.b32.xlu0 %v1151, 32
    %v7803 = vpop.permute.xlu0 %7802
    %7804 = vrot.lane.b32.xlu0 %v1167, 32
    %v7805 = vpop.permute.xlu0 %7804
    %v7807 = vsel %vm1191, %v7803, 0
    %v7810 = vsel %vm1191, %v7805, 0
    %7812 = vmatprep.subr.bf16.mxu0 0
    %7813 = vmatpush1.bf16.xpose.msra.mxu0 0
    %7814 = vmatprep.subr.bf16.mxu0 0
    %7815 = vmatpush1.bf16.xpose.msra.mxu0 0
    %7816 = vmatprep.subr.bf16.mxu0 0
    %7817 = vmatpush1.bf16.xpose.msra.mxu0 0
    %7818 = vmatprep.subr.bf16.mxu0 0
    %7819 = vmatpush1.bf16.xpose.msra.mxu0 0
    %7820 = vmatprep.subr.bf16.mxu0 0
    %7821 = vmatpush1.bf16.xpose.msra.mxu0 0
    %7822 = vmatprep.subr.bf16.mxu0 0
    %7823 = vmatpush1.bf16.xpose.msra.mxu0 0
    %7824 = vmatprep.subr.bf16.mxu0 0
    %7825 = vmatpush1.bf16.xpose.msra.mxu0 0
    %7826 = vmatprep.subr.bf16.mxu0 0
    %7827 = vmatpush1.bf16.xpose.msra.mxu0 %v7810
    %7828 = vmatprep.subr.bf16.mxu0 0
    %7829 = vmatpush2.bf16.xpose.msra.mxu0 0
    %7830 = vmatprep.subr.bf16.mxu0 0
    %7831 = vmatpush2.bf16.xpose.msra.mxu0 0
    %7832 = vmatprep.subr.bf16.mxu0 0
    %7833 = vmatpush2.bf16.xpose.msra.mxu0 0
    %7834 = vmatprep.subr.bf16.mxu0 0
    %7835 = vmatpush2.bf16.xpose.msra.mxu0 0
    %7836 = vmatprep.subr.bf16.mxu0 0
    %7837 = vmatpush2.bf16.xpose.msra.mxu0 0
    %7838 = vmatprep.subr.bf16.mxu0 0
    %7839 = vmatpush2.bf16.xpose.msra.mxu0 0
    %7840 = vmatprep.subr.bf16.mxu0 0
    %7841 = vmatpush2.bf16.xpose.msra.mxu0 0
    %7842 = vmatprep.subr.bf16.mxu0 0
    %7843 = vmatpush2.bf16.xpose.msra.mxu0 0
    %7844 = vmatprep.mubr.bf16.mxu0 0
    %7845 = vmatmul.mubr.bf16.gmra.mxu0 %v7807
    %v7846 = vpop.f32.mrf.mxu0
    %v7847 = vadd.f32 0.0, %v7846
    %v7848 = vpop.f32.mrf.mxu0
    %v7849 = vpop.f32.mrf.mxu0
    %v7850 = vadd.f32 0.0, %v7849
    %v7851 = vpop.f32.mrf.mxu0
    %7852 = vdwg.mxu0
    %v7853 = vsel %vm1946, %v7082, -1e+30
    %v7854 = vsel %vm1947, %v7085, -1e+30
    %v7855 = vsel %vm1946, %v7133, -1e+30
    %v7856 = vsel %vm1947, %v7136, -1e+30
    %v7857 = vsel %vm1946, %v7184, -1e+30
    %v7858 = vsel %vm1947, %v7187, -1e+30
    %v7859 = vsel %vm1946, %v7235, -1e+30
    %v7860 = vsel %vm1947, %v7238, -1e+30
    %v7861 = vsel %vm1946, %v7286, -1e+30
    %v7862 = vsel %vm1947, %v7289, -1e+30
    %v7863 = vsel %vm1946, %v7337, -1e+30
    %v7864 = vsel %vm1947, %v7340, -1e+30
    %v7865 = vsel %vm1946, %v7388, -1e+30
    %v7866 = vsel %vm1947, %v7391, -1e+30
    %v7867 = vsel %vm1946, %v7439, -1e+30
    %v7868 = vsel %vm1947, %v7442, -1e+30
    %v7869 = vsel %vm1946, %v7490, -1e+30
    %v7870 = vsel %vm1947, %v7493, -1e+30
    %v7871 = vsel %vm1946, %v7541, -1e+30
    %v7872 = vsel %vm1947, %v7544, -1e+30
    %v7873 = vsel %vm1946, %v7592, -1e+30
    %v7874 = vsel %vm1947, %v7595, -1e+30
    %v7875 = vsel %vm1946, %v7643, -1e+30
    %v7876 = vsel %vm1947, %v7646, -1e+30
    %v7877 = vsel %vm1946, %v7694, -1e+30
    %v7878 = vsel %vm1947, %v7697, -1e+30
    %v7879 = vsel %vm1946, %v7745, -1e+30
    %v7880 = vsel %vm1947, %v7748, -1e+30
    %v7881 = vsel %vm1946, %v7796, -1e+30
    %v7882 = vsel %vm1947, %v7799, -1e+30
    %v7883 = vsel %vm1946, %v7847, -1e+30
    %v7884 = vsel %vm1947, %v7850, -1e+30
    %v7885 = vsel %vm1980, %v7853, -inf
    %7886 = vmax.xlane.f32.xlu0 %v7885
    %v7887 = vpop.xlane.xlu0 %7886
    %v7888 = vsel %vm1980, %v7854, -inf
    %7889 = vmax.xlane.f32.xlu0 %v7888
    %v7890 = vpop.xlane.xlu0 %7889
    %v7891 = vsel %vm1980, %v7855, -inf
    %7892 = vmax.xlane.f32.xlu0 %v7891
    %v7893 = vpop.xlane.xlu0 %7892
    %v7894 = vsel %vm1980, %v7856, -inf
    %7895 = vmax.xlane.f32.xlu0 %v7894
    %v7896 = vpop.xlane.xlu0 %7895
    %v7897 = vsel %vm1980, %v7857, -inf
    %7898 = vmax.xlane.f32.xlu0 %v7897
    %v7899 = vpop.xlane.xlu0 %7898
    %v7900 = vsel %vm1980, %v7858, -inf
    %7901 = vmax.xlane.f32.xlu0 %v7900
    %v7902 = vpop.xlane.xlu0 %7901
    %v7903 = vsel %vm1980, %v7859, -inf
    %7904 = vmax.xlane.f32.xlu0 %v7903
    %v7905 = vpop.xlane.xlu0 %7904
    %v7906 = vsel %vm1980, %v7860, -inf
    %7907 = vmax.xlane.f32.xlu0 %v7906
    %v7908 = vpop.xlane.xlu0 %7907
    %v7909 = vsel %vm1980, %v7861, -inf
    %7910 = vmax.xlane.f32.xlu0 %v7909
    %v7911 = vpop.xlane.xlu0 %7910
    %v7912 = vsel %vm1980, %v7862, -inf
    %7913 = vmax.xlane.f32.xlu0 %v7912
    %v7914 = vpop.xlane.xlu0 %7913
    %v7915 = vsel %vm1980, %v7863, -inf
    %7916 = vmax.xlane.f32.xlu0 %v7915
    %v7917 = vpop.xlane.xlu0 %7916
    %v7918 = vsel %vm1980, %v7864, -inf
    %7919 = vmax.xlane.f32.xlu0 %v7918
    %v7920 = vpop.xlane.xlu0 %7919
    %v7921 = vsel %vm1980, %v7865, -inf
    %7922 = vmax.xlane.f32.xlu0 %v7921
    %v7923 = vpop.xlane.xlu0 %7922
    %v7924 = vsel %vm1980, %v7866, -inf
    %7925 = vmax.xlane.f32.xlu0 %v7924
    %v7926 = vpop.xlane.xlu0 %7925
    %v7927 = vsel %vm1980, %v7867, -inf
    %7928 = vmax.xlane.f32.xlu0 %v7927
    %v7929 = vpop.xlane.xlu0 %7928
    %v7930 = vsel %vm1980, %v7868, -inf
    %7931 = vmax.xlane.f32.xlu0 %v7930
    %v7932 = vpop.xlane.xlu0 %7931
    %v7933 = vsel %vm1980, %v7869, -inf
    %7934 = vmax.xlane.f32.xlu0 %v7933
    %v7935 = vpop.xlane.xlu0 %7934
    %v7936 = vsel %vm1980, %v7870, -inf
    %7937 = vmax.xlane.f32.xlu0 %v7936
    %v7938 = vpop.xlane.xlu0 %7937
    %v7939 = vsel %vm1980, %v7871, -inf
    %7940 = vmax.xlane.f32.xlu0 %v7939
    %v7941 = vpop.xlane.xlu0 %7940
    %v7942 = vsel %vm1980, %v7872, -inf
    %7943 = vmax.xlane.f32.xlu0 %v7942
    %v7944 = vpop.xlane.xlu0 %7943
    %v7945 = vsel %vm1980, %v7873, -inf
    %7946 = vmax.xlane.f32.xlu0 %v7945
    %v7947 = vpop.xlane.xlu0 %7946
    %v7948 = vsel %vm1980, %v7874, -inf
    %7949 = vmax.xlane.f32.xlu0 %v7948
    %v7950 = vpop.xlane.xlu0 %7949
    %v7951 = vsel %vm1980, %v7875, -inf
    %7952 = vmax.xlane.f32.xlu0 %v7951
    %v7953 = vpop.xlane.xlu0 %7952
    %v7954 = vsel %vm1980, %v7876, -inf
    %7955 = vmax.xlane.f32.xlu0 %v7954
    %v7956 = vpop.xlane.xlu0 %7955
    %v7957 = vsel %vm1980, %v7877, -inf
    %7958 = vmax.xlane.f32.xlu0 %v7957
    %v7959 = vpop.xlane.xlu0 %7958
    %v7960 = vsel %vm1980, %v7878, -inf
    %7961 = vmax.xlane.f32.xlu0 %v7960
    %v7962 = vpop.xlane.xlu0 %7961
    %v7963 = vsel %vm1980, %v7879, -inf
    %7964 = vmax.xlane.f32.xlu0 %v7963
    %v7965 = vpop.xlane.xlu0 %7964
    %v7966 = vsel %vm1980, %v7880, -inf
    %7967 = vmax.xlane.f32.xlu0 %v7966
    %v7968 = vpop.xlane.xlu0 %7967
    %v7969 = vsel %vm1980, %v7881, -inf
    %7970 = vmax.xlane.f32.xlu0 %v7969
    %v7971 = vpop.xlane.xlu0 %7970
    %v7972 = vsel %vm1980, %v7882, -inf
    %7973 = vmax.xlane.f32.xlu0 %v7972
    %v7974 = vpop.xlane.xlu0 %7973
    %v7975 = vsel %vm1980, %v7883, -inf
    %7976 = vmax.xlane.f32.xlu0 %v7975
    %v7977 = vpop.xlane.xlu0 %7976
    %v7978 = vsel %vm1980, %v7884, -inf
    %7979 = vmax.xlane.f32.xlu0 %v7978
    %v7980 = vpop.xlane.xlu0 %7979
    %v7981 = vsub.f32 %v7853, %v7887
    %v7982 = vsub.f32 %v7854, %v7890
    %v7983 = vsub.f32 %v7855, %v7893
    %v7984 = vsub.f32 %v7856, %v7896
    %v7985 = vsub.f32 %v7857, %v7899
    %v7986 = vsub.f32 %v7858, %v7902
    %v7987 = vsub.f32 %v7859, %v7905
    %v7988 = vsub.f32 %v7860, %v7908
    %v7989 = vsub.f32 %v7861, %v7911
    %v7990 = vsub.f32 %v7862, %v7914
    %v7991 = vsub.f32 %v7863, %v7917
    %v7992 = vsub.f32 %v7864, %v7920
    %v7993 = vsub.f32 %v7865, %v7923
    %v7994 = vsub.f32 %v7866, %v7926
    %v7995 = vsub.f32 %v7867, %v7929
    %v7996 = vsub.f32 %v7868, %v7932
    %v7997 = vsub.f32 %v7869, %v7935
    %v7998 = vsub.f32 %v7870, %v7938
    %v7999 = vsub.f32 %v7871, %v7941
    %v8000 = vsub.f32 %v7872, %v7944
    %v8001 = vsub.f32 %v7873, %v7947
    %v8002 = vsub.f32 %v7874, %v7950
    %v8003 = vsub.f32 %v7875, %v7953
    %v8004 = vsub.f32 %v7876, %v7956
    %v8005 = vsub.f32 %v7877, %v7959
    %v8006 = vsub.f32 %v7878, %v7962
    %v8007 = vsub.f32 %v7879, %v7965
    %v8008 = vsub.f32 %v7880, %v7968
    %v8009 = vsub.f32 %v7881, %v7971
    %v8010 = vsub.f32 %v7882, %v7974
    %v8011 = vsub.f32 %v7883, %v7977
    %v8012 = vsub.f32 %v7884, %v7980
    %v8013 = vmul.f32 %v7981, 1.442695
    %v8014 = vpow.pop %v8013
    %v8015 = vmul.f32 %v7982, 1.442695
    %v8016 = vpow.pop %v8015
    %v8017 = vmul.f32 %v7983, 1.442695
    %v8018 = vpow.pop %v8017
    %v8019 = vmul.f32 %v7984, 1.442695
    %v8020 = vpow.pop %v8019
    %v8021 = vmul.f32 %v7985, 1.442695
    %v8022 = vpow.pop %v8021
    %v8023 = vmul.f32 %v7986, 1.442695
    %v8024 = vpow.pop %v8023
    %v8025 = vmul.f32 %v7987, 1.442695
    %v8026 = vpow.pop %v8025
    %v8027 = vmul.f32 %v7988, 1.442695
    %v8028 = vpow.pop %v8027
    %v8029 = vmul.f32 %v7989, 1.442695
    %v8030 = vpow.pop %v8029
    %v8031 = vmul.f32 %v7990, 1.442695
    %v8032 = vpow.pop %v8031
    %v8033 = vmul.f32 %v7991, 1.442695
    %v8034 = vpow.pop %v8033
    %v8035 = vmul.f32 %v7992, 1.442695
    %v8036 = vpow.pop %v8035
    %v8037 = vmul.f32 %v7993, 1.442695
    %v8038 = vpow.pop %v8037
    %v8039 = vmul.f32 %v7994, 1.442695
    %v8040 = vpow.pop %v8039
    %v8041 = vmul.f32 %v7995, 1.442695
    %v8042 = vpow.pop %v8041
    %v8043 = vmul.f32 %v7996, 1.442695
    %v8044 = vpow.pop %v8043
    %v8045 = vmul.f32 %v7997, 1.442695
    %v8046 = vpow.pop %v8045
    %v8047 = vmul.f32 %v7998, 1.442695
    %v8048 = vpow.pop %v8047
    %v8049 = vmul.f32 %v7999, 1.442695
    %v8050 = vpow.pop %v8049
    %v8051 = vmul.f32 %v8000, 1.442695
    %v8052 = vpow.pop %v8051
    %v8053 = vmul.f32 %v8001, 1.442695
    %v8054 = vpow.pop %v8053
    %v8055 = vmul.f32 %v8002, 1.442695
    %v8056 = vpow.pop %v8055
    %v8057 = vmul.f32 %v8003, 1.442695
    %v8058 = vpow.pop %v8057
    %v8059 = vmul.f32 %v8004, 1.442695
    %v8060 = vpow.pop %v8059
    %v8061 = vmul.f32 %v8005, 1.442695
    %v8062 = vpow.pop %v8061
    %v8063 = vmul.f32 %v8006, 1.442695
    %v8064 = vpow.pop %v8063
    %v8065 = vmul.f32 %v8007, 1.442695
    %v8066 = vpow.pop %v8065
    %v8067 = vmul.f32 %v8008, 1.442695
    %v8068 = vpow.pop %v8067
    %v8069 = vmul.f32 %v8009, 1.442695
    %v8070 = vpow.pop %v8069
    %v8071 = vmul.f32 %v8010, 1.442695
    %v8072 = vpow.pop %v8071
    %v8073 = vmul.f32 %v8011, 1.442695
    %v8074 = vpow.pop %v8073
    %v8075 = vmul.f32 %v8012, 1.442695
    %v8076 = vpow.pop %v8075
    %v8077 = vsel %vm1980, %v8014, 0.0
    %8078 = vadd.xlane.f32.xlu0 %v8077
    %v8079 = vpop.xlane.xlu0 %8078
    %v8080 = vsel %vm1980, %v8016, 0.0
    %8081 = vadd.xlane.f32.xlu0 %v8080
    %v8082 = vpop.xlane.xlu0 %8081
    %v8083 = vsel %vm1980, %v8018, 0.0
    %8084 = vadd.xlane.f32.xlu0 %v8083
    %v8085 = vpop.xlane.xlu0 %8084
    %v8086 = vsel %vm1980, %v8020, 0.0
    %8087 = vadd.xlane.f32.xlu0 %v8086
    %v8088 = vpop.xlane.xlu0 %8087
    %v8089 = vsel %vm1980, %v8022, 0.0
    %8090 = vadd.xlane.f32.xlu0 %v8089
    %v8091 = vpop.xlane.xlu0 %8090
    %v8092 = vsel %vm1980, %v8024, 0.0
    %8093 = vadd.xlane.f32.xlu0 %v8092
    %v8094 = vpop.xlane.xlu0 %8093
    %v8095 = vsel %vm1980, %v8026, 0.0
    %8096 = vadd.xlane.f32.xlu0 %v8095
    %v8097 = vpop.xlane.xlu0 %8096
    %v8098 = vsel %vm1980, %v8028, 0.0
    %8099 = vadd.xlane.f32.xlu0 %v8098
    %v8100 = vpop.xlane.xlu0 %8099
    %v8101 = vsel %vm1980, %v8030, 0.0
    %8102 = vadd.xlane.f32.xlu0 %v8101
    %v8103 = vpop.xlane.xlu0 %8102
    %v8104 = vsel %vm1980, %v8032, 0.0
    %8105 = vadd.xlane.f32.xlu0 %v8104
    %v8106 = vpop.xlane.xlu0 %8105
    %v8107 = vsel %vm1980, %v8034, 0.0
    %8108 = vadd.xlane.f32.xlu0 %v8107
    %v8109 = vpop.xlane.xlu0 %8108
    %v8110 = vsel %vm1980, %v8036, 0.0
    %8111 = vadd.xlane.f32.xlu0 %v8110
    %v8112 = vpop.xlane.xlu0 %8111
    %v8113 = vsel %vm1980, %v8038, 0.0
    %8114 = vadd.xlane.f32.xlu0 %v8113
    %v8115 = vpop.xlane.xlu0 %8114
    %v8116 = vsel %vm1980, %v8040, 0.0
    %8117 = vadd.xlane.f32.xlu0 %v8116
    %v8118 = vpop.xlane.xlu0 %8117
    %v8119 = vsel %vm1980, %v8042, 0.0
    %8120 = vadd.xlane.f32.xlu0 %v8119
    %v8121 = vpop.xlane.xlu0 %8120
    %v8122 = vsel %vm1980, %v8044, 0.0
    %8123 = vadd.xlane.f32.xlu0 %v8122
    %v8124 = vpop.xlane.xlu0 %8123
    %v8125 = vsel %vm1980, %v8046, 0.0
    %8126 = vadd.xlane.f32.xlu0 %v8125
    %v8127 = vpop.xlane.xlu0 %8126
    %v8128 = vsel %vm1980, %v8048, 0.0
    %8129 = vadd.xlane.f32.xlu0 %v8128
    %v8130 = vpop.xlane.xlu0 %8129
    %v8131 = vsel %vm1980, %v8050, 0.0
    %8132 = vadd.xlane.f32.xlu0 %v8131
    %v8133 = vpop.xlane.xlu0 %8132
    %v8134 = vsel %vm1980, %v8052, 0.0
    %8135 = vadd.xlane.f32.xlu0 %v8134
    %v8136 = vpop.xlane.xlu0 %8135
    %v8137 = vsel %vm1980, %v8054, 0.0
    %8138 = vadd.xlane.f32.xlu0 %v8137
    %v8139 = vpop.xlane.xlu0 %8138
    %v8140 = vsel %vm1980, %v8056, 0.0
    %8141 = vadd.xlane.f32.xlu0 %v8140
    %v8142 = vpop.xlane.xlu0 %8141
    %v8143 = vsel %vm1980, %v8058, 0.0
    %8144 = vadd.xlane.f32.xlu0 %v8143
    %v8145 = vpop.xlane.xlu0 %8144
    %v8146 = vsel %vm1980, %v8060, 0.0
    %8147 = vadd.xlane.f32.xlu0 %v8146
    %v8148 = vpop.xlane.xlu0 %8147
    %v8149 = vsel %vm1980, %v8062, 0.0
    %8150 = vadd.xlane.f32.xlu0 %v8149
    %v8151 = vpop.xlane.xlu0 %8150
    %v8152 = vsel %vm1980, %v8064, 0.0
    %8153 = vadd.xlane.f32.xlu0 %v8152
    %v8154 = vpop.xlane.xlu0 %8153
    %v8155 = vsel %vm1980, %v8066, 0.0
    %8156 = vadd.xlane.f32.xlu0 %v8155
    %v8157 = vpop.xlane.xlu0 %8156
    %v8158 = vsel %vm1980, %v8068, 0.0
    %8159 = vadd.xlane.f32.xlu0 %v8158
    %v8160 = vpop.xlane.xlu0 %8159
    %v8161 = vsel %vm1980, %v8070, 0.0
    %8162 = vadd.xlane.f32.xlu0 %v8161
    %v8163 = vpop.xlane.xlu0 %8162
    %v8164 = vsel %vm1980, %v8072, 0.0
    %8165 = vadd.xlane.f32.xlu0 %v8164
    %v8166 = vpop.xlane.xlu0 %8165
    %v8167 = vsel %vm1980, %v8074, 0.0
    %8168 = vadd.xlane.f32.xlu0 %v8167
    %v8169 = vpop.xlane.xlu0 %8168
    %v8170 = vsel %vm1980, %v8076, 0.0
    %8171 = vadd.xlane.f32.xlu0 %v8170
    %v8172 = vpop.xlane.xlu0 %8171
    %v8173 = vrcp.pop %v8079
    %v8174 = vrcp.pop %v8082
    %v8175 = vrcp.pop %v8085
    %v8176 = vrcp.pop %v8088
    %v8177 = vrcp.pop %v8091
    %v8178 = vrcp.pop %v8094
    %v8179 = vrcp.pop %v8097
    %v8180 = vrcp.pop %v8100
    %v8181 = vrcp.pop %v8103
    %v8182 = vrcp.pop %v8106
    %v8183 = vrcp.pop %v8109
    %v8184 = vrcp.pop %v8112
    %v8185 = vrcp.pop %v8115
    %v8186 = vrcp.pop %v8118
    %v8187 = vrcp.pop %v8121
    %v8188 = vrcp.pop %v8124
    %v8189 = vrcp.pop %v8127
    %v8190 = vrcp.pop %v8130
    %v8191 = vrcp.pop %v8133
    %v8192 = vrcp.pop %v8136
    %v8193 = vrcp.pop %v8139
    %v8194 = vrcp.pop %v8142
    %v8195 = vrcp.pop %v8145
    %v8196 = vrcp.pop %v8148
    %v8197 = vrcp.pop %v8151
    %v8198 = vrcp.pop %v8154
    %v8199 = vrcp.pop %v8157
    %v8200 = vrcp.pop %v8160
    %v8201 = vrcp.pop %v8163
    %v8202 = vrcp.pop %v8166
    %v8203 = vrcp.pop %v8169
    %v8204 = vrcp.pop %v8172
    %v8205 = vmul.f32 %v8014, %v8173
    %v8206 = vmul.f32 %v8016, %v8174
    %v8207 = vmul.f32 %v8018, %v8175
    %v8208 = vmul.f32 %v8020, %v8176
    %v8209 = vmul.f32 %v8022, %v8177
    %v8210 = vmul.f32 %v8024, %v8178
    %v8211 = vmul.f32 %v8026, %v8179
    %v8212 = vmul.f32 %v8028, %v8180
    %v8213 = vmul.f32 %v8030, %v8181
    %v8214 = vmul.f32 %v8032, %v8182
    %v8215 = vmul.f32 %v8034, %v8183
    %v8216 = vmul.f32 %v8036, %v8184
    %v8217 = vmul.f32 %v8038, %v8185
    %v8218 = vmul.f32 %v8040, %v8186
    %v8219 = vmul.f32 %v8042, %v8187
    %v8220 = vmul.f32 %v8044, %v8188
    %v8221 = vmul.f32 %v8046, %v8189
    %v8222 = vmul.f32 %v8048, %v8190
    %v8223 = vmul.f32 %v8050, %v8191
    %v8224 = vmul.f32 %v8052, %v8192
    %v8225 = vmul.f32 %v8054, %v8193
    %v8226 = vmul.f32 %v8056, %v8194
    %v8227 = vmul.f32 %v8058, %v8195
    %v8228 = vmul.f32 %v8060, %v8196
    %v8229 = vmul.f32 %v8062, %v8197
    %v8230 = vmul.f32 %v8064, %v8198
    %v8231 = vmul.f32 %v8066, %v8199
    %v8232 = vmul.f32 %v8068, %v8200
    %v8233 = vmul.f32 %v8070, %v8201
    %v8234 = vmul.f32 %v8072, %v8202
    %v8235 = vmul.f32 %v8074, %v8203
    %v8236 = vmul.f32 %v8076, %v8204
    %v8237 = vpack.c.bf16 %v8206, %v8205
    %v8238 = vpack.c.bf16 %v8208, %v8207
    %v8239 = vpack.c.bf16 %v8210, %v8209
    %v8240 = vpack.c.bf16 %v8212, %v8211
    %v8241 = vpack.c.bf16 %v8214, %v8213
    %v8242 = vpack.c.bf16 %v8216, %v8215
    %v8243 = vpack.c.bf16 %v8218, %v8217
    %v8244 = vpack.c.bf16 %v8220, %v8219
    %v8245 = vpack.c.bf16 %v8222, %v8221
    %v8246 = vpack.c.bf16 %v8224, %v8223
    %v8247 = vpack.c.bf16 %v8226, %v8225
    %v8248 = vpack.c.bf16 %v8228, %v8227
    %v8249 = vpack.c.bf16 %v8230, %v8229
    %v8250 = vpack.c.bf16 %v8232, %v8231
    %v8251 = vpack.c.bf16 %v8234, %v8233
    %v8252 = vpack.c.bf16 %v8236, %v8235
    %8253 = vrot.lane.b32.xlu0 %v1168, 32
    %v8254 = vpop.permute.xlu0 %8253
    %v8257 = vsel %vm1980, %v8237, 0
    %8259 = vmatprep.subr.bf16.mxu0 0
    %8260 = vmatpush1.bf16.msra.mxu0 0
    %8261 = vmatprep.subr.bf16.mxu0 0
    %8262 = vmatpush1.bf16.msra.mxu0 0
    %8263 = vmatprep.subr.bf16.mxu0 0
    %8264 = vmatpush1.bf16.msra.mxu0 0
    %8265 = vmatprep.subr.bf16.mxu0 0
    %8266 = vmatpush1.bf16.msra.mxu0 0
    %8267 = vmatprep.subr.bf16.mxu0 0
    %8268 = vmatpush1.bf16.msra.mxu0 0
    %8269 = vmatprep.subr.bf16.mxu0 0
    %8270 = vmatpush1.bf16.msra.mxu0 0
    %8271 = vmatprep.subr.bf16.mxu0 0
    %8272 = vmatpush1.bf16.msra.mxu0 0
    %8273 = vmatprep.subr.bf16.mxu0 0
    %8274 = vmatpush1.bf16.msra.mxu0 %v8254
    %8275 = vmatprep.subr.bf16.mxu0 0
    %8276 = vmatpush2.bf16.msra.mxu0 0
    %8277 = vmatprep.subr.bf16.mxu0 0
    %8278 = vmatpush2.bf16.msra.mxu0 0
    %8279 = vmatprep.subr.bf16.mxu0 0
    %8280 = vmatpush2.bf16.msra.mxu0 0
    %8281 = vmatprep.subr.bf16.mxu0 0
    %8282 = vmatpush2.bf16.msra.mxu0 0
    %8283 = vmatprep.subr.bf16.mxu0 0
    %8284 = vmatpush2.bf16.msra.mxu0 0
    %8285 = vmatprep.subr.bf16.mxu0 0
    %8286 = vmatpush2.bf16.msra.mxu0 0
    %8287 = vmatprep.subr.bf16.mxu0 0
    %8288 = vmatpush2.bf16.msra.mxu0 0
    %8289 = vmatprep.subr.bf16.mxu0 0
    %8290 = vmatpush2.bf16.msra.mxu0 0
    %8291 = vmatprep.mubr.bf16.mxu0 0
    %8292 = vmatmul.mubr.bf16.gmra.mxu0 %v8257
    %v8293 = vpop.f32.mrf.mxu0
    %v8294 = vadd.f32 0.0, %v8293
    %v8295 = vpop.f32.mrf.mxu0
    %v8296 = vpop.f32.mrf.mxu0
    %v8297 = vadd.f32 0.0, %v8296
    %v8298 = vpop.f32.mrf.mxu0
    %8299 = vdwg.mxu0
    %8300 = vrot.lane.b32.xlu0 %v1169, 32
    %v8301 = vpop.permute.xlu0 %8300
    %v8304 = vsel %vm1980, %v8238, 0
    %8306 = vmatprep.subr.bf16.mxu0 0
    %8307 = vmatpush1.bf16.msra.mxu0 0
    %8308 = vmatprep.subr.bf16.mxu0 0
    %8309 = vmatpush1.bf16.msra.mxu0 0
    %8310 = vmatprep.subr.bf16.mxu0 0
    %8311 = vmatpush1.bf16.msra.mxu0 0
    %8312 = vmatprep.subr.bf16.mxu0 0
    %8313 = vmatpush1.bf16.msra.mxu0 0
    %8314 = vmatprep.subr.bf16.mxu0 0
    %8315 = vmatpush1.bf16.msra.mxu0 0
    %8316 = vmatprep.subr.bf16.mxu0 0
    %8317 = vmatpush1.bf16.msra.mxu0 0
    %8318 = vmatprep.subr.bf16.mxu0 0
    %8319 = vmatpush1.bf16.msra.mxu0 0
    %8320 = vmatprep.subr.bf16.mxu0 0
    %8321 = vmatpush1.bf16.msra.mxu0 %v8301
    %8322 = vmatprep.subr.bf16.mxu0 0
    %8323 = vmatpush2.bf16.msra.mxu0 0
    %8324 = vmatprep.subr.bf16.mxu0 0
    %8325 = vmatpush2.bf16.msra.mxu0 0
    %8326 = vmatprep.subr.bf16.mxu0 0
    %8327 = vmatpush2.bf16.msra.mxu0 0
    %8328 = vmatprep.subr.bf16.mxu0 0
    %8329 = vmatpush2.bf16.msra.mxu0 0
    %8330 = vmatprep.subr.bf16.mxu0 0
    %8331 = vmatpush2.bf16.msra.mxu0 0
    %8332 = vmatprep.subr.bf16.mxu0 0
    %8333 = vmatpush2.bf16.msra.mxu0 0
    %8334 = vmatprep.subr.bf16.mxu0 0
    %8335 = vmatpush2.bf16.msra.mxu0 0
    %8336 = vmatprep.subr.bf16.mxu0 0
    %8337 = vmatpush2.bf16.msra.mxu0 0
    %8338 = vmatprep.mubr.bf16.mxu0 0
    %8339 = vmatmul.mubr.bf16.gmra.mxu0 %v8304
    %v8340 = vpop.f32.mrf.mxu0
    %v8341 = vadd.f32 0.0, %v8340
    %v8342 = vpop.f32.mrf.mxu0
    %v8343 = vpop.f32.mrf.mxu0
    %v8344 = vadd.f32 0.0, %v8343
    %v8345 = vpop.f32.mrf.mxu0
    %8346 = vdwg.mxu0
    %8347 = vrot.lane.b32.xlu0 %v1170, 32
    %v8348 = vpop.permute.xlu0 %8347
    %v8351 = vsel %vm1980, %v8239, 0
    %8353 = vmatprep.subr.bf16.mxu0 0
    %8354 = vmatpush1.bf16.msra.mxu0 0
    %8355 = vmatprep.subr.bf16.mxu0 0
    %8356 = vmatpush1.bf16.msra.mxu0 0
    %8357 = vmatprep.subr.bf16.mxu0 0
    %8358 = vmatpush1.bf16.msra.mxu0 0
    %8359 = vmatprep.subr.bf16.mxu0 0
    %8360 = vmatpush1.bf16.msra.mxu0 0
    %8361 = vmatprep.subr.bf16.mxu0 0
    %8362 = vmatpush1.bf16.msra.mxu0 0
    %8363 = vmatprep.subr.bf16.mxu0 0
    %8364 = vmatpush1.bf16.msra.mxu0 0
    %8365 = vmatprep.subr.bf16.mxu0 0
    %8366 = vmatpush1.bf16.msra.mxu0 0
    %8367 = vmatprep.subr.bf16.mxu0 0
    %8368 = vmatpush1.bf16.msra.mxu0 %v8348
    %8369 = vmatprep.subr.bf16.mxu0 0
    %8370 = vmatpush2.bf16.msra.mxu0 0
    %8371 = vmatprep.subr.bf16.mxu0 0
    %8372 = vmatpush2.bf16.msra.mxu0 0
    %8373 = vmatprep.subr.bf16.mxu0 0
    %8374 = vmatpush2.bf16.msra.mxu0 0
    %8375 = vmatprep.subr.bf16.mxu0 0
    %8376 = vmatpush2.bf16.msra.mxu0 0
    %8377 = vmatprep.subr.bf16.mxu0 0
    %8378 = vmatpush2.bf16.msra.mxu0 0
    %8379 = vmatprep.subr.bf16.mxu0 0
    %8380 = vmatpush2.bf16.msra.mxu0 0
    %8381 = vmatprep.subr.bf16.mxu0 0
    %8382 = vmatpush2.bf16.msra.mxu0 0
    %8383 = vmatprep.subr.bf16.mxu0 0
    %8384 = vmatpush2.bf16.msra.mxu0 0
    %8385 = vmatprep.mubr.bf16.mxu0 0
    %8386 = vmatmul.mubr.bf16.gmra.mxu0 %v8351
    %v8387 = vpop.f32.mrf.mxu0
    %v8388 = vadd.f32 0.0, %v8387
    %v8389 = vpop.f32.mrf.mxu0
    %v8390 = vpop.f32.mrf.mxu0
    %v8391 = vadd.f32 0.0, %v8390
    %v8392 = vpop.f32.mrf.mxu0
    %8393 = vdwg.mxu0
    %8394 = vrot.lane.b32.xlu0 %v1171, 32
    %v8395 = vpop.permute.xlu0 %8394
    %v8398 = vsel %vm1980, %v8240, 0
    %8400 = vmatprep.subr.bf16.mxu0 0
    %8401 = vmatpush1.bf16.msra.mxu0 0
    %8402 = vmatprep.subr.bf16.mxu0 0
    %8403 = vmatpush1.bf16.msra.mxu0 0
    %8404 = vmatprep.subr.bf16.mxu0 0
    %8405 = vmatpush1.bf16.msra.mxu0 0
    %8406 = vmatprep.subr.bf16.mxu0 0
    %8407 = vmatpush1.bf16.msra.mxu0 0
    %8408 = vmatprep.subr.bf16.mxu0 0
    %8409 = vmatpush1.bf16.msra.mxu0 0
    %8410 = vmatprep.subr.bf16.mxu0 0
    %8411 = vmatpush1.bf16.msra.mxu0 0
    %8412 = vmatprep.subr.bf16.mxu0 0
    %8413 = vmatpush1.bf16.msra.mxu0 0
    %8414 = vmatprep.subr.bf16.mxu0 0
    %8415 = vmatpush1.bf16.msra.mxu0 %v8395
    %8416 = vmatprep.subr.bf16.mxu0 0
    %8417 = vmatpush2.bf16.msra.mxu0 0
    %8418 = vmatprep.subr.bf16.mxu0 0
    %8419 = vmatpush2.bf16.msra.mxu0 0
    %8420 = vmatprep.subr.bf16.mxu0 0
    %8421 = vmatpush2.bf16.msra.mxu0 0
    %8422 = vmatprep.subr.bf16.mxu0 0
    %8423 = vmatpush2.bf16.msra.mxu0 0
    %8424 = vmatprep.subr.bf16.mxu0 0
    %8425 = vmatpush2.bf16.msra.mxu0 0
    %8426 = vmatprep.subr.bf16.mxu0 0
    %8427 = vmatpush2.bf16.msra.mxu0 0
    %8428 = vmatprep.subr.bf16.mxu0 0
    %8429 = vmatpush2.bf16.msra.mxu0 0
    %8430 = vmatprep.subr.bf16.mxu0 0
    %8431 = vmatpush2.bf16.msra.mxu0 0
    %8432 = vmatprep.mubr.bf16.mxu0 0
    %8433 = vmatmul.mubr.bf16.gmra.mxu0 %v8398
    %v8434 = vpop.f32.mrf.mxu0
    %v8435 = vadd.f32 0.0, %v8434
    %v8436 = vpop.f32.mrf.mxu0
    %v8437 = vpop.f32.mrf.mxu0
    %v8438 = vadd.f32 0.0, %v8437
    %v8439 = vpop.f32.mrf.mxu0
    %8440 = vdwg.mxu0
    %8441 = vrot.lane.b32.xlu0 %v1172, 32
    %v8442 = vpop.permute.xlu0 %8441
    %v8445 = vsel %vm1980, %v8241, 0
    %8447 = vmatprep.subr.bf16.mxu0 0
    %8448 = vmatpush1.bf16.msra.mxu0 0
    %8449 = vmatprep.subr.bf16.mxu0 0
    %8450 = vmatpush1.bf16.msra.mxu0 0
    %8451 = vmatprep.subr.bf16.mxu0 0
    %8452 = vmatpush1.bf16.msra.mxu0 0
    %8453 = vmatprep.subr.bf16.mxu0 0
    %8454 = vmatpush1.bf16.msra.mxu0 0
    %8455 = vmatprep.subr.bf16.mxu0 0
    %8456 = vmatpush1.bf16.msra.mxu0 0
    %8457 = vmatprep.subr.bf16.mxu0 0
    %8458 = vmatpush1.bf16.msra.mxu0 0
    %8459 = vmatprep.subr.bf16.mxu0 0
    %8460 = vmatpush1.bf16.msra.mxu0 0
    %8461 = vmatprep.subr.bf16.mxu0 0
    %8462 = vmatpush1.bf16.msra.mxu0 %v8442
    %8463 = vmatprep.subr.bf16.mxu0 0
    %8464 = vmatpush2.bf16.msra.mxu0 0
    %8465 = vmatprep.subr.bf16.mxu0 0
    %8466 = vmatpush2.bf16.msra.mxu0 0
    %8467 = vmatprep.subr.bf16.mxu0 0
    %8468 = vmatpush2.bf16.msra.mxu0 0
    %8469 = vmatprep.subr.bf16.mxu0 0
    %8470 = vmatpush2.bf16.msra.mxu0 0
    %8471 = vmatprep.subr.bf16.mxu0 0
    %8472 = vmatpush2.bf16.msra.mxu0 0
    %8473 = vmatprep.subr.bf16.mxu0 0
    %8474 = vmatpush2.bf16.msra.mxu0 0
    %8475 = vmatprep.subr.bf16.mxu0 0
    %8476 = vmatpush2.bf16.msra.mxu0 0
    %8477 = vmatprep.subr.bf16.mxu0 0
    %8478 = vmatpush2.bf16.msra.mxu0 0
    %8479 = vmatprep.mubr.bf16.mxu0 0
    %8480 = vmatmul.mubr.bf16.gmra.mxu0 %v8445
    %v8481 = vpop.f32.mrf.mxu0
    %v8482 = vadd.f32 0.0, %v8481
    %v8483 = vpop.f32.mrf.mxu0
    %v8484 = vpop.f32.mrf.mxu0
    %v8485 = vadd.f32 0.0, %v8484
    %v8486 = vpop.f32.mrf.mxu0
    %8487 = vdwg.mxu0
    %8488 = vrot.lane.b32.xlu0 %v1173, 32
    %v8489 = vpop.permute.xlu0 %8488
    %v8492 = vsel %vm1980, %v8242, 0
    %8494 = vmatprep.subr.bf16.mxu0 0
    %8495 = vmatpush1.bf16.msra.mxu0 0
    %8496 = vmatprep.subr.bf16.mxu0 0
    %8497 = vmatpush1.bf16.msra.mxu0 0
    %8498 = vmatprep.subr.bf16.mxu0 0
    %8499 = vmatpush1.bf16.msra.mxu0 0
    %8500 = vmatprep.subr.bf16.mxu0 0
    %8501 = vmatpush1.bf16.msra.mxu0 0
    %8502 = vmatprep.subr.bf16.mxu0 0
    %8503 = vmatpush1.bf16.msra.mxu0 0
    %8504 = vmatprep.subr.bf16.mxu0 0
    %8505 = vmatpush1.bf16.msra.mxu0 0
    %8506 = vmatprep.subr.bf16.mxu0 0
    %8507 = vmatpush1.bf16.msra.mxu0 0
    %8508 = vmatprep.subr.bf16.mxu0 0
    %8509 = vmatpush1.bf16.msra.mxu0 %v8489
    %8510 = vmatprep.subr.bf16.mxu0 0
    %8511 = vmatpush2.bf16.msra.mxu0 0
    %8512 = vmatprep.subr.bf16.mxu0 0
    %8513 = vmatpush2.bf16.msra.mxu0 0
    %8514 = vmatprep.subr.bf16.mxu0 0
    %8515 = vmatpush2.bf16.msra.mxu0 0
    %8516 = vmatprep.subr.bf16.mxu0 0
    %8517 = vmatpush2.bf16.msra.mxu0 0
    %8518 = vmatprep.subr.bf16.mxu0 0
    %8519 = vmatpush2.bf16.msra.mxu0 0
    %8520 = vmatprep.subr.bf16.mxu0 0
    %8521 = vmatpush2.bf16.msra.mxu0 0
    %8522 = vmatprep.subr.bf16.mxu0 0
    %8523 = vmatpush2.bf16.msra.mxu0 0
    %8524 = vmatprep.subr.bf16.mxu0 0
    %8525 = vmatpush2.bf16.msra.mxu0 0
    %8526 = vmatprep.mubr.bf16.mxu0 0
    %8527 = vmatmul.mubr.bf16.gmra.mxu0 %v8492
    %v8528 = vpop.f32.mrf.mxu0
    %v8529 = vadd.f32 0.0, %v8528
    %v8530 = vpop.f32.mrf.mxu0
    %v8531 = vpop.f32.mrf.mxu0
    %v8532 = vadd.f32 0.0, %v8531
    %v8533 = vpop.f32.mrf.mxu0
    %8534 = vdwg.mxu0
    %8535 = vrot.lane.b32.xlu0 %v1174, 32
    %v8536 = vpop.permute.xlu0 %8535
    %v8539 = vsel %vm1980, %v8243, 0
    %8541 = vmatprep.subr.bf16.mxu0 0
    %8542 = vmatpush1.bf16.msra.mxu0 0
    %8543 = vmatprep.subr.bf16.mxu0 0
    %8544 = vmatpush1.bf16.msra.mxu0 0
    %8545 = vmatprep.subr.bf16.mxu0 0
    %8546 = vmatpush1.bf16.msra.mxu0 0
    %8547 = vmatprep.subr.bf16.mxu0 0
    %8548 = vmatpush1.bf16.msra.mxu0 0
    %8549 = vmatprep.subr.bf16.mxu0 0
    %8550 = vmatpush1.bf16.msra.mxu0 0
    %8551 = vmatprep.subr.bf16.mxu0 0
    %8552 = vmatpush1.bf16.msra.mxu0 0
    %8553 = vmatprep.subr.bf16.mxu0 0
    %8554 = vmatpush1.bf16.msra.mxu0 0
    %8555 = vmatprep.subr.bf16.mxu0 0
    %8556 = vmatpush1.bf16.msra.mxu0 %v8536
    %8557 = vmatprep.subr.bf16.mxu0 0
    %8558 = vmatpush2.bf16.msra.mxu0 0
    %8559 = vmatprep.subr.bf16.mxu0 0
    %8560 = vmatpush2.bf16.msra.mxu0 0
    %8561 = vmatprep.subr.bf16.mxu0 0
    %8562 = vmatpush2.bf16.msra.mxu0 0
    %8563 = vmatprep.subr.bf16.mxu0 0
    %8564 = vmatpush2.bf16.msra.mxu0 0
    %8565 = vmatprep.subr.bf16.mxu0 0
    %8566 = vmatpush2.bf16.msra.mxu0 0
    %8567 = vmatprep.subr.bf16.mxu0 0
    %8568 = vmatpush2.bf16.msra.mxu0 0
    %8569 = vmatprep.subr.bf16.mxu0 0
    %8570 = vmatpush2.bf16.msra.mxu0 0
    %8571 = vmatprep.subr.bf16.mxu0 0
    %8572 = vmatpush2.bf16.msra.mxu0 0
    %8573 = vmatprep.mubr.bf16.mxu0 0
    %8574 = vmatmul.mubr.bf16.gmra.mxu0 %v8539
    %v8575 = vpop.f32.mrf.mxu0
    %v8576 = vadd.f32 0.0, %v8575
    %v8577 = vpop.f32.mrf.mxu0
    %v8578 = vpop.f32.mrf.mxu0
    %v8579 = vadd.f32 0.0, %v8578
    %v8580 = vpop.f32.mrf.mxu0
    %8581 = vdwg.mxu0
    %8582 = vrot.lane.b32.xlu0 %v1175, 32
    %v8583 = vpop.permute.xlu0 %8582
    %v8586 = vsel %vm1980, %v8244, 0
    %8588 = vmatprep.subr.bf16.mxu0 0
    %8589 = vmatpush1.bf16.msra.mxu0 0
    %8590 = vmatprep.subr.bf16.mxu0 0
    %8591 = vmatpush1.bf16.msra.mxu0 0
    %8592 = vmatprep.subr.bf16.mxu0 0
    %8593 = vmatpush1.bf16.msra.mxu0 0
    %8594 = vmatprep.subr.bf16.mxu0 0
    %8595 = vmatpush1.bf16.msra.mxu0 0
    %8596 = vmatprep.subr.bf16.mxu0 0
    %8597 = vmatpush1.bf16.msra.mxu0 0
    %8598 = vmatprep.subr.bf16.mxu0 0
    %8599 = vmatpush1.bf16.msra.mxu0 0
    %8600 = vmatprep.subr.bf16.mxu0 0
    %8601 = vmatpush1.bf16.msra.mxu0 0
    %8602 = vmatprep.subr.bf16.mxu0 0
    %8603 = vmatpush1.bf16.msra.mxu0 %v8583
    %8604 = vmatprep.subr.bf16.mxu0 0
    %8605 = vmatpush2.bf16.msra.mxu0 0
    %8606 = vmatprep.subr.bf16.mxu0 0
    %8607 = vmatpush2.bf16.msra.mxu0 0
    %8608 = vmatprep.subr.bf16.mxu0 0
    %8609 = vmatpush2.bf16.msra.mxu0 0
    %8610 = vmatprep.subr.bf16.mxu0 0
    %8611 = vmatpush2.bf16.msra.mxu0 0
    %8612 = vmatprep.subr.bf16.mxu0 0
    %8613 = vmatpush2.bf16.msra.mxu0 0
    %8614 = vmatprep.subr.bf16.mxu0 0
    %8615 = vmatpush2.bf16.msra.mxu0 0
    %8616 = vmatprep.subr.bf16.mxu0 0
    %8617 = vmatpush2.bf16.msra.mxu0 0
    %8618 = vmatprep.subr.bf16.mxu0 0
    %8619 = vmatpush2.bf16.msra.mxu0 0
    %8620 = vmatprep.mubr.bf16.mxu0 0
    %8621 = vmatmul.mubr.bf16.gmra.mxu0 %v8586
    %v8622 = vpop.f32.mrf.mxu0
    %v8623 = vadd.f32 0.0, %v8622
    %v8624 = vpop.f32.mrf.mxu0
    %v8625 = vpop.f32.mrf.mxu0
    %v8626 = vadd.f32 0.0, %v8625
    %v8627 = vpop.f32.mrf.mxu0
    %8628 = vdwg.mxu0
    %8629 = vrot.lane.b32.xlu0 %v1176, 32
    %v8630 = vpop.permute.xlu0 %8629
    %v8633 = vsel %vm1980, %v8245, 0
    %8635 = vmatprep.subr.bf16.mxu0 0
    %8636 = vmatpush1.bf16.msra.mxu0 0
    %8637 = vmatprep.subr.bf16.mxu0 0
    %8638 = vmatpush1.bf16.msra.mxu0 0
    %8639 = vmatprep.subr.bf16.mxu0 0
    %8640 = vmatpush1.bf16.msra.mxu0 0
    %8641 = vmatprep.subr.bf16.mxu0 0
    %8642 = vmatpush1.bf16.msra.mxu0 0
    %8643 = vmatprep.subr.bf16.mxu0 0
    %8644 = vmatpush1.bf16.msra.mxu0 0
    %8645 = vmatprep.subr.bf16.mxu0 0
    %8646 = vmatpush1.bf16.msra.mxu0 0
    %8647 = vmatprep.subr.bf16.mxu0 0
    %8648 = vmatpush1.bf16.msra.mxu0 0
    %8649 = vmatprep.subr.bf16.mxu0 0
    %8650 = vmatpush1.bf16.msra.mxu0 %v8630
    %8651 = vmatprep.subr.bf16.mxu0 0
    %8652 = vmatpush2.bf16.msra.mxu0 0
    %8653 = vmatprep.subr.bf16.mxu0 0
    %8654 = vmatpush2.bf16.msra.mxu0 0
    %8655 = vmatprep.subr.bf16.mxu0 0
    %8656 = vmatpush2.bf16.msra.mxu0 0
    %8657 = vmatprep.subr.bf16.mxu0 0
    %8658 = vmatpush2.bf16.msra.mxu0 0
    %8659 = vmatprep.subr.bf16.mxu0 0
    %8660 = vmatpush2.bf16.msra.mxu0 0
    %8661 = vmatprep.subr.bf16.mxu0 0
    %8662 = vmatpush2.bf16.msra.mxu0 0
    %8663 = vmatprep.subr.bf16.mxu0 0
    %8664 = vmatpush2.bf16.msra.mxu0 0
    %8665 = vmatprep.subr.bf16.mxu0 0
    %8666 = vmatpush2.bf16.msra.mxu0 0
    %8667 = vmatprep.mubr.bf16.mxu0 0
    %8668 = vmatmul.mubr.bf16.gmra.mxu0 %v8633
    %v8669 = vpop.f32.mrf.mxu0
    %v8670 = vadd.f32 0.0, %v8669
    %v8671 = vpop.f32.mrf.mxu0
    %v8672 = vpop.f32.mrf.mxu0
    %v8673 = vadd.f32 0.0, %v8672
    %v8674 = vpop.f32.mrf.mxu0
    %8675 = vdwg.mxu0
    %8676 = vrot.lane.b32.xlu0 %v1177, 32
    %v8677 = vpop.permute.xlu0 %8676
    %v8680 = vsel %vm1980, %v8246, 0
    %8682 = vmatprep.subr.bf16.mxu0 0
    %8683 = vmatpush1.bf16.msra.mxu0 0
    %8684 = vmatprep.subr.bf16.mxu0 0
    %8685 = vmatpush1.bf16.msra.mxu0 0
    %8686 = vmatprep.subr.bf16.mxu0 0
    %8687 = vmatpush1.bf16.msra.mxu0 0
    %8688 = vmatprep.subr.bf16.mxu0 0
    %8689 = vmatpush1.bf16.msra.mxu0 0
    %8690 = vmatprep.subr.bf16.mxu0 0
    %8691 = vmatpush1.bf16.msra.mxu0 0
    %8692 = vmatprep.subr.bf16.mxu0 0
    %8693 = vmatpush1.bf16.msra.mxu0 0
    %8694 = vmatprep.subr.bf16.mxu0 0
    %8695 = vmatpush1.bf16.msra.mxu0 0
    %8696 = vmatprep.subr.bf16.mxu0 0
    %8697 = vmatpush1.bf16.msra.mxu0 %v8677
    %8698 = vmatprep.subr.bf16.mxu0 0
    %8699 = vmatpush2.bf16.msra.mxu0 0
    %8700 = vmatprep.subr.bf16.mxu0 0
    %8701 = vmatpush2.bf16.msra.mxu0 0
    %8702 = vmatprep.subr.bf16.mxu0 0
    %8703 = vmatpush2.bf16.msra.mxu0 0
    %8704 = vmatprep.subr.bf16.mxu0 0
    %8705 = vmatpush2.bf16.msra.mxu0 0
    %8706 = vmatprep.subr.bf16.mxu0 0
    %8707 = vmatpush2.bf16.msra.mxu0 0
    %8708 = vmatprep.subr.bf16.mxu0 0
    %8709 = vmatpush2.bf16.msra.mxu0 0
    %8710 = vmatprep.subr.bf16.mxu0 0
    %8711 = vmatpush2.bf16.msra.mxu0 0
    %8712 = vmatprep.subr.bf16.mxu0 0
    %8713 = vmatpush2.bf16.msra.mxu0 0
    %8714 = vmatprep.mubr.bf16.mxu0 0
    %8715 = vmatmul.mubr.bf16.gmra.mxu0 %v8680
    %v8716 = vpop.f32.mrf.mxu0
    %v8717 = vadd.f32 0.0, %v8716
    %v8718 = vpop.f32.mrf.mxu0
    %v8719 = vpop.f32.mrf.mxu0
    %v8720 = vadd.f32 0.0, %v8719
    %v8721 = vpop.f32.mrf.mxu0
    %8722 = vdwg.mxu0
    %8723 = vrot.lane.b32.xlu0 %v1178, 32
    %v8724 = vpop.permute.xlu0 %8723
    %v8727 = vsel %vm1980, %v8247, 0
    %8729 = vmatprep.subr.bf16.mxu0 0
    %8730 = vmatpush1.bf16.msra.mxu0 0
    %8731 = vmatprep.subr.bf16.mxu0 0
    %8732 = vmatpush1.bf16.msra.mxu0 0
    %8733 = vmatprep.subr.bf16.mxu0 0
    %8734 = vmatpush1.bf16.msra.mxu0 0
    %8735 = vmatprep.subr.bf16.mxu0 0
    %8736 = vmatpush1.bf16.msra.mxu0 0
    %8737 = vmatprep.subr.bf16.mxu0 0
    %8738 = vmatpush1.bf16.msra.mxu0 0
    %8739 = vmatprep.subr.bf16.mxu0 0
    %8740 = vmatpush1.bf16.msra.mxu0 0
    %8741 = vmatprep.subr.bf16.mxu0 0
    %8742 = vmatpush1.bf16.msra.mxu0 0
    %8743 = vmatprep.subr.bf16.mxu0 0
    %8744 = vmatpush1.bf16.msra.mxu0 %v8724
    %8745 = vmatprep.subr.bf16.mxu0 0
    %8746 = vmatpush2.bf16.msra.mxu0 0
    %8747 = vmatprep.subr.bf16.mxu0 0
    %8748 = vmatpush2.bf16.msra.mxu0 0
    %8749 = vmatprep.subr.bf16.mxu0 0
    %8750 = vmatpush2.bf16.msra.mxu0 0
    %8751 = vmatprep.subr.bf16.mxu0 0
    %8752 = vmatpush2.bf16.msra.mxu0 0
    %8753 = vmatprep.subr.bf16.mxu0 0
    %8754 = vmatpush2.bf16.msra.mxu0 0
    %8755 = vmatprep.subr.bf16.mxu0 0
    %8756 = vmatpush2.bf16.msra.mxu0 0
    %8757 = vmatprep.subr.bf16.mxu0 0
    %8758 = vmatpush2.bf16.msra.mxu0 0
    %8759 = vmatprep.subr.bf16.mxu0 0
    %8760 = vmatpush2.bf16.msra.mxu0 0
    %8761 = vmatprep.mubr.bf16.mxu0 0
    %8762 = vmatmul.mubr.bf16.gmra.mxu0 %v8727
    %v8763 = vpop.f32.mrf.mxu0
    %v8764 = vadd.f32 0.0, %v8763
    %v8765 = vpop.f32.mrf.mxu0
    %v8766 = vpop.f32.mrf.mxu0
    %v8767 = vadd.f32 0.0, %v8766
    %v8768 = vpop.f32.mrf.mxu0
    %8769 = vdwg.mxu0
    %8770 = vrot.lane.b32.xlu0 %v1179, 32
    %v8771 = vpop.permute.xlu0 %8770
    %v8774 = vsel %vm1980, %v8248, 0
    %8776 = vmatprep.subr.bf16.mxu0 0
    %8777 = vmatpush1.bf16.msra.mxu0 0
    %8778 = vmatprep.subr.bf16.mxu0 0
    %8779 = vmatpush1.bf16.msra.mxu0 0
    %8780 = vmatprep.subr.bf16.mxu0 0
    %8781 = vmatpush1.bf16.msra.mxu0 0
    %8782 = vmatprep.subr.bf16.mxu0 0
    %8783 = vmatpush1.bf16.msra.mxu0 0
    %8784 = vmatprep.subr.bf16.mxu0 0
    %8785 = vmatpush1.bf16.msra.mxu0 0
    %8786 = vmatprep.subr.bf16.mxu0 0
    %8787 = vmatpush1.bf16.msra.mxu0 0
    %8788 = vmatprep.subr.bf16.mxu0 0
    %8789 = vmatpush1.bf16.msra.mxu0 0
    %8790 = vmatprep.subr.bf16.mxu0 0
    %8791 = vmatpush1.bf16.msra.mxu0 %v8771
    %8792 = vmatprep.subr.bf16.mxu0 0
    %8793 = vmatpush2.bf16.msra.mxu0 0
    %8794 = vmatprep.subr.bf16.mxu0 0
    %8795 = vmatpush2.bf16.msra.mxu0 0
    %8796 = vmatprep.subr.bf16.mxu0 0
    %8797 = vmatpush2.bf16.msra.mxu0 0
    %8798 = vmatprep.subr.bf16.mxu0 0
    %8799 = vmatpush2.bf16.msra.mxu0 0
    %8800 = vmatprep.subr.bf16.mxu0 0
    %8801 = vmatpush2.bf16.msra.mxu0 0
    %8802 = vmatprep.subr.bf16.mxu0 0
    %8803 = vmatpush2.bf16.msra.mxu0 0
    %8804 = vmatprep.subr.bf16.mxu0 0
    %8805 = vmatpush2.bf16.msra.mxu0 0
    %8806 = vmatprep.subr.bf16.mxu0 0
    %8807 = vmatpush2.bf16.msra.mxu0 0
    %8808 = vmatprep.mubr.bf16.mxu0 0
    %8809 = vmatmul.mubr.bf16.gmra.mxu0 %v8774
    %v8810 = vpop.f32.mrf.mxu0
    %v8811 = vadd.f32 0.0, %v8810
    %v8812 = vpop.f32.mrf.mxu0
    %v8813 = vpop.f32.mrf.mxu0
    %v8814 = vadd.f32 0.0, %v8813
    %v8815 = vpop.f32.mrf.mxu0
    %8816 = vdwg.mxu0
    %8817 = vrot.lane.b32.xlu0 %v1180, 32
    %v8818 = vpop.permute.xlu0 %8817
    %v8821 = vsel %vm1980, %v8249, 0
    %8823 = vmatprep.subr.bf16.mxu0 0
    %8824 = vmatpush1.bf16.msra.mxu0 0
    %8825 = vmatprep.subr.bf16.mxu0 0
    %8826 = vmatpush1.bf16.msra.mxu0 0
    %8827 = vmatprep.subr.bf16.mxu0 0
    %8828 = vmatpush1.bf16.msra.mxu0 0
    %8829 = vmatprep.subr.bf16.mxu0 0
    %8830 = vmatpush1.bf16.msra.mxu0 0
    %8831 = vmatprep.subr.bf16.mxu0 0
    %8832 = vmatpush1.bf16.msra.mxu0 0
    %8833 = vmatprep.subr.bf16.mxu0 0
    %8834 = vmatpush1.bf16.msra.mxu0 0
    %8835 = vmatprep.subr.bf16.mxu0 0
    %8836 = vmatpush1.bf16.msra.mxu0 0
    %8837 = vmatprep.subr.bf16.mxu0 0
    %8838 = vmatpush1.bf16.msra.mxu0 %v8818
    %8839 = vmatprep.subr.bf16.mxu0 0
    %8840 = vmatpush2.bf16.msra.mxu0 0
    %8841 = vmatprep.subr.bf16.mxu0 0
    %8842 = vmatpush2.bf16.msra.mxu0 0
    %8843 = vmatprep.subr.bf16.mxu0 0
    %8844 = vmatpush2.bf16.msra.mxu0 0
    %8845 = vmatprep.subr.bf16.mxu0 0
    %8846 = vmatpush2.bf16.msra.mxu0 0
    %8847 = vmatprep.subr.bf16.mxu0 0
    %8848 = vmatpush2.bf16.msra.mxu0 0
    %8849 = vmatprep.subr.bf16.mxu0 0
    %8850 = vmatpush2.bf16.msra.mxu0 0
    %8851 = vmatprep.subr.bf16.mxu0 0
    %8852 = vmatpush2.bf16.msra.mxu0 0
    %8853 = vmatprep.subr.bf16.mxu0 0
    %8854 = vmatpush2.bf16.msra.mxu0 0
    %8855 = vmatprep.mubr.bf16.mxu0 0
    %8856 = vmatmul.mubr.bf16.gmra.mxu0 %v8821
    %v8857 = vpop.f32.mrf.mxu0
    %v8858 = vadd.f32 0.0, %v8857
    %v8859 = vpop.f32.mrf.mxu0
    %v8860 = vpop.f32.mrf.mxu0
    %v8861 = vadd.f32 0.0, %v8860
    %v8862 = vpop.f32.mrf.mxu0
    %8863 = vdwg.mxu0
    %8864 = vrot.lane.b32.xlu0 %v1181, 32
    %v8865 = vpop.permute.xlu0 %8864
    %v8868 = vsel %vm1980, %v8250, 0
    %8870 = vmatprep.subr.bf16.mxu0 0
    %8871 = vmatpush1.bf16.msra.mxu0 0
    %8872 = vmatprep.subr.bf16.mxu0 0
    %8873 = vmatpush1.bf16.msra.mxu0 0
    %8874 = vmatprep.subr.bf16.mxu0 0
    %8875 = vmatpush1.bf16.msra.mxu0 0
    %8876 = vmatprep.subr.bf16.mxu0 0
    %8877 = vmatpush1.bf16.msra.mxu0 0
    %8878 = vmatprep.subr.bf16.mxu0 0
    %8879 = vmatpush1.bf16.msra.mxu0 0
    %8880 = vmatprep.subr.bf16.mxu0 0
    %8881 = vmatpush1.bf16.msra.mxu0 0
    %8882 = vmatprep.subr.bf16.mxu0 0
    %8883 = vmatpush1.bf16.msra.mxu0 0
    %8884 = vmatprep.subr.bf16.mxu0 0
    %8885 = vmatpush1.bf16.msra.mxu0 %v8865
    %8886 = vmatprep.subr.bf16.mxu0 0
    %8887 = vmatpush2.bf16.msra.mxu0 0
    %8888 = vmatprep.subr.bf16.mxu0 0
    %8889 = vmatpush2.bf16.msra.mxu0 0
    %8890 = vmatprep.subr.bf16.mxu0 0
    %8891 = vmatpush2.bf16.msra.mxu0 0
    %8892 = vmatprep.subr.bf16.mxu0 0
    %8893 = vmatpush2.bf16.msra.mxu0 0
    %8894 = vmatprep.subr.bf16.mxu0 0
    %8895 = vmatpush2.bf16.msra.mxu0 0
    %8896 = vmatprep.subr.bf16.mxu0 0
    %8897 = vmatpush2.bf16.msra.mxu0 0
    %8898 = vmatprep.subr.bf16.mxu0 0
    %8899 = vmatpush2.bf16.msra.mxu0 0
    %8900 = vmatprep.subr.bf16.mxu0 0
    %8901 = vmatpush2.bf16.msra.mxu0 0
    %8902 = vmatprep.mubr.bf16.mxu0 0
    %8903 = vmatmul.mubr.bf16.gmra.mxu0 %v8868
    %v8904 = vpop.f32.mrf.mxu0
    %v8905 = vadd.f32 0.0, %v8904
    %v8906 = vpop.f32.mrf.mxu0
    %v8907 = vpop.f32.mrf.mxu0
    %v8908 = vadd.f32 0.0, %v8907
    %v8909 = vpop.f32.mrf.mxu0
    %8910 = vdwg.mxu0
    %8911 = vrot.lane.b32.xlu0 %v1182, 32
    %v8912 = vpop.permute.xlu0 %8911
    %v8915 = vsel %vm1980, %v8251, 0
    %8917 = vmatprep.subr.bf16.mxu0 0
    %8918 = vmatpush1.bf16.msra.mxu0 0
    %8919 = vmatprep.subr.bf16.mxu0 0
    %8920 = vmatpush1.bf16.msra.mxu0 0
    %8921 = vmatprep.subr.bf16.mxu0 0
    %8922 = vmatpush1.bf16.msra.mxu0 0
    %8923 = vmatprep.subr.bf16.mxu0 0
    %8924 = vmatpush1.bf16.msra.mxu0 0
    %8925 = vmatprep.subr.bf16.mxu0 0
    %8926 = vmatpush1.bf16.msra.mxu0 0
    %8927 = vmatprep.subr.bf16.mxu0 0
    %8928 = vmatpush1.bf16.msra.mxu0 0
    %8929 = vmatprep.subr.bf16.mxu0 0
    %8930 = vmatpush1.bf16.msra.mxu0 0
    %8931 = vmatprep.subr.bf16.mxu0 0
    %8932 = vmatpush1.bf16.msra.mxu0 %v8912
    %8933 = vmatprep.subr.bf16.mxu0 0
    %8934 = vmatpush2.bf16.msra.mxu0 0
    %8935 = vmatprep.subr.bf16.mxu0 0
    %8936 = vmatpush2.bf16.msra.mxu0 0
    %8937 = vmatprep.subr.bf16.mxu0 0
    %8938 = vmatpush2.bf16.msra.mxu0 0
    %8939 = vmatprep.subr.bf16.mxu0 0
    %8940 = vmatpush2.bf16.msra.mxu0 0
    %8941 = vmatprep.subr.bf16.mxu0 0
    %8942 = vmatpush2.bf16.msra.mxu0 0
    %8943 = vmatprep.subr.bf16.mxu0 0
    %8944 = vmatpush2.bf16.msra.mxu0 0
    %8945 = vmatprep.subr.bf16.mxu0 0
    %8946 = vmatpush2.bf16.msra.mxu0 0
    %8947 = vmatprep.subr.bf16.mxu0 0
    %8948 = vmatpush2.bf16.msra.mxu0 0
    %8949 = vmatprep.mubr.bf16.mxu0 0
    %8950 = vmatmul.mubr.bf16.gmra.mxu0 %v8915
    %v8951 = vpop.f32.mrf.mxu0
    %v8952 = vadd.f32 0.0, %v8951
    %v8953 = vpop.f32.mrf.mxu0
    %v8954 = vpop.f32.mrf.mxu0
    %v8955 = vadd.f32 0.0, %v8954
    %v8956 = vpop.f32.mrf.mxu0
    %8957 = vdwg.mxu0
    %8958 = vrot.lane.b32.xlu0 %v1183, 32
    %v8959 = vpop.permute.xlu0 %8958
    %v8962 = vsel %vm1980, %v8252, 0
    %8964 = vmatprep.subr.bf16.mxu0 0
    %8965 = vmatpush1.bf16.msra.mxu0 0
    %8966 = vmatprep.subr.bf16.mxu0 0
    %8967 = vmatpush1.bf16.msra.mxu0 0
    %8968 = vmatprep.subr.bf16.mxu0 0
    %8969 = vmatpush1.bf16.msra.mxu0 0
    %8970 = vmatprep.subr.bf16.mxu0 0
    %8971 = vmatpush1.bf16.msra.mxu0 0
    %8972 = vmatprep.subr.bf16.mxu0 0
    %8973 = vmatpush1.bf16.msra.mxu0 0
    %8974 = vmatprep.subr.bf16.mxu0 0
    %8975 = vmatpush1.bf16.msra.mxu0 0
    %8976 = vmatprep.subr.bf16.mxu0 0
    %8977 = vmatpush1.bf16.msra.mxu0 0
    %8978 = vmatprep.subr.bf16.mxu0 0
    %8979 = vmatpush1.bf16.msra.mxu0 %v8959
    %8980 = vmatprep.subr.bf16.mxu0 0
    %8981 = vmatpush2.bf16.msra.mxu0 0
    %8982 = vmatprep.subr.bf16.mxu0 0
    %8983 = vmatpush2.bf16.msra.mxu0 0
    %8984 = vmatprep.subr.bf16.mxu0 0
    %8985 = vmatpush2.bf16.msra.mxu0 0
    %8986 = vmatprep.subr.bf16.mxu0 0
    %8987 = vmatpush2.bf16.msra.mxu0 0
    %8988 = vmatprep.subr.bf16.mxu0 0
    %8989 = vmatpush2.bf16.msra.mxu0 0
    %8990 = vmatprep.subr.bf16.mxu0 0
    %8991 = vmatpush2.bf16.msra.mxu0 0
    %8992 = vmatprep.subr.bf16.mxu0 0
    %8993 = vmatpush2.bf16.msra.mxu0 0
    %8994 = vmatprep.subr.bf16.mxu0 0
    %8995 = vmatpush2.bf16.msra.mxu0 0
    %8996 = vmatprep.mubr.bf16.mxu0 0
    %8997 = vmatmul.mubr.bf16.gmra.mxu0 %v8962
    %v8998 = vpop.f32.mrf.mxu0
    %v8999 = vadd.f32 0.0, %v8998
    %v9000 = vpop.f32.mrf.mxu0
    %v9001 = vpop.f32.mrf.mxu0
    %v9002 = vadd.f32 0.0, %v9001
    %v9003 = vpop.f32.mrf.mxu0
    %9004 = vdwg.mxu0
    %9037 = vrot.lane.b32.xlu0 %v4343, 32
    %v9038 = vpop.permute.xlu0 %9037
    %9039 = vrot.lane.b32.xlu0 %v4346, 32
    %v9040 = vpop.permute.xlu0 %9039
    %9041 = vrot.lane.b32.xlu0 %v4391, 32
    %v9042 = vpop.permute.xlu0 %9041
    %9043 = vrot.lane.b32.xlu0 %v4394, 32
    %v9044 = vpop.permute.xlu0 %9043
    %9045 = vrot.lane.b32.xlu0 %v4439, 32
    %v9046 = vpop.permute.xlu0 %9045
    %9047 = vrot.lane.b32.xlu0 %v4442, 32
    %v9048 = vpop.permute.xlu0 %9047
    %9049 = vrot.lane.b32.xlu0 %v4487, 32
    %v9050 = vpop.permute.xlu0 %9049
    %9051 = vrot.lane.b32.xlu0 %v4490, 32
    %v9052 = vpop.permute.xlu0 %9051
    %9053 = vrot.lane.b32.xlu0 %v4535, 32
    %v9054 = vpop.permute.xlu0 %9053
    %9055 = vrot.lane.b32.xlu0 %v4538, 32
    %v9056 = vpop.permute.xlu0 %9055
    %9057 = vrot.lane.b32.xlu0 %v4583, 32
    %v9058 = vpop.permute.xlu0 %9057
    %9059 = vrot.lane.b32.xlu0 %v4586, 32
    %v9060 = vpop.permute.xlu0 %9059
    %9061 = vrot.lane.b32.xlu0 %v4631, 32
    %v9062 = vpop.permute.xlu0 %9061
    %9063 = vrot.lane.b32.xlu0 %v4634, 32
    %v9064 = vpop.permute.xlu0 %9063
    %9065 = vrot.lane.b32.xlu0 %v4679, 32
    %v9066 = vpop.permute.xlu0 %9065
    %9067 = vrot.lane.b32.xlu0 %v4682, 32
    %v9068 = vpop.permute.xlu0 %9067
    %9069 = vrot.lane.b32.xlu0 %v4727, 32
    %v9070 = vpop.permute.xlu0 %9069
    %9071 = vrot.lane.b32.xlu0 %v4730, 32
    %v9072 = vpop.permute.xlu0 %9071
    %9073 = vrot.lane.b32.xlu0 %v4775, 32
    %v9074 = vpop.permute.xlu0 %9073
    %9075 = vrot.lane.b32.xlu0 %v4778, 32
    %v9076 = vpop.permute.xlu0 %9075
    %9077 = vrot.lane.b32.xlu0 %v4823, 32
    %v9078 = vpop.permute.xlu0 %9077
    %9079 = vrot.lane.b32.xlu0 %v4826, 32
    %v9080 = vpop.permute.xlu0 %9079
    %9081 = vrot.lane.b32.xlu0 %v4871, 32
    %v9082 = vpop.permute.xlu0 %9081
    %9083 = vrot.lane.b32.xlu0 %v4874, 32
    %v9084 = vpop.permute.xlu0 %9083
    %9085 = vrot.lane.b32.xlu0 %v4919, 32
    %v9086 = vpop.permute.xlu0 %9085
    %9087 = vrot.lane.b32.xlu0 %v4922, 32
    %v9088 = vpop.permute.xlu0 %9087
    %9089 = vrot.lane.b32.xlu0 %v4967, 32
    %v9090 = vpop.permute.xlu0 %9089
    %9091 = vrot.lane.b32.xlu0 %v4970, 32
    %v9092 = vpop.permute.xlu0 %9091
    %9093 = vrot.lane.b32.xlu0 %v5015, 32
    %v9094 = vpop.permute.xlu0 %9093
    %9095 = vrot.lane.b32.xlu0 %v5018, 32
    %v9096 = vpop.permute.xlu0 %9095
    %9097 = vrot.lane.b32.xlu0 %v5063, 32
    %v9098 = vpop.permute.xlu0 %9097
    %9099 = vrot.lane.b32.xlu0 %v5066, 32
    %v9100 = vpop.permute.xlu0 %9099
    %9165 = vrot.lane.b32.xlu0 %v6326, 64
    %v9166 = vpop.permute.xlu0 %9165
    %9167 = vrot.lane.b32.xlu0 %v6329, 64
    %v9168 = vpop.permute.xlu0 %9167
    %9169 = vrot.lane.b32.xlu0 %v6373, 64
    %v9170 = vpop.permute.xlu0 %9169
    %9171 = vrot.lane.b32.xlu0 %v6376, 64
    %v9172 = vpop.permute.xlu0 %9171
    %9173 = vrot.lane.b32.xlu0 %v6420, 64
    %v9174 = vpop.permute.xlu0 %9173
    %9175 = vrot.lane.b32.xlu0 %v6423, 64
    %v9176 = vpop.permute.xlu0 %9175
    %9177 = vrot.lane.b32.xlu0 %v6467, 64
    %v9178 = vpop.permute.xlu0 %9177
    %9179 = vrot.lane.b32.xlu0 %v6470, 64
    %v9180 = vpop.permute.xlu0 %9179
    %9181 = vrot.lane.b32.xlu0 %v6514, 64
    %v9182 = vpop.permute.xlu0 %9181
    %9183 = vrot.lane.b32.xlu0 %v6517, 64
    %v9184 = vpop.permute.xlu0 %9183
    %9185 = vrot.lane.b32.xlu0 %v6561, 64
    %v9186 = vpop.permute.xlu0 %9185
    %9187 = vrot.lane.b32.xlu0 %v6564, 64
    %v9188 = vpop.permute.xlu0 %9187
    %9189 = vrot.lane.b32.xlu0 %v6608, 64
    %v9190 = vpop.permute.xlu0 %9189
    %9191 = vrot.lane.b32.xlu0 %v6611, 64
    %v9192 = vpop.permute.xlu0 %9191
    %9193 = vrot.lane.b32.xlu0 %v6655, 64
    %v9194 = vpop.permute.xlu0 %9193
    %9195 = vrot.lane.b32.xlu0 %v6658, 64
    %v9196 = vpop.permute.xlu0 %9195
    %9197 = vrot.lane.b32.xlu0 %v6702, 64
    %v9198 = vpop.permute.xlu0 %9197
    %9199 = vrot.lane.b32.xlu0 %v6705, 64
    %v9200 = vpop.permute.xlu0 %9199
    %9201 = vrot.lane.b32.xlu0 %v6749, 64
    %v9202 = vpop.permute.xlu0 %9201
    %9203 = vrot.lane.b32.xlu0 %v6752, 64
    %v9204 = vpop.permute.xlu0 %9203
    %9205 = vrot.lane.b32.xlu0 %v6796, 64
    %v9206 = vpop.permute.xlu0 %9205
    %9207 = vrot.lane.b32.xlu0 %v6799, 64
    %v9208 = vpop.permute.xlu0 %9207
    %9209 = vrot.lane.b32.xlu0 %v6843, 64
    %v9210 = vpop.permute.xlu0 %9209
    %9211 = vrot.lane.b32.xlu0 %v6846, 64
    %v9212 = vpop.permute.xlu0 %9211
    %9213 = vrot.lane.b32.xlu0 %v6890, 64
    %v9214 = vpop.permute.xlu0 %9213
    %9215 = vrot.lane.b32.xlu0 %v6893, 64
    %v9216 = vpop.permute.xlu0 %9215
    %9217 = vrot.lane.b32.xlu0 %v6937, 64
    %v9218 = vpop.permute.xlu0 %9217
    %9219 = vrot.lane.b32.xlu0 %v6940, 64
    %v9220 = vpop.permute.xlu0 %9219
    %9221 = vrot.lane.b32.xlu0 %v6984, 64
    %v9222 = vpop.permute.xlu0 %9221
    %9223 = vrot.lane.b32.xlu0 %v6987, 64
    %v9224 = vpop.permute.xlu0 %9223
    %9225 = vrot.lane.b32.xlu0 %v7031, 64
    %v9226 = vpop.permute.xlu0 %9225
    %9227 = vrot.lane.b32.xlu0 %v7034, 64
    %v9228 = vpop.permute.xlu0 %9227
    %9293 = vrot.lane.b32.xlu0 %v8294, 96
    %v9294 = vpop.permute.xlu0 %9293
    %9295 = vrot.lane.b32.xlu0 %v8297, 96
    %v9296 = vpop.permute.xlu0 %9295
    %9297 = vrot.lane.b32.xlu0 %v8341, 96
    %v9298 = vpop.permute.xlu0 %9297
    %9299 = vrot.lane.b32.xlu0 %v8344, 96
    %v9300 = vpop.permute.xlu0 %9299
    %9301 = vrot.lane.b32.xlu0 %v8388, 96
    %v9302 = vpop.permute.xlu0 %9301
    %9303 = vrot.lane.b32.xlu0 %v8391, 96
    %v9304 = vpop.permute.xlu0 %9303
    %9305 = vrot.lane.b32.xlu0 %v8435, 96
    %v9306 = vpop.permute.xlu0 %9305
    %9307 = vrot.lane.b32.xlu0 %v8438, 96
    %v9308 = vpop.permute.xlu0 %9307
    %9309 = vrot.lane.b32.xlu0 %v8482, 96
    %v9310 = vpop.permute.xlu0 %9309
    %9311 = vrot.lane.b32.xlu0 %v8485, 96
    %v9312 = vpop.permute.xlu0 %9311
    %9313 = vrot.lane.b32.xlu0 %v8529, 96
    %v9314 = vpop.permute.xlu0 %9313
    %9315 = vrot.lane.b32.xlu0 %v8532, 96
    %v9316 = vpop.permute.xlu0 %9315
    %9317 = vrot.lane.b32.xlu0 %v8576, 96
    %v9318 = vpop.permute.xlu0 %9317
    %9319 = vrot.lane.b32.xlu0 %v8579, 96
    %v9320 = vpop.permute.xlu0 %9319
    %9321 = vrot.lane.b32.xlu0 %v8623, 96
    %v9322 = vpop.permute.xlu0 %9321
    %9323 = vrot.lane.b32.xlu0 %v8626, 96
    %v9324 = vpop.permute.xlu0 %9323
    %9325 = vrot.lane.b32.xlu0 %v8670, 96
    %v9326 = vpop.permute.xlu0 %9325
    %9327 = vrot.lane.b32.xlu0 %v8673, 96
    %v9328 = vpop.permute.xlu0 %9327
    %9329 = vrot.lane.b32.xlu0 %v8717, 96
    %v9330 = vpop.permute.xlu0 %9329
    %9331 = vrot.lane.b32.xlu0 %v8720, 96
    %v9332 = vpop.permute.xlu0 %9331
    %9333 = vrot.lane.b32.xlu0 %v8764, 96
    %v9334 = vpop.permute.xlu0 %9333
    %9335 = vrot.lane.b32.xlu0 %v8767, 96
    %v9336 = vpop.permute.xlu0 %9335
    %9337 = vrot.lane.b32.xlu0 %v8811, 96
    %v9338 = vpop.permute.xlu0 %9337
    %9339 = vrot.lane.b32.xlu0 %v8814, 96
    %v9340 = vpop.permute.xlu0 %9339
    %9341 = vrot.lane.b32.xlu0 %v8858, 96
    %v9342 = vpop.permute.xlu0 %9341
    %9343 = vrot.lane.b32.xlu0 %v8861, 96
    %v9344 = vpop.permute.xlu0 %9343
    %9345 = vrot.lane.b32.xlu0 %v8905, 96
    %v9346 = vpop.permute.xlu0 %9345
    %9347 = vrot.lane.b32.xlu0 %v8908, 96
    %v9348 = vpop.permute.xlu0 %9347
    %9349 = vrot.lane.b32.xlu0 %v8952, 96
    %v9350 = vpop.permute.xlu0 %9349
    %9351 = vrot.lane.b32.xlu0 %v8955, 96
    %v9352 = vpop.permute.xlu0 %9351
    %9353 = vrot.lane.b32.xlu0 %v8999, 96
    %v9354 = vpop.permute.xlu0 %9353
    %9355 = vrot.lane.b32.xlu0 %v9002, 96
    %v9356 = vpop.permute.xlu0 %9355
    %v9389 = vsel %vm1191, %v2387, %v9038
    %v9390 = vsel %vm1191, %v2390, %v9040
    %v9391 = vsel %vm1191, %v2431, %v9042
    %v9392 = vsel %vm1191, %v2434, %v9044
    %v9393 = vsel %vm1191, %v2475, %v9046
    %v9394 = vsel %vm1191, %v2478, %v9048
    %v9395 = vsel %vm1191, %v2519, %v9050
    %v9396 = vsel %vm1191, %v2522, %v9052
    %v9397 = vsel %vm1191, %v2563, %v9054
    %v9398 = vsel %vm1191, %v2566, %v9056
    %v9399 = vsel %vm1191, %v2607, %v9058
    %v9400 = vsel %vm1191, %v2610, %v9060
    %v9401 = vsel %vm1191, %v2651, %v9062
    %v9402 = vsel %vm1191, %v2654, %v9064
    %v9403 = vsel %vm1191, %v2695, %v9066
    %v9404 = vsel %vm1191, %v2698, %v9068
    %v9405 = vsel %vm1191, %v2739, %v9070
    %v9406 = vsel %vm1191, %v2742, %v9072
    %v9407 = vsel %vm1191, %v2783, %v9074
    %v9408 = vsel %vm1191, %v2786, %v9076
    %v9409 = vsel %vm1191, %v2827, %v9078
    %v9410 = vsel %vm1191, %v2830, %v9080
    %v9411 = vsel %vm1191, %v2871, %v9082
    %v9412 = vsel %vm1191, %v2874, %v9084
    %v9413 = vsel %vm1191, %v2915, %v9086
    %v9414 = vsel %vm1191, %v2918, %v9088
    %v9415 = vsel %vm1191, %v2959, %v9090
    %v9416 = vsel %vm1191, %v2962, %v9092
    %v9417 = vsel %vm1191, %v3003, %v9094
    %v9418 = vsel %vm1191, %v3006, %v9096
    %v9419 = vsel %vm1191, %v3047, %v9098
    %v9420 = vsel %vm1191, %v3050, %v9100
    %vm9421 = vcmask 523264
    %v9422 = vsel %vm9421, %v9389, %v9166
    %v9423 = vsel %vm9421, %v9390, %v9168
    %v9424 = vsel %vm9421, %v9391, %v9170
    %v9425 = vsel %vm9421, %v9392, %v9172
    %v9426 = vsel %vm9421, %v9393, %v9174
    %v9427 = vsel %vm9421, %v9394, %v9176
    %v9428 = vsel %vm9421, %v9395, %v9178
    %v9429 = vsel %vm9421, %v9396, %v9180
    %v9430 = vsel %vm9421, %v9397, %v9182
    %v9431 = vsel %vm9421, %v9398, %v9184
    %v9432 = vsel %vm9421, %v9399, %v9186
    %v9433 = vsel %vm9421, %v9400, %v9188
    %v9434 = vsel %vm9421, %v9401, %v9190
    %v9435 = vsel %vm9421, %v9402, %v9192
    %v9436 = vsel %vm9421, %v9403, %v9194
    %v9437 = vsel %vm9421, %v9404, %v9196
    %v9438 = vsel %vm9421, %v9405, %v9198
    %v9439 = vsel %vm9421, %v9406, %v9200
    %v9440 = vsel %vm9421, %v9407, %v9202
    %v9441 = vsel %vm9421, %v9408, %v9204
    %v9442 = vsel %vm9421, %v9409, %v9206
    %v9443 = vsel %vm9421, %v9410, %v9208
    %v9444 = vsel %vm9421, %v9411, %v9210
    %v9445 = vsel %vm9421, %v9412, %v9212
    %v9446 = vsel %vm9421, %v9413, %v9214
    %v9447 = vsel %vm9421, %v9414, %v9216
    %v9448 = vsel %vm9421, %v9415, %v9218
    %v9449 = vsel %vm9421, %v9416, %v9220
    %v9450 = vsel %vm9421, %v9417, %v9222
    %v9451 = vsel %vm9421, %v9418, %v9224
    %v9452 = vsel %vm9421, %v9419, %v9226
    %v9453 = vsel %vm9421, %v9420, %v9228
    %vm9454 = vcmask 785408
    %v9455 = vsel %vm9454, %v9422, %v9294
    %v9456 = vsel %vm9454, %v9423, %v9296
    %v9457 = vsel %vm9454, %v9424, %v9298
    %v9458 = vsel %vm9454, %v9425, %v9300
    %v9459 = vsel %vm9454, %v9426, %v9302
    %v9460 = vsel %vm9454, %v9427, %v9304
    %v9461 = vsel %vm9454, %v9428, %v9306
    %v9462 = vsel %vm9454, %v9429, %v9308
    %v9463 = vsel %vm9454, %v9430, %v9310
    %v9464 = vsel %vm9454, %v9431, %v9312
    %v9465 = vsel %vm9454, %v9432, %v9314
    %v9466 = vsel %vm9454, %v9433, %v9316
    %v9467 = vsel %vm9454, %v9434, %v9318
    %v9468 = vsel %vm9454, %v9435, %v9320
    %v9469 = vsel %vm9454, %v9436, %v9322
    %v9470 = vsel %vm9454, %v9437, %v9324
    %v9471 = vsel %vm9454, %v9438, %v9326
    %v9472 = vsel %vm9454, %v9439, %v9328
    %v9473 = vsel %vm9454, %v9440, %v9330
    %v9474 = vsel %vm9454, %v9441, %v9332
    %v9475 = vsel %vm9454, %v9442, %v9334
    %v9476 = vsel %vm9454, %v9443, %v9336
    %v9477 = vsel %vm9454, %v9444, %v9338
    %v9478 = vsel %vm9454, %v9445, %v9340
    %v9479 = vsel %vm9454, %v9446, %v9342
    %v9480 = vsel %vm9454, %v9447, %v9344
    %v9481 = vsel %vm9454, %v9448, %v9346
    %v9482 = vsel %vm9454, %v9449, %v9348
    %v9483 = vsel %vm9454, %v9450, %v9350
    %v9484 = vsel %vm9454, %v9451, %v9352
    %v9485 = vsel %vm9454, %v9452, %v9354
    %v9486 = vsel %vm9454, %v9453, %v9356
    %v9487 = vpack.c.bf16 %v9456, %v9455
    %v9488 = vpack.c.bf16 %v9458, %v9457
    %v9489 = vpack.c.bf16 %v9460, %v9459
    %v9490 = vpack.c.bf16 %v9462, %v9461
    %v9491 = vpack.c.bf16 %v9464, %v9463
    %v9492 = vpack.c.bf16 %v9466, %v9465
    %v9493 = vpack.c.bf16 %v9468, %v9467
    %v9494 = vpack.c.bf16 %v9470, %v9469
    %v9495 = vpack.c.bf16 %v9472, %v9471
    %v9496 = vpack.c.bf16 %v9474, %v9473
    %v9497 = vpack.c.bf16 %v9476, %v9475
    %v9498 = vpack.c.bf16 %v9478, %v9477
    %v9499 = vpack.c.bf16 %v9480, %v9479
    %v9500 = vpack.c.bf16 %v9482, %v9481
    %v9501 = vpack.c.bf16 %v9484, %v9483
    %v9502 = vpack.c.bf16 %v9486, %v9485
    %v9503 = vld [vmem:[#allocation7] sm:$0xf]
    %v9504 = vld [vmem:[#allocation7 + $0x4] sm:$0xf]
    %v9505 = vld [vmem:[#allocation7 + $0x8] sm:$0xf]
    %v9506 = vld [vmem:[#allocation7 + $0xc] sm:$0xf]
    %v9507 = vld [vmem:[#allocation7 + $0x10] sm:$0xf]
    %v9508 = vld [vmem:[#allocation7 + $0x14] sm:$0xf]
    %v9509 = vld [vmem:[#allocation7 + $0x18] sm:$0xf]
    %v9510 = vld [vmem:[#allocation7 + $0x1c] sm:$0xf]
    %v9511 = vld [vmem:[#allocation7 + $0x20] sm:$0xf]
    %v9512 = vld [vmem:[#allocation7 + $0x24] sm:$0xf]
    %v9513 = vld [vmem:[#allocation7 + $0x28] sm:$0xf]
    %v9514 = vld [vmem:[#allocation7 + $0x2c] sm:$0xf]
    %v9515 = vld [vmem:[#allocation7 + $0x30] sm:$0xf]
    %v9516 = vld [vmem:[#allocation7 + $0x34] sm:$0xf]
    %v9517 = vld [vmem:[#allocation7 + $0x38] sm:$0xf]
    %v9518 = vld [vmem:[#allocation7 + $0x3c] sm:$0xf]
    %v9535 = vunpack.c.l.b16 %v9503
    %v9536 = vunpack.c.l.b16 %v9504
    %v9537 = vunpack.c.l.b16 %v9505
    %v9538 = vunpack.c.l.b16 %v9506
    %v9539 = vunpack.c.l.b16 %v9507
    %v9540 = vunpack.c.l.b16 %v9508
    %v9541 = vunpack.c.l.b16 %v9509
    %v9542 = vunpack.c.l.b16 %v9510
    %v9543 = vunpack.c.l.b16 %v9511
    %v9544 = vunpack.c.l.b16 %v9512
    %v9545 = vunpack.c.l.b16 %v9513
    %v9546 = vunpack.c.l.b16 %v9514
    %v9547 = vunpack.c.l.b16 %v9515
    %v9548 = vunpack.c.l.b16 %v9516
    %v9549 = vunpack.c.l.b16 %v9517
    %v9550 = vunpack.c.l.b16 %v9518
    %v9551 = vpack.c.b16 %v9536, %v9535
    %v9552 = vpack.c.b16 %v9538, %v9537
    %v9553 = vpack.c.b16 %v9540, %v9539
    %v9554 = vpack.c.b16 %v9542, %v9541
    %v9555 = vpack.c.b16 %v9544, %v9543
    %v9556 = vpack.c.b16 %v9546, %v9545
    %v9557 = vpack.c.b16 %v9548, %v9547
    %v9558 = vpack.c.b16 %v9550, %v9549
    %9567 = vmatprep.subr.bf16.mxu0 0
    %9568 = vmatpush1.bf16.msra.mxu0 %v9558
    %9569 = vmatprep.subr.bf16.mxu0 0
    %9570 = vmatpush1.bf16.msra.mxu0 %v9557
    %9571 = vmatprep.subr.bf16.mxu0 0
    %9572 = vmatpush1.bf16.msra.mxu0 %v9556
    %9573 = vmatprep.subr.bf16.mxu0 0
    %9574 = vmatpush1.bf16.msra.mxu0 %v9555
    %9575 = vmatprep.subr.bf16.mxu0 0
    %9576 = vmatpush1.bf16.msra.mxu0 %v9554
    %9577 = vmatprep.subr.bf16.mxu0 0
    %9578 = vmatpush1.bf16.msra.mxu0 %v9553
    %9579 = vmatprep.subr.bf16.mxu0 0
    %9580 = vmatpush1.bf16.msra.mxu0 %v9552
    %9581 = vmatprep.subr.bf16.mxu0 0
    %9582 = vmatpush1.bf16.msra.mxu0 %v9551
    %9583 = vmatprep.subr.bf16.mxu0 0
    %9584 = vmatpush2.bf16.msra.mxu0 0
    %9585 = vmatprep.subr.bf16.mxu0 0
    %9586 = vmatpush2.bf16.msra.mxu0 0
    %9587 = vmatprep.subr.bf16.mxu0 0
    %9588 = vmatpush2.bf16.msra.mxu0 0
    %9589 = vmatprep.subr.bf16.mxu0 0
    %9590 = vmatpush2.bf16.msra.mxu0 0
    %9591 = vmatprep.subr.bf16.mxu0 0
    %9592 = vmatpush2.bf16.msra.mxu0 0
    %9593 = vmatprep.subr.bf16.mxu0 0
    %9594 = vmatpush2.bf16.msra.mxu0 0
    %9595 = vmatprep.subr.bf16.mxu0 0
    %9596 = vmatpush2.bf16.msra.mxu0 0
    %9597 = vmatprep.subr.bf16.mxu0 0
    %9598 = vmatpush2.bf16.msra.mxu0 0
    %9599 = vmatprep.mubr.bf16.mxu0 0
    %9600 = vmatmul.mubr.bf16.gmra.mxu0 %v9487
    %v9601 = vpop.f32.mrf.mxu0
    %v9602 = vadd.f32 0.0, %v9601
    %v9603 = vpop.f32.mrf.mxu0
    %v9604 = vpop.f32.mrf.mxu0
    %v9605 = vadd.f32 0.0, %v9604
    %v9606 = vpop.f32.mrf.mxu0
    %9607 = vmatprep.mubr.bf16.mxu0 0
    %9608 = vmatmul.mubr.bf16.gmra.mxu0 %v9488
    %v9609 = vpop.f32.mrf.mxu0
    %v9610 = vadd.f32 0.0, %v9609
    %v9611 = vpop.f32.mrf.mxu0
    %v9612 = vpop.f32.mrf.mxu0
    %v9613 = vadd.f32 0.0, %v9612
    %v9614 = vpop.f32.mrf.mxu0
    %9615 = vmatprep.mubr.bf16.mxu0 0
    %9616 = vmatmul.mubr.bf16.gmra.mxu0 %v9489
    %v9617 = vpop.f32.mrf.mxu0
    %v9618 = vadd.f32 0.0, %v9617
    %v9619 = vpop.f32.mrf.mxu0
    %v9620 = vpop.f32.mrf.mxu0
    %v9621 = vadd.f32 0.0, %v9620
    %v9622 = vpop.f32.mrf.mxu0
    %9623 = vmatprep.mubr.bf16.mxu0 0
    %9624 = vmatmul.mubr.bf16.gmra.mxu0 %v9490
    %v9625 = vpop.f32.mrf.mxu0
    %v9626 = vadd.f32 0.0, %v9625
    %v9627 = vpop.f32.mrf.mxu0
    %v9628 = vpop.f32.mrf.mxu0
    %v9629 = vadd.f32 0.0, %v9628
    %v9630 = vpop.f32.mrf.mxu0
    %9631 = vmatprep.mubr.bf16.mxu0 0
    %9632 = vmatmul.mubr.bf16.gmra.mxu0 %v9491
    %v9633 = vpop.f32.mrf.mxu0
    %v9634 = vadd.f32 0.0, %v9633
    %v9635 = vpop.f32.mrf.mxu0
    %v9636 = vpop.f32.mrf.mxu0
    %v9637 = vadd.f32 0.0, %v9636
    %v9638 = vpop.f32.mrf.mxu0
    %9639 = vmatprep.mubr.bf16.mxu0 0
    %9640 = vmatmul.mubr.bf16.gmra.mxu0 %v9492
    %v9641 = vpop.f32.mrf.mxu0
    %v9642 = vadd.f32 0.0, %v9641
    %v9643 = vpop.f32.mrf.mxu0
    %v9644 = vpop.f32.mrf.mxu0
    %v9645 = vadd.f32 0.0, %v9644
    %v9646 = vpop.f32.mrf.mxu0
    %9647 = vmatprep.mubr.bf16.mxu0 0
    %9648 = vmatmul.mubr.bf16.gmra.mxu0 %v9493
    %v9649 = vpop.f32.mrf.mxu0
    %v9650 = vadd.f32 0.0, %v9649
    %v9651 = vpop.f32.mrf.mxu0
    %v9652 = vpop.f32.mrf.mxu0
    %v9653 = vadd.f32 0.0, %v9652
    %v9654 = vpop.f32.mrf.mxu0
    %9655 = vmatprep.mubr.bf16.mxu0 0
    %9656 = vmatmul.mubr.bf16.gmra.mxu0 %v9494
    %v9657 = vpop.f32.mrf.mxu0
    %v9658 = vadd.f32 0.0, %v9657
    %v9659 = vpop.f32.mrf.mxu0
    %v9660 = vpop.f32.mrf.mxu0
    %v9661 = vadd.f32 0.0, %v9660
    %v9662 = vpop.f32.mrf.mxu0
    %9663 = vmatprep.mubr.bf16.mxu0 0
    %9664 = vmatmul.mubr.bf16.gmra.mxu0 %v9495
    %v9665 = vpop.f32.mrf.mxu0
    %v9666 = vadd.f32 0.0, %v9665
    %v9667 = vpop.f32.mrf.mxu0
    %v9668 = vpop.f32.mrf.mxu0
    %v9669 = vadd.f32 0.0, %v9668
    %v9670 = vpop.f32.mrf.mxu0
    %9671 = vmatprep.mubr.bf16.mxu0 0
    %9672 = vmatmul.mubr.bf16.gmra.mxu0 %v9496
    %v9673 = vpop.f32.mrf.mxu0
    %v9674 = vadd.f32 0.0, %v9673
    %v9675 = vpop.f32.mrf.mxu0
    %v9676 = vpop.f32.mrf.mxu0
    %v9677 = vadd.f32 0.0, %v9676
    %v9678 = vpop.f32.mrf.mxu0
    %9679 = vmatprep.mubr.bf16.mxu0 0
    %9680 = vmatmul.mubr.bf16.gmra.mxu0 %v9497
    %v9681 = vpop.f32.mrf.mxu0
    %v9682 = vadd.f32 0.0, %v9681
    %v9683 = vpop.f32.mrf.mxu0
    %v9684 = vpop.f32.mrf.mxu0
    %v9685 = vadd.f32 0.0, %v9684
    %v9686 = vpop.f32.mrf.mxu0
    %9687 = vmatprep.mubr.bf16.mxu0 0
    %9688 = vmatmul.mubr.bf16.gmra.mxu0 %v9498
    %v9689 = vpop.f32.mrf.mxu0
    %v9690 = vadd.f32 0.0, %v9689
    %v9691 = vpop.f32.mrf.mxu0
    %v9692 = vpop.f32.mrf.mxu0
    %v9693 = vadd.f32 0.0, %v9692
    %v9694 = vpop.f32.mrf.mxu0
    %9695 = vmatprep.mubr.bf16.mxu0 0
    %9696 = vmatmul.mubr.bf16.gmra.mxu0 %v9499
    %v9697 = vpop.f32.mrf.mxu0
    %v9698 = vadd.f32 0.0, %v9697
    %v9699 = vpop.f32.mrf.mxu0
    %v9700 = vpop.f32.mrf.mxu0
    %v9701 = vadd.f32 0.0, %v9700
    %v9702 = vpop.f32.mrf.mxu0
    %9703 = vmatprep.mubr.bf16.mxu0 0
    %9704 = vmatmul.mubr.bf16.gmra.mxu0 %v9500
    %v9705 = vpop.f32.mrf.mxu0
    %v9706 = vadd.f32 0.0, %v9705
    %v9707 = vpop.f32.mrf.mxu0
    %v9708 = vpop.f32.mrf.mxu0
    %v9709 = vadd.f32 0.0, %v9708
    %v9710 = vpop.f32.mrf.mxu0
    %9711 = vmatprep.mubr.bf16.mxu0 0
    %9712 = vmatmul.mubr.bf16.gmra.mxu0 %v9501
    %v9713 = vpop.f32.mrf.mxu0
    %v9714 = vadd.f32 0.0, %v9713
    %v9715 = vpop.f32.mrf.mxu0
    %v9716 = vpop.f32.mrf.mxu0
    %v9717 = vadd.f32 0.0, %v9716
    %v9718 = vpop.f32.mrf.mxu0
    %9719 = vmatprep.mubr.bf16.mxu0 0
    %9720 = vmatmul.mubr.bf16.gmra.mxu0 %v9502
    %v9721 = vpop.f32.mrf.mxu0
    %v9722 = vadd.f32 0.0, %v9721
    %v9723 = vpop.f32.mrf.mxu0
    %v9724 = vpop.f32.mrf.mxu0
    %v9725 = vadd.f32 0.0, %v9724
    %v9726 = vpop.f32.mrf.mxu0
    %9727 = vdwg.mxu0
    %v9728 = vadd.f32 %v111, %v9602
    %v9729 = vadd.f32 %v112, %v9605
    %v9730 = vadd.f32 %v113, %v9610
    %v9731 = vadd.f32 %v114, %v9613
    %v9732 = vadd.f32 %v115, %v9618
    %v9733 = vadd.f32 %v116, %v9621
    %v9734 = vadd.f32 %v117, %v9626
    %v9735 = vadd.f32 %v118, %v9629
    %v9736 = vadd.f32 %v119, %v9634
    %v9737 = vadd.f32 %v120, %v9637
    %v9738 = vadd.f32 %v121, %v9642
    %v9739 = vadd.f32 %v122, %v9645
    %v9740 = vadd.f32 %v123, %v9650
    %v9741 = vadd.f32 %v124, %v9653
    %v9742 = vadd.f32 %v125, %v9658
    %v9743 = vadd.f32 %v126, %v9661
    %v9744 = vadd.f32 %v127, %v9666
    %v9745 = vadd.f32 %v128, %v9669
    %v9746 = vadd.f32 %v129, %v9674
    %v9747 = vadd.f32 %v130, %v9677
    %v9748 = vadd.f32 %v131, %v9682
    %v9749 = vadd.f32 %v132, %v9685
    %v9750 = vadd.f32 %v133, %v9690
    %v9751 = vadd.f32 %v134, %v9693
    %v9752 = vadd.f32 %v135, %v9698
    %v9753 = vadd.f32 %v136, %v9701
    %v9754 = vadd.f32 %v137, %v9706
    %v9755 = vadd.f32 %v138, %v9709
    %v9756 = vadd.f32 %v139, %v9714
    %v9757 = vadd.f32 %v140, %v9717
    %v9758 = vadd.f32 %v141, %v9722
    %v9759 = vadd.f32 %v142, %v9725
    %v9760 = vld [vmem:[%s3] sm:$0x1]
    %v9762 = vlaneseq
    %v9763 = vshrl.u32 %v9762, 7
    %v9764 = vsub.s32 0, %v9763
    %v9765 = vrot.slane %v9760, %v9764
    %v9767 = vadd.f32 %v9728, %v9765
    %v9768 = vadd.f32 %v9729, %v9765
    %v9769 = vadd.f32 %v9730, %v9765
    %v9770 = vadd.f32 %v9731, %v9765
    %v9771 = vadd.f32 %v9732, %v9765
    %v9772 = vadd.f32 %v9733, %v9765
    %v9773 = vadd.f32 %v9734, %v9765
    %v9774 = vadd.f32 %v9735, %v9765
    %v9775 = vadd.f32 %v9736, %v9765
    %v9776 = vadd.f32 %v9737, %v9765
    %v9777 = vadd.f32 %v9738, %v9765
    %v9778 = vadd.f32 %v9739, %v9765
    %v9779 = vadd.f32 %v9740, %v9765
    %v9780 = vadd.f32 %v9741, %v9765
    %v9781 = vadd.f32 %v9742, %v9765
    %v9782 = vadd.f32 %v9743, %v9765
    %v9783 = vadd.f32 %v9744, %v9765
    %v9784 = vadd.f32 %v9745, %v9765
    %v9785 = vadd.f32 %v9746, %v9765
    %v9786 = vadd.f32 %v9747, %v9765
    %v9787 = vadd.f32 %v9748, %v9765
    %v9788 = vadd.f32 %v9749, %v9765
    %v9789 = vadd.f32 %v9750, %v9765
    %v9790 = vadd.f32 %v9751, %v9765
    %v9791 = vadd.f32 %v9752, %v9765
    %v9792 = vadd.f32 %v9753, %v9765
    %v9793 = vadd.f32 %v9754, %v9765
    %v9794 = vadd.f32 %v9755, %v9765
    %v9795 = vadd.f32 %v9756, %v9765
    %v9796 = vadd.f32 %v9757, %v9765
    %v9797 = vadd.f32 %v9758, %v9765
    %v9798 = vadd.f32 %v9759, %v9765
    %v9799 = vld [vmem:[%s6] sm:$0x1]
    %v9800 = vld [vmem:[%s7] sm:$0x1]
    %9801 = vadd.xlane.f32.xlu0 %v9767
    %v9802 = vpop.xlane.xlu0 %9801
    %9803 = vadd.xlane.f32.xlu0 %v9768
    %v9804 = vpop.xlane.xlu0 %9803
    %9805 = vadd.xlane.f32.xlu0 %v9769
    %v9806 = vpop.xlane.xlu0 %9805
    %9807 = vadd.xlane.f32.xlu0 %v9770
    %v9808 = vpop.xlane.xlu0 %9807
    %9809 = vadd.xlane.f32.xlu0 %v9771
    %v9810 = vpop.xlane.xlu0 %9809
    %9811 = vadd.xlane.f32.xlu0 %v9772
    %v9812 = vpop.xlane.xlu0 %9811
    %9813 = vadd.xlane.f32.xlu0 %v9773
    %v9814 = vpop.xlane.xlu0 %9813
    %9815 = vadd.xlane.f32.xlu0 %v9774
    %v9816 = vpop.xlane.xlu0 %9815
    %9817 = vadd.xlane.f32.xlu0 %v9775
    %v9818 = vpop.xlane.xlu0 %9817
    %9819 = vadd.xlane.f32.xlu0 %v9776
    %v9820 = vpop.xlane.xlu0 %9819
    %9821 = vadd.xlane.f32.xlu0 %v9777
    %v9822 = vpop.xlane.xlu0 %9821
    %9823 = vadd.xlane.f32.xlu0 %v9778
    %v9824 = vpop.xlane.xlu0 %9823
    %9825 = vadd.xlane.f32.xlu0 %v9779
    %v9826 = vpop.xlane.xlu0 %9825
    %9827 = vadd.xlane.f32.xlu0 %v9780
    %v9828 = vpop.xlane.xlu0 %9827
    %9829 = vadd.xlane.f32.xlu0 %v9781
    %v9830 = vpop.xlane.xlu0 %9829
    %9831 = vadd.xlane.f32.xlu0 %v9782
    %v9832 = vpop.xlane.xlu0 %9831
    %9833 = vadd.xlane.f32.xlu0 %v9783
    %v9834 = vpop.xlane.xlu0 %9833
    %9835 = vadd.xlane.f32.xlu0 %v9784
    %v9836 = vpop.xlane.xlu0 %9835
    %9837 = vadd.xlane.f32.xlu0 %v9785
    %v9838 = vpop.xlane.xlu0 %9837
    %9839 = vadd.xlane.f32.xlu0 %v9786
    %v9840 = vpop.xlane.xlu0 %9839
    %9841 = vadd.xlane.f32.xlu0 %v9787
    %v9842 = vpop.xlane.xlu0 %9841
    %9843 = vadd.xlane.f32.xlu0 %v9788
    %v9844 = vpop.xlane.xlu0 %9843
    %9845 = vadd.xlane.f32.xlu0 %v9789
    %v9846 = vpop.xlane.xlu0 %9845
    %9847 = vadd.xlane.f32.xlu0 %v9790
    %v9848 = vpop.xlane.xlu0 %9847
    %9849 = vadd.xlane.f32.xlu0 %v9791
    %v9850 = vpop.xlane.xlu0 %9849
    %9851 = vadd.xlane.f32.xlu0 %v9792
    %v9852 = vpop.xlane.xlu0 %9851
    %9853 = vadd.xlane.f32.xlu0 %v9793
    %v9854 = vpop.xlane.xlu0 %9853
    %9855 = vadd.xlane.f32.xlu0 %v9794
    %v9856 = vpop.xlane.xlu0 %9855
    %9857 = vadd.xlane.f32.xlu0 %v9795
    %v9858 = vpop.xlane.xlu0 %9857
    %9859 = vadd.xlane.f32.xlu0 %v9796
    %v9860 = vpop.xlane.xlu0 %9859
    %9861 = vadd.xlane.f32.xlu0 %v9797
    %v9862 = vpop.xlane.xlu0 %9861
    %9863 = vadd.xlane.f32.xlu0 %v9798
    %v9864 = vpop.xlane.xlu0 %9863
    %v9865 = vmul.f32 %v9802, %v209
    %v9866 = vmul.f32 %v9804, %v209
    %v9867 = vmul.f32 %v9806, %v209
    %v9868 = vmul.f32 %v9808, %v209
    %v9869 = vmul.f32 %v9810, %v209
    %v9870 = vmul.f32 %v9812, %v209
    %v9871 = vmul.f32 %v9814, %v209
    %v9872 = vmul.f32 %v9816, %v209
    %v9873 = vmul.f32 %v9818, %v209
    %v9874 = vmul.f32 %v9820, %v209
    %v9875 = vmul.f32 %v9822, %v209
    %v9876 = vmul.f32 %v9824, %v209
    %v9877 = vmul.f32 %v9826, %v209
    %v9878 = vmul.f32 %v9828, %v209
    %v9879 = vmul.f32 %v9830, %v209
    %v9880 = vmul.f32 %v9832, %v209
    %v9881 = vmul.f32 %v9834, %v209
    %v9882 = vmul.f32 %v9836, %v209
    %v9883 = vmul.f32 %v9838, %v209
    %v9884 = vmul.f32 %v9840, %v209
    %v9885 = vmul.f32 %v9842, %v209
    %v9886 = vmul.f32 %v9844, %v209
    %v9887 = vmul.f32 %v9846, %v209
    %v9888 = vmul.f32 %v9848, %v209
    %v9889 = vmul.f32 %v9850, %v209
    %v9890 = vmul.f32 %v9852, %v209
    %v9891 = vmul.f32 %v9854, %v209
    %v9892 = vmul.f32 %v9856, %v209
    %v9893 = vmul.f32 %v9858, %v209
    %v9894 = vmul.f32 %v9860, %v209
    %v9895 = vmul.f32 %v9862, %v209
    %v9896 = vmul.f32 %v9864, %v209
    %v9897 = vsub.f32 %v9767, %v9865
    %v9898 = vsub.f32 %v9768, %v9866
    %v9899 = vsub.f32 %v9769, %v9867
    %v9900 = vsub.f32 %v9770, %v9868
    %v9901 = vsub.f32 %v9771, %v9869
    %v9902 = vsub.f32 %v9772, %v9870
    %v9903 = vsub.f32 %v9773, %v9871
    %v9904 = vsub.f32 %v9774, %v9872
    %v9905 = vsub.f32 %v9775, %v9873
    %v9906 = vsub.f32 %v9776, %v9874
    %v9907 = vsub.f32 %v9777, %v9875
    %v9908 = vsub.f32 %v9778, %v9876
    %v9909 = vsub.f32 %v9779, %v9877
    %v9910 = vsub.f32 %v9780, %v9878
    %v9911 = vsub.f32 %v9781, %v9879
    %v9912 = vsub.f32 %v9782, %v9880
    %v9913 = vsub.f32 %v9783, %v9881
    %v9914 = vsub.f32 %v9784, %v9882
    %v9915 = vsub.f32 %v9785, %v9883
    %v9916 = vsub.f32 %v9786, %v9884
    %v9917 = vsub.f32 %v9787, %v9885
    %v9918 = vsub.f32 %v9788, %v9886
    %v9919 = vsub.f32 %v9789, %v9887
    %v9920 = vsub.f32 %v9790, %v9888
    %v9921 = vsub.f32 %v9791, %v9889
    %v9922 = vsub.f32 %v9792, %v9890
    %v9923 = vsub.f32 %v9793, %v9891
    %v9924 = vsub.f32 %v9794, %v9892
    %v9925 = vsub.f32 %v9795, %v9893
    %v9926 = vsub.f32 %v9796, %v9894
    %v9927 = vsub.f32 %v9797, %v9895
    %v9928 = vsub.f32 %v9798, %v9896
    %v9929 = vmul.f32 %v9897, %v9897
    %v9930 = vmul.f32 %v9898, %v9898
    %v9931 = vmul.f32 %v9899, %v9899
    %v9932 = vmul.f32 %v9900, %v9900
    %v9933 = vmul.f32 %v9901, %v9901
    %v9934 = vmul.f32 %v9902, %v9902
    %v9935 = vmul.f32 %v9903, %v9903
    %v9936 = vmul.f32 %v9904, %v9904
    %v9937 = vmul.f32 %v9905, %v9905
    %v9938 = vmul.f32 %v9906, %v9906
    %v9939 = vmul.f32 %v9907, %v9907
    %v9940 = vmul.f32 %v9908, %v9908
    %v9941 = vmul.f32 %v9909, %v9909
    %v9942 = vmul.f32 %v9910, %v9910
    %v9943 = vmul.f32 %v9911, %v9911
    %v9944 = vmul.f32 %v9912, %v9912
    %v9945 = vmul.f32 %v9913, %v9913
    %v9946 = vmul.f32 %v9914, %v9914
    %v9947 = vmul.f32 %v9915, %v9915
    %v9948 = vmul.f32 %v9916, %v9916
    %v9949 = vmul.f32 %v9917, %v9917
    %v9950 = vmul.f32 %v9918, %v9918
    %v9951 = vmul.f32 %v9919, %v9919
    %v9952 = vmul.f32 %v9920, %v9920
    %v9953 = vmul.f32 %v9921, %v9921
    %v9954 = vmul.f32 %v9922, %v9922
    %v9955 = vmul.f32 %v9923, %v9923
    %v9956 = vmul.f32 %v9924, %v9924
    %v9957 = vmul.f32 %v9925, %v9925
    %v9958 = vmul.f32 %v9926, %v9926
    %v9959 = vmul.f32 %v9927, %v9927
    %v9960 = vmul.f32 %v9928, %v9928
    %9961 = vadd.xlane.f32.xlu0 %v9929
    %v9962 = vpop.xlane.xlu0 %9961
    %9963 = vadd.xlane.f32.xlu0 %v9930
    %v9964 = vpop.xlane.xlu0 %9963
    %9965 = vadd.xlane.f32.xlu0 %v9931
    %v9966 = vpop.xlane.xlu0 %9965
    %9967 = vadd.xlane.f32.xlu0 %v9932
    %v9968 = vpop.xlane.xlu0 %9967
    %9969 = vadd.xlane.f32.xlu0 %v9933
    %v9970 = vpop.xlane.xlu0 %9969
    %9971 = vadd.xlane.f32.xlu0 %v9934
    %v9972 = vpop.xlane.xlu0 %9971
    %9973 = vadd.xlane.f32.xlu0 %v9935
    %v9974 = vpop.xlane.xlu0 %9973
    %9975 = vadd.xlane.f32.xlu0 %v9936
    %v9976 = vpop.xlane.xlu0 %9975
    %9977 = vadd.xlane.f32.xlu0 %v9937
    %v9978 = vpop.xlane.xlu0 %9977
    %9979 = vadd.xlane.f32.xlu0 %v9938
    %v9980 = vpop.xlane.xlu0 %9979
    %9981 = vadd.xlane.f32.xlu0 %v9939
    %v9982 = vpop.xlane.xlu0 %9981
    %9983 = vadd.xlane.f32.xlu0 %v9940
    %v9984 = vpop.xlane.xlu0 %9983
    %9985 = vadd.xlane.f32.xlu0 %v9941
    %v9986 = vpop.xlane.xlu0 %9985
    %9987 = vadd.xlane.f32.xlu0 %v9942
    %v9988 = vpop.xlane.xlu0 %9987
    %9989 = vadd.xlane.f32.xlu0 %v9943
    %v9990 = vpop.xlane.xlu0 %9989
    %9991 = vadd.xlane.f32.xlu0 %v9944
    %v9992 = vpop.xlane.xlu0 %9991
    %9993 = vadd.xlane.f32.xlu0 %v9945
    %v9994 = vpop.xlane.xlu0 %9993
    %9995 = vadd.xlane.f32.xlu0 %v9946
    %v9996 = vpop.xlane.xlu0 %9995
    %9997 = vadd.xlane.f32.xlu0 %v9947
    %v9998 = vpop.xlane.xlu0 %9997
    %9999 = vadd.xlane.f32.xlu0 %v9948
    %v10000 = vpop.xlane.xlu0 %9999
    %10001 = vadd.xlane.f32.xlu0 %v9949
    %v10002 = vpop.xlane.xlu0 %10001
    %10003 = vadd.xlane.f32.xlu0 %v9950
    %v10004 = vpop.xlane.xlu0 %10003
    %10005 = vadd.xlane.f32.xlu0 %v9951
    %v10006 = vpop.xlane.xlu0 %10005
    %10007 = vadd.xlane.f32.xlu0 %v9952
    %v10008 = vpop.xlane.xlu0 %10007
    %10009 = vadd.xlane.f32.xlu0 %v9953
    %v10010 = vpop.xlane.xlu0 %10009
    %10011 = vadd.xlane.f32.xlu0 %v9954
    %v10012 = vpop.xlane.xlu0 %10011
    %10013 = vadd.xlane.f32.xlu0 %v9955
    %v10014 = vpop.xlane.xlu0 %10013
    %10015 = vadd.xlane.f32.xlu0 %v9956
    %v10016 = vpop.xlane.xlu0 %10015
    %10017 = vadd.xlane.f32.xlu0 %v9957
    %v10018 = vpop.xlane.xlu0 %10017
    %10019 = vadd.xlane.f32.xlu0 %v9958
    %v10020 = vpop.xlane.xlu0 %10019
    %10021 = vadd.xlane.f32.xlu0 %v9959
    %v10022 = vpop.xlane.xlu0 %10021
    %10023 = vadd.xlane.f32.xlu0 %v9960
    %v10024 = vpop.xlane.xlu0 %10023
    %v10025 = vmul.f32 %v9962, %v209
    %v10026 = vmul.f32 %v9964, %v209
    %v10027 = vmul.f32 %v9966, %v209
    %v10028 = vmul.f32 %v9968, %v209
    %v10029 = vmul.f32 %v9970, %v209
    %v10030 = vmul.f32 %v9972, %v209
    %v10031 = vmul.f32 %v9974, %v209
    %v10032 = vmul.f32 %v9976, %v209
    %v10033 = vmul.f32 %v9978, %v209
    %v10034 = vmul.f32 %v9980, %v209
    %v10035 = vmul.f32 %v9982, %v209
    %v10036 = vmul.f32 %v9984, %v209
    %v10037 = vmul.f32 %v9986, %v209
    %v10038 = vmul.f32 %v9988, %v209
    %v10039 = vmul.f32 %v9990, %v209
    %v10040 = vmul.f32 %v9992, %v209
    %v10041 = vmul.f32 %v9994, %v209
    %v10042 = vmul.f32 %v9996, %v209
    %v10043 = vmul.f32 %v9998, %v209
    %v10044 = vmul.f32 %v10000, %v209
    %v10045 = vmul.f32 %v10002, %v209
    %v10046 = vmul.f32 %v10004, %v209
    %v10047 = vmul.f32 %v10006, %v209
    %v10048 = vmul.f32 %v10008, %v209
    %v10049 = vmul.f32 %v10010, %v209
    %v10050 = vmul.f32 %v10012, %v209
    %v10051 = vmul.f32 %v10014, %v209
    %v10052 = vmul.f32 %v10016, %v209
    %v10053 = vmul.f32 %v10018, %v209
    %v10054 = vmul.f32 %v10020, %v209
    %v10055 = vmul.f32 %v10022, %v209
    %v10056 = vmul.f32 %v10024, %v209
    %v10057 = vadd.f32 %v10025, 1e-05
    %v10058 = vadd.f32 %v10026, 1e-05
    %v10059 = vadd.f32 %v10027, 1e-05
    %v10060 = vadd.f32 %v10028, 1e-05
    %v10061 = vadd.f32 %v10029, 1e-05
    %v10062 = vadd.f32 %v10030, 1e-05
    %v10063 = vadd.f32 %v10031, 1e-05
    %v10064 = vadd.f32 %v10032, 1e-05
    %v10065 = vadd.f32 %v10033, 1e-05
    %v10066 = vadd.f32 %v10034, 1e-05
    %v10067 = vadd.f32 %v10035, 1e-05
    %v10068 = vadd.f32 %v10036, 1e-05
    %v10069 = vadd.f32 %v10037, 1e-05
    %v10070 = vadd.f32 %v10038, 1e-05
    %v10071 = vadd.f32 %v10039, 1e-05
    %v10072 = vadd.f32 %v10040, 1e-05
    %v10073 = vadd.f32 %v10041, 1e-05
    %v10074 = vadd.f32 %v10042, 1e-05
    %v10075 = vadd.f32 %v10043, 1e-05
    %v10076 = vadd.f32 %v10044, 1e-05
    %v10077 = vadd.f32 %v10045, 1e-05
    %v10078 = vadd.f32 %v10046, 1e-05
    %v10079 = vadd.f32 %v10047, 1e-05
    %v10080 = vadd.f32 %v10048, 1e-05
    %v10081 = vadd.f32 %v10049, 1e-05
    %v10082 = vadd.f32 %v10050, 1e-05
    %v10083 = vadd.f32 %v10051, 1e-05
    %v10084 = vadd.f32 %v10052, 1e-05
    %v10085 = vadd.f32 %v10053, 1e-05
    %v10086 = vadd.f32 %v10054, 1e-05
    %v10087 = vadd.f32 %v10055, 1e-05
    %v10088 = vadd.f32 %v10056, 1e-05
    %v10089 = vrsqrt.pop %v10057
    %v10090 = vrsqrt.pop %v10058
    %v10091 = vrsqrt.pop %v10059
    %v10092 = vrsqrt.pop %v10060
    %v10093 = vrsqrt.pop %v10061
    %v10094 = vrsqrt.pop %v10062
    %v10095 = vrsqrt.pop %v10063
    %v10096 = vrsqrt.pop %v10064
    %v10097 = vrsqrt.pop %v10065
    %v10098 = vrsqrt.pop %v10066
    %v10099 = vrsqrt.pop %v10067
    %v10100 = vrsqrt.pop %v10068
    %v10101 = vrsqrt.pop %v10069
    %v10102 = vrsqrt.pop %v10070
    %v10103 = vrsqrt.pop %v10071
    %v10104 = vrsqrt.pop %v10072
    %v10105 = vrsqrt.pop %v10073
    %v10106 = vrsqrt.pop %v10074
    %v10107 = vrsqrt.pop %v10075
    %v10108 = vrsqrt.pop %v10076
    %v10109 = vrsqrt.pop %v10077
    %v10110 = vrsqrt.pop %v10078
    %v10111 = vrsqrt.pop %v10079
    %v10112 = vrsqrt.pop %v10080
    %v10113 = vrsqrt.pop %v10081
    %v10114 = vrsqrt.pop %v10082
    %v10115 = vrsqrt.pop %v10083
    %v10116 = vrsqrt.pop %v10084
    %v10117 = vrsqrt.pop %v10085
    %v10118 = vrsqrt.pop %v10086
    %v10119 = vrsqrt.pop %v10087
    %v10120 = vrsqrt.pop %v10088
    %v10121 = vmul.f32 %v9897, %v10089
    %v10122 = vmul.f32 %v9898, %v10090
    %v10123 = vmul.f32 %v9899, %v10091
    %v10124 = vmul.f32 %v9900, %v10092
    %v10125 = vmul.f32 %v9901, %v10093
    %v10126 = vmul.f32 %v9902, %v10094
    %v10127 = vmul.f32 %v9903, %v10095
    %v10128 = vmul.f32 %v9904, %v10096
    %v10129 = vmul.f32 %v9905, %v10097
    %v10130 = vmul.f32 %v9906, %v10098
    %v10131 = vmul.f32 %v9907, %v10099
    %v10132 = vmul.f32 %v9908, %v10100
    %v10133 = vmul.f32 %v9909, %v10101
    %v10134 = vmul.f32 %v9910, %v10102
    %v10135 = vmul.f32 %v9911, %v10103
    %v10136 = vmul.f32 %v9912, %v10104
    %v10137 = vmul.f32 %v9913, %v10105
    %v10138 = vmul.f32 %v9914, %v10106
    %v10139 = vmul.f32 %v9915, %v10107
    %v10140 = vmul.f32 %v9916, %v10108
    %v10141 = vmul.f32 %v9917, %v10109
    %v10142 = vmul.f32 %v9918, %v10110
    %v10143 = vmul.f32 %v9919, %v10111
    %v10144 = vmul.f32 %v9920, %v10112
    %v10145 = vmul.f32 %v9921, %v10113
    %v10146 = vmul.f32 %v9922, %v10114
    %v10147 = vmul.f32 %v9923, %v10115
    %v10148 = vmul.f32 %v9924, %v10116
    %v10149 = vmul.f32 %v9925, %v10117
    %v10150 = vmul.f32 %v9926, %v10118
    %v10151 = vmul.f32 %v9927, %v10119
    %v10152 = vmul.f32 %v9928, %v10120
    %v10154 = vlaneseq
    %v10155 = vshrl.u32 %v10154, 7
    %v10156 = vsub.s32 0, %v10155
    %v10157 = vrot.slane %v9799, %v10156
    %v10159 = vmul.f32 %v10121, %v10157
    %v10160 = vmul.f32 %v10122, %v10157
    %v10161 = vmul.f32 %v10123, %v10157
    %v10162 = vmul.f32 %v10124, %v10157
    %v10163 = vmul.f32 %v10125, %v10157
    %v10164 = vmul.f32 %v10126, %v10157
    %v10165 = vmul.f32 %v10127, %v10157
    %v10166 = vmul.f32 %v10128, %v10157
    %v10167 = vmul.f32 %v10129, %v10157
    %v10168 = vmul.f32 %v10130, %v10157
    %v10169 = vmul.f32 %v10131, %v10157
    %v10170 = vmul.f32 %v10132, %v10157
    %v10171 = vmul.f32 %v10133, %v10157
    %v10172 = vmul.f32 %v10134, %v10157
    %v10173 = vmul.f32 %v10135, %v10157
    %v10174 = vmul.f32 %v10136, %v10157
    %v10175 = vmul.f32 %v10137, %v10157
    %v10176 = vmul.f32 %v10138, %v10157
    %v10177 = vmul.f32 %v10139, %v10157
    %v10178 = vmul.f32 %v10140, %v10157
    %v10179 = vmul.f32 %v10141, %v10157
    %v10180 = vmul.f32 %v10142, %v10157
    %v10181 = vmul.f32 %v10143, %v10157
    %v10182 = vmul.f32 %v10144, %v10157
    %v10183 = vmul.f32 %v10145, %v10157
    %v10184 = vmul.f32 %v10146, %v10157
    %v10185 = vmul.f32 %v10147, %v10157
    %v10186 = vmul.f32 %v10148, %v10157
    %v10187 = vmul.f32 %v10149, %v10157
    %v10188 = vmul.f32 %v10150, %v10157
    %v10189 = vmul.f32 %v10151, %v10157
    %v10190 = vmul.f32 %v10152, %v10157
    %v10192 = vlaneseq
    %v10193 = vshrl.u32 %v10192, 7
    %v10194 = vsub.s32 0, %v10193
    %v10195 = vrot.slane %v9800, %v10194
    %v10197 = vadd.f32 %v10159, %v10195
    %v10198 = vadd.f32 %v10160, %v10195
    %v10199 = vadd.f32 %v10161, %v10195
    %v10200 = vadd.f32 %v10162, %v10195
    %v10201 = vadd.f32 %v10163, %v10195
    %v10202 = vadd.f32 %v10164, %v10195
    %v10203 = vadd.f32 %v10165, %v10195
    %v10204 = vadd.f32 %v10166, %v10195
    %v10205 = vadd.f32 %v10167, %v10195
    %v10206 = vadd.f32 %v10168, %v10195
    %v10207 = vadd.f32 %v10169, %v10195
    %v10208 = vadd.f32 %v10170, %v10195
    %v10209 = vadd.f32 %v10171, %v10195
    %v10210 = vadd.f32 %v10172, %v10195
    %v10211 = vadd.f32 %v10173, %v10195
    %v10212 = vadd.f32 %v10174, %v10195
    %v10213 = vadd.f32 %v10175, %v10195
    %v10214 = vadd.f32 %v10176, %v10195
    %v10215 = vadd.f32 %v10177, %v10195
    %v10216 = vadd.f32 %v10178, %v10195
    %v10217 = vadd.f32 %v10179, %v10195
    %v10218 = vadd.f32 %v10180, %v10195
    %v10219 = vadd.f32 %v10181, %v10195
    %v10220 = vadd.f32 %v10182, %v10195
    %v10221 = vadd.f32 %v10183, %v10195
    %v10222 = vadd.f32 %v10184, %v10195
    %v10223 = vadd.f32 %v10185, %v10195
    %v10224 = vadd.f32 %v10186, %v10195
    %v10225 = vadd.f32 %v10187, %v10195
    %v10226 = vadd.f32 %v10188, %v10195
    %v10227 = vadd.f32 %v10189, %v10195
    %v10228 = vadd.f32 %v10190, %v10195
    %v10229 = vpack.c.bf16 %v10198, %v10197
    %v10230 = vpack.c.bf16 %v10200, %v10199
    %v10231 = vpack.c.bf16 %v10202, %v10201
    %v10232 = vpack.c.bf16 %v10204, %v10203
    %v10233 = vpack.c.bf16 %v10206, %v10205
    %v10234 = vpack.c.bf16 %v10208, %v10207
    %v10235 = vpack.c.bf16 %v10210, %v10209
    %v10236 = vpack.c.bf16 %v10212, %v10211
    %v10237 = vpack.c.bf16 %v10214, %v10213
    %v10238 = vpack.c.bf16 %v10216, %v10215
    %v10239 = vpack.c.bf16 %v10218, %v10217
    %v10240 = vpack.c.bf16 %v10220, %v10219
    %v10241 = vpack.c.bf16 %v10222, %v10221
    %v10242 = vpack.c.bf16 %v10224, %v10223
    %v10243 = vpack.c.bf16 %v10226, %v10225
    %v10244 = vpack.c.bf16 %v10228, %v10227
    %v10245 = vld [vmem:[#allocation8] sm:$0xff]
    %v10246 = vld [vmem:[#allocation8 + $0x8] sm:$0xff]
    %v10247 = vld [vmem:[#allocation8 + $0x10] sm:$0xff]
    %v10248 = vld [vmem:[#allocation8 + $0x18] sm:$0xff]
    %v10249 = vld [vmem:[#allocation8 + $0x20] sm:$0xff]
    %v10250 = vld [vmem:[#allocation8 + $0x28] sm:$0xff]
    %v10251 = vld [vmem:[#allocation8 + $0x30] sm:$0xff]
    %v10252 = vld [vmem:[#allocation8 + $0x38] sm:$0xff]
    %v10253 = vld [vmem:[#allocation8 + $0x40] sm:$0xff]
    %v10254 = vld [vmem:[#allocation8 + $0x48] sm:$0xff]
    %v10255 = vld [vmem:[#allocation8 + $0x50] sm:$0xff]
    %v10256 = vld [vmem:[#allocation8 + $0x58] sm:$0xff]
    %v10257 = vld [vmem:[#allocation8 + $0x60] sm:$0xff]
    %v10258 = vld [vmem:[#allocation8 + $0x68] sm:$0xff]
    %v10259 = vld [vmem:[#allocation8 + $0x70] sm:$0xff]
    %v10260 = vld [vmem:[#allocation8 + $0x78] sm:$0xff]
    %v10261 = vld [vmem:[#allocation8 + $0x80] sm:$0xff]
    %v10262 = vld [vmem:[#allocation8 + $0x88] sm:$0xff]
    %v10263 = vld [vmem:[#allocation8 + $0x90] sm:$0xff]
    %v10264 = vld [vmem:[#allocation8 + $0x98] sm:$0xff]
    %v10265 = vld [vmem:[#allocation8 + $0xa0] sm:$0xff]
    %v10266 = vld [vmem:[#allocation8 + $0xa8] sm:$0xff]
    %v10267 = vld [vmem:[#allocation8 + $0xb0] sm:$0xff]
    %v10268 = vld [vmem:[#allocation8 + $0xb8] sm:$0xff]
    %v10269 = vld [vmem:[#allocation8 + $0xc0] sm:$0xff]
    %v10270 = vld [vmem:[#allocation8 + $0xc8] sm:$0xff]
    %v10271 = vld [vmem:[#allocation8 + $0xd0] sm:$0xff]
    %v10272 = vld [vmem:[#allocation8 + $0xd8] sm:$0xff]
    %v10273 = vld [vmem:[#allocation8 + $0xe0] sm:$0xff]
    %v10274 = vld [vmem:[#allocation8 + $0xe8] sm:$0xff]
    %v10275 = vld [vmem:[#allocation8 + $0xf0] sm:$0xff]
    %v10276 = vld [vmem:[#allocation8 + $0xf8] sm:$0xff]
    %v10277 = vld [vmem:[%s9] sm:$0xf]
    %v10279 = vlaneseq
    %v10280 = vshrl.u32 %v10279, 7
    %v10281 = vsub.s32 0, %v10280
    %v10282 = vrot.slane %v10277, %v10281
    %v10283 = vlaneseq
    %v10284 = vshrl.u32 %v10283, 7
    %v10285 = vsub.s32 1, %v10284
    %v10286 = vrot.slane %v10277, %v10285
    %v10287 = vlaneseq
    %v10288 = vshrl.u32 %v10287, 7
    %v10289 = vsub.s32 2, %v10288
    %v10290 = vrot.slane %v10277, %v10289
    %v10291 = vlaneseq
    %v10292 = vshrl.u32 %v10291, 7
    %v10293 = vsub.s32 3, %v10292
    %v10294 = vrot.slane %v10277, %v10293
    %v10331 = vunpack.c.l.b16 %v10245
    %v10332 = vunpack.c.h.b16 %v10245
    %v10333 = vunpack.c.l.b16 %v10246
    %v10334 = vunpack.c.h.b16 %v10246
    %v10335 = vunpack.c.l.b16 %v10247
    %v10336 = vunpack.c.h.b16 %v10247
    %v10337 = vunpack.c.l.b16 %v10248
    %v10338 = vunpack.c.h.b16 %v10248
    %v10339 = vunpack.c.l.b16 %v10249
    %v10340 = vunpack.c.h.b16 %v10249
    %v10341 = vunpack.c.l.b16 %v10250
    %v10342 = vunpack.c.h.b16 %v10250
    %v10343 = vunpack.c.l.b16 %v10251
    %v10344 = vunpack.c.h.b16 %v10251
    %v10345 = vunpack.c.l.b16 %v10252
    %v10346 = vunpack.c.h.b16 %v10252
    %v10347 = vunpack.c.l.b16 %v10253
    %v10348 = vunpack.c.h.b16 %v10253
    %v10349 = vunpack.c.l.b16 %v10254
    %v10350 = vunpack.c.h.b16 %v10254
    %v10351 = vunpack.c.l.b16 %v10255
    %v10352 = vunpack.c.h.b16 %v10255
    %v10353 = vunpack.c.l.b16 %v10256
    %v10354 = vunpack.c.h.b16 %v10256
    %v10355 = vunpack.c.l.b16 %v10257
    %v10356 = vunpack.c.h.b16 %v10257
    %v10357 = vunpack.c.l.b16 %v10258
    %v10358 = vunpack.c.h.b16 %v10258
    %v10359 = vunpack.c.l.b16 %v10259
    %v10360 = vunpack.c.h.b16 %v10259
    %v10361 = vunpack.c.l.b16 %v10260
    %v10362 = vunpack.c.h.b16 %v10260
    %v10363 = vunpack.c.l.b16 %v10261
    %v10364 = vunpack.c.h.b16 %v10261
    %v10365 = vunpack.c.l.b16 %v10262
    %v10366 = vunpack.c.h.b16 %v10262
    %v10367 = vunpack.c.l.b16 %v10263
    %v10368 = vunpack.c.h.b16 %v10263
    %v10369 = vunpack.c.l.b16 %v10264
    %v10370 = vunpack.c.h.b16 %v10264
    %v10371 = vunpack.c.l.b16 %v10265
    %v10372 = vunpack.c.h.b16 %v10265
    %v10373 = vunpack.c.l.b16 %v10266
    %v10374 = vunpack.c.h.b16 %v10266
    %v10375 = vunpack.c.l.b16 %v10267
    %v10376 = vunpack.c.h.b16 %v10267
    %v10377 = vunpack.c.l.b16 %v10268
    %v10378 = vunpack.c.h.b16 %v10268
    %v10379 = vunpack.c.l.b16 %v10269
    %v10380 = vunpack.c.h.b16 %v10269
    %v10381 = vunpack.c.l.b16 %v10270
    %v10382 = vunpack.c.h.b16 %v10270
    %v10383 = vunpack.c.l.b16 %v10271
    %v10384 = vunpack.c.h.b16 %v10271
    %v10385 = vunpack.c.l.b16 %v10272
    %v10386 = vunpack.c.h.b16 %v10272
    %v10387 = vunpack.c.l.b16 %v10273
    %v10388 = vunpack.c.h.b16 %v10273
    %v10389 = vunpack.c.l.b16 %v10274
    %v10390 = vunpack.c.h.b16 %v10274
    %v10391 = vunpack.c.l.b16 %v10275
    %v10392 = vunpack.c.h.b16 %v10275
    %v10393 = vunpack.c.l.b16 %v10276
    %v10394 = vunpack.c.h.b16 %v10276
    %v10395 = vpack.c.b16 %v10335, %v10331
    %v10396 = vpack.c.b16 %v10336, %v10332
    %v10397 = vpack.c.b16 %v10337, %v10333
    %v10398 = vpack.c.b16 %v10338, %v10334
    %v10399 = vpack.c.b16 %v10343, %v10339
    %v10400 = vpack.c.b16 %v10344, %v10340
    %v10401 = vpack.c.b16 %v10345, %v10341
    %v10402 = vpack.c.b16 %v10346, %v10342
    %v10403 = vpack.c.b16 %v10351, %v10347
    %v10404 = vpack.c.b16 %v10352, %v10348
    %v10405 = vpack.c.b16 %v10353, %v10349
    %v10406 = vpack.c.b16 %v10354, %v10350
    %v10407 = vpack.c.b16 %v10359, %v10355
    %v10408 = vpack.c.b16 %v10360, %v10356
    %v10409 = vpack.c.b16 %v10361, %v10357
    %v10410 = vpack.c.b16 %v10362, %v10358
    %v10411 = vpack.c.b16 %v10367, %v10363
    %v10412 = vpack.c.b16 %v10368, %v10364
    %v10413 = vpack.c.b16 %v10369, %v10365
    %v10414 = vpack.c.b16 %v10370, %v10366
    %v10415 = vpack.c.b16 %v10375, %v10371
    %v10416 = vpack.c.b16 %v10376, %v10372
    %v10417 = vpack.c.b16 %v10377, %v10373
    %v10418 = vpack.c.b16 %v10378, %v10374
    %v10419 = vpack.c.b16 %v10383, %v10379
    %v10420 = vpack.c.b16 %v10384, %v10380
    %v10421 = vpack.c.b16 %v10385, %v10381
    %v10422 = vpack.c.b16 %v10386, %v10382
    %v10423 = vpack.c.b16 %v10391, %v10387
    %v10424 = vpack.c.b16 %v10392, %v10388
    %v10425 = vpack.c.b16 %v10393, %v10389
    %v10426 = vpack.c.b16 %v10394, %v10390
    %10459 = vmatprep.subr.bf16.mxu0 %v10424
    %10460 = vmatpush1.bf16.msra.mxu0 %v10423
    %10461 = vmatprep.subr.bf16.mxu0 %v10420
    %10462 = vmatpush1.bf16.msra.mxu0 %v10419
    %10463 = vmatprep.subr.bf16.mxu0 %v10416
    %10464 = vmatpush1.bf16.msra.mxu0 %v10415
    %10465 = vmatprep.subr.bf16.mxu0 %v10412
    %10466 = vmatpush1.bf16.msra.mxu0 %v10411
    %10467 = vmatprep.subr.bf16.mxu0 %v10408
    %10468 = vmatpush1.bf16.msra.mxu0 %v10407
    %10469 = vmatprep.subr.bf16.mxu0 %v10404
    %10470 = vmatpush1.bf16.msra.mxu0 %v10403
    %10471 = vmatprep.subr.bf16.mxu0 %v10400
    %10472 = vmatpush1.bf16.msra.mxu0 %v10399
    %10473 = vmatprep.subr.bf16.mxu0 %v10396
    %10474 = vmatpush1.bf16.msra.mxu0 %v10395
    %10475 = vmatprep.subr.bf16.mxu0 0
    %10476 = vmatpush2.bf16.msra.mxu0 0
    %10477 = vmatprep.subr.bf16.mxu0 0
    %10478 = vmatpush2.bf16.msra.mxu0 0
    %10479 = vmatprep.subr.bf16.mxu0 0
    %10480 = vmatpush2.bf16.msra.mxu0 0
    %10481 = vmatprep.subr.bf16.mxu0 0
    %10482 = vmatpush2.bf16.msra.mxu0 0
    %10483 = vmatprep.subr.bf16.mxu0 0
    %10484 = vmatpush2.bf16.msra.mxu0 0
    %10485 = vmatprep.subr.bf16.mxu0 0
    %10486 = vmatpush2.bf16.msra.mxu0 0
    %10487 = vmatprep.subr.bf16.mxu0 0
    %10488 = vmatpush2.bf16.msra.mxu0 0
    %10489 = vmatprep.subr.bf16.mxu0 0
    %10490 = vmatpush2.bf16.msra.mxu0 0
    %10491 = vmatprep.mubr.bf16.mxu0 0
    %10492 = vmatmul.mubr.bf16.gmra.mxu0 %v10229
    %v10493 = vpop.f32.mrf.mxu0
    %v10494 = vadd.f32 %v10282, %v10493
    %v10495 = vpop.f32.mrf.mxu0
    %v10496 = vadd.f32 %v10286, %v10495
    %v10497 = vpop.f32.mrf.mxu0
    %v10498 = vadd.f32 %v10282, %v10497
    %v10499 = vpop.f32.mrf.mxu0
    %v10500 = vadd.f32 %v10286, %v10499
    %10501 = vmatprep.mubr.bf16.mxu0 0
    %10502 = vmatmul.mubr.bf16.gmra.mxu0 %v10230
    %v10503 = vpop.f32.mrf.mxu0
    %v10504 = vadd.f32 %v10282, %v10503
    %v10505 = vpop.f32.mrf.mxu0
    %v10506 = vadd.f32 %v10286, %v10505
    %v10507 = vpop.f32.mrf.mxu0
    %v10508 = vadd.f32 %v10282, %v10507
    %v10509 = vpop.f32.mrf.mxu0
    %v10510 = vadd.f32 %v10286, %v10509
    %10511 = vmatprep.mubr.bf16.mxu0 0
    %10512 = vmatmul.mubr.bf16.gmra.mxu0 %v10231
    %v10513 = vpop.f32.mrf.mxu0
    %v10514 = vadd.f32 %v10282, %v10513
    %v10515 = vpop.f32.mrf.mxu0
    %v10516 = vadd.f32 %v10286, %v10515
    %v10517 = vpop.f32.mrf.mxu0
    %v10518 = vadd.f32 %v10282, %v10517
    %v10519 = vpop.f32.mrf.mxu0
    %v10520 = vadd.f32 %v10286, %v10519
    %10521 = vmatprep.mubr.bf16.mxu0 0
    %10522 = vmatmul.mubr.bf16.gmra.mxu0 %v10232
    %v10523 = vpop.f32.mrf.mxu0
    %v10524 = vadd.f32 %v10282, %v10523
    %v10525 = vpop.f32.mrf.mxu0
    %v10526 = vadd.f32 %v10286, %v10525
    %v10527 = vpop.f32.mrf.mxu0
    %v10528 = vadd.f32 %v10282, %v10527
    %v10529 = vpop.f32.mrf.mxu0
    %v10530 = vadd.f32 %v10286, %v10529
    %10531 = vmatprep.mubr.bf16.mxu0 0
    %10532 = vmatmul.mubr.bf16.gmra.mxu0 %v10233
    %v10533 = vpop.f32.mrf.mxu0
    %v10534 = vadd.f32 %v10282, %v10533
    %v10535 = vpop.f32.mrf.mxu0
    %v10536 = vadd.f32 %v10286, %v10535
    %v10537 = vpop.f32.mrf.mxu0
    %v10538 = vadd.f32 %v10282, %v10537
    %v10539 = vpop.f32.mrf.mxu0
    %v10540 = vadd.f32 %v10286, %v10539
    %10541 = vmatprep.mubr.bf16.mxu0 0
    %10542 = vmatmul.mubr.bf16.gmra.mxu0 %v10234
    %v10543 = vpop.f32.mrf.mxu0
    %v10544 = vadd.f32 %v10282, %v10543
    %v10545 = vpop.f32.mrf.mxu0
    %v10546 = vadd.f32 %v10286, %v10545
    %v10547 = vpop.f32.mrf.mxu0
    %v10548 = vadd.f32 %v10282, %v10547
    %v10549 = vpop.f32.mrf.mxu0
    %v10550 = vadd.f32 %v10286, %v10549
    %10551 = vmatprep.mubr.bf16.mxu0 0
    %10552 = vmatmul.mubr.bf16.gmra.mxu0 %v10235
    %v10553 = vpop.f32.mrf.mxu0
    %v10554 = vadd.f32 %v10282, %v10553
    %v10555 = vpop.f32.mrf.mxu0
    %v10556 = vadd.f32 %v10286, %v10555
    %v10557 = vpop.f32.mrf.mxu0
    %v10558 = vadd.f32 %v10282, %v10557
    %v10559 = vpop.f32.mrf.mxu0
    %v10560 = vadd.f32 %v10286, %v10559
    %10561 = vmatprep.mubr.bf16.mxu0 0
    %10562 = vmatmul.mubr.bf16.gmra.mxu0 %v10236
    %v10563 = vpop.f32.mrf.mxu0
    %v10564 = vadd.f32 %v10282, %v10563
    %v10565 = vpop.f32.mrf.mxu0
    %v10566 = vadd.f32 %v10286, %v10565
    %v10567 = vpop.f32.mrf.mxu0
    %v10568 = vadd.f32 %v10282, %v10567
    %v10569 = vpop.f32.mrf.mxu0
    %v10570 = vadd.f32 %v10286, %v10569
    %10571 = vmatprep.mubr.bf16.mxu0 0
    %10572 = vmatmul.mubr.bf16.gmra.mxu0 %v10237
    %v10573 = vpop.f32.mrf.mxu0
    %v10574 = vadd.f32 %v10282, %v10573
    %v10575 = vpop.f32.mrf.mxu0
    %v10576 = vadd.f32 %v10286, %v10575
    %v10577 = vpop.f32.mrf.mxu0
    %v10578 = vadd.f32 %v10282, %v10577
    %v10579 = vpop.f32.mrf.mxu0
    %v10580 = vadd.f32 %v10286, %v10579
    %10581 = vmatprep.mubr.bf16.mxu0 0
    %10582 = vmatmul.mubr.bf16.gmra.mxu0 %v10238
    %v10583 = vpop.f32.mrf.mxu0
    %v10584 = vadd.f32 %v10282, %v10583
    %v10585 = vpop.f32.mrf.mxu0
    %v10586 = vadd.f32 %v10286, %v10585
    %v10587 = vpop.f32.mrf.mxu0
    %v10588 = vadd.f32 %v10282, %v10587
    %v10589 = vpop.f32.mrf.mxu0
    %v10590 = vadd.f32 %v10286, %v10589
    %10591 = vmatprep.mubr.bf16.mxu0 0
    %10592 = vmatmul.mubr.bf16.gmra.mxu0 %v10239
    %v10593 = vpop.f32.mrf.mxu0
    %v10594 = vadd.f32 %v10282, %v10593
    %v10595 = vpop.f32.mrf.mxu0
    %v10596 = vadd.f32 %v10286, %v10595
    %v10597 = vpop.f32.mrf.mxu0
    %v10598 = vadd.f32 %v10282, %v10597
    %v10599 = vpop.f32.mrf.mxu0
    %v10600 = vadd.f32 %v10286, %v10599
    %10601 = vmatprep.mubr.bf16.mxu0 0
    %10602 = vmatmul.mubr.bf16.gmra.mxu0 %v10240
    %v10603 = vpop.f32.mrf.mxu0
    %v10604 = vadd.f32 %v10282, %v10603
    %v10605 = vpop.f32.mrf.mxu0
    %v10606 = vadd.f32 %v10286, %v10605
    %v10607 = vpop.f32.mrf.mxu0
    %v10608 = vadd.f32 %v10282, %v10607
    %v10609 = vpop.f32.mrf.mxu0
    %v10610 = vadd.f32 %v10286, %v10609
    %10611 = vmatprep.mubr.bf16.mxu0 0
    %10612 = vmatmul.mubr.bf16.gmra.mxu0 %v10241
    %v10613 = vpop.f32.mrf.mxu0
    %v10614 = vadd.f32 %v10282, %v10613
    %v10615 = vpop.f32.mrf.mxu0
    %v10616 = vadd.f32 %v10286, %v10615
    %v10617 = vpop.f32.mrf.mxu0
    %v10618 = vadd.f32 %v10282, %v10617
    %v10619 = vpop.f32.mrf.mxu0
    %v10620 = vadd.f32 %v10286, %v10619
    %10621 = vmatprep.mubr.bf16.mxu0 0
    %10622 = vmatmul.mubr.bf16.gmra.mxu0 %v10242
    %v10623 = vpop.f32.mrf.mxu0
    %v10624 = vadd.f32 %v10282, %v10623
    %v10625 = vpop.f32.mrf.mxu0
    %v10626 = vadd.f32 %v10286, %v10625
    %v10627 = vpop.f32.mrf.mxu0
    %v10628 = vadd.f32 %v10282, %v10627
    %v10629 = vpop.f32.mrf.mxu0
    %v10630 = vadd.f32 %v10286, %v10629
    %10631 = vmatprep.mubr.bf16.mxu0 0
    %10632 = vmatmul.mubr.bf16.gmra.mxu0 %v10243
    %v10633 = vpop.f32.mrf.mxu0
    %v10634 = vadd.f32 %v10282, %v10633
    %v10635 = vpop.f32.mrf.mxu0
    %v10636 = vadd.f32 %v10286, %v10635
    %v10637 = vpop.f32.mrf.mxu0
    %v10638 = vadd.f32 %v10282, %v10637
    %v10639 = vpop.f32.mrf.mxu0
    %v10640 = vadd.f32 %v10286, %v10639
    %10641 = vmatprep.mubr.bf16.mxu0 0
    %10642 = vmatmul.mubr.bf16.gmra.mxu0 %v10244
    %v10643 = vpop.f32.mrf.mxu0
    %v10644 = vadd.f32 %v10282, %v10643
    %v10645 = vpop.f32.mrf.mxu0
    %v10646 = vadd.f32 %v10286, %v10645
    %v10647 = vpop.f32.mrf.mxu0
    %v10648 = vadd.f32 %v10282, %v10647
    %v10649 = vpop.f32.mrf.mxu0
    %v10650 = vadd.f32 %v10286, %v10649
    %10651 = vdwg.mxu0
    %10652 = vmatprep.subr.bf16.mxu0 %v10426
    %10653 = vmatpush1.bf16.msra.mxu0 %v10425
    %10654 = vmatprep.subr.bf16.mxu0 %v10422
    %10655 = vmatpush1.bf16.msra.mxu0 %v10421
    %10656 = vmatprep.subr.bf16.mxu0 %v10418
    %10657 = vmatpush1.bf16.msra.mxu0 %v10417
    %10658 = vmatprep.subr.bf16.mxu0 %v10414
    %10659 = vmatpush1.bf16.msra.mxu0 %v10413
    %10660 = vmatprep.subr.bf16.mxu0 %v10410
    %10661 = vmatpush1.bf16.msra.mxu0 %v10409
    %10662 = vmatprep.subr.bf16.mxu0 %v10406
    %10663 = vmatpush1.bf16.msra.mxu0 %v10405
    %10664 = vmatprep.subr.bf16.mxu0 %v10402
    %10665 = vmatpush1.bf16.msra.mxu0 %v10401
    %10666 = vmatprep.subr.bf16.mxu0 %v10398
    %10667 = vmatpush1.bf16.msra.mxu0 %v10397
    %10668 = vmatprep.subr.bf16.mxu0 0
    %10669 = vmatpush2.bf16.msra.mxu0 0
    %10670 = vmatprep.subr.bf16.mxu0 0
    %10671 = vmatpush2.bf16.msra.mxu0 0
    %10672 = vmatprep.subr.bf16.mxu0 0
    %10673 = vmatpush2.bf16.msra.mxu0 0
    %10674 = vmatprep.subr.bf16.mxu0 0
    %10675 = vmatpush2.bf16.msra.mxu0 0
    %10676 = vmatprep.subr.bf16.mxu0 0
    %10677 = vmatpush2.bf16.msra.mxu0 0
    %10678 = vmatprep.subr.bf16.mxu0 0
    %10679 = vmatpush2.bf16.msra.mxu0 0
    %10680 = vmatprep.subr.bf16.mxu0 0
    %10681 = vmatpush2.bf16.msra.mxu0 0
    %10682 = vmatprep.subr.bf16.mxu0 0
    %10683 = vmatpush2.bf16.msra.mxu0 0
    %10684 = vmatprep.mubr.bf16.mxu0 0
    %10685 = vmatmul.mubr.bf16.gmra.mxu0 %v10229
    %v10686 = vpop.f32.mrf.mxu0
    %v10687 = vadd.f32 %v10290, %v10686
    %v10688 = vpop.f32.mrf.mxu0
    %v10689 = vadd.f32 %v10294, %v10688
    %v10690 = vpop.f32.mrf.mxu0
    %v10691 = vadd.f32 %v10290, %v10690
    %v10692 = vpop.f32.mrf.mxu0
    %v10693 = vadd.f32 %v10294, %v10692
    %10694 = vmatprep.mubr.bf16.mxu0 0
    %10695 = vmatmul.mubr.bf16.gmra.mxu0 %v10230
    %v10696 = vpop.f32.mrf.mxu0
    %v10697 = vadd.f32 %v10290, %v10696
    %v10698 = vpop.f32.mrf.mxu0
    %v10699 = vadd.f32 %v10294, %v10698
    %v10700 = vpop.f32.mrf.mxu0
    %v10701 = vadd.f32 %v10290, %v10700
    %v10702 = vpop.f32.mrf.mxu0
    %v10703 = vadd.f32 %v10294, %v10702
    %10704 = vmatprep.mubr.bf16.mxu0 0
    %10705 = vmatmul.mubr.bf16.gmra.mxu0 %v10231
    %v10706 = vpop.f32.mrf.mxu0
    %v10707 = vadd.f32 %v10290, %v10706
    %v10708 = vpop.f32.mrf.mxu0
    %v10709 = vadd.f32 %v10294, %v10708
    %v10710 = vpop.f32.mrf.mxu0
    %v10711 = vadd.f32 %v10290, %v10710
    %v10712 = vpop.f32.mrf.mxu0
    %v10713 = vadd.f32 %v10294, %v10712
    %10714 = vmatprep.mubr.bf16.mxu0 0
    %10715 = vmatmul.mubr.bf16.gmra.mxu0 %v10232
    %v10716 = vpop.f32.mrf.mxu0
    %v10717 = vadd.f32 %v10290, %v10716
    %v10718 = vpop.f32.mrf.mxu0
    %v10719 = vadd.f32 %v10294, %v10718
    %v10720 = vpop.f32.mrf.mxu0
    %v10721 = vadd.f32 %v10290, %v10720
    %v10722 = vpop.f32.mrf.mxu0
    %v10723 = vadd.f32 %v10294, %v10722
    %10724 = vmatprep.mubr.bf16.mxu0 0
    %10725 = vmatmul.mubr.bf16.gmra.mxu0 %v10233
    %v10726 = vpop.f32.mrf.mxu0
    %v10727 = vadd.f32 %v10290, %v10726
    %v10728 = vpop.f32.mrf.mxu0
    %v10729 = vadd.f32 %v10294, %v10728
    %v10730 = vpop.f32.mrf.mxu0
    %v10731 = vadd.f32 %v10290, %v10730
    %v10732 = vpop.f32.mrf.mxu0
    %v10733 = vadd.f32 %v10294, %v10732
    %10734 = vmatprep.mubr.bf16.mxu0 0
    %10735 = vmatmul.mubr.bf16.gmra.mxu0 %v10234
    %v10736 = vpop.f32.mrf.mxu0
    %v10737 = vadd.f32 %v10290, %v10736
    %v10738 = vpop.f32.mrf.mxu0
    %v10739 = vadd.f32 %v10294, %v10738
    %v10740 = vpop.f32.mrf.mxu0
    %v10741 = vadd.f32 %v10290, %v10740
    %v10742 = vpop.f32.mrf.mxu0
    %v10743 = vadd.f32 %v10294, %v10742
    %10744 = vmatprep.mubr.bf16.mxu0 0
    %10745 = vmatmul.mubr.bf16.gmra.mxu0 %v10235
    %v10746 = vpop.f32.mrf.mxu0
    %v10747 = vadd.f32 %v10290, %v10746
    %v10748 = vpop.f32.mrf.mxu0
    %v10749 = vadd.f32 %v10294, %v10748
    %v10750 = vpop.f32.mrf.mxu0
    %v10751 = vadd.f32 %v10290, %v10750
    %v10752 = vpop.f32.mrf.mxu0
    %v10753 = vadd.f32 %v10294, %v10752
    %10754 = vmatprep.mubr.bf16.mxu0 0
    %10755 = vmatmul.mubr.bf16.gmra.mxu0 %v10236
    %v10756 = vpop.f32.mrf.mxu0
    %v10757 = vadd.f32 %v10290, %v10756
    %v10758 = vpop.f32.mrf.mxu0
    %v10759 = vadd.f32 %v10294, %v10758
    %v10760 = vpop.f32.mrf.mxu0
    %v10761 = vadd.f32 %v10290, %v10760
    %v10762 = vpop.f32.mrf.mxu0
    %v10763 = vadd.f32 %v10294, %v10762
    %10764 = vmatprep.mubr.bf16.mxu0 0
    %10765 = vmatmul.mubr.bf16.gmra.mxu0 %v10237
    %v10766 = vpop.f32.mrf.mxu0
    %v10767 = vadd.f32 %v10290, %v10766
    %v10768 = vpop.f32.mrf.mxu0
    %v10769 = vadd.f32 %v10294, %v10768
    %v10770 = vpop.f32.mrf.mxu0
    %v10771 = vadd.f32 %v10290, %v10770
    %v10772 = vpop.f32.mrf.mxu0
    %v10773 = vadd.f32 %v10294, %v10772
    %10774 = vmatprep.mubr.bf16.mxu0 0
    %10775 = vmatmul.mubr.bf16.gmra.mxu0 %v10238
    %v10776 = vpop.f32.mrf.mxu0
    %v10777 = vadd.f32 %v10290, %v10776
    %v10778 = vpop.f32.mrf.mxu0
    %v10779 = vadd.f32 %v10294, %v10778
    %v10780 = vpop.f32.mrf.mxu0
    %v10781 = vadd.f32 %v10290, %v10780
    %v10782 = vpop.f32.mrf.mxu0
    %v10783 = vadd.f32 %v10294, %v10782
    %10784 = vmatprep.mubr.bf16.mxu0 0
    %10785 = vmatmul.mubr.bf16.gmra.mxu0 %v10239
    %v10786 = vpop.f32.mrf.mxu0
    %v10787 = vadd.f32 %v10290, %v10786
    %v10788 = vpop.f32.mrf.mxu0
    %v10789 = vadd.f32 %v10294, %v10788
    %v10790 = vpop.f32.mrf.mxu0
    %v10791 = vadd.f32 %v10290, %v10790
    %v10792 = vpop.f32.mrf.mxu0
    %v10793 = vadd.f32 %v10294, %v10792
    %10794 = vmatprep.mubr.bf16.mxu0 0
    %10795 = vmatmul.mubr.bf16.gmra.mxu0 %v10240
    %v10796 = vpop.f32.mrf.mxu0
    %v10797 = vadd.f32 %v10290, %v10796
    %v10798 = vpop.f32.mrf.mxu0
    %v10799 = vadd.f32 %v10294, %v10798
    %v10800 = vpop.f32.mrf.mxu0
    %v10801 = vadd.f32 %v10290, %v10800
    %v10802 = vpop.f32.mrf.mxu0
    %v10803 = vadd.f32 %v10294, %v10802
    %10804 = vmatprep.mubr.bf16.mxu0 0
    %10805 = vmatmul.mubr.bf16.gmra.mxu0 %v10241
    %v10806 = vpop.f32.mrf.mxu0
    %v10807 = vadd.f32 %v10290, %v10806
    %v10808 = vpop.f32.mrf.mxu0
    %v10809 = vadd.f32 %v10294, %v10808
    %v10810 = vpop.f32.mrf.mxu0
    %v10811 = vadd.f32 %v10290, %v10810
    %v10812 = vpop.f32.mrf.mxu0
    %v10813 = vadd.f32 %v10294, %v10812
    %10814 = vmatprep.mubr.bf16.mxu0 0
    %10815 = vmatmul.mubr.bf16.gmra.mxu0 %v10242
    %v10816 = vpop.f32.mrf.mxu0
    %v10817 = vadd.f32 %v10290, %v10816
    %v10818 = vpop.f32.mrf.mxu0
    %v10819 = vadd.f32 %v10294, %v10818
    %v10820 = vpop.f32.mrf.mxu0
    %v10821 = vadd.f32 %v10290, %v10820
    %v10822 = vpop.f32.mrf.mxu0
    %v10823 = vadd.f32 %v10294, %v10822
    %10824 = vmatprep.mubr.bf16.mxu0 0
    %10825 = vmatmul.mubr.bf16.gmra.mxu0 %v10243
    %v10826 = vpop.f32.mrf.mxu0
    %v10827 = vadd.f32 %v10290, %v10826
    %v10828 = vpop.f32.mrf.mxu0
    %v10829 = vadd.f32 %v10294, %v10828
    %v10830 = vpop.f32.mrf.mxu0
    %v10831 = vadd.f32 %v10290, %v10830
    %v10832 = vpop.f32.mrf.mxu0
    %v10833 = vadd.f32 %v10294, %v10832
    %10834 = vmatprep.mubr.bf16.mxu0 0
    %10835 = vmatmul.mubr.bf16.gmra.mxu0 %v10244
    %v10836 = vpop.f32.mrf.mxu0
    %v10837 = vadd.f32 %v10290, %v10836
    %v10838 = vpop.f32.mrf.mxu0
    %v10839 = vadd.f32 %v10294, %v10838
    %v10840 = vpop.f32.mrf.mxu0
    %v10841 = vadd.f32 %v10290, %v10840
    %v10842 = vpop.f32.mrf.mxu0
    %v10843 = vadd.f32 %v10294, %v10842
    %10844 = vdwg.mxu0
    %v10845 = vmax.f32 %v10494, 0.0
    %v10846 = vmax.f32 %v10496, 0.0
    %v10847 = vmax.f32 %v10687, 0.0
    %v10848 = vmax.f32 %v10689, 0.0
    %v10849 = vmax.f32 %v10498, 0.0
    %v10850 = vmax.f32 %v10500, 0.0
    %v10851 = vmax.f32 %v10691, 0.0
    %v10852 = vmax.f32 %v10693, 0.0
    %v10853 = vmax.f32 %v10504, 0.0
    %v10854 = vmax.f32 %v10506, 0.0
    %v10855 = vmax.f32 %v10697, 0.0
    %v10856 = vmax.f32 %v10699, 0.0
    %v10857 = vmax.f32 %v10508, 0.0
    %v10858 = vmax.f32 %v10510, 0.0
    %v10859 = vmax.f32 %v10701, 0.0
    %v10860 = vmax.f32 %v10703, 0.0
    %v10861 = vmax.f32 %v10514, 0.0
    %v10862 = vmax.f32 %v10516, 0.0
    %v10863 = vmax.f32 %v10707, 0.0
    %v10864 = vmax.f32 %v10709, 0.0
    %v10865 = vmax.f32 %v10518, 0.0
    %v10866 = vmax.f32 %v10520, 0.0
    %v10867 = vmax.f32 %v10711, 0.0
    %v10868 = vmax.f32 %v10713, 0.0
    %v10869 = vmax.f32 %v10524, 0.0
    %v10870 = vmax.f32 %v10526, 0.0
    %v10871 = vmax.f32 %v10717, 0.0
    %v10872 = vmax.f32 %v10719, 0.0
    %v10873 = vmax.f32 %v10528, 0.0
    %v10874 = vmax.f32 %v10530, 0.0
    %v10875 = vmax.f32 %v10721, 0.0
    %v10876 = vmax.f32 %v10723, 0.0
    %v10877 = vmax.f32 %v10534, 0.0
    %v10878 = vmax.f32 %v10536, 0.0
    %v10879 = vmax.f32 %v10727, 0.0
    %v10880 = vmax.f32 %v10729, 0.0
    %v10881 = vmax.f32 %v10538, 0.0
    %v10882 = vmax.f32 %v10540, 0.0
    %v10883 = vmax.f32 %v10731, 0.0
    %v10884 = vmax.f32 %v10733, 0.0
    %v10885 = vmax.f32 %v10544, 0.0
    %v10886 = vmax.f32 %v10546, 0.0
    %v10887 = vmax.f32 %v10737, 0.0
    %v10888 = vmax.f32 %v10739, 0.0
    %v10889 = vmax.f32 %v10548, 0.0
    %v10890 = vmax.f32 %v10550, 0.0
    %v10891 = vmax.f32 %v10741, 0.0
    %v10892 = vmax.f32 %v10743, 0.0
    %v10893 = vmax.f32 %v10554, 0.0
    %v10894 = vmax.f32 %v10556, 0.0
    %v10895 = vmax.f32 %v10747, 0.0
    %v10896 = vmax.f32 %v10749, 0.0
    %v10897 = vmax.f32 %v10558, 0.0
    %v10898 = vmax.f32 %v10560, 0.0
    %v10899 = vmax.f32 %v10751, 0.0
    %v10900 = vmax.f32 %v10753, 0.0
    %v10901 = vmax.f32 %v10564, 0.0
    %v10902 = vmax.f32 %v10566, 0.0
    %v10903 = vmax.f32 %v10757, 0.0
    %v10904 = vmax.f32 %v10759, 0.0
    %v10905 = vmax.f32 %v10568, 0.0
    %v10906 = vmax.f32 %v10570, 0.0
    %v10907 = vmax.f32 %v10761, 0.0
    %v10908 = vmax.f32 %v10763, 0.0
    %v10909 = vmax.f32 %v10574, 0.0
    %v10910 = vmax.f32 %v10576, 0.0
    %v10911 = vmax.f32 %v10767, 0.0
    %v10912 = vmax.f32 %v10769, 0.0
    %v10913 = vmax.f32 %v10578, 0.0
    %v10914 = vmax.f32 %v10580, 0.0
    %v10915 = vmax.f32 %v10771, 0.0
    %v10916 = vmax.f32 %v10773, 0.0
    %v10917 = vmax.f32 %v10584, 0.0
    %v10918 = vmax.f32 %v10586, 0.0
    %v10919 = vmax.f32 %v10777, 0.0
    %v10920 = vmax.f32 %v10779, 0.0
    %v10921 = vmax.f32 %v10588, 0.0
    %v10922 = vmax.f32 %v10590, 0.0
    %v10923 = vmax.f32 %v10781, 0.0
    %v10924 = vmax.f32 %v10783, 0.0
    %v10925 = vmax.f32 %v10594, 0.0
    %v10926 = vmax.f32 %v10596, 0.0
    %v10927 = vmax.f32 %v10787, 0.0
    %v10928 = vmax.f32 %v10789, 0.0
    %v10929 = vmax.f32 %v10598, 0.0
    %v10930 = vmax.f32 %v10600, 0.0
    %v10931 = vmax.f32 %v10791, 0.0
    %v10932 = vmax.f32 %v10793, 0.0
    %v10933 = vmax.f32 %v10604, 0.0
    %v10934 = vmax.f32 %v10606, 0.0
    %v10935 = vmax.f32 %v10797, 0.0
    %v10936 = vmax.f32 %v10799, 0.0
    %v10937 = vmax.f32 %v10608, 0.0
    %v10938 = vmax.f32 %v10610, 0.0
    %v10939 = vmax.f32 %v10801, 0.0
    %v10940 = vmax.f32 %v10803, 0.0
    %v10941 = vmax.f32 %v10614, 0.0
    %v10942 = vmax.f32 %v10616, 0.0
    %v10943 = vmax.f32 %v10807, 0.0
    %v10944 = vmax.f32 %v10809, 0.0
    %v10945 = vmax.f32 %v10618, 0.0
    %v10946 = vmax.f32 %v10620, 0.0
    %v10947 = vmax.f32 %v10811, 0.0
    %v10948 = vmax.f32 %v10813, 0.0
    %v10949 = vmax.f32 %v10624, 0.0
    %v10950 = vmax.f32 %v10626, 0.0
    %v10951 = vmax.f32 %v10817, 0.0
    %v10952 = vmax.f32 %v10819, 0.0
    %v10953 = vmax.f32 %v10628, 0.0
    %v10954 = vmax.f32 %v10630, 0.0
    %v10955 = vmax.f32 %v10821, 0.0
    %v10956 = vmax.f32 %v10823, 0.0
    %v10957 = vmax.f32 %v10634, 0.0
    %v10958 = vmax.f32 %v10636, 0.0
    %v10959 = vmax.f32 %v10827, 0.0
    %v10960 = vmax.f32 %v10829, 0.0
    %v10961 = vmax.f32 %v10638, 0.0
    %v10962 = vmax.f32 %v10640, 0.0
    %v10963 = vmax.f32 %v10831, 0.0
    %v10964 = vmax.f32 %v10833, 0.0
    %v10965 = vmax.f32 %v10644, 0.0
    %v10966 = vmax.f32 %v10646, 0.0
    %v10967 = vmax.f32 %v10837, 0.0
    %v10968 = vmax.f32 %v10839, 0.0
    %v10969 = vmax.f32 %v10648, 0.0
    %v10970 = vmax.f32 %v10650, 0.0
    %v10971 = vmax.f32 %v10841, 0.0
    %v10972 = vmax.f32 %v10843, 0.0
    %v10973 = vpack.c.bf16 %v10849, %v10845
    %v10974 = vpack.c.bf16 %v10850, %v10846
    %v10975 = vpack.c.bf16 %v10851, %v10847
    %v10976 = vpack.c.bf16 %v10852, %v10848
    %v10977 = vpack.c.bf16 %v10857, %v10853
    %v10978 = vpack.c.bf16 %v10858, %v10854
    %v10979 = vpack.c.bf16 %v10859, %v10855
    %v10980 = vpack.c.bf16 %v10860, %v10856
    %v10981 = vpack.c.bf16 %v10865, %v10861
    %v10982 = vpack.c.bf16 %v10866, %v10862
    %v10983 = vpack.c.bf16 %v10867, %v10863
    %v10984 = vpack.c.bf16 %v10868, %v10864
    %v10985 = vpack.c.bf16 %v10873, %v10869
    %v10986 = vpack.c.bf16 %v10874, %v10870
    %v10987 = vpack.c.bf16 %v10875, %v10871
    %v10988 = vpack.c.bf16 %v10876, %v10872
    %v10989 = vpack.c.bf16 %v10881, %v10877
    %v10990 = vpack.c.bf16 %v10882, %v10878
    %v10991 = vpack.c.bf16 %v10883, %v10879
    %v10992 = vpack.c.bf16 %v10884, %v10880
    %v10993 = vpack.c.bf16 %v10889, %v10885
    %v10994 = vpack.c.bf16 %v10890, %v10886
    %v10995 = vpack.c.bf16 %v10891, %v10887
    %v10996 = vpack.c.bf16 %v10892, %v10888
    %v10997 = vpack.c.bf16 %v10897, %v10893
    %v10998 = vpack.c.bf16 %v10898, %v10894
    %v10999 = vpack.c.bf16 %v10899, %v10895
    %v11000 = vpack.c.bf16 %v10900, %v10896
    %v11001 = vpack.c.bf16 %v10905, %v10901
    %v11002 = vpack.c.bf16 %v10906, %v10902
    %v11003 = vpack.c.bf16 %v10907, %v10903
    %v11004 = vpack.c.bf16 %v10908, %v10904
    %v11005 = vpack.c.bf16 %v10913, %v10909
    %v11006 = vpack.c.bf16 %v10914, %v10910
    %v11007 = vpack.c.bf16 %v10915, %v10911
    %v11008 = vpack.c.bf16 %v10916, %v10912
    %v11009 = vpack.c.bf16 %v10921, %v10917
    %v11010 = vpack.c.bf16 %v10922, %v10918
    %v11011 = vpack.c.bf16 %v10923, %v10919
    %v11012 = vpack.c.bf16 %v10924, %v10920
    %v11013 = vpack.c.bf16 %v10929, %v10925
    %v11014 = vpack.c.bf16 %v10930, %v10926
    %v11015 = vpack.c.bf16 %v10931, %v10927
    %v11016 = vpack.c.bf16 %v10932, %v10928
    %v11017 = vpack.c.bf16 %v10937, %v10933
    %v11018 = vpack.c.bf16 %v10938, %v10934
    %v11019 = vpack.c.bf16 %v10939, %v10935
    %v11020 = vpack.c.bf16 %v10940, %v10936
    %v11021 = vpack.c.bf16 %v10945, %v10941
    %v11022 = vpack.c.bf16 %v10946, %v10942
    %v11023 = vpack.c.bf16 %v10947, %v10943
    %v11024 = vpack.c.bf16 %v10948, %v10944
    %v11025 = vpack.c.bf16 %v10953, %v10949
    %v11026 = vpack.c.bf16 %v10954, %v10950
    %v11027 = vpack.c.bf16 %v10955, %v10951
    %v11028 = vpack.c.bf16 %v10956, %v10952
    %v11029 = vpack.c.bf16 %v10961, %v10957
    %v11030 = vpack.c.bf16 %v10962, %v10958
    %v11031 = vpack.c.bf16 %v10963, %v10959
    %v11032 = vpack.c.bf16 %v10964, %v10960
    %v11033 = vpack.c.bf16 %v10969, %v10965
    %v11034 = vpack.c.bf16 %v10970, %v10966
    %v11035 = vpack.c.bf16 %v10971, %v10967
    %v11036 = vpack.c.bf16 %v10972, %v10968
    %v11037 = vld [vmem:[#allocation10] sm:$0xf]
    %v11038 = vld [vmem:[#allocation10 + $0x4] sm:$0xf]
    %v11039 = vld [vmem:[#allocation10 + $0x8] sm:$0xf]
    %v11040 = vld [vmem:[#allocation10 + $0xc] sm:$0xf]
    %v11041 = vld [vmem:[#allocation10 + $0x10] sm:$0xf]
    %v11042 = vld [vmem:[#allocation10 + $0x14] sm:$0xf]
    %v11043 = vld [vmem:[#allocation10 + $0x18] sm:$0xf]
    %v11044 = vld [vmem:[#allocation10 + $0x1c] sm:$0xf]
    %v11045 = vld [vmem:[#allocation10 + $0x20] sm:$0xf]
    %v11046 = vld [vmem:[#allocation10 + $0x24] sm:$0xf]
    %v11047 = vld [vmem:[#allocation10 + $0x28] sm:$0xf]
    %v11048 = vld [vmem:[#allocation10 + $0x2c] sm:$0xf]
    %v11049 = vld [vmem:[#allocation10 + $0x30] sm:$0xf]
    %v11050 = vld [vmem:[#allocation10 + $0x34] sm:$0xf]
    %v11051 = vld [vmem:[#allocation10 + $0x38] sm:$0xf]
    %v11052 = vld [vmem:[#allocation10 + $0x3c] sm:$0xf]
    %v11053 = vld [vmem:[#allocation10 + $0x40] sm:$0xf]
    %v11054 = vld [vmem:[#allocation10 + $0x44] sm:$0xf]
    %v11055 = vld [vmem:[#allocation10 + $0x48] sm:$0xf]
    %v11056 = vld [vmem:[#allocation10 + $0x4c] sm:$0xf]
    %v11057 = vld [vmem:[#allocation10 + $0x50] sm:$0xf]
    %v11058 = vld [vmem:[#allocation10 + $0x54] sm:$0xf]
    %v11059 = vld [vmem:[#allocation10 + $0x58] sm:$0xf]
    %v11060 = vld [vmem:[#allocation10 + $0x5c] sm:$0xf]
    %v11061 = vld [vmem:[#allocation10 + $0x60] sm:$0xf]
    %v11062 = vld [vmem:[#allocation10 + $0x64] sm:$0xf]
    %v11063 = vld [vmem:[#allocation10 + $0x68] sm:$0xf]
    %v11064 = vld [vmem:[#allocation10 + $0x6c] sm:$0xf]
    %v11065 = vld [vmem:[#allocation10 + $0x70] sm:$0xf]
    %v11066 = vld [vmem:[#allocation10 + $0x74] sm:$0xf]
    %v11067 = vld [vmem:[#allocation10 + $0x78] sm:$0xf]
    %v11068 = vld [vmem:[#allocation10 + $0x7c] sm:$0xf]
    %v11069 = vld [vmem:[#allocation10 + $0x80] sm:$0xf]
    %v11070 = vld [vmem:[#allocation10 + $0x84] sm:$0xf]
    %v11071 = vld [vmem:[#allocation10 + $0x88] sm:$0xf]
    %v11072 = vld [vmem:[#allocation10 + $0x8c] sm:$0xf]
    %v11073 = vld [vmem:[#allocation10 + $0x90] sm:$0xf]
    %v11074 = vld [vmem:[#allocation10 + $0x94] sm:$0xf]
    %v11075 = vld [vmem:[#allocation10 + $0x98] sm:$0xf]
    %v11076 = vld [vmem:[#allocation10 + $0x9c] sm:$0xf]
    %v11077 = vld [vmem:[#allocation10 + $0xa0] sm:$0xf]
    %v11078 = vld [vmem:[#allocation10 + $0xa4] sm:$0xf]
    %v11079 = vld [vmem:[#allocation10 + $0xa8] sm:$0xf]
    %v11080 = vld [vmem:[#allocation10 + $0xac] sm:$0xf]
    %v11081 = vld [vmem:[#allocation10 + $0xb0] sm:$0xf]
    %v11082 = vld [vmem:[#allocation10 + $0xb4] sm:$0xf]
    %v11083 = vld [vmem:[#allocation10 + $0xb8] sm:$0xf]
    %v11084 = vld [vmem:[#allocation10 + $0xbc] sm:$0xf]
    %v11085 = vld [vmem:[#allocation10 + $0xc0] sm:$0xf]
    %v11086 = vld [vmem:[#allocation10 + $0xc4] sm:$0xf]
    %v11087 = vld [vmem:[#allocation10 + $0xc8] sm:$0xf]
    %v11088 = vld [vmem:[#allocation10 + $0xcc] sm:$0xf]
    %v11089 = vld [vmem:[#allocation10 + $0xd0] sm:$0xf]
    %v11090 = vld [vmem:[#allocation10 + $0xd4] sm:$0xf]
    %v11091 = vld [vmem:[#allocation10 + $0xd8] sm:$0xf]
    %v11092 = vld [vmem:[#allocation10 + $0xdc] sm:$0xf]
    %v11093 = vld [vmem:[#allocation10 + $0xe0] sm:$0xf]
    %v11094 = vld [vmem:[#allocation10 + $0xe4] sm:$0xf]
    %v11095 = vld [vmem:[#allocation10 + $0xe8] sm:$0xf]
    %v11096 = vld [vmem:[#allocation10 + $0xec] sm:$0xf]
    %v11097 = vld [vmem:[#allocation10 + $0xf0] sm:$0xf]
    %v11098 = vld [vmem:[#allocation10 + $0xf4] sm:$0xf]
    %v11099 = vld [vmem:[#allocation10 + $0xf8] sm:$0xf]
    %v11100 = vld [vmem:[#allocation10 + $0xfc] sm:$0xf]
    %v11101 = vld [vmem:[%s11] sm:$0x1]
    %v11103 = vlaneseq
    %v11104 = vshrl.u32 %v11103, 7
    %v11105 = vsub.s32 0, %v11104
    %v11106 = vrot.slane %v11101, %v11105
    %v11172 = vunpack.c.l.b16 %v11037
    %v11173 = vunpack.c.l.b16 %v11038
    %v11174 = vunpack.c.l.b16 %v11039
    %v11175 = vunpack.c.l.b16 %v11040
    %v11176 = vunpack.c.l.b16 %v11041
    %v11177 = vunpack.c.l.b16 %v11042
    %v11178 = vunpack.c.l.b16 %v11043
    %v11179 = vunpack.c.l.b16 %v11044
    %v11180 = vunpack.c.l.b16 %v11045
    %v11181 = vunpack.c.l.b16 %v11046
    %v11182 = vunpack.c.l.b16 %v11047
    %v11183 = vunpack.c.l.b16 %v11048
    %v11184 = vunpack.c.l.b16 %v11049
    %v11185 = vunpack.c.l.b16 %v11050
    %v11186 = vunpack.c.l.b16 %v11051
    %v11187 = vunpack.c.l.b16 %v11052
    %v11188 = vunpack.c.l.b16 %v11053
    %v11189 = vunpack.c.l.b16 %v11054
    %v11190 = vunpack.c.l.b16 %v11055
    %v11191 = vunpack.c.l.b16 %v11056
    %v11192 = vunpack.c.l.b16 %v11057
    %v11193 = vunpack.c.l.b16 %v11058
    %v11194 = vunpack.c.l.b16 %v11059
    %v11195 = vunpack.c.l.b16 %v11060
    %v11196 = vunpack.c.l.b16 %v11061
    %v11197 = vunpack.c.l.b16 %v11062
    %v11198 = vunpack.c.l.b16 %v11063
    %v11199 = vunpack.c.l.b16 %v11064
    %v11200 = vunpack.c.l.b16 %v11065
    %v11201 = vunpack.c.l.b16 %v11066
    %v11202 = vunpack.c.l.b16 %v11067
    %v11203 = vunpack.c.l.b16 %v11068
    %v11204 = vunpack.c.l.b16 %v11069
    %v11205 = vunpack.c.l.b16 %v11070
    %v11206 = vunpack.c.l.b16 %v11071
    %v11207 = vunpack.c.l.b16 %v11072
    %v11208 = vunpack.c.l.b16 %v11073
    %v11209 = vunpack.c.l.b16 %v11074
    %v11210 = vunpack.c.l.b16 %v11075
    %v11211 = vunpack.c.l.b16 %v11076
    %v11212 = vunpack.c.l.b16 %v11077
    %v11213 = vunpack.c.l.b16 %v11078
    %v11214 = vunpack.c.l.b16 %v11079
    %v11215 = vunpack.c.l.b16 %v11080
    %v11216 = vunpack.c.l.b16 %v11081
    %v11217 = vunpack.c.l.b16 %v11082
    %v11218 = vunpack.c.l.b16 %v11083
    %v11219 = vunpack.c.l.b16 %v11084
    %v11220 = vunpack.c.l.b16 %v11085
    %v11221 = vunpack.c.l.b16 %v11086
    %v11222 = vunpack.c.l.b16 %v11087
    %v11223 = vunpack.c.l.b16 %v11088
    %v11224 = vunpack.c.l.b16 %v11089
    %v11225 = vunpack.c.l.b16 %v11090
    %v11226 = vunpack.c.l.b16 %v11091
    %v11227 = vunpack.c.l.b16 %v11092
    %v11228 = vunpack.c.l.b16 %v11093
    %v11229 = vunpack.c.l.b16 %v11094
    %v11230 = vunpack.c.l.b16 %v11095
    %v11231 = vunpack.c.l.b16 %v11096
    %v11232 = vunpack.c.l.b16 %v11097
    %v11233 = vunpack.c.l.b16 %v11098
    %v11234 = vunpack.c.l.b16 %v11099
    %v11235 = vunpack.c.l.b16 %v11100
    %v11236 = vpack.c.b16 %v11173, %v11172
    %v11237 = vpack.c.b16 %v11175, %v11174
    %v11238 = vpack.c.b16 %v11177, %v11176
    %v11239 = vpack.c.b16 %v11179, %v11178
    %v11240 = vpack.c.b16 %v11181, %v11180
    %v11241 = vpack.c.b16 %v11183, %v11182
    %v11242 = vpack.c.b16 %v11185, %v11184
    %v11243 = vpack.c.b16 %v11187, %v11186
    %v11244 = vpack.c.b16 %v11189, %v11188
    %v11245 = vpack.c.b16 %v11191, %v11190
    %v11246 = vpack.c.b16 %v11193, %v11192
    %v11247 = vpack.c.b16 %v11195, %v11194
    %v11248 = vpack.c.b16 %v11197, %v11196
    %v11249 = vpack.c.b16 %v11199, %v11198
    %v11250 = vpack.c.b16 %v11201, %v11200
    %v11251 = vpack.c.b16 %v11203, %v11202
    %v11252 = vpack.c.b16 %v11205, %v11204
    %v11253 = vpack.c.b16 %v11207, %v11206
    %v11254 = vpack.c.b16 %v11209, %v11208
    %v11255 = vpack.c.b16 %v11211, %v11210
    %v11256 = vpack.c.b16 %v11213, %v11212
    %v11257 = vpack.c.b16 %v11215, %v11214
    %v11258 = vpack.c.b16 %v11217, %v11216
    %v11259 = vpack.c.b16 %v11219, %v11218
    %v11260 = vpack.c.b16 %v11221, %v11220
    %v11261 = vpack.c.b16 %v11223, %v11222
    %v11262 = vpack.c.b16 %v11225, %v11224
    %v11263 = vpack.c.b16 %v11227, %v11226
    %v11264 = vpack.c.b16 %v11229, %v11228
    %v11265 = vpack.c.b16 %v11231, %v11230
    %v11266 = vpack.c.b16 %v11233, %v11232
    %v11267 = vpack.c.b16 %v11235, %v11234
    %11300 = vmatprep.subr.bf16.mxu0 0
    %11301 = vmatpush1.bf16.msra.mxu0 %v11243
    %11302 = vmatprep.subr.bf16.mxu0 0
    %11303 = vmatpush1.bf16.msra.mxu0 %v11242
    %11304 = vmatprep.subr.bf16.mxu0 0
    %11305 = vmatpush1.bf16.msra.mxu0 %v11241
    %11306 = vmatprep.subr.bf16.mxu0 0
    %11307 = vmatpush1.bf16.msra.mxu0 %v11240
    %11308 = vmatprep.subr.bf16.mxu0 0
    %11309 = vmatpush1.bf16.msra.mxu0 %v11239
    %11310 = vmatprep.subr.bf16.mxu0 0
    %11311 = vmatpush1.bf16.msra.mxu0 %v11238
    %11312 = vmatprep.subr.bf16.mxu0 0
    %11313 = vmatpush1.bf16.msra.mxu0 %v11237
    %11314 = vmatprep.subr.bf16.mxu0 0
    %11315 = vmatpush1.bf16.msra.mxu0 %v11236
    %11316 = vmatprep.subr.bf16.mxu0 0
    %11317 = vmatpush2.bf16.msra.mxu0 %v11251
    %11318 = vmatprep.subr.bf16.mxu0 0
    %11319 = vmatpush2.bf16.msra.mxu0 %v11250
    %11320 = vmatprep.subr.bf16.mxu0 0
    %11321 = vmatpush2.bf16.msra.mxu0 %v11249
    %11322 = vmatprep.subr.bf16.mxu0 0
    %11323 = vmatpush2.bf16.msra.mxu0 %v11248
    %11324 = vmatprep.subr.bf16.mxu0 0
    %11325 = vmatpush2.bf16.msra.mxu0 %v11247
    %11326 = vmatprep.subr.bf16.mxu0 0
    %11327 = vmatpush2.bf16.msra.mxu0 %v11246
    %11328 = vmatprep.subr.bf16.mxu0 0
    %11329 = vmatpush2.bf16.msra.mxu0 %v11245
    %11330 = vmatprep.subr.bf16.mxu0 0
    %11331 = vmatpush2.bf16.msra.mxu0 %v11244
    %11332 = vmatprep.mubr.bf16.mxu0 %v10974
    %11333 = vmatmul.mubr.bf16.gmra.mxu0 %v10973
    %v11334 = vpop.f32.mrf.mxu0
    %v11335 = vadd.f32 %v11106, %v11334
    %v11336 = vpop.f32.mrf.mxu0
    %v11337 = vpop.f32.mrf.mxu0
    %v11338 = vadd.f32 %v11106, %v11337
    %v11339 = vpop.f32.mrf.mxu0
    %11340 = vmatprep.mubr.bf16.mxu0 %v10978
    %11341 = vmatmul.mubr.bf16.gmra.mxu0 %v10977
    %v11342 = vpop.f32.mrf.mxu0
    %v11343 = vadd.f32 %v11106, %v11342
    %v11344 = vpop.f32.mrf.mxu0
    %v11345 = vpop.f32.mrf.mxu0
    %v11346 = vadd.f32 %v11106, %v11345
    %v11347 = vpop.f32.mrf.mxu0
    %11348 = vmatprep.mubr.bf16.mxu0 %v10982
    %11349 = vmatmul.mubr.bf16.gmra.mxu0 %v10981
    %v11350 = vpop.f32.mrf.mxu0
    %v11351 = vadd.f32 %v11106, %v11350
    %v11352 = vpop.f32.mrf.mxu0
    %v11353 = vpop.f32.mrf.mxu0
    %v11354 = vadd.f32 %v11106, %v11353
    %v11355 = vpop.f32.mrf.mxu0
    %11356 = vmatprep.mubr.bf16.mxu0 %v10986
    %11357 = vmatmul.mubr.bf16.gmra.mxu0 %v10985
    %v11358 = vpop.f32.mrf.mxu0
    %v11359 = vadd.f32 %v11106, %v11358
    %v11360 = vpop.f32.mrf.mxu0
    %v11361 = vpop.f32.mrf.mxu0
    %v11362 = vadd.f32 %v11106, %v11361
    %v11363 = vpop.f32.mrf.mxu0
    %11364 = vmatprep.mubr.bf16.mxu0 %v10990
    %11365 = vmatmul.mubr.bf16.gmra.mxu0 %v10989
    %v11366 = vpop.f32.mrf.mxu0
    %v11367 = vadd.f32 %v11106, %v11366
    %v11368 = vpop.f32.mrf.mxu0
    %v11369 = vpop.f32.mrf.mxu0
    %v11370 = vadd.f32 %v11106, %v11369
    %v11371 = vpop.f32.mrf.mxu0
    %11372 = vmatprep.mubr.bf16.mxu0 %v10994
    %11373 = vmatmul.mubr.bf16.gmra.mxu0 %v10993
    %v11374 = vpop.f32.mrf.mxu0
    %v11375 = vadd.f32 %v11106, %v11374
    %v11376 = vpop.f32.mrf.mxu0
    %v11377 = vpop.f32.mrf.mxu0
    %v11378 = vadd.f32 %v11106, %v11377
    %v11379 = vpop.f32.mrf.mxu0
    %11380 = vmatprep.mubr.bf16.mxu0 %v10998
    %11381 = vmatmul.mubr.bf16.gmra.mxu0 %v10997
    %v11382 = vpop.f32.mrf.mxu0
    %v11383 = vadd.f32 %v11106, %v11382
    %v11384 = vpop.f32.mrf.mxu0
    %v11385 = vpop.f32.mrf.mxu0
    %v11386 = vadd.f32 %v11106, %v11385
    %v11387 = vpop.f32.mrf.mxu0
    %11388 = vmatprep.mubr.bf16.mxu0 %v11002
    %11389 = vmatmul.mubr.bf16.gmra.mxu0 %v11001
    %v11390 = vpop.f32.mrf.mxu0
    %v11391 = vadd.f32 %v11106, %v11390
    %v11392 = vpop.f32.mrf.mxu0
    %v11393 = vpop.f32.mrf.mxu0
    %v11394 = vadd.f32 %v11106, %v11393
    %v11395 = vpop.f32.mrf.mxu0
    %11396 = vmatprep.mubr.bf16.mxu0 %v11006
    %11397 = vmatmul.mubr.bf16.gmra.mxu0 %v11005
    %v11398 = vpop.f32.mrf.mxu0
    %v11399 = vadd.f32 %v11106, %v11398
    %v11400 = vpop.f32.mrf.mxu0
    %v11401 = vpop.f32.mrf.mxu0
    %v11402 = vadd.f32 %v11106, %v11401
    %v11403 = vpop.f32.mrf.mxu0
    %11404 = vmatprep.mubr.bf16.mxu0 %v11010
    %11405 = vmatmul.mubr.bf16.gmra.mxu0 %v11009
    %v11406 = vpop.f32.mrf.mxu0
    %v11407 = vadd.f32 %v11106, %v11406
    %v11408 = vpop.f32.mrf.mxu0
    %v11409 = vpop.f32.mrf.mxu0
    %v11410 = vadd.f32 %v11106, %v11409
    %v11411 = vpop.f32.mrf.mxu0
    %11412 = vmatprep.mubr.bf16.mxu0 %v11014
    %11413 = vmatmul.mubr.bf16.gmra.mxu0 %v11013
    %v11414 = vpop.f32.mrf.mxu0
    %v11415 = vadd.f32 %v11106, %v11414
    %v11416 = vpop.f32.mrf.mxu0
    %v11417 = vpop.f32.mrf.mxu0
    %v11418 = vadd.f32 %v11106, %v11417
    %v11419 = vpop.f32.mrf.mxu0
    %11420 = vmatprep.mubr.bf16.mxu0 %v11018
    %11421 = vmatmul.mubr.bf16.gmra.mxu0 %v11017
    %v11422 = vpop.f32.mrf.mxu0
    %v11423 = vadd.f32 %v11106, %v11422
    %v11424 = vpop.f32.mrf.mxu0
    %v11425 = vpop.f32.mrf.mxu0
    %v11426 = vadd.f32 %v11106, %v11425
    %v11427 = vpop.f32.mrf.mxu0
    %11428 = vmatprep.mubr.bf16.mxu0 %v11022
    %11429 = vmatmul.mubr.bf16.gmra.mxu0 %v11021
    %v11430 = vpop.f32.mrf.mxu0
    %v11431 = vadd.f32 %v11106, %v11430
    %v11432 = vpop.f32.mrf.mxu0
    %v11433 = vpop.f32.mrf.mxu0
    %v11434 = vadd.f32 %v11106, %v11433
    %v11435 = vpop.f32.mrf.mxu0
    %11436 = vmatprep.mubr.bf16.mxu0 %v11026
    %11437 = vmatmul.mubr.bf16.gmra.mxu0 %v11025
    %v11438 = vpop.f32.mrf.mxu0
    %v11439 = vadd.f32 %v11106, %v11438
    %v11440 = vpop.f32.mrf.mxu0
    %v11441 = vpop.f32.mrf.mxu0
    %v11442 = vadd.f32 %v11106, %v11441
    %v11443 = vpop.f32.mrf.mxu0
    %11444 = vmatprep.mubr.bf16.mxu0 %v11030
    %11445 = vmatmul.mubr.bf16.gmra.mxu0 %v11029
    %v11446 = vpop.f32.mrf.mxu0
    %v11447 = vadd.f32 %v11106, %v11446
    %v11448 = vpop.f32.mrf.mxu0
    %v11449 = vpop.f32.mrf.mxu0
    %v11450 = vadd.f32 %v11106, %v11449
    %v11451 = vpop.f32.mrf.mxu0
    %11452 = vmatprep.mubr.bf16.mxu0 %v11034
    %11453 = vmatmul.mubr.bf16.gmra.mxu0 %v11033
    %v11454 = vpop.f32.mrf.mxu0
    %v11455 = vadd.f32 %v11106, %v11454
    %v11456 = vpop.f32.mrf.mxu0
    %v11457 = vpop.f32.mrf.mxu0
    %v11458 = vadd.f32 %v11106, %v11457
    %v11459 = vpop.f32.mrf.mxu0
    %11460 = vdwg.mxu0
    %11461 = vmatprep.subr.bf16.mxu0 0
    %11462 = vmatpush1.bf16.msra.mxu0 %v11259
    %11463 = vmatprep.subr.bf16.mxu0 0
    %11464 = vmatpush1.bf16.msra.mxu0 %v11258
    %11465 = vmatprep.subr.bf16.mxu0 0
    %11466 = vmatpush1.bf16.msra.mxu0 %v11257
    %11467 = vmatprep.subr.bf16.mxu0 0
    %11468 = vmatpush1.bf16.msra.mxu0 %v11256
    %11469 = vmatprep.subr.bf16.mxu0 0
    %11470 = vmatpush1.bf16.msra.mxu0 %v11255
    %11471 = vmatprep.subr.bf16.mxu0 0
    %11472 = vmatpush1.bf16.msra.mxu0 %v11254
    %11473 = vmatprep.subr.bf16.mxu0 0
    %11474 = vmatpush1.bf16.msra.mxu0 %v11253
    %11475 = vmatprep.subr.bf16.mxu0 0
    %11476 = vmatpush1.bf16.msra.mxu0 %v11252
    %11477 = vmatprep.subr.bf16.mxu0 0
    %11478 = vmatpush2.bf16.msra.mxu0 %v11267
    %11479 = vmatprep.subr.bf16.mxu0 0
    %11480 = vmatpush2.bf16.msra.mxu0 %v11266
    %11481 = vmatprep.subr.bf16.mxu0 0
    %11482 = vmatpush2.bf16.msra.mxu0 %v11265
    %11483 = vmatprep.subr.bf16.mxu0 0
    %11484 = vmatpush2.bf16.msra.mxu0 %v11264
    %11485 = vmatprep.subr.bf16.mxu0 0
    %11486 = vmatpush2.bf16.msra.mxu0 %v11263
    %11487 = vmatprep.subr.bf16.mxu0 0
    %11488 = vmatpush2.bf16.msra.mxu0 %v11262
    %11489 = vmatprep.subr.bf16.mxu0 0
    %11490 = vmatpush2.bf16.msra.mxu0 %v11261
    %11491 = vmatprep.subr.bf16.mxu0 0
    %11492 = vmatpush2.bf16.msra.mxu0 %v11260
    %11493 = vmatprep.mubr.bf16.mxu0 %v10976
    %11494 = vmatmul.mubr.bf16.gmra.mxu0 %v10975
    %v11495 = vpop.f32.mrf.mxu0
    %v11496 = vadd.f32 %v11335, %v11495
    %v11497 = vpop.f32.mrf.mxu0
    %v11498 = vpop.f32.mrf.mxu0
    %v11499 = vadd.f32 %v11338, %v11498
    %v11500 = vpop.f32.mrf.mxu0
    %11501 = vmatprep.mubr.bf16.mxu0 %v10980
    %11502 = vmatmul.mubr.bf16.gmra.mxu0 %v10979
    %v11503 = vpop.f32.mrf.mxu0
    %v11504 = vadd.f32 %v11343, %v11503
    %v11505 = vpop.f32.mrf.mxu0
    %v11506 = vpop.f32.mrf.mxu0
    %v11507 = vadd.f32 %v11346, %v11506
    %v11508 = vpop.f32.mrf.mxu0
    %11509 = vmatprep.mubr.bf16.mxu0 %v10984
    %11510 = vmatmul.mubr.bf16.gmra.mxu0 %v10983
    %v11511 = vpop.f32.mrf.mxu0
    %v11512 = vadd.f32 %v11351, %v11511
    %v11513 = vpop.f32.mrf.mxu0
    %v11514 = vpop.f32.mrf.mxu0
    %v11515 = vadd.f32 %v11354, %v11514
    %v11516 = vpop.f32.mrf.mxu0
    %11517 = vmatprep.mubr.bf16.mxu0 %v10988
    %11518 = vmatmul.mubr.bf16.gmra.mxu0 %v10987
    %v11519 = vpop.f32.mrf.mxu0
    %v11520 = vadd.f32 %v11359, %v11519
    %v11521 = vpop.f32.mrf.mxu0
    %v11522 = vpop.f32.mrf.mxu0
    %v11523 = vadd.f32 %v11362, %v11522
    %v11524 = vpop.f32.mrf.mxu0
    %11525 = vmatprep.mubr.bf16.mxu0 %v10992
    %11526 = vmatmul.mubr.bf16.gmra.mxu0 %v10991
    %v11527 = vpop.f32.mrf.mxu0
    %v11528 = vadd.f32 %v11367, %v11527
    %v11529 = vpop.f32.mrf.mxu0
    %v11530 = vpop.f32.mrf.mxu0
    %v11531 = vadd.f32 %v11370, %v11530
    %v11532 = vpop.f32.mrf.mxu0
    %11533 = vmatprep.mubr.bf16.mxu0 %v10996
    %11534 = vmatmul.mubr.bf16.gmra.mxu0 %v10995
    %v11535 = vpop.f32.mrf.mxu0
    %v11536 = vadd.f32 %v11375, %v11535
    %v11537 = vpop.f32.mrf.mxu0
    %v11538 = vpop.f32.mrf.mxu0
    %v11539 = vadd.f32 %v11378, %v11538
    %v11540 = vpop.f32.mrf.mxu0
    %11541 = vmatprep.mubr.bf16.mxu0 %v11000
    %11542 = vmatmul.mubr.bf16.gmra.mxu0 %v10999
    %v11543 = vpop.f32.mrf.mxu0
    %v11544 = vadd.f32 %v11383, %v11543
    %v11545 = vpop.f32.mrf.mxu0
    %v11546 = vpop.f32.mrf.mxu0
    %v11547 = vadd.f32 %v11386, %v11546
    %v11548 = vpop.f32.mrf.mxu0
    %11549 = vmatprep.mubr.bf16.mxu0 %v11004
    %11550 = vmatmul.mubr.bf16.gmra.mxu0 %v11003
    %v11551 = vpop.f32.mrf.mxu0
    %v11552 = vadd.f32 %v11391, %v11551
    %v11553 = vpop.f32.mrf.mxu0
    %v11554 = vpop.f32.mrf.mxu0
    %v11555 = vadd.f32 %v11394, %v11554
    %v11556 = vpop.f32.mrf.mxu0
    %11557 = vmatprep.mubr.bf16.mxu0 %v11008
    %11558 = vmatmul.mubr.bf16.gmra.mxu0 %v11007
    %v11559 = vpop.f32.mrf.mxu0
    %v11560 = vadd.f32 %v11399, %v11559
    %v11561 = vpop.f32.mrf.mxu0
    %v11562 = vpop.f32.mrf.mxu0
    %v11563 = vadd.f32 %v11402, %v11562
    %v11564 = vpop.f32.mrf.mxu0
    %11565 = vmatprep.mubr.bf16.mxu0 %v11012
    %11566 = vmatmul.mubr.bf16.gmra.mxu0 %v11011
    %v11567 = vpop.f32.mrf.mxu0
    %v11568 = vadd.f32 %v11407, %v11567
    %v11569 = vpop.f32.mrf.mxu0
    %v11570 = vpop.f32.mrf.mxu0
    %v11571 = vadd.f32 %v11410, %v11570
    %v11572 = vpop.f32.mrf.mxu0
    %11573 = vmatprep.mubr.bf16.mxu0 %v11016
    %11574 = vmatmul.mubr.bf16.gmra.mxu0 %v11015
    %v11575 = vpop.f32.mrf.mxu0
    %v11576 = vadd.f32 %v11415, %v11575
    %v11577 = vpop.f32.mrf.mxu0
    %v11578 = vpop.f32.mrf.mxu0
    %v11579 = vadd.f32 %v11418, %v11578
    %v11580 = vpop.f32.mrf.mxu0
    %11581 = vmatprep.mubr.bf16.mxu0 %v11020
    %11582 = vmatmul.mubr.bf16.gmra.mxu0 %v11019
    %v11583 = vpop.f32.mrf.mxu0
    %v11584 = vadd.f32 %v11423, %v11583
    %v11585 = vpop.f32.mrf.mxu0
    %v11586 = vpop.f32.mrf.mxu0
    %v11587 = vadd.f32 %v11426, %v11586
    %v11588 = vpop.f32.mrf.mxu0
    %11589 = vmatprep.mubr.bf16.mxu0 %v11024
    %11590 = vmatmul.mubr.bf16.gmra.mxu0 %v11023
    %v11591 = vpop.f32.mrf.mxu0
    %v11592 = vadd.f32 %v11431, %v11591
    %v11593 = vpop.f32.mrf.mxu0
    %v11594 = vpop.f32.mrf.mxu0
    %v11595 = vadd.f32 %v11434, %v11594
    %v11596 = vpop.f32.mrf.mxu0
    %11597 = vmatprep.mubr.bf16.mxu0 %v11028
    %11598 = vmatmul.mubr.bf16.gmra.mxu0 %v11027
    %v11599 = vpop.f32.mrf.mxu0
    %v11600 = vadd.f32 %v11439, %v11599
    %v11601 = vpop.f32.mrf.mxu0
    %v11602 = vpop.f32.mrf.mxu0
    %v11603 = vadd.f32 %v11442, %v11602
    %v11604 = vpop.f32.mrf.mxu0
    %11605 = vmatprep.mubr.bf16.mxu0 %v11032
    %11606 = vmatmul.mubr.bf16.gmra.mxu0 %v11031
    %v11607 = vpop.f32.mrf.mxu0
    %v11608 = vadd.f32 %v11447, %v11607
    %v11609 = vpop.f32.mrf.mxu0
    %v11610 = vpop.f32.mrf.mxu0
    %v11611 = vadd.f32 %v11450, %v11610
    %v11612 = vpop.f32.mrf.mxu0
    %11613 = vmatprep.mubr.bf16.mxu0 %v11036
    %11614 = vmatmul.mubr.bf16.gmra.mxu0 %v11035
    %v11615 = vpop.f32.mrf.mxu0
    %v11616 = vadd.f32 %v11455, %v11615
    %v11617 = vpop.f32.mrf.mxu0
    %v11618 = vpop.f32.mrf.mxu0
    %v11619 = vadd.f32 %v11458, %v11618
    %v11620 = vpop.f32.mrf.mxu0
    %11621 = vdwg.mxu0
    %v11622 = vadd.f32 %v9767, %v11496
    %v11623 = vadd.f32 %v9768, %v11499
    %v11624 = vadd.f32 %v9769, %v11504
    %v11625 = vadd.f32 %v9770, %v11507
    %v11626 = vadd.f32 %v9771, %v11512
    %v11627 = vadd.f32 %v9772, %v11515
    %v11628 = vadd.f32 %v9773, %v11520
    %v11629 = vadd.f32 %v9774, %v11523
    %v11630 = vadd.f32 %v9775, %v11528
    %v11631 = vadd.f32 %v9776, %v11531
    %v11632 = vadd.f32 %v9777, %v11536
    %v11633 = vadd.f32 %v9778, %v11539
    %v11634 = vadd.f32 %v9779, %v11544
    %v11635 = vadd.f32 %v9780, %v11547
    %v11636 = vadd.f32 %v9781, %v11552
    %v11637 = vadd.f32 %v9782, %v11555
    %v11638 = vadd.f32 %v9783, %v11560
    %v11639 = vadd.f32 %v9784, %v11563
    %v11640 = vadd.f32 %v9785, %v11568
    %v11641 = vadd.f32 %v9786, %v11571
    %v11642 = vadd.f32 %v9787, %v11576
    %v11643 = vadd.f32 %v9788, %v11579
    %v11644 = vadd.f32 %v9789, %v11584
    %v11645 = vadd.f32 %v9790, %v11587
    %v11646 = vadd.f32 %v9791, %v11592
    %v11647 = vadd.f32 %v9792, %v11595
    %v11648 = vadd.f32 %v9793, %v11600
    %v11649 = vadd.f32 %v9794, %v11603
    %v11650 = vadd.f32 %v9795, %v11608
    %v11651 = vadd.f32 %v9796, %v11611
    %v11652 = vadd.f32 %v9797, %v11616
    %v11653 = vadd.f32 %v9798, %v11619
    %11654 = vst [vmem:[#allocation11] sm:$0xff] %v11622
    %11655 = vst [vmem:[#allocation11 + $0x8] sm:$0xff] %v11623
    %11656 = vst [vmem:[#allocation11 + $0x10] sm:$0xff] %v11624
    %11657 = vst [vmem:[#allocation11 + $0x18] sm:$0xff] %v11625
    %11658 = vst [vmem:[#allocation11 + $0x20] sm:$0xff] %v11626
    %11659 = vst [vmem:[#allocation11 + $0x28] sm:$0xff] %v11627
    %11660 = vst [vmem:[#allocation11 + $0x30] sm:$0xff] %v11628
    %11661 = vst [vmem:[#allocation11 + $0x38] sm:$0xff] %v11629
    %11662 = vst [vmem:[#allocation11 + $0x40] sm:$0xff] %v11630
    %11663 = vst [vmem:[#allocation11 + $0x48] sm:$0xff] %v11631
    %11664 = vst [vmem:[#allocation11 + $0x50] sm:$0xff] %v11632
    %11665 = vst [vmem:[#allocation11 + $0x58] sm:$0xff] %v11633
    %11666 = vst [vmem:[#allocation11 + $0x60] sm:$0xff] %v11634
    %11667 = vst [vmem:[#allocation11 + $0x68] sm:$0xff] %v11635
    %11668 = vst [vmem:[#allocation11 + $0x70] sm:$0xff] %v11636
    %11669 = vst [vmem:[#allocation11 + $0x78] sm:$0xff] %v11637
    %11670 = vst [vmem:[#allocation11 + $0x80] sm:$0xff] %v11638
    %11671 = vst [vmem:[#allocation11 + $0x88] sm:$0xff] %v11639
    %11672 = vst [vmem:[#allocation11 + $0x90] sm:$0xff] %v11640
    %11673 = vst [vmem:[#allocation11 + $0x98] sm:$0xff] %v11641
    %11674 = vst [vmem:[#allocation11 + $0xa0] sm:$0xff] %v11642
    %11675 = vst [vmem:[#allocation11 + $0xa8] sm:$0xff] %v11643
    %11676 = vst [vmem:[#allocation11 + $0xb0] sm:$0xff] %v11644
    %11677 = vst [vmem:[#allocation11 + $0xb8] sm:$0xff] %v11645
    %11678 = vst [vmem:[#allocation11 + $0xc0] sm:$0xff] %v11646
    %11679 = vst [vmem:[#allocation11 + $0xc8] sm:$0xff] %v11647
    %11680 = vst [vmem:[#allocation11 + $0xd0] sm:$0xff] %v11648
    %11681 = vst [vmem:[#allocation11 + $0xd8] sm:$0xff] %v11649
    %11682 = vst [vmem:[#allocation11 + $0xe0] sm:$0xff] %v11650
    %11683 = vst [vmem:[#allocation11 + $0xe8] sm:$0xff] %v11651
    %11684 = vst [vmem:[#allocation11 + $0xf0] sm:$0xff] %v11652
    %11685 = vst [vmem:[#allocation11 + $0xf8] sm:$0xff] %v11653
    // Predicated region
    $region70: #{tpu_custom_call.1} parent=1 // pred_check
      _
    $region71: #{tpu_custom_call.1} parent=1 // pred_check_branch
      %11687 = sbr.rel (0) target = $region73
    $region72: #{tpu_custom_call.1} parent=1 // pred_region
      %s11689 = ssub.s32 4096, 4096
      %11690 = vsyncadd [#allocation4], %s11689
      %s11691 = sshll.u32 [#allocation11], 4
      %s11692 = int_to_ptr.vmem [resolvable:$true] %s11691
      %11697 = dma.vmem_to_hbm [thread:$0]  %s11692, 4096, %s12, [#allocation4], 128, 128, 8
    $region73: #{tpu_custom_call.1} parent=1 // pred_fallthru
      _
    // Predicated region
    $region74: #{tpu_custom_call.1} parent=1 // pred_check
      _
    $region75: #{tpu_custom_call.1} parent=1 // pred_check_branch
      %11699 = sbr.rel (0) target = $region77
    $region76: #{tpu_custom_call.1} parent=1 // pred_region
      %11700 = dma.done [#allocation4], 4096
    $region77: #{tpu_custom_call.1} parent=1 // pred_fallthru
      _
    %11701 = vsyncpa [#allocation3], 1
    %11702 = vsyncpa [#allocation6], 1
    %11703 = vsyncpa [#allocation9], 1
    %11704 = vsyncpa [#allocation4], 1

</llo_original>
